<compile_context>
chip_gen: v5e
topology: v5e:2x2
jax: 0.10.0
libtpu: 0.0.40
codegen_flags: <defaults>
</compile_context>

<pallas_src>
import math

import jax
import jax.numpy as jnp
from jax import lax
from jax.experimental import pallas as pl
from jax.experimental.pallas import tpu as pltpu

# ---------------------------------------------------------------------------
# Small synthetic Q-Former config
# ---------------------------------------------------------------------------
HIDDEN = 32
NUM_HEADS = 4
HEAD_DIM = HIDDEN // NUM_HEADS
INTERMEDIATE = 64
NUM_LAYERS = 2
NUM_QUERY = 8
SEQ = 16
BATCH = 2
EPS = 1e-12

PARAM_ORDER = ('q0', 'sa_w', 'sa_b', 'sa_wo', 'sa_bo',
               'ca_wq', 'ca_bq', 'ca_wkv', 'ca_bkv', 'ca_wo', 'ca_bo',
               'ln_g', 'ln_b', 'ff_w1', 'ff_b1', 'ff_w2', 'ff_b2')


# ---------------------------------------------------------------------------
# Shared math helpers
# ---------------------------------------------------------------------------
def _gelu(x, exact):
    if exact:
        # Exact erf-based GELU == torch.nn.GELU() default.
        return 0.5 * x * (1.0 + lax.erf(x * (1.0 / math.sqrt(2.0))))
    # TODO(synk): tanh-approximate fallback used only if lax.erf does not lower
    # on this Mosaic build; slight deviation from torch's exact GELU.
    return jax.nn.gelu(x, approximate=True)


def _layernorm_onepass(h, g, b):
    # One-pass variance: two independent cross-lane reductions (shorter dep chain).
    m1 = jnp.mean(h, axis=-1, keepdims=True)
    m2 = jnp.mean(h * h, axis=-1, keepdims=True)
    var = m2 - m1 * m1
    return (h - m1) * lax.rsqrt(var + EPS) * g + b


def _layernorm_ref(h, g, b):
    # Two-pass (torch-style) variance for the pure-JAX reference.
    mu = jnp.mean(h, axis=-1, keepdims=True)
    var = jnp.mean((h - mu) ** 2, axis=-1, keepdims=True)
    return (h - mu) * lax.rsqrt(var + EPS) * g + b


# ---------------------------------------------------------------------------
# Fused Pallas kernel: all layers + final LayerNorm
# ---------------------------------------------------------------------------
def build_qformer_forward(block_batch, gelu_exact):
    """Returns a jitted forward.  block_batch = batch elements per grid step."""
    BB = block_batch

    def split_heads(t, base):
        # (S, wide) -> (NH, S, D) via static lane slices + leading-axis stack.
        return jnp.stack(
            [t[:, base + hh * HEAD_DIM: base + (hh + 1) * HEAD_DIM]
             for hh in range(NUM_HEADS)], axis=0)

    def attn_core(qh, kh, vh, add_mask, wo, bo):
        # Head-batched scores / softmax / context (leading batch dim on both operands).
        scores = jnp.einsum('hqd,hkd->hqk', qh, kh,
                            preferred_element_type=jnp.float32)
        if add_mask is not None:
            scores = scores + add_mask              # (1,L) broadcasts over (NH,Qn,L)
        m = jnp.max(scores, axis=-1, keepdims=True)
        e = jnp.exp(scores - m)
        probs = e * pl.reciprocal(jnp.sum(e, axis=-1, keepdims=True), approx=True)
        ctx = jnp.einsum('hqk,hkd->hqd', probs, vh,
                         preferred_element_type=jnp.float32)
        # Lane-concat the per-head contexts, then ONE (Qn,32)@(32,32) projection.
        ctx_cat = jnp.concatenate([ctx[hh] for hh in range(NUM_HEADS)], axis=-1)
        return jnp.dot(ctx_cat, wo, preferred_element_type=jnp.float32) + bo

    def kernel(x_ref, mask_ref, q0_ref,
               sa_w_ref, sa_b_ref, sa_wo_ref, sa_bo_ref,
               ca_wq_ref, ca_bq_ref, ca_wkv_ref, ca_bkv_ref, ca_wo_ref, ca_bo_ref,
               ln_g_ref, ln_b_ref, ff_w1_ref, ff_b1_ref, ff_w2_ref, ff_b2_ref,
               out_ref):
        # Static loop over the batch elements in this block: independent chains
        # the VLIW scheduler can interleave on a single TensorCore.
        for b in range(BB):
            x = x_ref[b]                            # (L, H) encoder states
            add_mask = mask_ref[b, 0]               # (1, L) additive cross-attn mask
            # Hoisted once per batch element: cross-attention K/V for EVERY layer,
            # a single (L,32)@(32, NUM_LAYERS*64) matmul.
            kv_all = jnp.dot(x, ca_wkv_ref[...],
                             preferred_element_type=jnp.float32) + ca_bkv_ref[0]
            q = q0_ref[...]                         # (Qn, H) query tokens

            for li in range(NUM_LAYERS):            # static layer unroll
                # --- self-attention block (no mask, matching QFormer.forward) ---
                h = _layernorm_onepass(q, ln_g_ref[li * 3 + 0], ln_b_ref[li * 3 + 0])
                qkv = jnp.dot(h, sa_w_ref[li],
                              preferred_element_type=jnp.float32) + sa_b_ref[li]
                q = q + attn_core(split_heads(qkv, 0),
                                  split_heads(qkv, HIDDEN),
                                  split_heads(qkv, 2 * HIDDEN),
                                  None, sa_wo_ref[li], sa_bo_ref[li])

                # --- cross-attention block (K/V taken from hoisted kv_all) -------
                h = _layernorm_onepass(q, ln_g_ref[li * 3 + 1], ln_b_ref[li * 3 + 1])
                qp = jnp.dot(h, ca_wq_ref[li],
                             preferred_element_type=jnp.float32) + ca_bq_ref[li]
                base = li * 2 * HIDDEN
                q = q + attn_core(split_heads(qp, 0),
                                  split_heads(kv_all, base),
                                  split_heads(kv_all, base + HIDDEN),
                                  add_mask, ca_wo_ref[li], ca_bo_ref[li])

                # --- feed-forward block ------------------------------------------
                h = _layernorm_onepass(q, ln_g_ref[li * 3 + 2], ln_b_ref[li * 3 + 2])
                h = jnp.dot(h, ff_w1_ref[li],
                            preferred_element_type=jnp.float32) + ff_b1_ref[li]
                h = _gelu(h, gelu_exact)
                h = jnp.dot(h, ff_w2_ref[li],
                            preferred_element_type=jnp.float32) + ff_b2_ref[li]
                q = q + h

            # Final LayerNorm; only this small (Qn, H) tile leaves the kernel.
            out_ref[b] = _layernorm_onepass(q, ln_g_ref[NUM_LAYERS * 3],
                                            ln_b_ref[NUM_LAYERS * 3])

    def fwd(packed, hidden_states, attention_mask):
        B, L, H = hidden_states.shape
        Qn = packed['q0'].shape[0]
        param_args = [packed[k] for k in PARAM_ORDER]

        def full_spec(arr):
            nd = arr.ndim
            return pl.BlockSpec(tuple(arr.shape), lambda g, _nd=nd: (0,) * _nd)

        in_specs = ([pl.BlockSpec((BB, L, H), lambda g: (g, 0, 0)),          # states
                     pl.BlockSpec((BB, 1, 1, L), lambda g: (g, 0, 0, 0))]    # mask
                    + [full_spec(a) for a in param_args])                    # weights

        return pl.pallas_call(
            kernel,
            grid=(B // BB,),
            in_specs=in_specs,
            out_specs=pl.BlockSpec((BB, Qn, H), lambda g: (g, 0, 0)),
            out_shape=jax.ShapeDtypeStruct((B, Qn, H), jnp.float32),
            compiler_params=pltpu.CompilerParams(
                dimension_semantics=("parallel",)),
        )(hidden_states, attention_mask, *param_args)

    return jax.jit(fwd)


def _default_block_batch(batch):
    """Megacore chips (v7x/v4/v5p): keep a per-batch 'parallel' grid so the batch
    axis is sharded across the 2 TensorCores.  Single-TC chips (v5e/v6e): fold
    the whole batch into one kernel body for ILP (grid of size 1)."""
    try:
        kind = jax.devices()[0].device_kind.lower()
    except Exception:
        return batch
    if any(tag in kind for tag in ("v7", "v4", "v5p")):
        return 1
    return batch


# ---------------------------------------------------------------------------
# Deterministic synthetic parameters (torch-equivalent layout) + kernel packing
# ---------------------------------------------------------------------------
def init_raw_params(key):
    k_q, k_fin, *k_layers = jax.random.split(key, 2 + NUM_LAYERS)
    query_tokens = 0.02 * jax.random.normal(k_q, (1, NUM_QUERY, HIDDEN), jnp.float32)

    def linear(k, din, dout):
        kw, kb = jax.random.split(k)
        return (0.02 * jax.random.normal(kw, (din, dout), jnp.float32),
                0.02 * jax.random.normal(kb, (dout,), jnp.float32))

    def lnorm(k):
        kg, kb = jax.random.split(k)
        return (1.0 + 0.1 * jax.random.normal(kg, (HIDDEN,), jnp.float32),
                0.1 * jax.random.normal(kb, (HIDDEN,), jnp.float32))

    layers = []
    for kl in k_layers:
        ks = jax.random.split(kl, 13)

        def attn(k4):
            wq, bq = linear(k4[0], HIDDEN, HIDDEN)
            wk, bk = linear(k4[1], HIDDEN, HIDDEN)
            wv, bv = linear(k4[2], HIDDEN, HIDDEN)
            wo, bo = linear(k4[3], HIDDEN, HIDDEN)
            return dict(wq=wq, bq=bq, wk=wk, bk=bk, wv=wv, bv=bv, wo=wo, bo=bo)

        ln1_g, ln1_b = lnorm(ks[0])
        ln2_g, ln2_b = lnorm(ks[1])
        ffn_g, ffn_b = lnorm(ks[2])
        sa = attn(ks[3:7])
        ca = attn(ks[7:11])
        ff_w1, ff_b1 = linear(ks[11], HIDDEN, INTERMEDIATE)
        ff_w2, ff_b2 = linear(ks[12], INTERMEDIATE, HIDDEN)
        layers.append(dict(ln1_g=ln1_g, ln1_b=ln1_b, ln2_g=ln2_g, ln2_b=ln2_b,
                           ffn_g=ffn_g, ffn_b=ffn_b, sa=sa, ca=ca,
                           ff_w1=ff_w1, ff_b1=ff_b1, ff_w2=ff_w2, ff_b2=ff_b2))
    fin_g, fin_b = lnorm(k_fin)
    return dict(query_tokens=query_tokens, layers=layers,
                final_ln_g=fin_g, final_ln_b=fin_b)


def pack_params(raw):
    """Pack per-layer params into a few stacked, matmul-fused arrays.

    Host-side algebra: 1/sqrt(HEAD_DIM) is folded into Wq / bq (both for the
    fused self-attention QKV slab and the cross-attention Q projection)."""
    s = 1.0 / math.sqrt(HEAD_DIM)
    sa_w, sa_b, sa_wo, sa_bo = [], [], [], []
    ca_wq, ca_bq, ca_wkv_cols, ca_bkv_cols, ca_wo, ca_bo = [], [], [], [], [], []
    ln_g, ln_b = [], []
    ff_w1, ff_b1, ff_w2, ff_b2 = [], [], [], []
    for lp in raw['layers']:
        sa, ca = lp['sa'], lp['ca']
        # Fused self-attention QKV: columns [Wq*s | Wk | Wv]  -> (H, 3H)
        sa_w.append(jnp.concatenate([sa['wq'] * s, sa['wk'], sa['wv']], axis=1))
        sa_b.append(jnp.concatenate([sa['bq'] * s, sa['bk'], sa['bv']], axis=0))
        sa_wo.append(sa['wo'])
        sa_bo.append(sa['bo'])
        # Cross-attention: Q separate (scaled), K/V fused across layers.
        ca_wq.append(ca['wq'] * s)
        ca_bq.append(ca['bq'] * s)
        ca_wkv_cols.append(jnp.concatenate([ca['wk'], ca['wv']], axis=1))   # (H, 2H)
        ca_bkv_cols.append(jnp.concatenate([ca['bk'], ca['bv']], axis=0))   # (2H,)
        ca_wo.append(ca['wo'])
        ca_bo.append(ca['bo'])
        ln_g += [lp['ln1_g'], lp['ln2_g'], lp['ffn_g']]
        ln_b += [lp['ln1_b'], lp['ln2_b'], lp['ffn_b']]
        ff_w1.append(lp['ff_w1'])
        ff_b1.append(lp['ff_b1'])
        ff_w2.append(lp['ff_w2'])
        ff_b2.append(lp['ff_b2'])
    ln_g.append(raw['final_ln_g'])                 # final LayerNorm rides the same slab
    ln_b.append(raw['final_ln_b'])
    return dict(
        q0=raw['query_tokens'][0],                              # (Qn, H)
        sa_w=jnp.stack(sa_w), sa_b=jnp.stack(sa_b),             # (L, H, 3H), (L, 3H)
        sa_wo=jnp.stack(sa_wo), sa_bo=jnp.stack(sa_bo),         # (L, H, H), (L, H)
        ca_wq=jnp.stack(ca_wq), ca_bq=jnp.stack(ca_bq),         # (L, H, H), (L, H)
        ca_wkv=jnp.concatenate(ca_wkv_cols, axis=1),            # (H, L*2H)
        ca_bkv=jnp.concatenate(ca_bkv_cols, axis=0)[None, :],   # (1, L*2H)
        ca_wo=jnp.stack(ca_wo), ca_bo=jnp.stack(ca_bo),         # (L, H, H), (L, H)
        ln_g=jnp.stack(ln_g), ln_b=jnp.stack(ln_b),             # (L*3+1, H)
        ff_w1=jnp.stack(ff_w1), ff_b1=jnp.stack(ff_b1),         # (L, H, I), (L, I)
        ff_w2=jnp.stack(ff_w2), ff_b2=jnp.stack(ff_b2),         # (L, I, H), (L, H)
    )


# ---------------------------------------------------------------------------
# Pure-JAX reference (torch-style layout, no Pallas) for a correctness check
# ---------------------------------------------------------------------------
def _ref_mha(h_q, h_kv, att, add_mask):
    qp = h_q @ att['wq'] + att['bq']
    kp = h_kv @ att['wk'] + att['bk']
    vp = h_kv @ att['wv'] + att['bv']

    def split(t):  # (S, H) -> (NH, S, D)
        return t.reshape(t.shape[0], NUM_HEADS, HEAD_DIM).transpose(1, 0, 2)

    qh, kh, vh = split(qp), split(kp), split(vp)
    scores = jnp.einsum('hqd,hkd->hqk', qh, kh) / math.sqrt(HEAD_DIM)
    if add_mask is not None:
        scores = scores + add_mask
    probs = jax.nn.softmax(scores, axis=-1)
    ctx = jnp.einsum('hqk,hkd->hqd', probs, vh)
    ctx = ctx.transpose(1, 0, 2).reshape(h_q.shape[0], HIDDEN)
    return ctx @ att['wo'] + att['bo']


def _ref_layer(q, x, mask, lp, gelu_exact):
    res = q
    h = _layernorm_ref(q, lp['ln1_g'], lp['ln1_b'])
    q = res + _ref_mha(h, h, lp['sa'], None)
    res = q
    h = _layernorm_ref(q, lp['ln2_g'], lp['ln2_b'])
    q = res + _ref_mha(h, x, lp['ca'], mask)
    res = q
    h = _layernorm_ref(q, lp['ffn_g'], lp['ffn_b'])
    h = h @ lp['ff_w1'] + lp['ff_b1']
    h = _gelu(h, gelu_exact)
    h = h @ lp['ff_w2'] + lp['ff_b2']
    return res + h


def reference_forward(raw, hidden_states, attention_mask, gelu_exact):
    B = hidden_states.shape[0]
    outs = []
    for b in range(B):
        q = raw['query_tokens'][0]
        x = hidden_states[b]
        mask = attention_mask[b, 0]                  # (1, L)
        for lp in raw['layers']:
            q = _ref_layer(q, x, mask, lp, gelu_exact)
        outs.append(_layernorm_ref(q, raw['final_ln_g'], raw['final_ln_b']))
    return jnp.stack(outs, axis=0)


def _probe_erf():
    """Check whether lax.erf lowers inside a Pallas TPU kernel on this build."""
    def k(x_ref, o_ref):
        o_ref[...] = lax.erf(x_ref[...])
    try:
        f = pl.pallas_call(k, out_shape=jax.ShapeDtypeStruct((8, 128), jnp.float32))
        jax.block_until_ready(f(jnp.zeros((8, 128), jnp.float32)))
        return True
    except Exception:
        return False


if __name__ == "__main__":
    gelu_exact = _probe_erf()

    key = jax.random.PRNGKey(0)
    kx, kp = jax.random.split(key)
    hidden_states = jax.random.normal(kx, (BATCH, SEQ, HIDDEN), jnp.float32)
    # Additive attention mask [B, 1, 1, L]; mask out last 3 encoder positions of
    # batch element 1 to exercise the cross-attention mask path.
    attention_mask = jnp.zeros((BATCH, 1, 1, SEQ), jnp.float32)
    attention_mask = attention_mask.at[1, :, :, SEQ - 3:].set(-1e9)

    raw_params = init_raw_params(kp)
    packed = pack_params(raw_params)

    block_batch = _default_block_batch(BATCH)
    qformer_forward = build_qformer_forward(block_batch=block_batch,
                                            gelu_exact=gelu_exact)

    out = jax.block_until_ready(qformer_forward(packed, hidden_states, attention_mask))
    assert out.shape == (BATCH, NUM_QUERY, HIDDEN), out.shape

    ref = reference_forward(raw_params, hidden_states, attention_mask, gelu_exact)
    max_err = float(jnp.max(jnp.abs(out - ref)))
    # Tolerance accounts for the approximate (EUP) softmax reciprocal and the
    # one-pass LayerNorm variance; everything else is algebraically identical.
    assert jnp.allclose(out, ref, atol=2e-3, rtol=2e-3), f"max_err={max_err}"

    print("KERNEL_OK")
</pallas_src>

<mosaic_0001>
module attributes {stable_mosaic.version = 11 : i64} {
  func.func @k(%arg0: memref<8x128xf32, #tpu.memory_space<vmem>>, %arg1: memref<8x128xf32, #tpu.memory_space<vmem>>) attributes {dimension_semantics = [], scalar_prefetch = 0 : i64, scratch_operands = 0 : i64, tpu.core_type = #tpu.core_type<tc>} {
    %c0 = arith.constant 0 : index
    %c0_0 = arith.constant 0 : index
    %0 = vector.load %arg0[%c0, %c0_0] : memref<8x128xf32, #tpu.memory_space<vmem>>, vector<8x128xf32>
    %1 = math.erf %0 : vector<8x128xf32>
    %c0_1 = arith.constant 0 : index
    %c0_2 = arith.constant 0 : index
    %2 = vector.load %arg1[%c0_1, %c0_2] : memref<8x128xf32, #tpu.memory_space<vmem>>, vector<8x128xf32>
    tpu.vector_store %arg1[%c0_1, %c0_2], %1 {strides = array<i32>} : memref<8x128xf32, #tpu.memory_space<vmem>>, vector<8x128xf32>,
    return
  }
}

module attributes {stable_mosaic.version = 11 : i64} {
  func.func @kernel(%arg0: i32, %arg1: memref<2x16x32xf32, #tpu.memory_space<vmem>>, %arg2: memref<2x1x1x16xf32, #tpu.memory_space<vmem>>, %arg3: memref<8x32xf32, #tpu.memory_space<vmem>>, %arg4: memref<2x32x96xf32, #tpu.memory_space<vmem>>, %arg5: memref<2x96xf32, #tpu.memory_space<vmem>>, %arg6: memref<2x32x32xf32, #tpu.memory_space<vmem>>, %arg7: memref<2x32xf32, #tpu.memory_space<vmem>>, %arg8: memref<2x32x32xf32, #tpu.memory_space<vmem>>, %arg9: memref<2x32xf32, #tpu.memory_space<vmem>>, %arg10: memref<32x128xf32, #tpu.memory_space<vmem>>, %arg11: memref<1x128xf32, #tpu.memory_space<vmem>>, %arg12: memref<2x32x32xf32, #tpu.memory_space<vmem>>, %arg13: memref<2x32xf32, #tpu.memory_space<vmem>>, %arg14: memref<7x32xf32, #tpu.memory_space<vmem>>, %arg15: memref<7x32xf32, #tpu.memory_space<vmem>>, %arg16: memref<2x32x64xf32, #tpu.memory_space<vmem>>, %arg17: memref<2x64xf32, #tpu.memory_space<vmem>>, %arg18: memref<2x64x32xf32, #tpu.memory_space<vmem>>, %arg19: memref<2x32xf32, #tpu.memory_space<vmem>>, %arg20: memref<2x8x32xf32, #tpu.memory_space<vmem>>) attributes {dimension_semantics = [#tpu.dimension_semantics<parallel>], iteration_bounds = array<i64: 1>, scalar_prefetch = 0 : i64, scratch_operands = 0 : i64, tpu.core_type = #tpu.core_type<tc>, window_params = [{transform_indices = @transform_0, window_bounds = array<i64: 2, 16, 32>}, {transform_indices = @transform_1, window_bounds = array<i64: 2, 1, 1, 16>}, {pipeline_mode = #tpu.pipeline_mode<synchronous>, transform_indices = @transform_2, window_bounds = array<i64: 8, 32>}, {pipeline_mode = #tpu.pipeline_mode<synchronous>, transform_indices = @transform_3, window_bounds = array<i64: 2, 32, 96>}, {pipeline_mode = #tpu.pipeline_mode<synchronous>, transform_indices = @transform_4, window_bounds = array<i64: 2, 96>}, {pipeline_mode = #tpu.pipeline_mode<synchronous>, transform_indices = @transform_5, window_bounds = array<i64: 2, 32, 32>}, {pipeline_mode = #tpu.pipeline_mode<synchronous>, transform_indices = @transform_6, window_bounds = array<i64: 2, 32>}, {pipeline_mode = #tpu.pipeline_mode<synchronous>, transform_indices = @transform_7, window_bounds = array<i64: 2, 32, 32>}, {pipeline_mode = #tpu.pipeline_mode<synchronous>, transform_indices = @transform_8, window_bounds = array<i64: 2, 32>}, {pipeline_mode = #tpu.pipeline_mode<synchronous>, transform_indices = @transform_9, window_bounds = array<i64: 32, 128>}, {pipeline_mode = #tpu.pipeline_mode<synchronous>, transform_indices = @transform_10, window_bounds = array<i64: 1, 128>}, {pipeline_mode = #tpu.pipeline_mode<synchronous>, transform_indices = @transform_11, window_bounds = array<i64: 2, 32, 32>}, {pipeline_mode = #tpu.pipeline_mode<synchronous>, transform_indices = @transform_12, window_bounds = array<i64: 2, 32>}, {pipeline_mode = #tpu.pipeline_mode<synchronous>, transform_indices = @transform_13, window_bounds = array<i64: 7, 32>}, {pipeline_mode = #tpu.pipeline_mode<synchronous>, transform_indices = @transform_14, window_bounds = array<i64: 7, 32>}, {pipeline_mode = #tpu.pipeline_mode<synchronous>, transform_indices = @transform_15, window_bounds = array<i64: 2, 32, 64>}, {pipeline_mode = #tpu.pipeline_mode<synchronous>, transform_indices = @transform_16, window_bounds = array<i64: 2, 64>}, {pipeline_mode = #tpu.pipeline_mode<synchronous>, transform_indices = @transform_17, window_bounds = array<i64: 2, 64, 32>}, {pipeline_mode = #tpu.pipeline_mode<synchronous>, transform_indices = @transform_18, window_bounds = array<i64: 2, 32>}, {transform_indices = @transform_19, window_bounds = array<i64: 2, 8, 32>}]} {
    %c0 = arith.constant 0 : index
    %c0_0 = arith.constant 0 : index
    %c0_1 = arith.constant 0 : index
    %0 = vector.load %arg1[%c0, %c0_0, %c0_1] : memref<2x16x32xf32, #tpu.memory_space<vmem>>, vector<1x16x32xf32>
    %1 = vector.shape_cast %0 : vector<1x16x32xf32> to vector<16x32xf32>
    %c0_2 = arith.constant 0 : index
    %c0_3 = arith.constant 0 : index
    %c0_4 = arith.constant 0 : index
    %c0_5 = arith.constant 0 : index
    %2 = vector.load %arg2[%c0_2, %c0_3, %c0_4, %c0_5] : memref<2x1x1x16xf32, #tpu.memory_space<vmem>>, vector<1x1x1x16xf32>
    %3 = vector.shape_cast %2 : vector<1x1x1x16xf32> to vector<1x16xf32>
    %c0_6 = arith.constant 0 : index
    %c0_7 = arith.constant 0 : index
    %4 = vector.load %arg10[%c0_6, %c0_7] : memref<32x128xf32, #tpu.memory_space<vmem>>, vector<32x128xf32>
    %cst = arith.constant dense<0.000000e+00> : vector<16x128xf32>
    %5 = tpu.matmul %1, %4, %cst {dimension_numbers = #tpu.dot_dimension_numbers<[1], [0], [0], [1], [0, 0, 1, 1], [], []>} : vector<16x32xf32>, vector<32x128xf32>, vector<16x128xf32> -> vector<16x128xf32>
    %c0_8 = arith.constant 0 : index
    %c0_9 = arith.constant 0 : index
    %6 = vector.load %arg11[%c0_8, %c0_9] : memref<1x128xf32, #tpu.memory_space<vmem>>, vector<1x128xf32>
    %7 = vector.shape_cast %6 : vector<1x128xf32> to vector<128xf32>
    %8 = vector.shape_cast %7 : vector<128xf32> to vector<1x128xf32>
    %9 = vector.broadcast %8 : vector<1x128xf32> to vector<16x128xf32>
    %10 = arith.addf %5, %9 : vector<16x128xf32>
    %c0_10 = arith.constant 0 : index
    %c0_11 = arith.constant 0 : index
    %11 = vector.load %arg3[%c0_10, %c0_11] : memref<8x32xf32, #tpu.memory_space<vmem>>, vector<8x32xf32>
    %c0_12 = arith.constant 0 : index
    %c0_13 = arith.constant 0 : index
    %12 = vector.load %arg14[%c0_12, %c0_13] : memref<7x32xf32, #tpu.memory_space<vmem>>, vector<1x32xf32>
    %13 = vector.shape_cast %12 : vector<1x32xf32> to vector<32xf32>
    %c0_14 = arith.constant 0 : index
    %c0_15 = arith.constant 0 : index
    %14 = vector.load %arg15[%c0_14, %c0_15] : memref<7x32xf32, #tpu.memory_space<vmem>>, vector<1x32xf32>
    %15 = vector.shape_cast %14 : vector<1x32xf32> to vector<32xf32>
    %cst_16 = arith.constant dense<0.000000e+00> : vector<8xf32>
    %16 = vector.multi_reduction <add>, %11, %cst_16 [1] : vector<8x32xf32> to vector<8xf32>
    %17 = vector.shape_cast %16 : vector<8xf32> to vector<8x1xf32>
    %cst_17 = arith.constant 3.200000e+01 : f32
    %18 = vector.broadcast %cst_17 : f32 to vector<8x1xf32>
    %19 = arith.divf %17, %18 : vector<8x1xf32>
    %20 = arith.mulf %11, %11 : vector<8x32xf32>
    %cst_18 = arith.constant dense<0.000000e+00> : vector<8xf32>
    %21 = vector.multi_reduction <add>, %20, %cst_18 [1] : vector<8x32xf32> to vector<8xf32>
    %22 = vector.shape_cast %21 : vector<8xf32> to vector<8x1xf32>
    %cst_19 = arith.constant 3.200000e+01 : f32
    %23 = vector.broadcast %cst_19 : f32 to vector<8x1xf32>
    %24 = arith.divf %22, %23 : vector<8x1xf32>
    %25 = arith.mulf %19, %19 : vector<8x1xf32>
    %26 = arith.subf %24, %25 : vector<8x1xf32>
    %27 = vector.broadcast %19 : vector<8x1xf32> to vector<8x32xf32>
    %28 = arith.subf %11, %27 : vector<8x32xf32>
    %cst_20 = arith.constant 9.99999996E-13 : f32
    %29 = vector.broadcast %cst_20 : f32 to vector<8x1xf32>
    %30 = arith.addf %26, %29 : vector<8x1xf32>
    %31 = math.rsqrt %30 : vector<8x1xf32>
    %32 = vector.broadcast %31 : vector<8x1xf32> to vector<8x32xf32>
    %33 = arith.mulf %28, %32 : vector<8x32xf32>
    %34 = vector.shape_cast %13 : vector<32xf32> to vector<1x32xf32>
    %35 = vector.broadcast %34 : vector<1x32xf32> to vector<8x32xf32>
    %36 = arith.mulf %33, %35 : vector<8x32xf32>
    %37 = vector.shape_cast %15 : vector<32xf32> to vector<1x32xf32>
    %38 = vector.broadcast %37 : vector<1x32xf32> to vector<8x32xf32>
    %39 = arith.addf %36, %38 : vector<8x32xf32>
    %c0_21 = arith.constant 0 : index
    %c0_22 = arith.constant 0 : index
    %c0_23 = arith.constant 0 : index
    %40 = vector.load %arg4[%c0_21, %c0_22, %c0_23] : memref<2x32x96xf32, #tpu.memory_space<vmem>>, vector<1x32x96xf32>
    %41 = vector.shape_cast %40 : vector<1x32x96xf32> to vector<32x96xf32>
    %cst_24 = arith.constant dense<0.000000e+00> : vector<8x96xf32>
    %42 = tpu.matmul %39, %41, %cst_24 {dimension_numbers = #tpu.dot_dimension_numbers<[1], [0], [0], [1], [0, 0, 1, 1], [], []>} : vector<8x32xf32>, vector<32x96xf32>, vector<8x96xf32> -> vector<8x96xf32>
    %c0_25 = arith.constant 0 : index
    %c0_26 = arith.constant 0 : index
    %43 = vector.load %arg5[%c0_25, %c0_26] : memref<2x96xf32, #tpu.memory_space<vmem>>, vector<1x96xf32>
    %44 = vector.shape_cast %43 : vector<1x96xf32> to vector<96xf32>
    %45 = vector.shape_cast %44 : vector<96xf32> to vector<1x96xf32>
    %46 = vector.broadcast %45 : vector<1x96xf32> to vector<8x96xf32>
    %47 = arith.addf %42, %46 : vector<8x96xf32>
    %48 = vector.extract_strided_slice %47 {offsets = [0, 0], sizes = [8, 8], strides = [1, 1]} : vector<8x96xf32> to vector<8x8xf32>
    %49 = vector.extract_strided_slice %47 {offsets = [0, 8], sizes = [8, 8], strides = [1, 1]} : vector<8x96xf32> to vector<8x8xf32>
    %50 = vector.extract_strided_slice %47 {offsets = [0, 16], sizes = [8, 8], strides = [1, 1]} : vector<8x96xf32> to vector<8x8xf32>
    %51 = vector.extract_strided_slice %47 {offsets = [0, 24], sizes = [8, 8], strides = [1, 1]} : vector<8x96xf32> to vector<8x8xf32>
    %52 = vector.shape_cast %48 : vector<8x8xf32> to vector<1x8x8xf32>
    %53 = vector.shape_cast %49 : vector<8x8xf32> to vector<1x8x8xf32>
    %54 = vector.shape_cast %50 : vector<8x8xf32> to vector<1x8x8xf32>
    %55 = vector.shape_cast %51 : vector<8x8xf32> to vector<1x8x8xf32>
    %56 = tpu.concatenate %52, %53, %54, %55 in 0 : vector<1x8x8xf32>, vector<1x8x8xf32>, vector<1x8x8xf32>, vector<1x8x8xf32> -> vector<4x8x8xf32>
    %57 = vector.extract_strided_slice %47 {offsets = [0, 32], sizes = [8, 8], strides = [1, 1]} : vector<8x96xf32> to vector<8x8xf32>
    %58 = vector.extract_strided_slice %47 {offsets = [0, 40], sizes = [8, 8], strides = [1, 1]} : vector<8x96xf32> to vector<8x8xf32>
    %59 = vector.extract_strided_slice %47 {offsets = [0, 48], sizes = [8, 8], strides = [1, 1]} : vector<8x96xf32> to vector<8x8xf32>
    %60 = vector.extract_strided_slice %47 {offsets = [0, 56], sizes = [8, 8], strides = [1, 1]} : vector<8x96xf32> to vector<8x8xf32>
    %61 = vector.shape_cast %57 : vector<8x8xf32> to vector<1x8x8xf32>
    %62 = vector.shape_cast %58 : vector<8x8xf32> to vector<1x8x8xf32>
    %63 = vector.shape_cast %59 : vector<8x8xf32> to vector<1x8x8xf32>
    %64 = vector.shape_cast %60 : vector<8x8xf32> to vector<1x8x8xf32>
    %65 = tpu.concatenate %61, %62, %63, %64 in 0 : vector<1x8x8xf32>, vector<1x8x8xf32>, vector<1x8x8xf32>, vector<1x8x8xf32> -> vector<4x8x8xf32>
    %66 = vector.extract_strided_slice %47 {offsets = [0, 64], sizes = [8, 8], strides = [1, 1]} : vector<8x96xf32> to vector<8x8xf32>
    %67 = vector.extract_strided_slice %47 {offsets = [0, 72], sizes = [8, 8], strides = [1, 1]} : vector<8x96xf32> to vector<8x8xf32>
    %68 = vector.extract_strided_slice %47 {offsets = [0, 80], sizes = [8, 8], strides = [1, 1]} : vector<8x96xf32> to vector<8x8xf32>
    %69 = vector.extract_strided_slice %47 {offsets = [0, 88], sizes = [8, 8], strides = [1, 1]} : vector<8x96xf32> to vector<8x8xf32>
    %70 = vector.shape_cast %66 : vector<8x8xf32> to vector<1x8x8xf32>
    %71 = vector.shape_cast %67 : vector<8x8xf32> to vector<1x8x8xf32>
    %72 = vector.shape_cast %68 : vector<8x8xf32> to vector<1x8x8xf32>
    %73 = vector.shape_cast %69 : vector<8x8xf32> to vector<1x8x8xf32>
    %74 = tpu.concatenate %70, %71, %72, %73 in 0 : vector<1x8x8xf32>, vector<1x8x8xf32>, vector<1x8x8xf32>, vector<1x8x8xf32> -> vector<4x8x8xf32>
    %c0_27 = arith.constant 0 : index
    %c0_28 = arith.constant 0 : index
    %c0_29 = arith.constant 0 : index
    %75 = vector.load %arg6[%c0_27, %c0_28, %c0_29] : memref<2x32x32xf32, #tpu.memory_space<vmem>>, vector<1x32x32xf32>
    %76 = vector.shape_cast %75 : vector<1x32x32xf32> to vector<32x32xf32>
    %c0_30 = arith.constant 0 : index
    %c0_31 = arith.constant 0 : index
    %77 = vector.load %arg7[%c0_30, %c0_31] : memref<2x32xf32, #tpu.memory_space<vmem>>, vector<1x32xf32>
    %78 = vector.shape_cast %77 : vector<1x32xf32> to vector<32xf32>
    "tpu.trace_start"() <{level = 10 : i32, message = "hqd,hkd->hqk"}> : () -> ()
    %cst_32 = arith.constant dense<0.000000e+00> : vector<4x8x8xf32>
    %79 = tpu.matmul %56, %65, %cst_32 {dimension_numbers = #tpu.dot_dimension_numbers<[2], [2], [1], [1], [0, 0, 0, 1, 1, 1], [0], [0]>} : vector<4x8x8xf32>, vector<4x8x8xf32>, vector<4x8x8xf32> -> vector<4x8x8xf32>
    "tpu.trace_stop"() : () -> ()
    %cst_33 = arith.constant dense<0xFF800000> : vector<4x8xf32>
    %80 = vector.multi_reduction <maximumf>, %79, %cst_33 [2] : vector<4x8x8xf32> to vector<4x8xf32>
    %81 = vector.shape_cast %80 : vector<4x8xf32> to vector<4x8x1xf32>
    %82 = vector.broadcast %81 : vector<4x8x1xf32> to vector<4x8x8xf32>
    %83 = arith.subf %79, %82 : vector<4x8x8xf32>
    %84 = math.exp %83 : vector<4x8x8xf32>
    %cst_34 = arith.constant dense<0.000000e+00> : vector<4x8xf32>
    %85 = vector.multi_reduction <add>, %84, %cst_34 [2] : vector<4x8x8xf32> to vector<4x8xf32>
    %86 = vector.shape_cast %85 : vector<4x8xf32> to vector<4x8x1xf32>
    %87 = tpu.reciprocal %86 {approx = true} : vector<4x8x1xf32> -> vector<4x8x1xf32>
    %88 = vector.broadcast %87 : vector<4x8x1xf32> to vector<4x8x8xf32>
    %89 = arith.mulf %84, %88 : vector<4x8x8xf32>
    "tpu.trace_start"() <{level = 10 : i32, message = "hqk,hkd->hqd"}> : () -> ()
    %cst_35 = arith.constant dense<0.000000e+00> : vector<4x8x8xf32>
    %90 = tpu.matmul %89, %74, %cst_35 {dimension_numbers = #tpu.dot_dimension_numbers<[2], [1], [1], [2], [0, 0, 0, 1, 1, 2], [0], [0]>} : vector<4x8x8xf32>, vector<4x8x8xf32>, vector<4x8x8xf32> -> vector<4x8x8xf32>
    "tpu.trace_stop"() : () -> ()
    %91 = vector.extract_strided_slice %90 {offsets = [0, 0, 0], sizes = [1, 8, 8], strides = [1, 1, 1]} : vector<4x8x8xf32> to vector<1x8x8xf32>
    %92 = vector.shape_cast %91 : vector<1x8x8xf32> to vector<8x8xf32>
    %93 = vector.extract_strided_slice %90 {offsets = [1, 0, 0], sizes = [1, 8, 8], strides = [1, 1, 1]} : vector<4x8x8xf32> to vector<1x8x8xf32>
    %94 = vector.shape_cast %93 : vector<1x8x8xf32> to vector<8x8xf32>
    %95 = vector.extract_strided_slice %90 {offsets = [2, 0, 0], sizes = [1, 8, 8], strides = [1, 1, 1]} : vector<4x8x8xf32> to vector<1x8x8xf32>
    %96 = vector.shape_cast %95 : vector<1x8x8xf32> to vector<8x8xf32>
    %97 = vector.extract_strided_slice %90 {offsets = [3, 0, 0], sizes = [1, 8, 8], strides = [1, 1, 1]} : vector<4x8x8xf32> to vector<1x8x8xf32>
    %98 = vector.shape_cast %97 : vector<1x8x8xf32> to vector<8x8xf32>
    %99 = tpu.concatenate %92, %94, %96, %98 in 1 : vector<8x8xf32>, vector<8x8xf32>, vector<8x8xf32>, vector<8x8xf32> -> vector<8x32xf32>
    %cst_36 = arith.constant dense<0.000000e+00> : vector<8x32xf32>
    %100 = tpu.matmul %99, %76, %cst_36 {dimension_numbers = #tpu.dot_dimension_numbers<[1], [0], [0], [1], [0, 0, 1, 1], [], []>} : vector<8x32xf32>, vector<32x32xf32>, vector<8x32xf32> -> vector<8x32xf32>
    %101 = vector.shape_cast %78 : vector<32xf32> to vector<1x32xf32>
    %102 = vector.broadcast %101 : vector<1x32xf32> to vector<8x32xf32>
    %103 = arith.addf %100, %102 : vector<8x32xf32>
    %104 = arith.addf %11, %103 : vector<8x32xf32>
    %c1 = arith.constant 1 : index
    %c0_37 = arith.constant 0 : index
    %105 = vector.load %arg14[%c1, %c0_37] : memref<7x32xf32, #tpu.memory_space<vmem>>, vector<1x32xf32>
    %106 = vector.shape_cast %105 : vector<1x32xf32> to vector<32xf32>
    %c1_38 = arith.constant 1 : index
    %c0_39 = arith.constant 0 : index
    %107 = vector.load %arg15[%c1_38, %c0_39] : memref<7x32xf32, #tpu.memory_space<vmem>>, vector<1x32xf32>
    %108 = vector.shape_cast %107 : vector<1x32xf32> to vector<32xf32>
    %cst_40 = arith.constant dense<0.000000e+00> : vector<8xf32>
    %109 = vector.multi_reduction <add>, %104, %cst_40 [1] : vector<8x32xf32> to vector<8xf32>
    %110 = vector.shape_cast %109 : vector<8xf32> to vector<8x1xf32>
    %cst_41 = arith.constant 3.200000e+01 : f32
    %111 = vector.broadcast %cst_41 : f32 to vector<8x1xf32>
    %112 = arith.divf %110, %111 : vector<8x1xf32>
    %113 = arith.mulf %104, %104 : vector<8x32xf32>
    %cst_42 = arith.constant dense<0.000000e+00> : vector<8xf32>
    %114 = vector.multi_reduction <add>, %113, %cst_42 [1] : vector<8x32xf32> to vector<8xf32>
    %115 = vector.shape_cast %114 : vector<8xf32> to vector<8x1xf32>
    %cst_43 = arith.constant 3.200000e+01 : f32
    %116 = vector.broadcast %cst_43 : f32 to vector<8x1xf32>
    %117 = arith.divf %115, %116 : vector<8x1xf32>
    %118 = arith.mulf %112, %112 : vector<8x1xf32>
    %119 = arith.subf %117, %118 : vector<8x1xf32>
    %120 = vector.broadcast %112 : vector<8x1xf32> to vector<8x32xf32>
    %121 = arith.subf %104, %120 : vector<8x32xf32>
    %cst_44 = arith.constant 9.99999996E-13 : f32
    %122 = vector.broadcast %cst_44 : f32 to vector<8x1xf32>
    %123 = arith.addf %119, %122 : vector<8x1xf32>
    %124 = math.rsqrt %123 : vector<8x1xf32>
    %125 = vector.broadcast %124 : vector<8x1xf32> to vector<8x32xf32>
    %126 = arith.mulf %121, %125 : vector<8x32xf32>
    %127 = vector.shape_cast %106 : vector<32xf32> to vector<1x32xf32>
    %128 = vector.broadcast %127 : vector<1x32xf32> to vector<8x32xf32>
    %129 = arith.mulf %126, %128 : vector<8x32xf32>
    %130 = vector.shape_cast %108 : vector<32xf32> to vector<1x32xf32>
    %131 = vector.broadcast %130 : vector<1x32xf32> to vector<8x32xf32>
    %132 = arith.addf %129, %131 : vector<8x32xf32>
    %c0_45 = arith.constant 0 : index
    %c0_46 = arith.constant 0 : index
    %c0_47 = arith.constant 0 : index
    %133 = vector.load %arg8[%c0_45, %c0_46, %c0_47] : memref<2x32x32xf32, #tpu.memory_space<vmem>>, vector<1x32x32xf32>
    %134 = vector.shape_cast %133 : vector<1x32x32xf32> to vector<32x32xf32>
    %cst_48 = arith.constant dense<0.000000e+00> : vector<8x32xf32>
    %135 = tpu.matmul %132, %134, %cst_48 {dimension_numbers = #tpu.dot_dimension_numbers<[1], [0], [0], [1], [0, 0, 1, 1], [], []>} : vector<8x32xf32>, vector<32x32xf32>, vector<8x32xf32> -> vector<8x32xf32>
    %c0_49 = arith.constant 0 : index
    %c0_50 = arith.constant 0 : index
    %136 = vector.load %arg9[%c0_49, %c0_50] : memref<2x32xf32, #tpu.memory_space<vmem>>, vector<1x32xf32>
    %137 = vector.shape_cast %136 : vector<1x32xf32> to vector<32xf32>
    %138 = vector.shape_cast %137 : vector<32xf32> to vector<1x32xf32>
    %139 = vector.broadcast %138 : vector<1x32xf32> to vector<8x32xf32>
    %140 = arith.addf %135, %139 : vector<8x32xf32>
    %141 = vector.extract_strided_slice %140 {offsets = [0, 0], sizes = [8, 8], strides = [1, 1]} : vector<8x32xf32> to vector<8x8xf32>
    %142 = vector.extract_strided_slice %140 {offsets = [0, 8], sizes = [8, 8], strides = [1, 1]} : vector<8x32xf32> to vector<8x8xf32>
    %143 = vector.extract_strided_slice %140 {offsets = [0, 16], sizes = [8, 8], strides = [1, 1]} : vector<8x32xf32> to vector<8x8xf32>
    %144 = vector.extract_strided_slice %140 {offsets = [0, 24], sizes = [8, 8], strides = [1, 1]} : vector<8x32xf32> to vector<8x8xf32>
    %145 = vector.shape_cast %141 : vector<8x8xf32> to vector<1x8x8xf32>
    %146 = vector.shape_cast %142 : vector<8x8xf32> to vector<1x8x8xf32>
    %147 = vector.shape_cast %143 : vector<8x8xf32> to vector<1x8x8xf32>
    %148 = vector.shape_cast %144 : vector<8x8xf32> to vector<1x8x8xf32>
    %149 = tpu.concatenate %145, %146, %147, %148 in 0 : vector<1x8x8xf32>, vector<1x8x8xf32>, vector<1x8x8xf32>, vector<1x8x8xf32> -> vector<4x8x8xf32>
    %150 = vector.extract_strided_slice %10 {offsets = [0, 0], sizes = [16, 8], strides = [1, 1]} : vector<16x128xf32> to vector<16x8xf32>
    %151 = vector.extract_strided_slice %10 {offsets = [0, 8], sizes = [16, 8], strides = [1, 1]} : vector<16x128xf32> to vector<16x8xf32>
    %152 = vector.extract_strided_slice %10 {offsets = [0, 16], sizes = [16, 8], strides = [1, 1]} : vector<16x128xf32> to vector<16x8xf32>
    %153 = vector.extract_strided_slice %10 {offsets = [0, 24], sizes = [16, 8], strides = [1, 1]} : vector<16x128xf32> to vector<16x8xf32>
    %154 = vector.shape_cast %150 : vector<16x8xf32> to vector<1x16x8xf32>
    %155 = vector.shape_cast %151 : vector<16x8xf32> to vector<1x16x8xf32>
    %156 = vector.shape_cast %152 : vector<16x8xf32> to vector<1x16x8xf32>
    %157 = vector.shape_cast %153 : vector<16x8xf32> to vector<1x16x8xf32>
    %158 = tpu.concatenate %154, %155, %156, %157 in 0 : vector<1x16x8xf32>, vector<1x16x8xf32>, vector<1x16x8xf32>, vector<1x16x8xf32> -> vector<4x16x8xf32>
    %159 = vector.extract_strided_slice %10 {offsets = [0, 32], sizes = [16, 8], strides = [1, 1]} : vector<16x128xf32> to vector<16x8xf32>
    %160 = vector.extract_strided_slice %10 {offsets = [0, 40], sizes = [16, 8], strides = [1, 1]} : vector<16x128xf32> to vector<16x8xf32>
    %161 = vector.extract_strided_slice %10 {offsets = [0, 48], sizes = [16, 8], strides = [1, 1]} : vector<16x128xf32> to vector<16x8xf32>
    %162 = vector.extract_strided_slice %10 {offsets = [0, 56], sizes = [16, 8], strides = [1, 1]} : vector<16x128xf32> to vector<16x8xf32>
    %163 = vector.shape_cast %159 : vector<16x8xf32> to vector<1x16x8xf32>
    %164 = vector.shape_cast %160 : vector<16x8xf32> to vector<1x16x8xf32>
    %165 = vector.shape_cast %161 : vector<16x8xf32> to vector<1x16x8xf32>
    %166 = vector.shape_cast %162 : vector<16x8xf32> to vector<1x16x8xf32>
    %167 = tpu.concatenate %163, %164, %165, %166 in 0 : vector<1x16x8xf32>, vector<1x16x8xf32>, vector<1x16x8xf32>, vector<1x16x8xf32> -> vector<4x16x8xf32>
    %c0_51 = arith.constant 0 : index
    %c0_52 = arith.constant 0 : index
    %c0_53 = arith.constant 0 : index
    %168 = vector.load %arg12[%c0_51, %c0_52, %c0_53] : memref<2x32x32xf32, #tpu.memory_space<vmem>>, vector<1x32x32xf32>
    %169 = vector.shape_cast %168 : vector<1x32x32xf32> to vector<32x32xf32>
    %c0_54 = arith.constant 0 : index
    %c0_55 = arith.constant 0 : index
    %170 = vector.load %arg13[%c0_54, %c0_55] : memref<2x32xf32, #tpu.memory_space<vmem>>, vector<1x32xf32>
    %171 = vector.shape_cast %170 : vector<1x32xf32> to vector<32xf32>
    "tpu.trace_start"() <{level = 10 : i32, message = "hqd,hkd->hqk"}> : () -> ()
    %cst_56 = arith.constant dense<0.000000e+00> : vector<4x8x16xf32>
    %172 = tpu.matmul %149, %158, %cst_56 {dimension_numbers = #tpu.dot_dimension_numbers<[2], [2], [1], [1], [0, 0, 0, 1, 1, 1], [0], [0]>} : vector<4x8x8xf32>, vector<4x16x8xf32>, vector<4x8x16xf32> -> vector<4x8x16xf32>
    "tpu.trace_stop"() : () -> ()
    %173 = vector.shape_cast %3 : vector<1x16xf32> to vector<1x1x16xf32>
    %174 = vector.broadcast %173 : vector<1x1x16xf32> to vector<4x8x16xf32>
    %175 = arith.addf %172, %174 : vector<4x8x16xf32>
    %cst_57 = arith.constant dense<0xFF800000> : vector<4x8xf32>
    %176 = vector.multi_reduction <maximumf>, %175, %cst_57 [2] : vector<4x8x16xf32> to vector<4x8xf32>
    %177 = vector.shape_cast %176 : vector<4x8xf32> to vector<4x8x1xf32>
    %178 = vector.broadcast %177 : vector<4x8x1xf32> to vector<4x8x16xf32>
    %179 = arith.subf %175, %178 : vector<4x8x16xf32>
    %180 = math.exp %179 : vector<4x8x16xf32>
    %cst_58 = arith.constant dense<0.000000e+00> : vector<4x8xf32>
    %181 = vector.multi_reduction <add>, %180, %cst_58 [2] : vector<4x8x16xf32> to vector<4x8xf32>
    %182 = vector.shape_cast %181 : vector<4x8xf32> to vector<4x8x1xf32>
    %183 = tpu.reciprocal %182 {approx = true} : vector<4x8x1xf32> -> vector<4x8x1xf32>
    %184 = vector.broadcast %183 : vector<4x8x1xf32> to vector<4x8x16xf32>
    %185 = arith.mulf %180, %184 : vector<4x8x16xf32>
    "tpu.trace_start"() <{level = 10 : i32, message = "hqk,hkd->hqd"}> : () -> ()
    %cst_59 = arith.constant dense<0.000000e+00> : vector<4x8x8xf32>
    %186 = tpu.matmul %185, %167, %cst_59 {dimension_numbers = #tpu.dot_dimension_numbers<[2], [1], [1], [2], [0, 0, 0, 1, 1, 2], [0], [0]>} : vector<4x8x16xf32>, vector<4x16x8xf32>, vector<4x8x8xf32> -> vector<4x8x8xf32>
    "tpu.trace_stop"() : () -> ()
    %187 = vector.extract_strided_slice %186 {offsets = [0, 0, 0], sizes = [1, 8, 8], strides = [1, 1, 1]} : vector<4x8x8xf32> to vector<1x8x8xf32>
    %188 = vector.shape_cast %187 : vector<1x8x8xf32> to vector<8x8xf32>
    %189 = vector.extract_strided_slice %186 {offsets = [1, 0, 0], sizes = [1, 8, 8], strides = [1, 1, 1]} : vector<4x8x8xf32> to vector<1x8x8xf32>
    %190 = vector.shape_cast %189 : vector<1x8x8xf32> to vector<8x8xf32>
    %191 = vector.extract_strided_slice %186 {offsets = [2, 0, 0], sizes = [1, 8, 8], strides = [1, 1, 1]} : vector<4x8x8xf32> to vector<1x8x8xf32>
    %192 = vector.shape_cast %191 : vector<1x8x8xf32> to vector<8x8xf32>
    %193 = vector.extract_strided_slice %186 {offsets = [3, 0, 0], sizes = [1, 8, 8], strides = [1, 1, 1]} : vector<4x8x8xf32> to vector<1x8x8xf32>
    %194 = vector.shape_cast %193 : vector<1x8x8xf32> to vector<8x8xf32>
    %195 = tpu.concatenate %188, %190, %192, %194 in 1 : vector<8x8xf32>, vector<8x8xf32>, vector<8x8xf32>, vector<8x8xf32> -> vector<8x32xf32>
    %cst_60 = arith.constant dense<0.000000e+00> : vector<8x32xf32>
    %196 = tpu.matmul %195, %169, %cst_60 {dimension_numbers = #tpu.dot_dimension_numbers<[1], [0], [0], [1], [0, 0, 1, 1], [], []>} : vector<8x32xf32>, vector<32x32xf32>, vector<8x32xf32> -> vector<8x32xf32>
    %197 = vector.shape_cast %171 : vector<32xf32> to vector<1x32xf32>
    %198 = vector.broadcast %197 : vector<1x32xf32> to vector<8x32xf32>
    %199 = arith.addf %196, %198 : vector<8x32xf32>
    %200 = arith.addf %104, %199 : vector<8x32xf32>
    %c2 = arith.constant 2 : index
    %c0_61 = arith.constant 0 : index
    %201 = vector.load %arg14[%c2, %c0_61] : memref<7x32xf32, #tpu.memory_space<vmem>>, vector<1x32xf32>
    %202 = vector.shape_cast %201 : vector<1x32xf32> to vector<32xf32>
    %c2_62 = arith.constant 2 : index
    %c0_63 = arith.constant 0 : index
    %203 = vector.load %arg15[%c2_62, %c0_63] : memref<7x32xf32, #tpu.memory_space<vmem>>, vector<1x32xf32>
    %204 = vector.shape_cast %203 : vector<1x32xf32> to vector<32xf32>
    %cst_64 = arith.constant dense<0.000000e+00> : vector<8xf32>
    %205 = vector.multi_reduction <add>, %200, %cst_64 [1] : vector<8x32xf32> to vector<8xf32>
    %206 = vector.shape_cast %205 : vector<8xf32> to vector<8x1xf32>
    %cst_65 = arith.constant 3.200000e+01 : f32
    %207 = vector.broadcast %cst_65 : f32 to vector<8x1xf32>
    %208 = arith.divf %206, %207 : vector<8x1xf32>
    %209 = arith.mulf %200, %200 : vector<8x32xf32>
    %cst_66 = arith.constant dense<0.000000e+00> : vector<8xf32>
    %210 = vector.multi_reduction <add>, %209, %cst_66 [1] : vector<8x32xf32> to vector<8xf32>
    %211 = vector.shape_cast %210 : vector<8xf32> to vector<8x1xf32>
    %cst_67 = arith.constant 3.200000e+01 : f32
    %212 = vector.broadcast %cst_67 : f32 to vector<8x1xf32>
    %213 = arith.divf %211, %212 : vector<8x1xf32>
    %214 = arith.mulf %208, %208 : vector<8x1xf32>
    %215 = arith.subf %213, %214 : vector<8x1xf32>
    %216 = vector.broadcast %208 : vector<8x1xf32> to vector<8x32xf32>
    %217 = arith.subf %200, %216 : vector<8x32xf32>
    %cst_68 = arith.constant 9.99999996E-13 : f32
    %218 = vector.broadcast %cst_68 : f32 to vector<8x1xf32>
    %219 = arith.addf %215, %218 : vector<8x1xf32>
    %220 = math.rsqrt %219 : vector<8x1xf32>
    %221 = vector.broadcast %220 : vector<8x1xf32> to vector<8x32xf32>
    %222 = arith.mulf %217, %221 : vector<8x32xf32>
    %223 = vector.shape_cast %202 : vector<32xf32> to vector<1x32xf32>
    %224 = vector.broadcast %223 : vector<1x32xf32> to vector<8x32xf32>
    %225 = arith.mulf %222, %224 : vector<8x32xf32>
    %226 = vector.shape_cast %204 : vector<32xf32> to vector<1x32xf32>
    %227 = vector.broadcast %226 : vector<1x32xf32> to vector<8x32xf32>
    %228 = arith.addf %225, %227 : vector<8x32xf32>
    %c0_69 = arith.constant 0 : index
    %c0_70 = arith.constant 0 : index
    %c0_71 = arith.constant 0 : index
    %229 = vector.load %arg16[%c0_69, %c0_70, %c0_71] : memref<2x32x64xf32, #tpu.memory_space<vmem>>, vector<1x32x64xf32>
    %230 = vector.shape_cast %229 : vector<1x32x64xf32> to vector<32x64xf32>
    %cst_72 = arith.constant dense<0.000000e+00> : vector<8x64xf32>
    %231 = tpu.matmul %228, %230, %cst_72 {dimension_numbers = #tpu.dot_dimension_numbers<[1], [0], [0], [1], [0, 0, 1, 1], [], []>} : vector<8x32xf32>, vector<32x64xf32>, vector<8x64xf32> -> vector<8x64xf32>
    %c0_73 = arith.constant 0 : index
    %c0_74 = arith.constant 0 : index
    %232 = vector.load %arg17[%c0_73, %c0_74] : memref<2x64xf32, #tpu.memory_space<vmem>>, vector<1x64xf32>
    %233 = vector.shape_cast %232 : vector<1x64xf32> to vector<64xf32>
    %234 = vector.shape_cast %233 : vector<64xf32> to vector<1x64xf32>
    %235 = vector.broadcast %234 : vector<1x64xf32> to vector<8x64xf32>
    %236 = arith.addf %231, %235 : vector<8x64xf32>
    %237 = arith.mulf %236, %236 : vector<8x64xf32>
    %238 = arith.mulf %236, %237 : vector<8x64xf32>
    %cst_75 = arith.constant 4.471500e-02 : f32
    %239 = vector.broadcast %cst_75 : f32 to vector<8x64xf32>
    %240 = arith.mulf %239, %238 : vector<8x64xf32>
    %241 = arith.addf %236, %240 : vector<8x64xf32>
    %cst_76 = arith.constant 0.797884583 : f32
    %242 = vector.broadcast %cst_76 : f32 to vector<8x64xf32>
    %243 = arith.mulf %242, %241 : vector<8x64xf32>
    %244 = math.tanh %243 : vector<8x64xf32>
    %cst_77 = arith.constant 1.000000e+00 : f32
    %245 = vector.broadcast %cst_77 : f32 to vector<8x64xf32>
    %246 = arith.addf %245, %244 : vector<8x64xf32>
    %cst_78 = arith.constant 5.000000e-01 : f32
    %247 = vector.broadcast %cst_78 : f32 to vector<8x64xf32>
    %248 = arith.mulf %247, %246 : vector<8x64xf32>
    %249 = arith.mulf %236, %248 : vector<8x64xf32>
    %c0_79 = arith.constant 0 : index
    %c0_80 = arith.constant 0 : index
    %c0_81 = arith.constant 0 : index
    %250 = vector.load %arg18[%c0_79, %c0_80, %c0_81] : memref<2x64x32xf32, #tpu.memory_space<vmem>>, vector<1x64x32xf32>
    %251 = vector.shape_cast %250 : vector<1x64x32xf32> to vector<64x32xf32>
    %cst_82 = arith.constant dense<0.000000e+00> : vector<8x32xf32>
    %252 = tpu.matmul %249, %251, %cst_82 {dimension_numbers = #tpu.dot_dimension_numbers<[1], [0], [0], [1], [0, 0, 1, 1], [], []>} : vector<8x64xf32>, vector<64x32xf32>, vector<8x32xf32> -> vector<8x32xf32>
    %c0_83 = arith.constant 0 : index
    %c0_84 = arith.constant 0 : index
    %253 = vector.load %arg19[%c0_83, %c0_84] : memref<2x32xf32, #tpu.memory_space<vmem>>, vector<1x32xf32>
    %254 = vector.shape_cast %253 : vector<1x32xf32> to vector<32xf32>
    %255 = vector.shape_cast %254 : vector<32xf32> to vector<1x32xf32>
    %256 = vector.broadcast %255 : vector<1x32xf32> to vector<8x32xf32>
    %257 = arith.addf %252, %256 : vector<8x32xf32>
    %258 = arith.addf %200, %257 : vector<8x32xf32>
    %c3 = arith.constant 3 : index
    %c0_85 = arith.constant 0 : index
    %259 = vector.load %arg14[%c3, %c0_85] : memref<7x32xf32, #tpu.memory_space<vmem>>, vector<1x32xf32>
    %260 = vector.shape_cast %259 : vector<1x32xf32> to vector<32xf32>
    %c3_86 = arith.constant 3 : index
    %c0_87 = arith.constant 0 : index
    %261 = vector.load %arg15[%c3_86, %c0_87] : memref<7x32xf32, #tpu.memory_space<vmem>>, vector<1x32xf32>
    %262 = vector.shape_cast %261 : vector<1x32xf32> to vector<32xf32>
    %cst_88 = arith.constant dense<0.000000e+00> : vector<8xf32>
    %263 = vector.multi_reduction <add>, %258, %cst_88 [1] : vector<8x32xf32> to vector<8xf32>
    %264 = vector.shape_cast %263 : vector<8xf32> to vector<8x1xf32>
    %cst_89 = arith.constant 3.200000e+01 : f32
    %265 = vector.broadcast %cst_89 : f32 to vector<8x1xf32>
    %266 = arith.divf %264, %265 : vector<8x1xf32>
    %267 = arith.mulf %258, %258 : vector<8x32xf32>
    %cst_90 = arith.constant dense<0.000000e+00> : vector<8xf32>
    %268 = vector.multi_reduction <add>, %267, %cst_90 [1] : vector<8x32xf32> to vector<8xf32>
    %269 = vector.shape_cast %268 : vector<8xf32> to vector<8x1xf32>
    %cst_91 = arith.constant 3.200000e+01 : f32
    %270 = vector.broadcast %cst_91 : f32 to vector<8x1xf32>
    %271 = arith.divf %269, %270 : vector<8x1xf32>
    %272 = arith.mulf %266, %266 : vector<8x1xf32>
    %273 = arith.subf %271, %272 : vector<8x1xf32>
    %274 = vector.broadcast %266 : vector<8x1xf32> to vector<8x32xf32>
    %275 = arith.subf %258, %274 : vector<8x32xf32>
    %cst_92 = arith.constant 9.99999996E-13 : f32
    %276 = vector.broadcast %cst_92 : f32 to vector<8x1xf32>
    %277 = arith.addf %273, %276 : vector<8x1xf32>
    %278 = math.rsqrt %277 : vector<8x1xf32>
    %279 = vector.broadcast %278 : vector<8x1xf32> to vector<8x32xf32>
    %280 = arith.mulf %275, %279 : vector<8x32xf32>
    %281 = vector.shape_cast %260 : vector<32xf32> to vector<1x32xf32>
    %282 = vector.broadcast %281 : vector<1x32xf32> to vector<8x32xf32>
    %283 = arith.mulf %280, %282 : vector<8x32xf32>
    %284 = vector.shape_cast %262 : vector<32xf32> to vector<1x32xf32>
    %285 = vector.broadcast %284 : vector<1x32xf32> to vector<8x32xf32>
    %286 = arith.addf %283, %285 : vector<8x32xf32>
    %c1_93 = arith.constant 1 : index
    %c0_94 = arith.constant 0 : index
    %c0_95 = arith.constant 0 : index
    %287 = vector.load %arg4[%c1_93, %c0_94, %c0_95] : memref<2x32x96xf32, #tpu.memory_space<vmem>>, vector<1x32x96xf32>
    %288 = vector.shape_cast %287 : vector<1x32x96xf32> to vector<32x96xf32>
    %cst_96 = arith.constant dense<0.000000e+00> : vector<8x96xf32>
    %289 = tpu.matmul %286, %288, %cst_96 {dimension_numbers = #tpu.dot_dimension_numbers<[1], [0], [0], [1], [0, 0, 1, 1], [], []>} : vector<8x32xf32>, vector<32x96xf32>, vector<8x96xf32> -> vector<8x96xf32>
    %c1_97 = arith.constant 1 : index
    %c0_98 = arith.constant 0 : index
    %290 = vector.load %arg5[%c1_97, %c0_98] : memref<2x96xf32, #tpu.memory_space<vmem>>, vector<1x96xf32>
    %291 = vector.shape_cast %290 : vector<1x96xf32> to vector<96xf32>
    %292 = vector.shape_cast %291 : vector<96xf32> to vector<1x96xf32>
    %293 = vector.broadcast %292 : vector<1x96xf32> to vector<8x96xf32>
    %294 = arith.addf %289, %293 : vector<8x96xf32>
    %295 = vector.extract_strided_slice %294 {offsets = [0, 0], sizes = [8, 8], strides = [1, 1]} : vector<8x96xf32> to vector<8x8xf32>
    %296 = vector.extract_strided_slice %294 {offsets = [0, 8], sizes = [8, 8], strides = [1, 1]} : vector<8x96xf32> to vector<8x8xf32>
    %297 = vector.extract_strided_slice %294 {offsets = [0, 16], sizes = [8, 8], strides = [1, 1]} : vector<8x96xf32> to vector<8x8xf32>
    %298 = vector.extract_strided_slice %294 {offsets = [0, 24], sizes = [8, 8], strides = [1, 1]} : vector<8x96xf32> to vector<8x8xf32>
    %299 = vector.shape_cast %295 : vector<8x8xf32> to vector<1x8x8xf32>
    %300 = vector.shape_cast %296 : vector<8x8xf32> to vector<1x8x8xf32>
    %301 = vector.shape_cast %297 : vector<8x8xf32> to vector<1x8x8xf32>
    %302 = vector.shape_cast %298 : vector<8x8xf32> to vector<1x8x8xf32>
    %303 = tpu.concatenate %299, %300, %301, %302 in 0 : vector<1x8x8xf32>, vector<1x8x8xf32>, vector<1x8x8xf32>, vector<1x8x8xf32> -> vector<4x8x8xf32>
    %304 = vector.extract_strided_slice %294 {offsets = [0, 32], sizes = [8, 8], strides = [1, 1]} : vector<8x96xf32> to vector<8x8xf32>
    %305 = vector.extract_strided_slice %294 {offsets = [0, 40], sizes = [8, 8], strides = [1, 1]} : vector<8x96xf32> to vector<8x8xf32>
    %306 = vector.extract_strided_slice %294 {offsets = [0, 48], sizes = [8, 8], strides = [1, 1]} : vector<8x96xf32> to vector<8x8xf32>
    %307 = vector.extract_strided_slice %294 {offsets = [0, 56], sizes = [8, 8], strides = [1, 1]} : vector<8x96xf32> to vector<8x8xf32>
    %308 = vector.shape_cast %304 : vector<8x8xf32> to vector<1x8x8xf32>
    %309 = vector.shape_cast %305 : vector<8x8xf32> to vector<1x8x8xf32>
    %310 = vector.shape_cast %306 : vector<8x8xf32> to vector<1x8x8xf32>
    %311 = vector.shape_cast %307 : vector<8x8xf32> to vector<1x8x8xf32>
    %312 = tpu.concatenate %308, %309, %310, %311 in 0 : vector<1x8x8xf32>, vector<1x8x8xf32>, vector<1x8x8xf32>, vector<1x8x8xf32> -> vector<4x8x8xf32>
    %313 = vector.extract_strided_slice %294 {offsets = [0, 64], sizes = [8, 8], strides = [1, 1]} : vector<8x96xf32> to vector<8x8xf32>
    %314 = vector.extract_strided_slice %294 {offsets = [0, 72], sizes = [8, 8], strides = [1, 1]} : vector<8x96xf32> to vector<8x8xf32>
    %315 = vector.extract_strided_slice %294 {offsets = [0, 80], sizes = [8, 8], strides = [1, 1]} : vector<8x96xf32> to vector<8x8xf32>
    %316 = vector.extract_strided_slice %294 {offsets = [0, 88], sizes = [8, 8], strides = [1, 1]} : vector<8x96xf32> to vector<8x8xf32>
    %317 = vector.shape_cast %313 : vector<8x8xf32> to vector<1x8x8xf32>
    %318 = vector.shape_cast %314 : vector<8x8xf32> to vector<1x8x8xf32>
    %319 = vector.shape_cast %315 : vector<8x8xf32> to vector<1x8x8xf32>
    %320 = vector.shape_cast %316 : vector<8x8xf32> to vector<1x8x8xf32>
    %321 = tpu.concatenate %317, %318, %319, %320 in 0 : vector<1x8x8xf32>, vector<1x8x8xf32>, vector<1x8x8xf32>, vector<1x8x8xf32> -> vector<4x8x8xf32>
    %c1_99 = arith.constant 1 : index
    %c0_100 = arith.constant 0 : index
    %c0_101 = arith.constant 0 : index
    %322 = vector.load %arg6[%c1_99, %c0_100, %c0_101] : memref<2x32x32xf32, #tpu.memory_space<vmem>>, vector<1x32x32xf32>
    %323 = vector.shape_cast %322 : vector<1x32x32xf32> to vector<32x32xf32>
    %c1_102 = arith.constant 1 : index
    %c0_103 = arith.constant 0 : index
    %324 = vector.load %arg7[%c1_102, %c0_103] : memref<2x32xf32, #tpu.memory_space<vmem>>, vector<1x32xf32>
    %325 = vector.shape_cast %324 : vector<1x32xf32> to vector<32xf32>
    "tpu.trace_start"() <{level = 10 : i32, message = "hqd,hkd->hqk"}> : () -> ()
    %cst_104 = arith.constant dense<0.000000e+00> : vector<4x8x8xf32>
    %326 = tpu.matmul %303, %312, %cst_104 {dimension_numbers = #tpu.dot_dimension_numbers<[2], [2], [1], [1], [0, 0, 0, 1, 1, 1], [0], [0]>} : vector<4x8x8xf32>, vector<4x8x8xf32>, vector<4x8x8xf32> -> vector<4x8x8xf32>
    "tpu.trace_stop"() : () -> ()
    %cst_105 = arith.constant dense<0xFF800000> : vector<4x8xf32>
    %327 = vector.multi_reduction <maximumf>, %326, %cst_105 [2] : vector<4x8x8xf32> to vector<4x8xf32>
    %328 = vector.shape_cast %327 : vector<4x8xf32> to vector<4x8x1xf32>
    %329 = vector.broadcast %328 : vector<4x8x1xf32> to vector<4x8x8xf32>
    %330 = arith.subf %326, %329 : vector<4x8x8xf32>
    %331 = math.exp %330 : vector<4x8x8xf32>
    %cst_106 = arith.constant dense<0.000000e+00> : vector<4x8xf32>
    %332 = vector.multi_reduction <add>, %331, %cst_106 [2] : vector<4x8x8xf32> to vector<4x8xf32>
    %333 = vector.shape_cast %332 : vector<4x8xf32> to vector<4x8x1xf32>
    %334 = tpu.reciprocal %333 {approx = true} : vector<4x8x1xf32> -> vector<4x8x1xf32>
    %335 = vector.broadcast %334 : vector<4x8x1xf32> to vector<4x8x8xf32>
    %336 = arith.mulf %331, %335 : vector<4x8x8xf32>
    "tpu.trace_start"() <{level = 10 : i32, message = "hqk,hkd->hqd"}> : () -> ()
    %cst_107 = arith.constant dense<0.000000e+00> : vector<4x8x8xf32>
    %337 = tpu.matmul %336, %321, %cst_107 {dimension_numbers = #tpu.dot_dimension_numbers<[2], [1], [1], [2], [0, 0, 0, 1, 1, 2], [0], [0]>} : vector<4x8x8xf32>, vector<4x8x8xf32>, vector<4x8x8xf32> -> vector<4x8x8xf32>
    "tpu.trace_stop"() : () -> ()
    %338 = vector.extract_strided_slice %337 {offsets = [0, 0, 0], sizes = [1, 8, 8], strides = [1, 1, 1]} : vector<4x8x8xf32> to vector<1x8x8xf32>
    %339 = vector.shape_cast %338 : vector<1x8x8xf32> to vector<8x8xf32>
    %340 = vector.extract_strided_slice %337 {offsets = [1, 0, 0], sizes = [1, 8, 8], strides = [1, 1, 1]} : vector<4x8x8xf32> to vector<1x8x8xf32>
    %341 = vector.shape_cast %340 : vector<1x8x8xf32> to vector<8x8xf32>
    %342 = vector.extract_strided_slice %337 {offsets = [2, 0, 0], sizes = [1, 8, 8], strides = [1, 1, 1]} : vector<4x8x8xf32> to vector<1x8x8xf32>
    %343 = vector.shape_cast %342 : vector<1x8x8xf32> to vector<8x8xf32>
    %344 = vector.extract_strided_slice %337 {offsets = [3, 0, 0], sizes = [1, 8, 8], strides = [1, 1, 1]} : vector<4x8x8xf32> to vector<1x8x8xf32>
    %345 = vector.shape_cast %344 : vector<1x8x8xf32> to vector<8x8xf32>
    %346 = tpu.concatenate %339, %341, %343, %345 in 1 : vector<8x8xf32>, vector<8x8xf32>, vector<8x8xf32>, vector<8x8xf32> -> vector<8x32xf32>
    %cst_108 = arith.constant dense<0.000000e+00> : vector<8x32xf32>
    %347 = tpu.matmul %346, %323, %cst_108 {dimension_numbers = #tpu.dot_dimension_numbers<[1], [0], [0], [1], [0, 0, 1, 1], [], []>} : vector<8x32xf32>, vector<32x32xf32>, vector<8x32xf32> -> vector<8x32xf32>
    %348 = vector.shape_cast %325 : vector<32xf32> to vector<1x32xf32>
    %349 = vector.broadcast %348 : vector<1x32xf32> to vector<8x32xf32>
    %350 = arith.addf %347, %349 : vector<8x32xf32>
    %351 = arith.addf %258, %350 : vector<8x32xf32>
    %c4 = arith.constant 4 : index
    %c0_109 = arith.constant 0 : index
    %352 = vector.load %arg14[%c4, %c0_109] : memref<7x32xf32, #tpu.memory_space<vmem>>, vector<1x32xf32>
    %353 = vector.shape_cast %352 : vector<1x32xf32> to vector<32xf32>
    %c4_110 = arith.constant 4 : index
    %c0_111 = arith.constant 0 : index
    %354 = vector.load %arg15[%c4_110, %c0_111] : memref<7x32xf32, #tpu.memory_space<vmem>>, vector<1x32xf32>
    %355 = vector.shape_cast %354 : vector<1x32xf32> to vector<32xf32>
    %cst_112 = arith.constant dense<0.000000e+00> : vector<8xf32>
    %356 = vector.multi_reduction <add>, %351, %cst_112 [1] : vector<8x32xf32> to vector<8xf32>
    %357 = vector.shape_cast %356 : vector<8xf32> to vector<8x1xf32>
    %cst_113 = arith.constant 3.200000e+01 : f32
    %358 = vector.broadcast %cst_113 : f32 to vector<8x1xf32>
    %359 = arith.divf %357, %358 : vector<8x1xf32>
    %360 = arith.mulf %351, %351 : vector<8x32xf32>
    %cst_114 = arith.constant dense<0.000000e+00> : vector<8xf32>
    %361 = vector.multi_reduction <add>, %360, %cst_114 [1] : vector<8x32xf32> to vector<8xf32>
    %362 = vector.shape_cast %361 : vector<8xf32> to vector<8x1xf32>
    %cst_115 = arith.constant 3.200000e+01 : f32
    %363 = vector.broadcast %cst_115 : f32 to vector<8x1xf32>
    %364 = arith.divf %362, %363 : vector<8x1xf32>
    %365 = arith.mulf %359, %359 : vector<8x1xf32>
    %366 = arith.subf %364, %365 : vector<8x1xf32>
    %367 = vector.broadcast %359 : vector<8x1xf32> to vector<8x32xf32>
    %368 = arith.subf %351, %367 : vector<8x32xf32>
    %cst_116 = arith.constant 9.99999996E-13 : f32
    %369 = vector.broadcast %cst_116 : f32 to vector<8x1xf32>
    %370 = arith.addf %366, %369 : vector<8x1xf32>
    %371 = math.rsqrt %370 : vector<8x1xf32>
    %372 = vector.broadcast %371 : vector<8x1xf32> to vector<8x32xf32>
    %373 = arith.mulf %368, %372 : vector<8x32xf32>
    %374 = vector.shape_cast %353 : vector<32xf32> to vector<1x32xf32>
    %375 = vector.broadcast %374 : vector<1x32xf32> to vector<8x32xf32>
    %376 = arith.mulf %373, %375 : vector<8x32xf32>
    %377 = vector.shape_cast %355 : vector<32xf32> to vector<1x32xf32>
    %378 = vector.broadcast %377 : vector<1x32xf32> to vector<8x32xf32>
    %379 = arith.addf %376, %378 : vector<8x32xf32>
    %c1_117 = arith.constant 1 : index
    %c0_118 = arith.constant 0 : index
    %c0_119 = arith.constant 0 : index
    %380 = vector.load %arg8[%c1_117, %c0_118, %c0_119] : memref<2x32x32xf32, #tpu.memory_space<vmem>>, vector<1x32x32xf32>
    %381 = vector.shape_cast %380 : vector<1x32x32xf32> to vector<32x32xf32>
    %cst_120 = arith.constant dense<0.000000e+00> : vector<8x32xf32>
    %382 = tpu.matmul %379, %381, %cst_120 {dimension_numbers = #tpu.dot_dimension_numbers<[1], [0], [0], [1], [0, 0, 1, 1], [], []>} : vector<8x32xf32>, vector<32x32xf32>, vector<8x32xf32> -> vector<8x32xf32>
    %c1_121 = arith.constant 1 : index
    %c0_122 = arith.constant 0 : index
    %383 = vector.load %arg9[%c1_121, %c0_122] : memref<2x32xf32, #tpu.memory_space<vmem>>, vector<1x32xf32>
    %384 = vector.shape_cast %383 : vector<1x32xf32> to vector<32xf32>
    %385 = vector.shape_cast %384 : vector<32xf32> to vector<1x32xf32>
    %386 = vector.broadcast %385 : vector<1x32xf32> to vector<8x32xf32>
    %387 = arith.addf %382, %386 : vector<8x32xf32>
    %388 = vector.extract_strided_slice %387 {offsets = [0, 0], sizes = [8, 8], strides = [1, 1]} : vector<8x32xf32> to vector<8x8xf32>
    %389 = vector.extract_strided_slice %387 {offsets = [0, 8], sizes = [8, 8], strides = [1, 1]} : vector<8x32xf32> to vector<8x8xf32>
    %390 = vector.extract_strided_slice %387 {offsets = [0, 16], sizes = [8, 8], strides = [1, 1]} : vector<8x32xf32> to vector<8x8xf32>
    %391 = vector.extract_strided_slice %387 {offsets = [0, 24], sizes = [8, 8], strides = [1, 1]} : vector<8x32xf32> to vector<8x8xf32>
    %392 = vector.shape_cast %388 : vector<8x8xf32> to vector<1x8x8xf32>
    %393 = vector.shape_cast %389 : vector<8x8xf32> to vector<1x8x8xf32>
    %394 = vector.shape_cast %390 : vector<8x8xf32> to vector<1x8x8xf32>
    %395 = vector.shape_cast %391 : vector<8x8xf32> to vector<1x8x8xf32>
    %396 = tpu.concatenate %392, %393, %394, %395 in 0 : vector<1x8x8xf32>, vector<1x8x8xf32>, vector<1x8x8xf32>, vector<1x8x8xf32> -> vector<4x8x8xf32>
    %397 = vector.extract_strided_slice %10 {offsets = [0, 64], sizes = [16, 8], strides = [1, 1]} : vector<16x128xf32> to vector<16x8xf32>
    %398 = vector.extract_strided_slice %10 {offsets = [0, 72], sizes = [16, 8], strides = [1, 1]} : vector<16x128xf32> to vector<16x8xf32>
    %399 = vector.extract_strided_slice %10 {offsets = [0, 80], sizes = [16, 8], strides = [1, 1]} : vector<16x128xf32> to vector<16x8xf32>
    %400 = vector.extract_strided_slice %10 {offsets = [0, 88], sizes = [16, 8], strides = [1, 1]} : vector<16x128xf32> to vector<16x8xf32>
    %401 = vector.shape_cast %397 : vector<16x8xf32> to vector<1x16x8xf32>
    %402 = vector.shape_cast %398 : vector<16x8xf32> to vector<1x16x8xf32>
    %403 = vector.shape_cast %399 : vector<16x8xf32> to vector<1x16x8xf32>
    %404 = vector.shape_cast %400 : vector<16x8xf32> to vector<1x16x8xf32>
    %405 = tpu.concatenate %401, %402, %403, %404 in 0 : vector<1x16x8xf32>, vector<1x16x8xf32>, vector<1x16x8xf32>, vector<1x16x8xf32> -> vector<4x16x8xf32>
    %406 = vector.extract_strided_slice %10 {offsets = [0, 96], sizes = [16, 8], strides = [1, 1]} : vector<16x128xf32> to vector<16x8xf32>
    %407 = vector.extract_strided_slice %10 {offsets = [0, 104], sizes = [16, 8], strides = [1, 1]} : vector<16x128xf32> to vector<16x8xf32>
    %408 = vector.extract_strided_slice %10 {offsets = [0, 112], sizes = [16, 8], strides = [1, 1]} : vector<16x128xf32> to vector<16x8xf32>
    %409 = vector.extract_strided_slice %10 {offsets = [0, 120], sizes = [16, 8], strides = [1, 1]} : vector<16x128xf32> to vector<16x8xf32>
    %410 = vector.shape_cast %406 : vector<16x8xf32> to vector<1x16x8xf32>
    %411 = vector.shape_cast %407 : vector<16x8xf32> to vector<1x16x8xf32>
    %412 = vector.shape_cast %408 : vector<16x8xf32> to vector<1x16x8xf32>
    %413 = vector.shape_cast %409 : vector<16x8xf32> to vector<1x16x8xf32>
    %414 = tpu.concatenate %410, %411, %412, %413 in 0 : vector<1x16x8xf32>, vector<1x16x8xf32>, vector<1x16x8xf32>, vector<1x16x8xf32> -> vector<4x16x8xf32>
    %c1_123 = arith.constant 1 : index
    %c0_124 = arith.constant 0 : index
    %c0_125 = arith.constant 0 : index
    %415 = vector.load %arg12[%c1_123, %c0_124, %c0_125] : memref<2x32x32xf32, #tpu.memory_space<vmem>>, vector<1x32x32xf32>
    %416 = vector.shape_cast %415 : vector<1x32x32xf32> to vector<32x32xf32>
    %c1_126 = arith.constant 1 : index
    %c0_127 = arith.constant 0 : index
    %417 = vector.load %arg13[%c1_126, %c0_127] : memref<2x32xf32, #tpu.memory_space<vmem>>, vector<1x32xf32>
    %418 = vector.shape_cast %417 : vector<1x32xf32> to vector<32xf32>
    "tpu.trace_start"() <{level = 10 : i32, message = "hqd,hkd->hqk"}> : () -> ()
    %cst_128 = arith.constant dense<0.000000e+00> : vector<4x8x16xf32>
    %419 = tpu.matmul %396, %405, %cst_128 {dimension_numbers = #tpu.dot_dimension_numbers<[2], [2], [1], [1], [0, 0, 0, 1, 1, 1], [0], [0]>} : vector<4x8x8xf32>, vector<4x16x8xf32>, vector<4x8x16xf32> -> vector<4x8x16xf32>
    "tpu.trace_stop"() : () -> ()
    %420 = vector.shape_cast %3 : vector<1x16xf32> to vector<1x1x16xf32>
    %421 = vector.broadcast %420 : vector<1x1x16xf32> to vector<4x8x16xf32>
    %422 = arith.addf %419, %421 : vector<4x8x16xf32>
    %cst_129 = arith.constant dense<0xFF800000> : vector<4x8xf32>
    %423 = vector.multi_reduction <maximumf>, %422, %cst_129 [2] : vector<4x8x16xf32> to vector<4x8xf32>
    %424 = vector.shape_cast %423 : vector<4x8xf32> to vector<4x8x1xf32>
    %425 = vector.broadcast %424 : vector<4x8x1xf32> to vector<4x8x16xf32>
    %426 = arith.subf %422, %425 : vector<4x8x16xf32>
    %427 = math.exp %426 : vector<4x8x16xf32>
    %cst_130 = arith.constant dense<0.000000e+00> : vector<4x8xf32>
    %428 = vector.multi_reduction <add>, %427, %cst_130 [2] : vector<4x8x16xf32> to vector<4x8xf32>
    %429 = vector.shape_cast %428 : vector<4x8xf32> to vector<4x8x1xf32>
    %430 = tpu.reciprocal %429 {approx = true} : vector<4x8x1xf32> -> vector<4x8x1xf32>
    %431 = vector.broadcast %430 : vector<4x8x1xf32> to vector<4x8x16xf32>
    %432 = arith.mulf %427, %431 : vector<4x8x16xf32>
    "tpu.trace_start"() <{level = 10 : i32, message = "hqk,hkd->hqd"}> : () -> ()
    %cst_131 = arith.constant dense<0.000000e+00> : vector<4x8x8xf32>
    %433 = tpu.matmul %432, %414, %cst_131 {dimension_numbers = #tpu.dot_dimension_numbers<[2], [1], [1], [2], [0, 0, 0, 1, 1, 2], [0], [0]>} : vector<4x8x16xf32>, vector<4x16x8xf32>, vector<4x8x8xf32> -> vector<4x8x8xf32>
    "tpu.trace_stop"() : () -> ()
    %434 = vector.extract_strided_slice %433 {offsets = [0, 0, 0], sizes = [1, 8, 8], strides = [1, 1, 1]} : vector<4x8x8xf32> to vector<1x8x8xf32>
    %435 = vector.shape_cast %434 : vector<1x8x8xf32> to vector<8x8xf32>
    %436 = vector.extract_strided_slice %433 {offsets = [1, 0, 0], sizes = [1, 8, 8], strides = [1, 1, 1]} : vector<4x8x8xf32> to vector<1x8x8xf32>
    %437 = vector.shape_cast %436 : vector<1x8x8xf32> to vector<8x8xf32>
    %438 = vector.extract_strided_slice %433 {offsets = [2, 0, 0], sizes = [1, 8, 8], strides = [1, 1, 1]} : vector<4x8x8xf32> to vector<1x8x8xf32>
    %439 = vector.shape_cast %438 : vector<1x8x8xf32> to vector<8x8xf32>
    %440 = vector.extract_strided_slice %433 {offsets = [3, 0, 0], sizes = [1, 8, 8], strides = [1, 1, 1]} : vector<4x8x8xf32> to vector<1x8x8xf32>
    %441 = vector.shape_cast %440 : vector<1x8x8xf32> to vector<8x8xf32>
    %442 = tpu.concatenate %435, %437, %439, %441 in 1 : vector<8x8xf32>, vector<8x8xf32>, vector<8x8xf32>, vector<8x8xf32> -> vector<8x32xf32>
    %cst_132 = arith.constant dense<0.000000e+00> : vector<8x32xf32>
    %443 = tpu.matmul %442, %416, %cst_132 {dimension_numbers = #tpu.dot_dimension_numbers<[1], [0], [0], [1], [0, 0, 1, 1], [], []>} : vector<8x32xf32>, vector<32x32xf32>, vector<8x32xf32> -> vector<8x32xf32>
    %444 = vector.shape_cast %418 : vector<32xf32> to vector<1x32xf32>
    %445 = vector.broadcast %444 : vector<1x32xf32> to vector<8x32xf32>
    %446 = arith.addf %443, %445 : vector<8x32xf32>
    %447 = arith.addf %351, %446 : vector<8x32xf32>
    %c5 = arith.constant 5 : index
    %c0_133 = arith.constant 0 : index
    %448 = vector.load %arg14[%c5, %c0_133] : memref<7x32xf32, #tpu.memory_space<vmem>>, vector<1x32xf32>
    %449 = vector.shape_cast %448 : vector<1x32xf32> to vector<32xf32>
    %c5_134 = arith.constant 5 : index
    %c0_135 = arith.constant 0 : index
    %450 = vector.load %arg15[%c5_134, %c0_135] : memref<7x32xf32, #tpu.memory_space<vmem>>, vector<1x32xf32>
    %451 = vector.shape_cast %450 : vector<1x32xf32> to vector<32xf32>
    %cst_136 = arith.constant dense<0.000000e+00> : vector<8xf32>
    %452 = vector.multi_reduction <add>, %447, %cst_136 [1] : vector<8x32xf32> to vector<8xf32>
    %453 = vector.shape_cast %452 : vector<8xf32> to vector<8x1xf32>
    %cst_137 = arith.constant 3.200000e+01 : f32
    %454 = vector.broadcast %cst_137 : f32 to vector<8x1xf32>
    %455 = arith.divf %453, %454 : vector<8x1xf32>
    %456 = arith.mulf %447, %447 : vector<8x32xf32>
    %cst_138 = arith.constant dense<0.000000e+00> : vector<8xf32>
    %457 = vector.multi_reduction <add>, %456, %cst_138 [1] : vector<8x32xf32> to vector<8xf32>
    %458 = vector.shape_cast %457 : vector<8xf32> to vector<8x1xf32>
    %cst_139 = arith.constant 3.200000e+01 : f32
    %459 = vector.broadcast %cst_139 : f32 to vector<8x1xf32>
    %460 = arith.divf %458, %459 : vector<8x1xf32>
    %461 = arith.mulf %455, %455 : vector<8x1xf32>
    %462 = arith.subf %460, %461 : vector<8x1xf32>
    %463 = vector.broadcast %455 : vector<8x1xf32> to vector<8x32xf32>
    %464 = arith.subf %447, %463 : vector<8x32xf32>
    %cst_140 = arith.constant 9.99999996E-13 : f32
    %465 = vector.broadcast %cst_140 : f32 to vector<8x1xf32>
    %466 = arith.addf %462, %465 : vector<8x1xf32>
    %467 = math.rsqrt %466 : vector<8x1xf32>
    %468 = vector.broadcast %467 : vector<8x1xf32> to vector<8x32xf32>
    %469 = arith.mulf %464, %468 : vector<8x32xf32>
    %470 = vector.shape_cast %449 : vector<32xf32> to vector<1x32xf32>
    %471 = vector.broadcast %470 : vector<1x32xf32> to vector<8x32xf32>
    %472 = arith.mulf %469, %471 : vector<8x32xf32>
    %473 = vector.shape_cast %451 : vector<32xf32> to vector<1x32xf32>
    %474 = vector.broadcast %473 : vector<1x32xf32> to vector<8x32xf32>
    %475 = arith.addf %472, %474 : vector<8x32xf32>
    %c1_141 = arith.constant 1 : index
    %c0_142 = arith.constant 0 : index
    %c0_143 = arith.constant 0 : index
    %476 = vector.load %arg16[%c1_141, %c0_142, %c0_143] : memref<2x32x64xf32, #tpu.memory_space<vmem>>, vector<1x32x64xf32>
    %477 = vector.shape_cast %476 : vector<1x32x64xf32> to vector<32x64xf32>
    %cst_144 = arith.constant dense<0.000000e+00> : vector<8x64xf32>
    %478 = tpu.matmul %475, %477, %cst_144 {dimension_numbers = #tpu.dot_dimension_numbers<[1], [0], [0], [1], [0, 0, 1, 1], [], []>} : vector<8x32xf32>, vector<32x64xf32>, vector<8x64xf32> -> vector<8x64xf32>
    %c1_145 = arith.constant 1 : index
    %c0_146 = arith.constant 0 : index
    %479 = vector.load %arg17[%c1_145, %c0_146] : memref<2x64xf32, #tpu.memory_space<vmem>>, vector<1x64xf32>
    %480 = vector.shape_cast %479 : vector<1x64xf32> to vector<64xf32>
    %481 = vector.shape_cast %480 : vector<64xf32> to vector<1x64xf32>
    %482 = vector.broadcast %481 : vector<1x64xf32> to vector<8x64xf32>
    %483 = arith.addf %478, %482 : vector<8x64xf32>
    %484 = arith.mulf %483, %483 : vector<8x64xf32>
    %485 = arith.mulf %483, %484 : vector<8x64xf32>
    %cst_147 = arith.constant 4.471500e-02 : f32
    %486 = vector.broadcast %cst_147 : f32 to vector<8x64xf32>
    %487 = arith.mulf %486, %485 : vector<8x64xf32>
    %488 = arith.addf %483, %487 : vector<8x64xf32>
    %cst_148 = arith.constant 0.797884583 : f32
    %489 = vector.broadcast %cst_148 : f32 to vector<8x64xf32>
    %490 = arith.mulf %489, %488 : vector<8x64xf32>
    %491 = math.tanh %490 : vector<8x64xf32>
    %cst_149 = arith.constant 1.000000e+00 : f32
    %492 = vector.broadcast %cst_149 : f32 to vector<8x64xf32>
    %493 = arith.addf %492, %491 : vector<8x64xf32>
    %cst_150 = arith.constant 5.000000e-01 : f32
    %494 = vector.broadcast %cst_150 : f32 to vector<8x64xf32>
    %495 = arith.mulf %494, %493 : vector<8x64xf32>
    %496 = arith.mulf %483, %495 : vector<8x64xf32>
    %c1_151 = arith.constant 1 : index
    %c0_152 = arith.constant 0 : index
    %c0_153 = arith.constant 0 : index
    %497 = vector.load %arg18[%c1_151, %c0_152, %c0_153] : memref<2x64x32xf32, #tpu.memory_space<vmem>>, vector<1x64x32xf32>
    %498 = vector.shape_cast %497 : vector<1x64x32xf32> to vector<64x32xf32>
    %cst_154 = arith.constant dense<0.000000e+00> : vector<8x32xf32>
    %499 = tpu.matmul %496, %498, %cst_154 {dimension_numbers = #tpu.dot_dimension_numbers<[1], [0], [0], [1], [0, 0, 1, 1], [], []>} : vector<8x64xf32>, vector<64x32xf32>, vector<8x32xf32> -> vector<8x32xf32>
    %c1_155 = arith.constant 1 : index
    %c0_156 = arith.constant 0 : index
    %500 = vector.load %arg19[%c1_155, %c0_156] : memref<2x32xf32, #tpu.memory_space<vmem>>, vector<1x32xf32>
    %501 = vector.shape_cast %500 : vector<1x32xf32> to vector<32xf32>
    %502 = vector.shape_cast %501 : vector<32xf32> to vector<1x32xf32>
    %503 = vector.broadcast %502 : vector<1x32xf32> to vector<8x32xf32>
    %504 = arith.addf %499, %503 : vector<8x32xf32>
    %505 = arith.addf %447, %504 : vector<8x32xf32>
    %c6 = arith.constant 6 : index
    %c0_157 = arith.constant 0 : index
    %506 = vector.load %arg14[%c6, %c0_157] : memref<7x32xf32, #tpu.memory_space<vmem>>, vector<1x32xf32>
    %507 = vector.shape_cast %506 : vector<1x32xf32> to vector<32xf32>
    %c6_158 = arith.constant 6 : index
    %c0_159 = arith.constant 0 : index
    %508 = vector.load %arg15[%c6_158, %c0_159] : memref<7x32xf32, #tpu.memory_space<vmem>>, vector<1x32xf32>
    %509 = vector.shape_cast %508 : vector<1x32xf32> to vector<32xf32>
    %cst_160 = arith.constant dense<0.000000e+00> : vector<8xf32>
    %510 = vector.multi_reduction <add>, %505, %cst_160 [1] : vector<8x32xf32> to vector<8xf32>
    %511 = vector.shape_cast %510 : vector<8xf32> to vector<8x1xf32>
    %cst_161 = arith.constant 3.200000e+01 : f32
    %512 = vector.broadcast %cst_161 : f32 to vector<8x1xf32>
    %513 = arith.divf %511, %512 : vector<8x1xf32>
    %514 = arith.mulf %505, %505 : vector<8x32xf32>
    %cst_162 = arith.constant dense<0.000000e+00> : vector<8xf32>
    %515 = vector.multi_reduction <add>, %514, %cst_162 [1] : vector<8x32xf32> to vector<8xf32>
    %516 = vector.shape_cast %515 : vector<8xf32> to vector<8x1xf32>
    %cst_163 = arith.constant 3.200000e+01 : f32
    %517 = vector.broadcast %cst_163 : f32 to vector<8x1xf32>
    %518 = arith.divf %516, %517 : vector<8x1xf32>
    %519 = arith.mulf %513, %513 : vector<8x1xf32>
    %520 = arith.subf %518, %519 : vector<8x1xf32>
    %521 = vector.broadcast %513 : vector<8x1xf32> to vector<8x32xf32>
    %522 = arith.subf %505, %521 : vector<8x32xf32>
    %cst_164 = arith.constant 9.99999996E-13 : f32
    %523 = vector.broadcast %cst_164 : f32 to vector<8x1xf32>
    %524 = arith.addf %520, %523 : vector<8x1xf32>
    %525 = math.rsqrt %524 : vector<8x1xf32>
    %526 = vector.broadcast %525 : vector<8x1xf32> to vector<8x32xf32>
    %527 = arith.mulf %522, %526 : vector<8x32xf32>
    %528 = vector.shape_cast %507 : vector<32xf32> to vector<1x32xf32>
    %529 = vector.broadcast %528 : vector<1x32xf32> to vector<8x32xf32>
    %530 = arith.mulf %527, %529 : vector<8x32xf32>
    %531 = vector.shape_cast %509 : vector<32xf32> to vector<1x32xf32>
    %532 = vector.broadcast %531 : vector<1x32xf32> to vector<8x32xf32>
    %533 = arith.addf %530, %532 : vector<8x32xf32>
    %c0_165 = arith.constant 0 : index
    %c0_166 = arith.constant 0 : index
    %c0_167 = arith.constant 0 : index
    %534 = vector.load %arg20[%c0_165, %c0_166, %c0_167] : memref<2x8x32xf32, #tpu.memory_space<vmem>>, vector<1x8x32xf32>
    %535 = vector.shape_cast %534 : vector<1x8x32xf32> to vector<8x32xf32>
    %536 = vector.shape_cast %533 : vector<8x32xf32> to vector<1x8x32xf32>
    tpu.vector_store %arg20[%c0_165, %c0_166, %c0_167], %536 {strides = array<i32>} : memref<2x8x32xf32, #tpu.memory_space<vmem>>, vector<1x8x32xf32>,
    %c1_168 = arith.constant 1 : index
    %c0_169 = arith.constant 0 : index
    %c0_170 = arith.constant 0 : index
    %537 = vector.load %arg1[%c1_168, %c0_169, %c0_170] : memref<2x16x32xf32, #tpu.memory_space<vmem>>, vector<1x16x32xf32>
    %538 = vector.shape_cast %537 : vector<1x16x32xf32> to vector<16x32xf32>
    %c1_171 = arith.constant 1 : index
    %c0_172 = arith.constant 0 : index
    %c0_173 = arith.constant 0 : index
    %c0_174 = arith.constant 0 : index
    %539 = vector.load %arg2[%c1_171, %c0_172, %c0_173, %c0_174] : memref<2x1x1x16xf32, #tpu.memory_space<vmem>>, vector<1x1x1x16xf32>
    %540 = vector.shape_cast %539 : vector<1x1x1x16xf32> to vector<1x16xf32>
    %c0_175 = arith.constant 0 : index
    %c0_176 = arith.constant 0 : index
    %541 = vector.load %arg10[%c0_175, %c0_176] : memref<32x128xf32, #tpu.memory_space<vmem>>, vector<32x128xf32>
    %cst_177 = arith.constant dense<0.000000e+00> : vector<16x128xf32>
    %542 = tpu.matmul %538, %541, %cst_177 {dimension_numbers = #tpu.dot_dimension_numbers<[1], [0], [0], [1], [0, 0, 1, 1], [], []>} : vector<16x32xf32>, vector<32x128xf32>, vector<16x128xf32> -> vector<16x128xf32>
    %c0_178 = arith.constant 0 : index
    %c0_179 = arith.constant 0 : index
    %543 = vector.load %arg11[%c0_178, %c0_179] : memref<1x128xf32, #tpu.memory_space<vmem>>, vector<1x128xf32>
    %544 = vector.shape_cast %543 : vector<1x128xf32> to vector<128xf32>
    %545 = vector.shape_cast %544 : vector<128xf32> to vector<1x128xf32>
    %546 = vector.broadcast %545 : vector<1x128xf32> to vector<16x128xf32>
    %547 = arith.addf %542, %546 : vector<16x128xf32>
    %c0_180 = arith.constant 0 : index
    %c0_181 = arith.constant 0 : index
    %548 = vector.load %arg3[%c0_180, %c0_181] : memref<8x32xf32, #tpu.memory_space<vmem>>, vector<8x32xf32>
    %c0_182 = arith.constant 0 : index
    %c0_183 = arith.constant 0 : index
    %549 = vector.load %arg14[%c0_182, %c0_183] : memref<7x32xf32, #tpu.memory_space<vmem>>, vector<1x32xf32>
    %550 = vector.shape_cast %549 : vector<1x32xf32> to vector<32xf32>
    %c0_184 = arith.constant 0 : index
    %c0_185 = arith.constant 0 : index
    %551 = vector.load %arg15[%c0_184, %c0_185] : memref<7x32xf32, #tpu.memory_space<vmem>>, vector<1x32xf32>
    %552 = vector.shape_cast %551 : vector<1x32xf32> to vector<32xf32>
    %cst_186 = arith.constant dense<0.000000e+00> : vector<8xf32>
    %553 = vector.multi_reduction <add>, %548, %cst_186 [1] : vector<8x32xf32> to vector<8xf32>
    %554 = vector.shape_cast %553 : vector<8xf32> to vector<8x1xf32>
    %cst_187 = arith.constant 3.200000e+01 : f32
    %555 = vector.broadcast %cst_187 : f32 to vector<8x1xf32>
    %556 = arith.divf %554, %555 : vector<8x1xf32>
    %557 = arith.mulf %548, %548 : vector<8x32xf32>
    %cst_188 = arith.constant dense<0.000000e+00> : vector<8xf32>
    %558 = vector.multi_reduction <add>, %557, %cst_188 [1] : vector<8x32xf32> to vector<8xf32>
    %559 = vector.shape_cast %558 : vector<8xf32> to vector<8x1xf32>
    %cst_189 = arith.constant 3.200000e+01 : f32
    %560 = vector.broadcast %cst_189 : f32 to vector<8x1xf32>
    %561 = arith.divf %559, %560 : vector<8x1xf32>
    %562 = arith.mulf %556, %556 : vector<8x1xf32>
    %563 = arith.subf %561, %562 : vector<8x1xf32>
    %564 = vector.broadcast %556 : vector<8x1xf32> to vector<8x32xf32>
    %565 = arith.subf %548, %564 : vector<8x32xf32>
    %cst_190 = arith.constant 9.99999996E-13 : f32
    %566 = vector.broadcast %cst_190 : f32 to vector<8x1xf32>
    %567 = arith.addf %563, %566 : vector<8x1xf32>
    %568 = math.rsqrt %567 : vector<8x1xf32>
    %569 = vector.broadcast %568 : vector<8x1xf32> to vector<8x32xf32>
    %570 = arith.mulf %565, %569 : vector<8x32xf32>
    %571 = vector.shape_cast %550 : vector<32xf32> to vector<1x32xf32>
    %572 = vector.broadcast %571 : vector<1x32xf32> to vector<8x32xf32>
    %573 = arith.mulf %570, %572 : vector<8x32xf32>
    %574 = vector.shape_cast %552 : vector<32xf32> to vector<1x32xf32>
    %575 = vector.broadcast %574 : vector<1x32xf32> to vector<8x32xf32>
    %576 = arith.addf %573, %575 : vector<8x32xf32>
    %c0_191 = arith.constant 0 : index
    %c0_192 = arith.constant 0 : index
    %c0_193 = arith.constant 0 : index
    %577 = vector.load %arg4[%c0_191, %c0_192, %c0_193] : memref<2x32x96xf32, #tpu.memory_space<vmem>>, vector<1x32x96xf32>
    %578 = vector.shape_cast %577 : vector<1x32x96xf32> to vector<32x96xf32>
    %cst_194 = arith.constant dense<0.000000e+00> : vector<8x96xf32>
    %579 = tpu.matmul %576, %578, %cst_194 {dimension_numbers = #tpu.dot_dimension_numbers<[1], [0], [0], [1], [0, 0, 1, 1], [], []>} : vector<8x32xf32>, vector<32x96xf32>, vector<8x96xf32> -> vector<8x96xf32>
    %c0_195 = arith.constant 0 : index
    %c0_196 = arith.constant 0 : index
    %580 = vector.load %arg5[%c0_195, %c0_196] : memref<2x96xf32, #tpu.memory_space<vmem>>, vector<1x96xf32>
    %581 = vector.shape_cast %580 : vector<1x96xf32> to vector<96xf32>
    %582 = vector.shape_cast %581 : vector<96xf32> to vector<1x96xf32>
    %583 = vector.broadcast %582 : vector<1x96xf32> to vector<8x96xf32>
    %584 = arith.addf %579, %583 : vector<8x96xf32>
    %585 = vector.extract_strided_slice %584 {offsets = [0, 0], sizes = [8, 8], strides = [1, 1]} : vector<8x96xf32> to vector<8x8xf32>
    %586 = vector.extract_strided_slice %584 {offsets = [0, 8], sizes = [8, 8], strides = [1, 1]} : vector<8x96xf32> to vector<8x8xf32>
    %587 = vector.extract_strided_slice %584 {offsets = [0, 16], sizes = [8, 8], strides = [1, 1]} : vector<8x96xf32> to vector<8x8xf32>
    %588 = vector.extract_strided_slice %584 {offsets = [0, 24], sizes = [8, 8], strides = [1, 1]} : vector<8x96xf32> to vector<8x8xf32>
    %589 = vector.shape_cast %585 : vector<8x8xf32> to vector<1x8x8xf32>
    %590 = vector.shape_cast %586 : vector<8x8xf32> to vector<1x8x8xf32>
    %591 = vector.shape_cast %587 : vector<8x8xf32> to vector<1x8x8xf32>
    %592 = vector.shape_cast %588 : vector<8x8xf32> to vector<1x8x8xf32>
    %593 = tpu.concatenate %589, %590, %591, %592 in 0 : vector<1x8x8xf32>, vector<1x8x8xf32>, vector<1x8x8xf32>, vector<1x8x8xf32> -> vector<4x8x8xf32>
    %594 = vector.extract_strided_slice %584 {offsets = [0, 32], sizes = [8, 8], strides = [1, 1]} : vector<8x96xf32> to vector<8x8xf32>
    %595 = vector.extract_strided_slice %584 {offsets = [0, 40], sizes = [8, 8], strides = [1, 1]} : vector<8x96xf32> to vector<8x8xf32>
    %596 = vector.extract_strided_slice %584 {offsets = [0, 48], sizes = [8, 8], strides = [1, 1]} : vector<8x96xf32> to vector<8x8xf32>
    %597 = vector.extract_strided_slice %584 {offsets = [0, 56], sizes = [8, 8], strides = [1, 1]} : vector<8x96xf32> to vector<8x8xf32>
    %598 = vector.shape_cast %594 : vector<8x8xf32> to vector<1x8x8xf32>
    %599 = vector.shape_cast %595 : vector<8x8xf32> to vector<1x8x8xf32>
    %600 = vector.shape_cast %596 : vector<8x8xf32> to vector<1x8x8xf32>
    %601 = vector.shape_cast %597 : vector<8x8xf32> to vector<1x8x8xf32>
    %602 = tpu.concatenate %598, %599, %600, %601 in 0 : vector<1x8x8xf32>, vector<1x8x8xf32>, vector<1x8x8xf32>, vector<1x8x8xf32> -> vector<4x8x8xf32>
    %603 = vector.extract_strided_slice %584 {offsets = [0, 64], sizes = [8, 8], strides = [1, 1]} : vector<8x96xf32> to vector<8x8xf32>
    %604 = vector.extract_strided_slice %584 {offsets = [0, 72], sizes = [8, 8], strides = [1, 1]} : vector<8x96xf32> to vector<8x8xf32>
    %605 = vector.extract_strided_slice %584 {offsets = [0, 80], sizes = [8, 8], strides = [1, 1]} : vector<8x96xf32> to vector<8x8xf32>
    %606 = vector.extract_strided_slice %584 {offsets = [0, 88], sizes = [8, 8], strides = [1, 1]} : vector<8x96xf32> to vector<8x8xf32>
    %607 = vector.shape_cast %603 : vector<8x8xf32> to vector<1x8x8xf32>
    %608 = vector.shape_cast %604 : vector<8x8xf32> to vector<1x8x8xf32>
    %609 = vector.shape_cast %605 : vector<8x8xf32> to vector<1x8x8xf32>
    %610 = vector.shape_cast %606 : vector<8x8xf32> to vector<1x8x8xf32>
    %611 = tpu.concatenate %607, %608, %609, %610 in 0 : vector<1x8x8xf32>, vector<1x8x8xf32>, vector<1x8x8xf32>, vector<1x8x8xf32> -> vector<4x8x8xf32>
    %c0_197 = arith.constant 0 : index
    %c0_198 = arith.constant 0 : index
    %c0_199 = arith.constant 0 : index
    %612 = vector.load %arg6[%c0_197, %c0_198, %c0_199] : memref<2x32x32xf32, #tpu.memory_space<vmem>>, vector<1x32x32xf32>
    %613 = vector.shape_cast %612 : vector<1x32x32xf32> to vector<32x32xf32>
    %c0_200 = arith.constant 0 : index
    %c0_201 = arith.constant 0 : index
    %614 = vector.load %arg7[%c0_200, %c0_201] : memref<2x32xf32, #tpu.memory_space<vmem>>, vector<1x32xf32>
    %615 = vector.shape_cast %614 : vector<1x32xf32> to vector<32xf32>
    "tpu.trace_start"() <{level = 10 : i32, message = "hqd,hkd->hqk"}> : () -> ()
    %cst_202 = arith.constant dense<0.000000e+00> : vector<4x8x8xf32>
    %616 = tpu.matmul %593, %602, %cst_202 {dimension_numbers = #tpu.dot_dimension_numbers<[2], [2], [1], [1], [0, 0, 0, 1, 1, 1], [0], [0]>} : vector<4x8x8xf32>, vector<4x8x8xf32>, vector<4x8x8xf32> -> vector<4x8x8xf32>
    "tpu.trace_stop"() : () -> ()
    %cst_203 = arith.constant dense<0xFF800000> : vector<4x8xf32>
    %617 = vector.multi_reduction <maximumf>, %616, %cst_203 [2] : vector<4x8x8xf32> to vector<4x8xf32>
    %618 = vector.shape_cast %617 : vector<4x8xf32> to vector<4x8x1xf32>
    %619 = vector.broadcast %618 : vector<4x8x1xf32> to vector<4x8x8xf32>
    %620 = arith.subf %616, %619 : vector<4x8x8xf32>
    %621 = math.exp %620 : vector<4x8x8xf32>
    %cst_204 = arith.constant dense<0.000000e+00> : vector<4x8xf32>
    %622 = vector.multi_reduction <add>, %621, %cst_204 [2] : vector<4x8x8xf32> to vector<4x8xf32>
    %623 = vector.shape_cast %622 : vector<4x8xf32> to vector<4x8x1xf32>
    %624 = tpu.reciprocal %623 {approx = true} : vector<4x8x1xf32> -> vector<4x8x1xf32>
    %625 = vector.broadcast %624 : vector<4x8x1xf32> to vector<4x8x8xf32>
    %626 = arith.mulf %621, %625 : vector<4x8x8xf32>
    "tpu.trace_start"() <{level = 10 : i32, message = "hqk,hkd->hqd"}> : () -> ()
    %cst_205 = arith.constant dense<0.000000e+00> : vector<4x8x8xf32>
    %627 = tpu.matmul %626, %611, %cst_205 {dimension_numbers = #tpu.dot_dimension_numbers<[2], [1], [1], [2], [0, 0, 0, 1, 1, 2], [0], [0]>} : vector<4x8x8xf32>, vector<4x8x8xf32>, vector<4x8x8xf32> -> vector<4x8x8xf32>
    "tpu.trace_stop"() : () -> ()
    %628 = vector.extract_strided_slice %627 {offsets = [0, 0, 0], sizes = [1, 8, 8], strides = [1, 1, 1]} : vector<4x8x8xf32> to vector<1x8x8xf32>
    %629 = vector.shape_cast %628 : vector<1x8x8xf32> to vector<8x8xf32>
    %630 = vector.extract_strided_slice %627 {offsets = [1, 0, 0], sizes = [1, 8, 8], strides = [1, 1, 1]} : vector<4x8x8xf32> to vector<1x8x8xf32>
    %631 = vector.shape_cast %630 : vector<1x8x8xf32> to vector<8x8xf32>
    %632 = vector.extract_strided_slice %627 {offsets = [2, 0, 0], sizes = [1, 8, 8], strides = [1, 1, 1]} : vector<4x8x8xf32> to vector<1x8x8xf32>
    %633 = vector.shape_cast %632 : vector<1x8x8xf32> to vector<8x8xf32>
    %634 = vector.extract_strided_slice %627 {offsets = [3, 0, 0], sizes = [1, 8, 8], strides = [1, 1, 1]} : vector<4x8x8xf32> to vector<1x8x8xf32>
    %635 = vector.shape_cast %634 : vector<1x8x8xf32> to vector<8x8xf32>
    %636 = tpu.concatenate %629, %631, %633, %635 in 1 : vector<8x8xf32>, vector<8x8xf32>, vector<8x8xf32>, vector<8x8xf32> -> vector<8x32xf32>
    %cst_206 = arith.constant dense<0.000000e+00> : vector<8x32xf32>
    %637 = tpu.matmul %636, %613, %cst_206 {dimension_numbers = #tpu.dot_dimension_numbers<[1], [0], [0], [1], [0, 0, 1, 1], [], []>} : vector<8x32xf32>, vector<32x32xf32>, vector<8x32xf32> -> vector<8x32xf32>
    %638 = vector.shape_cast %615 : vector<32xf32> to vector<1x32xf32>
    %639 = vector.broadcast %638 : vector<1x32xf32> to vector<8x32xf32>
    %640 = arith.addf %637, %639 : vector<8x32xf32>
    %641 = arith.addf %548, %640 : vector<8x32xf32>
    %c1_207 = arith.constant 1 : index
    %c0_208 = arith.constant 0 : index
    %642 = vector.load %arg14[%c1_207, %c0_208] : memref<7x32xf32, #tpu.memory_space<vmem>>, vector<1x32xf32>
    %643 = vector.shape_cast %642 : vector<1x32xf32> to vector<32xf32>
    %c1_209 = arith.constant 1 : index
    %c0_210 = arith.constant 0 : index
    %644 = vector.load %arg15[%c1_209, %c0_210] : memref<7x32xf32, #tpu.memory_space<vmem>>, vector<1x32xf32>
    %645 = vector.shape_cast %644 : vector<1x32xf32> to vector<32xf32>
    %cst_211 = arith.constant dense<0.000000e+00> : vector<8xf32>
    %646 = vector.multi_reduction <add>, %641, %cst_211 [1] : vector<8x32xf32> to vector<8xf32>
    %647 = vector.shape_cast %646 : vector<8xf32> to vector<8x1xf32>
    %cst_212 = arith.constant 3.200000e+01 : f32
    %648 = vector.broadcast %cst_212 : f32 to vector<8x1xf32>
    %649 = arith.divf %647, %648 : vector<8x1xf32>
    %650 = arith.mulf %641, %641 : vector<8x32xf32>
    %cst_213 = arith.constant dense<0.000000e+00> : vector<8xf32>
    %651 = vector.multi_reduction <add>, %650, %cst_213 [1] : vector<8x32xf32> to vector<8xf32>
    %652 = vector.shape_cast %651 : vector<8xf32> to vector<8x1xf32>
    %cst_214 = arith.constant 3.200000e+01 : f32
    %653 = vector.broadcast %cst_214 : f32 to vector<8x1xf32>
    %654 = arith.divf %652, %653 : vector<8x1xf32>
    %655 = arith.mulf %649, %649 : vector<8x1xf32>
    %656 = arith.subf %654, %655 : vector<8x1xf32>
    %657 = vector.broadcast %649 : vector<8x1xf32> to vector<8x32xf32>
    %658 = arith.subf %641, %657 : vector<8x32xf32>
    %cst_215 = arith.constant 9.99999996E-13 : f32
    %659 = vector.broadcast %cst_215 : f32 to vector<8x1xf32>
    %660 = arith.addf %656, %659 : vector<8x1xf32>
    %661 = math.rsqrt %660 : vector<8x1xf32>
    %662 = vector.broadcast %661 : vector<8x1xf32> to vector<8x32xf32>
    %663 = arith.mulf %658, %662 : vector<8x32xf32>
    %664 = vector.shape_cast %643 : vector<32xf32> to vector<1x32xf32>
    %665 = vector.broadcast %664 : vector<1x32xf32> to vector<8x32xf32>
    %666 = arith.mulf %663, %665 : vector<8x32xf32>
    %667 = vector.shape_cast %645 : vector<32xf32> to vector<1x32xf32>
    %668 = vector.broadcast %667 : vector<1x32xf32> to vector<8x32xf32>
    %669 = arith.addf %666, %668 : vector<8x32xf32>
    %c0_216 = arith.constant 0 : index
    %c0_217 = arith.constant 0 : index
    %c0_218 = arith.constant 0 : index
    %670 = vector.load %arg8[%c0_216, %c0_217, %c0_218] : memref<2x32x32xf32, #tpu.memory_space<vmem>>, vector<1x32x32xf32>
    %671 = vector.shape_cast %670 : vector<1x32x32xf32> to vector<32x32xf32>
    %cst_219 = arith.constant dense<0.000000e+00> : vector<8x32xf32>
    %672 = tpu.matmul %669, %671, %cst_219 {dimension_numbers = #tpu.dot_dimension_numbers<[1], [0], [0], [1], [0, 0, 1, 1], [], []>} : vector<8x32xf32>, vector<32x32xf32>, vector<8x32xf32> -> vector<8x32xf32>
    %c0_220 = arith.constant 0 : index
    %c0_221 = arith.constant 0 : index
    %673 = vector.load %arg9[%c0_220, %c0_221] : memref<2x32xf32, #tpu.memory_space<vmem>>, vector<1x32xf32>
    %674 = vector.shape_cast %673 : vector<1x32xf32> to vector<32xf32>
    %675 = vector.shape_cast %674 : vector<32xf32> to vector<1x32xf32>
    %676 = vector.broadcast %675 : vector<1x32xf32> to vector<8x32xf32>
    %677 = arith.addf %672, %676 : vector<8x32xf32>
    %678 = vector.extract_strided_slice %677 {offsets = [0, 0], sizes = [8, 8], strides = [1, 1]} : vector<8x32xf32> to vector<8x8xf32>
    %679 = vector.extract_strided_slice %677 {offsets = [0, 8], sizes = [8, 8], strides = [1, 1]} : vector<8x32xf32> to vector<8x8xf32>
    %680 = vector.extract_strided_slice %677 {offsets = [0, 16], sizes = [8, 8], strides = [1, 1]} : vector<8x32xf32> to vector<8x8xf32>
    %681 = vector.extract_strided_slice %677 {offsets = [0, 24], sizes = [8, 8], strides = [1, 1]} : vector<8x32xf32> to vector<8x8xf32>
    %682 = vector.shape_cast %678 : vector<8x8xf32> to vector<1x8x8xf32>
    %683 = vector.shape_cast %679 : vector<8x8xf32> to vector<1x8x8xf32>
    %684 = vector.shape_cast %680 : vector<8x8xf32> to vector<1x8x8xf32>
    %685 = vector.shape_cast %681 : vector<8x8xf32> to vector<1x8x8xf32>
    %686 = tpu.concatenate %682, %683, %684, %685 in 0 : vector<1x8x8xf32>, vector<1x8x8xf32>, vector<1x8x8xf32>, vector<1x8x8xf32> -> vector<4x8x8xf32>
    %687 = vector.extract_strided_slice %547 {offsets = [0, 0], sizes = [16, 8], strides = [1, 1]} : vector<16x128xf32> to vector<16x8xf32>
    %688 = vector.extract_strided_slice %547 {offsets = [0, 8], sizes = [16, 8], strides = [1, 1]} : vector<16x128xf32> to vector<16x8xf32>
    %689 = vector.extract_strided_slice %547 {offsets = [0, 16], sizes = [16, 8], strides = [1, 1]} : vector<16x128xf32> to vector<16x8xf32>
    %690 = vector.extract_strided_slice %547 {offsets = [0, 24], sizes = [16, 8], strides = [1, 1]} : vector<16x128xf32> to vector<16x8xf32>
    %691 = vector.shape_cast %687 : vector<16x8xf32> to vector<1x16x8xf32>
    %692 = vector.shape_cast %688 : vector<16x8xf32> to vector<1x16x8xf32>
    %693 = vector.shape_cast %689 : vector<16x8xf32> to vector<1x16x8xf32>
    %694 = vector.shape_cast %690 : vector<16x8xf32> to vector<1x16x8xf32>
    %695 = tpu.concatenate %691, %692, %693, %694 in 0 : vector<1x16x8xf32>, vector<1x16x8xf32>, vector<1x16x8xf32>, vector<1x16x8xf32> -> vector<4x16x8xf32>
    %696 = vector.extract_strided_slice %547 {offsets = [0, 32], sizes = [16, 8], strides = [1, 1]} : vector<16x128xf32> to vector<16x8xf32>
    %697 = vector.extract_strided_slice %547 {offsets = [0, 40], sizes = [16, 8], strides = [1, 1]} : vector<16x128xf32> to vector<16x8xf32>
    %698 = vector.extract_strided_slice %547 {offsets = [0, 48], sizes = [16, 8], strides = [1, 1]} : vector<16x128xf32> to vector<16x8xf32>
    %699 = vector.extract_strided_slice %547 {offsets = [0, 56], sizes = [16, 8], strides = [1, 1]} : vector<16x128xf32> to vector<16x8xf32>
    %700 = vector.shape_cast %696 : vector<16x8xf32> to vector<1x16x8xf32>
    %701 = vector.shape_cast %697 : vector<16x8xf32> to vector<1x16x8xf32>
    %702 = vector.shape_cast %698 : vector<16x8xf32> to vector<1x16x8xf32>
    %703 = vector.shape_cast %699 : vector<16x8xf32> to vector<1x16x8xf32>
    %704 = tpu.concatenate %700, %701, %702, %703 in 0 : vector<1x16x8xf32>, vector<1x16x8xf32>, vector<1x16x8xf32>, vector<1x16x8xf32> -> vector<4x16x8xf32>
    %c0_222 = arith.constant 0 : index
    %c0_223 = arith.constant 0 : index
    %c0_224 = arith.constant 0 : index
    %705 = vector.load %arg12[%c0_222, %c0_223, %c0_224] : memref<2x32x32xf32, #tpu.memory_space<vmem>>, vector<1x32x32xf32>
    %706 = vector.shape_cast %705 : vector<1x32x32xf32> to vector<32x32xf32>
    %c0_225 = arith.constant 0 : index
    %c0_226 = arith.constant 0 : index
    %707 = vector.load %arg13[%c0_225, %c0_226] : memref<2x32xf32, #tpu.memory_space<vmem>>, vector<1x32xf32>
    %708 = vector.shape_cast %707 : vector<1x32xf32> to vector<32xf32>
    "tpu.trace_start"() <{level = 10 : i32, message = "hqd,hkd->hqk"}> : () -> ()
    %cst_227 = arith.constant dense<0.000000e+00> : vector<4x8x16xf32>
    %709 = tpu.matmul %686, %695, %cst_227 {dimension_numbers = #tpu.dot_dimension_numbers<[2], [2], [1], [1], [0, 0, 0, 1, 1, 1], [0], [0]>} : vector<4x8x8xf32>, vector<4x16x8xf32>, vector<4x8x16xf32> -> vector<4x8x16xf32>
    "tpu.trace_stop"() : () -> ()
    %710 = vector.shape_cast %540 : vector<1x16xf32> to vector<1x1x16xf32>
    %711 = vector.broadcast %710 : vector<1x1x16xf32> to vector<4x8x16xf32>
    %712 = arith.addf %709, %711 : vector<4x8x16xf32>
    %cst_228 = arith.constant dense<0xFF800000> : vector<4x8xf32>
    %713 = vector.multi_reduction <maximumf>, %712, %cst_228 [2] : vector<4x8x16xf32> to vector<4x8xf32>
    %714 = vector.shape_cast %713 : vector<4x8xf32> to vector<4x8x1xf32>
    %715 = vector.broadcast %714 : vector<4x8x1xf32> to vector<4x8x16xf32>
    %716 = arith.subf %712, %715 : vector<4x8x16xf32>
    %717 = math.exp %716 : vector<4x8x16xf32>
    %cst_229 = arith.constant dense<0.000000e+00> : vector<4x8xf32>
    %718 = vector.multi_reduction <add>, %717, %cst_229 [2] : vector<4x8x16xf32> to vector<4x8xf32>
    %719 = vector.shape_cast %718 : vector<4x8xf32> to vector<4x8x1xf32>
    %720 = tpu.reciprocal %719 {approx = true} : vector<4x8x1xf32> -> vector<4x8x1xf32>
    %721 = vector.broadcast %720 : vector<4x8x1xf32> to vector<4x8x16xf32>
    %722 = arith.mulf %717, %721 : vector<4x8x16xf32>
    "tpu.trace_start"() <{level = 10 : i32, message = "hqk,hkd->hqd"}> : () -> ()
    %cst_230 = arith.constant dense<0.000000e+00> : vector<4x8x8xf32>
    %723 = tpu.matmul %722, %704, %cst_230 {dimension_numbers = #tpu.dot_dimension_numbers<[2], [1], [1], [2], [0, 0, 0, 1, 1, 2], [0], [0]>} : vector<4x8x16xf32>, vector<4x16x8xf32>, vector<4x8x8xf32> -> vector<4x8x8xf32>
    "tpu.trace_stop"() : () -> ()
    %724 = vector.extract_strided_slice %723 {offsets = [0, 0, 0], sizes = [1, 8, 8], strides = [1, 1, 1]} : vector<4x8x8xf32> to vector<1x8x8xf32>
    %725 = vector.shape_cast %724 : vector<1x8x8xf32> to vector<8x8xf32>
    %726 = vector.extract_strided_slice %723 {offsets = [1, 0, 0], sizes = [1, 8, 8], strides = [1, 1, 1]} : vector<4x8x8xf32> to vector<1x8x8xf32>
    %727 = vector.shape_cast %726 : vector<1x8x8xf32> to vector<8x8xf32>
    %728 = vector.extract_strided_slice %723 {offsets = [2, 0, 0], sizes = [1, 8, 8], strides = [1, 1, 1]} : vector<4x8x8xf32> to vector<1x8x8xf32>
    %729 = vector.shape_cast %728 : vector<1x8x8xf32> to vector<8x8xf32>
    %730 = vector.extract_strided_slice %723 {offsets = [3, 0, 0], sizes = [1, 8, 8], strides = [1, 1, 1]} : vector<4x8x8xf32> to vector<1x8x8xf32>
    %731 = vector.shape_cast %730 : vector<1x8x8xf32> to vector<8x8xf32>
    %732 = tpu.concatenate %725, %727, %729, %731 in 1 : vector<8x8xf32>, vector<8x8xf32>, vector<8x8xf32>, vector<8x8xf32> -> vector<8x32xf32>
    %cst_231 = arith.constant dense<0.000000e+00> : vector<8x32xf32>
    %733 = tpu.matmul %732, %706, %cst_231 {dimension_numbers = #tpu.dot_dimension_numbers<[1], [0], [0], [1], [0, 0, 1, 1], [], []>} : vector<8x32xf32>, vector<32x32xf32>, vector<8x32xf32> -> vector<8x32xf32>
    %734 = vector.shape_cast %708 : vector<32xf32> to vector<1x32xf32>
    %735 = vector.broadcast %734 : vector<1x32xf32> to vector<8x32xf32>
    %736 = arith.addf %733, %735 : vector<8x32xf32>
    %737 = arith.addf %641, %736 : vector<8x32xf32>
    %c2_232 = arith.constant 2 : index
    %c0_233 = arith.constant 0 : index
    %738 = vector.load %arg14[%c2_232, %c0_233] : memref<7x32xf32, #tpu.memory_space<vmem>>, vector<1x32xf32>
    %739 = vector.shape_cast %738 : vector<1x32xf32> to vector<32xf32>
    %c2_234 = arith.constant 2 : index
    %c0_235 = arith.constant 0 : index
    %740 = vector.load %arg15[%c2_234, %c0_235] : memref<7x32xf32, #tpu.memory_space<vmem>>, vector<1x32xf32>
    %741 = vector.shape_cast %740 : vector<1x32xf32> to vector<32xf32>
    %cst_236 = arith.constant dense<0.000000e+00> : vector<8xf32>
    %742 = vector.multi_reduction <add>, %737, %cst_236 [1] : vector<8x32xf32> to vector<8xf32>
    %743 = vector.shape_cast %742 : vector<8xf32> to vector<8x1xf32>
    %cst_237 = arith.constant 3.200000e+01 : f32
    %744 = vector.broadcast %cst_237 : f32 to vector<8x1xf32>
    %745 = arith.divf %743, %744 : vector<8x1xf32>
    %746 = arith.mulf %737, %737 : vector<8x32xf32>
    %cst_238 = arith.constant dense<0.000000e+00> : vector<8xf32>
    %747 = vector.multi_reduction <add>, %746, %cst_238 [1] : vector<8x32xf32> to vector<8xf32>
    %748 = vector.shape_cast %747 : vector<8xf32> to vector<8x1xf32>
    %cst_239 = arith.constant 3.200000e+01 : f32
    %749 = vector.broadcast %cst_239 : f32 to vector<8x1xf32>
    %750 = arith.divf %748, %749 : vector<8x1xf32>
    %751 = arith.mulf %745, %745 : vector<8x1xf32>
    %752 = arith.subf %750, %751 : vector<8x1xf32>
    %753 = vector.broadcast %745 : vector<8x1xf32> to vector<8x32xf32>
    %754 = arith.subf %737, %753 : vector<8x32xf32>
    %cst_240 = arith.constant 9.99999996E-13 : f32
    %755 = vector.broadcast %cst_240 : f32 to vector<8x1xf32>
    %756 = arith.addf %752, %755 : vector<8x1xf32>
    %757 = math.rsqrt %756 : vector<8x1xf32>
    %758 = vector.broadcast %757 : vector<8x1xf32> to vector<8x32xf32>
    %759 = arith.mulf %754, %758 : vector<8x32xf32>
    %760 = vector.shape_cast %739 : vector<32xf32> to vector<1x32xf32>
    %761 = vector.broadcast %760 : vector<1x32xf32> to vector<8x32xf32>
    %762 = arith.mulf %759, %761 : vector<8x32xf32>
    %763 = vector.shape_cast %741 : vector<32xf32> to vector<1x32xf32>
    %764 = vector.broadcast %763 : vector<1x32xf32> to vector<8x32xf32>
    %765 = arith.addf %762, %764 : vector<8x32xf32>
    %c0_241 = arith.constant 0 : index
    %c0_242 = arith.constant 0 : index
    %c0_243 = arith.constant 0 : index
    %766 = vector.load %arg16[%c0_241, %c0_242, %c0_243] : memref<2x32x64xf32, #tpu.memory_space<vmem>>, vector<1x32x64xf32>
    %767 = vector.shape_cast %766 : vector<1x32x64xf32> to vector<32x64xf32>
    %cst_244 = arith.constant dense<0.000000e+00> : vector<8x64xf32>
    %768 = tpu.matmul %765, %767, %cst_244 {dimension_numbers = #tpu.dot_dimension_numbers<[1], [0], [0], [1], [0, 0, 1, 1], [], []>} : vector<8x32xf32>, vector<32x64xf32>, vector<8x64xf32> -> vector<8x64xf32>
    %c0_245 = arith.constant 0 : index
    %c0_246 = arith.constant 0 : index
    %769 = vector.load %arg17[%c0_245, %c0_246] : memref<2x64xf32, #tpu.memory_space<vmem>>, vector<1x64xf32>
    %770 = vector.shape_cast %769 : vector<1x64xf32> to vector<64xf32>
    %771 = vector.shape_cast %770 : vector<64xf32> to vector<1x64xf32>
    %772 = vector.broadcast %771 : vector<1x64xf32> to vector<8x64xf32>
    %773 = arith.addf %768, %772 : vector<8x64xf32>
    %774 = arith.mulf %773, %773 : vector<8x64xf32>
    %775 = arith.mulf %773, %774 : vector<8x64xf32>
    %cst_247 = arith.constant 4.471500e-02 : f32
    %776 = vector.broadcast %cst_247 : f32 to vector<8x64xf32>
    %777 = arith.mulf %776, %775 : vector<8x64xf32>
    %778 = arith.addf %773, %777 : vector<8x64xf32>
    %cst_248 = arith.constant 0.797884583 : f32
    %779 = vector.broadcast %cst_248 : f32 to vector<8x64xf32>
    %780 = arith.mulf %779, %778 : vector<8x64xf32>
    %781 = math.tanh %780 : vector<8x64xf32>
    %cst_249 = arith.constant 1.000000e+00 : f32
    %782 = vector.broadcast %cst_249 : f32 to vector<8x64xf32>
    %783 = arith.addf %782, %781 : vector<8x64xf32>
    %cst_250 = arith.constant 5.000000e-01 : f32
    %784 = vector.broadcast %cst_250 : f32 to vector<8x64xf32>
    %785 = arith.mulf %784, %783 : vector<8x64xf32>
    %786 = arith.mulf %773, %785 : vector<8x64xf32>
    %c0_251 = arith.constant 0 : index
    %c0_252 = arith.constant 0 : index
    %c0_253 = arith.constant 0 : index
    %787 = vector.load %arg18[%c0_251, %c0_252, %c0_253] : memref<2x64x32xf32, #tpu.memory_space<vmem>>, vector<1x64x32xf32>
    %788 = vector.shape_cast %787 : vector<1x64x32xf32> to vector<64x32xf32>
    %cst_254 = arith.constant dense<0.000000e+00> : vector<8x32xf32>
    %789 = tpu.matmul %786, %788, %cst_254 {dimension_numbers = #tpu.dot_dimension_numbers<[1], [0], [0], [1], [0, 0, 1, 1], [], []>} : vector<8x64xf32>, vector<64x32xf32>, vector<8x32xf32> -> vector<8x32xf32>
    %c0_255 = arith.constant 0 : index
    %c0_256 = arith.constant 0 : index
    %790 = vector.load %arg19[%c0_255, %c0_256] : memref<2x32xf32, #tpu.memory_space<vmem>>, vector<1x32xf32>
    %791 = vector.shape_cast %790 : vector<1x32xf32> to vector<32xf32>
    %792 = vector.shape_cast %791 : vector<32xf32> to vector<1x32xf32>
    %793 = vector.broadcast %792 : vector<1x32xf32> to vector<8x32xf32>
    %794 = arith.addf %789, %793 : vector<8x32xf32>
    %795 = arith.addf %737, %794 : vector<8x32xf32>
    %c3_257 = arith.constant 3 : index
    %c0_258 = arith.constant 0 : index
    %796 = vector.load %arg14[%c3_257, %c0_258] : memref<7x32xf32, #tpu.memory_space<vmem>>, vector<1x32xf32>
    %797 = vector.shape_cast %796 : vector<1x32xf32> to vector<32xf32>
    %c3_259 = arith.constant 3 : index
    %c0_260 = arith.constant 0 : index
    %798 = vector.load %arg15[%c3_259, %c0_260] : memref<7x32xf32, #tpu.memory_space<vmem>>, vector<1x32xf32>
    %799 = vector.shape_cast %798 : vector<1x32xf32> to vector<32xf32>
    %cst_261 = arith.constant dense<0.000000e+00> : vector<8xf32>
    %800 = vector.multi_reduction <add>, %795, %cst_261 [1] : vector<8x32xf32> to vector<8xf32>
    %801 = vector.shape_cast %800 : vector<8xf32> to vector<8x1xf32>
    %cst_262 = arith.constant 3.200000e+01 : f32
    %802 = vector.broadcast %cst_262 : f32 to vector<8x1xf32>
    %803 = arith.divf %801, %802 : vector<8x1xf32>
    %804 = arith.mulf %795, %795 : vector<8x32xf32>
    %cst_263 = arith.constant dense<0.000000e+00> : vector<8xf32>
    %805 = vector.multi_reduction <add>, %804, %cst_263 [1] : vector<8x32xf32> to vector<8xf32>
    %806 = vector.shape_cast %805 : vector<8xf32> to vector<8x1xf32>
    %cst_264 = arith.constant 3.200000e+01 : f32
    %807 = vector.broadcast %cst_264 : f32 to vector<8x1xf32>
    %808 = arith.divf %806, %807 : vector<8x1xf32>
    %809 = arith.mulf %803, %803 : vector<8x1xf32>
    %810 = arith.subf %808, %809 : vector<8x1xf32>
    %811 = vector.broadcast %803 : vector<8x1xf32> to vector<8x32xf32>
    %812 = arith.subf %795, %811 : vector<8x32xf32>
    %cst_265 = arith.constant 9.99999996E-13 : f32
    %813 = vector.broadcast %cst_265 : f32 to vector<8x1xf32>
    %814 = arith.addf %810, %813 : vector<8x1xf32>
    %815 = math.rsqrt %814 : vector<8x1xf32>
    %816 = vector.broadcast %815 : vector<8x1xf32> to vector<8x32xf32>
    %817 = arith.mulf %812, %816 : vector<8x32xf32>
    %818 = vector.shape_cast %797 : vector<32xf32> to vector<1x32xf32>
    %819 = vector.broadcast %818 : vector<1x32xf32> to vector<8x32xf32>
    %820 = arith.mulf %817, %819 : vector<8x32xf32>
    %821 = vector.shape_cast %799 : vector<32xf32> to vector<1x32xf32>
    %822 = vector.broadcast %821 : vector<1x32xf32> to vector<8x32xf32>
    %823 = arith.addf %820, %822 : vector<8x32xf32>
    %c1_266 = arith.constant 1 : index
    %c0_267 = arith.constant 0 : index
    %c0_268 = arith.constant 0 : index
    %824 = vector.load %arg4[%c1_266, %c0_267, %c0_268] : memref<2x32x96xf32, #tpu.memory_space<vmem>>, vector<1x32x96xf32>
    %825 = vector.shape_cast %824 : vector<1x32x96xf32> to vector<32x96xf32>
    %cst_269 = arith.constant dense<0.000000e+00> : vector<8x96xf32>
    %826 = tpu.matmul %823, %825, %cst_269 {dimension_numbers = #tpu.dot_dimension_numbers<[1], [0], [0], [1], [0, 0, 1, 1], [], []>} : vector<8x32xf32>, vector<32x96xf32>, vector<8x96xf32> -> vector<8x96xf32>
    %c1_270 = arith.constant 1 : index
    %c0_271 = arith.constant 0 : index
    %827 = vector.load %arg5[%c1_270, %c0_271] : memref<2x96xf32, #tpu.memory_space<vmem>>, vector<1x96xf32>
    %828 = vector.shape_cast %827 : vector<1x96xf32> to vector<96xf32>
    %829 = vector.shape_cast %828 : vector<96xf32> to vector<1x96xf32>
    %830 = vector.broadcast %829 : vector<1x96xf32> to vector<8x96xf32>
    %831 = arith.addf %826, %830 : vector<8x96xf32>
    %832 = vector.extract_strided_slice %831 {offsets = [0, 0], sizes = [8, 8], strides = [1, 1]} : vector<8x96xf32> to vector<8x8xf32>
    %833 = vector.extract_strided_slice %831 {offsets = [0, 8], sizes = [8, 8], strides = [1, 1]} : vector<8x96xf32> to vector<8x8xf32>
    %834 = vector.extract_strided_slice %831 {offsets = [0, 16], sizes = [8, 8], strides = [1, 1]} : vector<8x96xf32> to vector<8x8xf32>
    %835 = vector.extract_strided_slice %831 {offsets = [0, 24], sizes = [8, 8], strides = [1, 1]} : vector<8x96xf32> to vector<8x8xf32>
    %836 = vector.shape_cast %832 : vector<8x8xf32> to vector<1x8x8xf32>
    %837 = vector.shape_cast %833 : vector<8x8xf32> to vector<1x8x8xf32>
    %838 = vector.shape_cast %834 : vector<8x8xf32> to vector<1x8x8xf32>
    %839 = vector.shape_cast %835 : vector<8x8xf32> to vector<1x8x8xf32>
    %840 = tpu.concatenate %836, %837, %838, %839 in 0 : vector<1x8x8xf32>, vector<1x8x8xf32>, vector<1x8x8xf32>, vector<1x8x8xf32> -> vector<4x8x8xf32>
    %841 = vector.extract_strided_slice %831 {offsets = [0, 32], sizes = [8, 8], strides = [1, 1]} : vector<8x96xf32> to vector<8x8xf32>
    %842 = vector.extract_strided_slice %831 {offsets = [0, 40], sizes = [8, 8], strides = [1, 1]} : vector<8x96xf32> to vector<8x8xf32>
    %843 = vector.extract_strided_slice %831 {offsets = [0, 48], sizes = [8, 8], strides = [1, 1]} : vector<8x96xf32> to vector<8x8xf32>
    %844 = vector.extract_strided_slice %831 {offsets = [0, 56], sizes = [8, 8], strides = [1, 1]} : vector<8x96xf32> to vector<8x8xf32>
    %845 = vector.shape_cast %841 : vector<8x8xf32> to vector<1x8x8xf32>
    %846 = vector.shape_cast %842 : vector<8x8xf32> to vector<1x8x8xf32>
    %847 = vector.shape_cast %843 : vector<8x8xf32> to vector<1x8x8xf32>
    %848 = vector.shape_cast %844 : vector<8x8xf32> to vector<1x8x8xf32>
    %849 = tpu.concatenate %845, %846, %847, %848 in 0 : vector<1x8x8xf32>, vector<1x8x8xf32>, vector<1x8x8xf32>, vector<1x8x8xf32> -> vector<4x8x8xf32>
    %850 = vector.extract_strided_slice %831 {offsets = [0, 64], sizes = [8, 8], strides = [1, 1]} : vector<8x96xf32> to vector<8x8xf32>
    %851 = vector.extract_strided_slice %831 {offsets = [0, 72], sizes = [8, 8], strides = [1, 1]} : vector<8x96xf32> to vector<8x8xf32>
    %852 = vector.extract_strided_slice %831 {offsets = [0, 80], sizes = [8, 8], strides = [1, 1]} : vector<8x96xf32> to vector<8x8xf32>
    %853 = vector.extract_strided_slice %831 {offsets = [0, 88], sizes = [8, 8], strides = [1, 1]} : vector<8x96xf32> to vector<8x8xf32>
    %854 = vector.shape_cast %850 : vector<8x8xf32> to vector<1x8x8xf32>
    %855 = vector.shape_cast %851 : vector<8x8xf32> to vector<1x8x8xf32>
    %856 = vector.shape_cast %852 : vector<8x8xf32> to vector<1x8x8xf32>
    %857 = vector.shape_cast %853 : vector<8x8xf32> to vector<1x8x8xf32>
    %858 = tpu.concatenate %854, %855, %856, %857 in 0 : vector<1x8x8xf32>, vector<1x8x8xf32>, vector<1x8x8xf32>, vector<1x8x8xf32> -> vector<4x8x8xf32>
    %c1_272 = arith.constant 1 : index
    %c0_273 = arith.constant 0 : index
    %c0_274 = arith.constant 0 : index
    %859 = vector.load %arg6[%c1_272, %c0_273, %c0_274] : memref<2x32x32xf32, #tpu.memory_space<vmem>>, vector<1x32x32xf32>
    %860 = vector.shape_cast %859 : vector<1x32x32xf32> to vector<32x32xf32>
    %c1_275 = arith.constant 1 : index
    %c0_276 = arith.constant 0 : index
    %861 = vector.load %arg7[%c1_275, %c0_276] : memref<2x32xf32, #tpu.memory_space<vmem>>, vector<1x32xf32>
    %862 = vector.shape_cast %861 : vector<1x32xf32> to vector<32xf32>
    "tpu.trace_start"() <{level = 10 : i32, message = "hqd,hkd->hqk"}> : () -> ()
    %cst_277 = arith.constant dense<0.000000e+00> : vector<4x8x8xf32>
    %863 = tpu.matmul %840, %849, %cst_277 {dimension_numbers = #tpu.dot_dimension_numbers<[2], [2], [1], [1], [0, 0, 0, 1, 1, 1], [0], [0]>} : vector<4x8x8xf32>, vector<4x8x8xf32>, vector<4x8x8xf32> -> vector<4x8x8xf32>
    "tpu.trace_stop"() : () -> ()
    %cst_278 = arith.constant dense<0xFF800000> : vector<4x8xf32>
    %864 = vector.multi_reduction <maximumf>, %863, %cst_278 [2] : vector<4x8x8xf32> to vector<4x8xf32>
    %865 = vector.shape_cast %864 : vector<4x8xf32> to vector<4x8x1xf32>
    %866 = vector.broadcast %865 : vector<4x8x1xf32> to vector<4x8x8xf32>
    %867 = arith.subf %863, %866 : vector<4x8x8xf32>
    %868 = math.exp %867 : vector<4x8x8xf32>
    %cst_279 = arith.constant dense<0.000000e+00> : vector<4x8xf32>
    %869 = vector.multi_reduction <add>, %868, %cst_279 [2] : vector<4x8x8xf32> to vector<4x8xf32>
    %870 = vector.shape_cast %869 : vector<4x8xf32> to vector<4x8x1xf32>
    %871 = tpu.reciprocal %870 {approx = true} : vector<4x8x1xf32> -> vector<4x8x1xf32>
    %872 = vector.broadcast %871 : vector<4x8x1xf32> to vector<4x8x8xf32>
    %873 = arith.mulf %868, %872 : vector<4x8x8xf32>
    "tpu.trace_start"() <{level = 10 : i32, message = "hqk,hkd->hqd"}> : () -> ()
    %cst_280 = arith.constant dense<0.000000e+00> : vector<4x8x8xf32>
    %874 = tpu.matmul %873, %858, %cst_280 {dimension_numbers = #tpu.dot_dimension_numbers<[2], [1], [1], [2], [0, 0, 0, 1, 1, 2], [0], [0]>} : vector<4x8x8xf32>, vector<4x8x8xf32>, vector<4x8x8xf32> -> vector<4x8x8xf32>
    "tpu.trace_stop"() : () -> ()
    %875 = vector.extract_strided_slice %874 {offsets = [0, 0, 0], sizes = [1, 8, 8], strides = [1, 1, 1]} : vector<4x8x8xf32> to vector<1x8x8xf32>
    %876 = vector.shape_cast %875 : vector<1x8x8xf32> to vector<8x8xf32>
    %877 = vector.extract_strided_slice %874 {offsets = [1, 0, 0], sizes = [1, 8, 8], strides = [1, 1, 1]} : vector<4x8x8xf32> to vector<1x8x8xf32>
    %878 = vector.shape_cast %877 : vector<1x8x8xf32> to vector<8x8xf32>
    %879 = vector.extract_strided_slice %874 {offsets = [2, 0, 0], sizes = [1, 8, 8], strides = [1, 1, 1]} : vector<4x8x8xf32> to vector<1x8x8xf32>
    %880 = vector.shape_cast %879 : vector<1x8x8xf32> to vector<8x8xf32>
    %881 = vector.extract_strided_slice %874 {offsets = [3, 0, 0], sizes = [1, 8, 8], strides = [1, 1, 1]} : vector<4x8x8xf32> to vector<1x8x8xf32>
    %882 = vector.shape_cast %881 : vector<1x8x8xf32> to vector<8x8xf32>
    %883 = tpu.concatenate %876, %878, %880, %882 in 1 : vector<8x8xf32>, vector<8x8xf32>, vector<8x8xf32>, vector<8x8xf32> -> vector<8x32xf32>
    %cst_281 = arith.constant dense<0.000000e+00> : vector<8x32xf32>
    %884 = tpu.matmul %883, %860, %cst_281 {dimension_numbers = #tpu.dot_dimension_numbers<[1], [0], [0], [1], [0, 0, 1, 1], [], []>} : vector<8x32xf32>, vector<32x32xf32>, vector<8x32xf32> -> vector<8x32xf32>
    %885 = vector.shape_cast %862 : vector<32xf32> to vector<1x32xf32>
    %886 = vector.broadcast %885 : vector<1x32xf32> to vector<8x32xf32>
    %887 = arith.addf %884, %886 : vector<8x32xf32>
    %888 = arith.addf %795, %887 : vector<8x32xf32>
    %c4_282 = arith.constant 4 : index
    %c0_283 = arith.constant 0 : index
    %889 = vector.load %arg14[%c4_282, %c0_283] : memref<7x32xf32, #tpu.memory_space<vmem>>, vector<1x32xf32>
    %890 = vector.shape_cast %889 : vector<1x32xf32> to vector<32xf32>
    %c4_284 = arith.constant 4 : index
    %c0_285 = arith.constant 0 : index
    %891 = vector.load %arg15[%c4_284, %c0_285] : memref<7x32xf32, #tpu.memory_space<vmem>>, vector<1x32xf32>
    %892 = vector.shape_cast %891 : vector<1x32xf32> to vector<32xf32>
    %cst_286 = arith.constant dense<0.000000e+00> : vector<8xf32>
    %893 = vector.multi_reduction <add>, %888, %cst_286 [1] : vector<8x32xf32> to vector<8xf32>
    %894 = vector.shape_cast %893 : vector<8xf32> to vector<8x1xf32>
    %cst_287 = arith.constant 3.200000e+01 : f32
    %895 = vector.broadcast %cst_287 : f32 to vector<8x1xf32>
    %896 = arith.divf %894, %895 : vector<8x1xf32>
    %897 = arith.mulf %888, %888 : vector<8x32xf32>
    %cst_288 = arith.constant dense<0.000000e+00> : vector<8xf32>
    %898 = vector.multi_reduction <add>, %897, %cst_288 [1] : vector<8x32xf32> to vector<8xf32>
    %899 = vector.shape_cast %898 : vector<8xf32> to vector<8x1xf32>
    %cst_289 = arith.constant 3.200000e+01 : f32
    %900 = vector.broadcast %cst_289 : f32 to vector<8x1xf32>
    %901 = arith.divf %899, %900 : vector<8x1xf32>
    %902 = arith.mulf %896, %896 : vector<8x1xf32>
    %903 = arith.subf %901, %902 : vector<8x1xf32>
    %904 = vector.broadcast %896 : vector<8x1xf32> to vector<8x32xf32>
    %905 = arith.subf %888, %904 : vector<8x32xf32>
    %cst_290 = arith.constant 9.99999996E-13 : f32
    %906 = vector.broadcast %cst_290 : f32 to vector<8x1xf32>
    %907 = arith.addf %903, %906 : vector<8x1xf32>
    %908 = math.rsqrt %907 : vector<8x1xf32>
    %909 = vector.broadcast %908 : vector<8x1xf32> to vector<8x32xf32>
    %910 = arith.mulf %905, %909 : vector<8x32xf32>
    %911 = vector.shape_cast %890 : vector<32xf32> to vector<1x32xf32>
    %912 = vector.broadcast %911 : vector<1x32xf32> to vector<8x32xf32>
    %913 = arith.mulf %910, %912 : vector<8x32xf32>
    %914 = vector.shape_cast %892 : vector<32xf32> to vector<1x32xf32>
    %915 = vector.broadcast %914 : vector<1x32xf32> to vector<8x32xf32>
    %916 = arith.addf %913, %915 : vector<8x32xf32>
    %c1_291 = arith.constant 1 : index
    %c0_292 = arith.constant 0 : index
    %c0_293 = arith.constant 0 : index
    %917 = vector.load %arg8[%c1_291, %c0_292, %c0_293] : memref<2x32x32xf32, #tpu.memory_space<vmem>>, vector<1x32x32xf32>
    %918 = vector.shape_cast %917 : vector<1x32x32xf32> to vector<32x32xf32>
    %cst_294 = arith.constant dense<0.000000e+00> : vector<8x32xf32>
    %919 = tpu.matmul %916, %918, %cst_294 {dimension_numbers = #tpu.dot_dimension_numbers<[1], [0], [0], [1], [0, 0, 1, 1], [], []>} : vector<8x32xf32>, vector<32x32xf32>, vector<8x32xf32> -> vector<8x32xf32>
    %c1_295 = arith.constant 1 : index
    %c0_296 = arith.constant 0 : index
    %920 = vector.load %arg9[%c1_295, %c0_296] : memref<2x32xf32, #tpu.memory_space<vmem>>, vector<1x32xf32>
    %921 = vector.shape_cast %920 : vector<1x32xf32> to vector<32xf32>
    %922 = vector.shape_cast %921 : vector<32xf32> to vector<1x32xf32>
    %923 = vector.broadcast %922 : vector<1x32xf32> to vector<8x32xf32>
    %924 = arith.addf %919, %923 : vector<8x32xf32>
    %925 = vector.extract_strided_slice %924 {offsets = [0, 0], sizes = [8, 8], strides = [1, 1]} : vector<8x32xf32> to vector<8x8xf32>
    %926 = vector.extract_strided_slice %924 {offsets = [0, 8], sizes = [8, 8], strides = [1, 1]} : vector<8x32xf32> to vector<8x8xf32>
    %927 = vector.extract_strided_slice %924 {offsets = [0, 16], sizes = [8, 8], strides = [1, 1]} : vector<8x32xf32> to vector<8x8xf32>
    %928 = vector.extract_strided_slice %924 {offsets = [0, 24], sizes = [8, 8], strides = [1, 1]} : vector<8x32xf32> to vector<8x8xf32>
    %929 = vector.shape_cast %925 : vector<8x8xf32> to vector<1x8x8xf32>
    %930 = vector.shape_cast %926 : vector<8x8xf32> to vector<1x8x8xf32>
    %931 = vector.shape_cast %927 : vector<8x8xf32> to vector<1x8x8xf32>
    %932 = vector.shape_cast %928 : vector<8x8xf32> to vector<1x8x8xf32>
    %933 = tpu.concatenate %929, %930, %931, %932 in 0 : vector<1x8x8xf32>, vector<1x8x8xf32>, vector<1x8x8xf32>, vector<1x8x8xf32> -> vector<4x8x8xf32>
    %934 = vector.extract_strided_slice %547 {offsets = [0, 64], sizes = [16, 8], strides = [1, 1]} : vector<16x128xf32> to vector<16x8xf32>
    %935 = vector.extract_strided_slice %547 {offsets = [0, 72], sizes = [16, 8], strides = [1, 1]} : vector<16x128xf32> to vector<16x8xf32>
    %936 = vector.extract_strided_slice %547 {offsets = [0, 80], sizes = [16, 8], strides = [1, 1]} : vector<16x128xf32> to vector<16x8xf32>
    %937 = vector.extract_strided_slice %547 {offsets = [0, 88], sizes = [16, 8], strides = [1, 1]} : vector<16x128xf32> to vector<16x8xf32>
    %938 = vector.shape_cast %934 : vector<16x8xf32> to vector<1x16x8xf32>
    %939 = vector.shape_cast %935 : vector<16x8xf32> to vector<1x16x8xf32>
    %940 = vector.shape_cast %936 : vector<16x8xf32> to vector<1x16x8xf32>
    %941 = vector.shape_cast %937 : vector<16x8xf32> to vector<1x16x8xf32>
    %942 = tpu.concatenate %938, %939, %940, %941 in 0 : vector<1x16x8xf32>, vector<1x16x8xf32>, vector<1x16x8xf32>, vector<1x16x8xf32> -> vector<4x16x8xf32>
    %943 = vector.extract_strided_slice %547 {offsets = [0, 96], sizes = [16, 8], strides = [1, 1]} : vector<16x128xf32> to vector<16x8xf32>
    %944 = vector.extract_strided_slice %547 {offsets = [0, 104], sizes = [16, 8], strides = [1, 1]} : vector<16x128xf32> to vector<16x8xf32>
    %945 = vector.extract_strided_slice %547 {offsets = [0, 112], sizes = [16, 8], strides = [1, 1]} : vector<16x128xf32> to vector<16x8xf32>
    %946 = vector.extract_strided_slice %547 {offsets = [0, 120], sizes = [16, 8], strides = [1, 1]} : vector<16x128xf32> to vector<16x8xf32>
    %947 = vector.shape_cast %943 : vector<16x8xf32> to vector<1x16x8xf32>
    %948 = vector.shape_cast %944 : vector<16x8xf32> to vector<1x16x8xf32>
    %949 = vector.shape_cast %945 : vector<16x8xf32> to vector<1x16x8xf32>
    %950 = vector.shape_cast %946 : vector<16x8xf32> to vector<1x16x8xf32>
    %951 = tpu.concatenate %947, %948, %949, %950 in 0 : vector<1x16x8xf32>, vector<1x16x8xf32>, vector<1x16x8xf32>, vector<1x16x8xf32> -> vector<4x16x8xf32>
    %c1_297 = arith.constant 1 : index
    %c0_298 = arith.constant 0 : index
    %c0_299 = arith.constant 0 : index
    %952 = vector.load %arg12[%c1_297, %c0_298, %c0_299] : memref<2x32x32xf32, #tpu.memory_space<vmem>>, vector<1x32x32xf32>
    %953 = vector.shape_cast %952 : vector<1x32x32xf32> to vector<32x32xf32>
    %c1_300 = arith.constant 1 : index
    %c0_301 = arith.constant 0 : index
    %954 = vector.load %arg13[%c1_300, %c0_301] : memref<2x32xf32, #tpu.memory_space<vmem>>, vector<1x32xf32>
    %955 = vector.shape_cast %954 : vector<1x32xf32> to vector<32xf32>
    "tpu.trace_start"() <{level = 10 : i32, message = "hqd,hkd->hqk"}> : () -> ()
    %cst_302 = arith.constant dense<0.000000e+00> : vector<4x8x16xf32>
    %956 = tpu.matmul %933, %942, %cst_302 {dimension_numbers = #tpu.dot_dimension_numbers<[2], [2], [1], [1], [0, 0, 0, 1, 1, 1], [0], [0]>} : vector<4x8x8xf32>, vector<4x16x8xf32>, vector<4x8x16xf32> -> vector<4x8x16xf32>
    "tpu.trace_stop"() : () -> ()
    %957 = vector.shape_cast %540 : vector<1x16xf32> to vector<1x1x16xf32>
    %958 = vector.broadcast %957 : vector<1x1x16xf32> to vector<4x8x16xf32>
    %959 = arith.addf %956, %958 : vector<4x8x16xf32>
    %cst_303 = arith.constant dense<0xFF800000> : vector<4x8xf32>
    %960 = vector.multi_reduction <maximumf>, %959, %cst_303 [2] : vector<4x8x16xf32> to vector<4x8xf32>
    %961 = vector.shape_cast %960 : vector<4x8xf32> to vector<4x8x1xf32>
    %962 = vector.broadcast %961 : vector<4x8x1xf32> to vector<4x8x16xf32>
    %963 = arith.subf %959, %962 : vector<4x8x16xf32>
    %964 = math.exp %963 : vector<4x8x16xf32>
    %cst_304 = arith.constant dense<0.000000e+00> : vector<4x8xf32>
    %965 = vector.multi_reduction <add>, %964, %cst_304 [2] : vector<4x8x16xf32> to vector<4x8xf32>
    %966 = vector.shape_cast %965 : vector<4x8xf32> to vector<4x8x1xf32>
    %967 = tpu.reciprocal %966 {approx = true} : vector<4x8x1xf32> -> vector<4x8x1xf32>
    %968 = vector.broadcast %967 : vector<4x8x1xf32> to vector<4x8x16xf32>
    %969 = arith.mulf %964, %968 : vector<4x8x16xf32>
    "tpu.trace_start"() <{level = 10 : i32, message = "hqk,hkd->hqd"}> : () -> ()
    %cst_305 = arith.constant dense<0.000000e+00> : vector<4x8x8xf32>
    %970 = tpu.matmul %969, %951, %cst_305 {dimension_numbers = #tpu.dot_dimension_numbers<[2], [1], [1], [2], [0, 0, 0, 1, 1, 2], [0], [0]>} : vector<4x8x16xf32>, vector<4x16x8xf32>, vector<4x8x8xf32> -> vector<4x8x8xf32>
    "tpu.trace_stop"() : () -> ()
    %971 = vector.extract_strided_slice %970 {offsets = [0, 0, 0], sizes = [1, 8, 8], strides = [1, 1, 1]} : vector<4x8x8xf32> to vector<1x8x8xf32>
    %972 = vector.shape_cast %971 : vector<1x8x8xf32> to vector<8x8xf32>
    %973 = vector.extract_strided_slice %970 {offsets = [1, 0, 0], sizes = [1, 8, 8], strides = [1, 1, 1]} : vector<4x8x8xf32> to vector<1x8x8xf32>
    %974 = vector.shape_cast %973 : vector<1x8x8xf32> to vector<8x8xf32>
    %975 = vector.extract_strided_slice %970 {offsets = [2, 0, 0], sizes = [1, 8, 8], strides = [1, 1, 1]} : vector<4x8x8xf32> to vector<1x8x8xf32>
    %976 = vector.shape_cast %975 : vector<1x8x8xf32> to vector<8x8xf32>
    %977 = vector.extract_strided_slice %970 {offsets = [3, 0, 0], sizes = [1, 8, 8], strides = [1, 1, 1]} : vector<4x8x8xf32> to vector<1x8x8xf32>
    %978 = vector.shape_cast %977 : vector<1x8x8xf32> to vector<8x8xf32>
    %979 = tpu.concatenate %972, %974, %976, %978 in 1 : vector<8x8xf32>, vector<8x8xf32>, vector<8x8xf32>, vector<8x8xf32> -> vector<8x32xf32>
    %cst_306 = arith.constant dense<0.000000e+00> : vector<8x32xf32>
    %980 = tpu.matmul %979, %953, %cst_306 {dimension_numbers = #tpu.dot_dimension_numbers<[1], [0], [0], [1], [0, 0, 1, 1], [], []>} : vector<8x32xf32>, vector<32x32xf32>, vector<8x32xf32> -> vector<8x32xf32>
    %981 = vector.shape_cast %955 : vector<32xf32> to vector<1x32xf32>
    %982 = vector.broadcast %981 : vector<1x32xf32> to vector<8x32xf32>
    %983 = arith.addf %980, %982 : vector<8x32xf32>
    %984 = arith.addf %888, %983 : vector<8x32xf32>
    %c5_307 = arith.constant 5 : index
    %c0_308 = arith.constant 0 : index
    %985 = vector.load %arg14[%c5_307, %c0_308] : memref<7x32xf32, #tpu.memory_space<vmem>>, vector<1x32xf32>
    %986 = vector.shape_cast %985 : vector<1x32xf32> to vector<32xf32>
    %c5_309 = arith.constant 5 : index
    %c0_310 = arith.constant 0 : index
    %987 = vector.load %arg15[%c5_309, %c0_310] : memref<7x32xf32, #tpu.memory_space<vmem>>, vector<1x32xf32>
    %988 = vector.shape_cast %987 : vector<1x32xf32> to vector<32xf32>
    %cst_311 = arith.constant dense<0.000000e+00> : vector<8xf32>
    %989 = vector.multi_reduction <add>, %984, %cst_311 [1] : vector<8x32xf32> to vector<8xf32>
    %990 = vector.shape_cast %989 : vector<8xf32> to vector<8x1xf32>
    %cst_312 = arith.constant 3.200000e+01 : f32
    %991 = vector.broadcast %cst_312 : f32 to vector<8x1xf32>
    %992 = arith.divf %990, %991 : vector<8x1xf32>
    %993 = arith.mulf %984, %984 : vector<8x32xf32>
    %cst_313 = arith.constant dense<0.000000e+00> : vector<8xf32>
    %994 = vector.multi_reduction <add>, %993, %cst_313 [1] : vector<8x32xf32> to vector<8xf32>
    %995 = vector.shape_cast %994 : vector<8xf32> to vector<8x1xf32>
    %cst_314 = arith.constant 3.200000e+01 : f32
    %996 = vector.broadcast %cst_314 : f32 to vector<8x1xf32>
    %997 = arith.divf %995, %996 : vector<8x1xf32>
    %998 = arith.mulf %992, %992 : vector<8x1xf32>
    %999 = arith.subf %997, %998 : vector<8x1xf32>
    %1000 = vector.broadcast %992 : vector<8x1xf32> to vector<8x32xf32>
    %1001 = arith.subf %984, %1000 : vector<8x32xf32>
    %cst_315 = arith.constant 9.99999996E-13 : f32
    %1002 = vector.broadcast %cst_315 : f32 to vector<8x1xf32>
    %1003 = arith.addf %999, %1002 : vector<8x1xf32>
    %1004 = math.rsqrt %1003 : vector<8x1xf32>
    %1005 = vector.broadcast %1004 : vector<8x1xf32> to vector<8x32xf32>
    %1006 = arith.mulf %1001, %1005 : vector<8x32xf32>
    %1007 = vector.shape_cast %986 : vector<32xf32> to vector<1x32xf32>
    %1008 = vector.broadcast %1007 : vector<1x32xf32> to vector<8x32xf32>
    %1009 = arith.mulf %1006, %1008 : vector<8x32xf32>
    %1010 = vector.shape_cast %988 : vector<32xf32> to vector<1x32xf32>
    %1011 = vector.broadcast %1010 : vector<1x32xf32> to vector<8x32xf32>
    %1012 = arith.addf %1009, %1011 : vector<8x32xf32>
    %c1_316 = arith.constant 1 : index
    %c0_317 = arith.constant 0 : index
    %c0_318 = arith.constant 0 : index
    %1013 = vector.load %arg16[%c1_316, %c0_317, %c0_318] : memref<2x32x64xf32, #tpu.memory_space<vmem>>, vector<1x32x64xf32>
    %1014 = vector.shape_cast %1013 : vector<1x32x64xf32> to vector<32x64xf32>
    %cst_319 = arith.constant dense<0.000000e+00> : vector<8x64xf32>
    %1015 = tpu.matmul %1012, %1014, %cst_319 {dimension_numbers = #tpu.dot_dimension_numbers<[1], [0], [0], [1], [0, 0, 1, 1], [], []>} : vector<8x32xf32>, vector<32x64xf32>, vector<8x64xf32> -> vector<8x64xf32>
    %c1_320 = arith.constant 1 : index
    %c0_321 = arith.constant 0 : index
    %1016 = vector.load %arg17[%c1_320, %c0_321] : memref<2x64xf32, #tpu.memory_space<vmem>>, vector<1x64xf32>
    %1017 = vector.shape_cast %1016 : vector<1x64xf32> to vector<64xf32>
    %1018 = vector.shape_cast %1017 : vector<64xf32> to vector<1x64xf32>
    %1019 = vector.broadcast %1018 : vector<1x64xf32> to vector<8x64xf32>
    %1020 = arith.addf %1015, %1019 : vector<8x64xf32>
    %1021 = arith.mulf %1020, %1020 : vector<8x64xf32>
    %1022 = arith.mulf %1020, %1021 : vector<8x64xf32>
    %cst_322 = arith.constant 4.471500e-02 : f32
    %1023 = vector.broadcast %cst_322 : f32 to vector<8x64xf32>
    %1024 = arith.mulf %1023, %1022 : vector<8x64xf32>
    %1025 = arith.addf %1020, %1024 : vector<8x64xf32>
    %cst_323 = arith.constant 0.797884583 : f32
    %1026 = vector.broadcast %cst_323 : f32 to vector<8x64xf32>
    %1027 = arith.mulf %1026, %1025 : vector<8x64xf32>
    %1028 = math.tanh %1027 : vector<8x64xf32>
    %cst_324 = arith.constant 1.000000e+00 : f32
    %1029 = vector.broadcast %cst_324 : f32 to vector<8x64xf32>
    %1030 = arith.addf %1029, %1028 : vector<8x64xf32>
    %cst_325 = arith.constant 5.000000e-01 : f32
    %1031 = vector.broadcast %cst_325 : f32 to vector<8x64xf32>
    %1032 = arith.mulf %1031, %1030 : vector<8x64xf32>
    %1033 = arith.mulf %1020, %1032 : vector<8x64xf32>
    %c1_326 = arith.constant 1 : index
    %c0_327 = arith.constant 0 : index
    %c0_328 = arith.constant 0 : index
    %1034 = vector.load %arg18[%c1_326, %c0_327, %c0_328] : memref<2x64x32xf32, #tpu.memory_space<vmem>>, vector<1x64x32xf32>
    %1035 = vector.shape_cast %1034 : vector<1x64x32xf32> to vector<64x32xf32>
    %cst_329 = arith.constant dense<0.000000e+00> : vector<8x32xf32>
    %1036 = tpu.matmul %1033, %1035, %cst_329 {dimension_numbers = #tpu.dot_dimension_numbers<[1], [0], [0], [1], [0, 0, 1, 1], [], []>} : vector<8x64xf32>, vector<64x32xf32>, vector<8x32xf32> -> vector<8x32xf32>
    %c1_330 = arith.constant 1 : index
    %c0_331 = arith.constant 0 : index
    %1037 = vector.load %arg19[%c1_330, %c0_331] : memref<2x32xf32, #tpu.memory_space<vmem>>, vector<1x32xf32>
    %1038 = vector.shape_cast %1037 : vector<1x32xf32> to vector<32xf32>
    %1039 = vector.shape_cast %1038 : vector<32xf32> to vector<1x32xf32>
    %1040 = vector.broadcast %1039 : vector<1x32xf32> to vector<8x32xf32>
    %1041 = arith.addf %1036, %1040 : vector<8x32xf32>
    %1042 = arith.addf %984, %1041 : vector<8x32xf32>
    %c6_332 = arith.constant 6 : index
    %c0_333 = arith.constant 0 : index
    %1043 = vector.load %arg14[%c6_332, %c0_333] : memref<7x32xf32, #tpu.memory_space<vmem>>, vector<1x32xf32>
    %1044 = vector.shape_cast %1043 : vector<1x32xf32> to vector<32xf32>
    %c6_334 = arith.constant 6 : index
    %c0_335 = arith.constant 0 : index
    %1045 = vector.load %arg15[%c6_334, %c0_335] : memref<7x32xf32, #tpu.memory_space<vmem>>, vector<1x32xf32>
    %1046 = vector.shape_cast %1045 : vector<1x32xf32> to vector<32xf32>
    %cst_336 = arith.constant dense<0.000000e+00> : vector<8xf32>
    %1047 = vector.multi_reduction <add>, %1042, %cst_336 [1] : vector<8x32xf32> to vector<8xf32>
    %1048 = vector.shape_cast %1047 : vector<8xf32> to vector<8x1xf32>
    %cst_337 = arith.constant 3.200000e+01 : f32
    %1049 = vector.broadcast %cst_337 : f32 to vector<8x1xf32>
    %1050 = arith.divf %1048, %1049 : vector<8x1xf32>
    %1051 = arith.mulf %1042, %1042 : vector<8x32xf32>
    %cst_338 = arith.constant dense<0.000000e+00> : vector<8xf32>
    %1052 = vector.multi_reduction <add>, %1051, %cst_338 [1] : vector<8x32xf32> to vector<8xf32>
    %1053 = vector.shape_cast %1052 : vector<8xf32> to vector<8x1xf32>
    %cst_339 = arith.constant 3.200000e+01 : f32
    %1054 = vector.broadcast %cst_339 : f32 to vector<8x1xf32>
    %1055 = arith.divf %1053, %1054 : vector<8x1xf32>
    %1056 = arith.mulf %1050, %1050 : vector<8x1xf32>
    %1057 = arith.subf %1055, %1056 : vector<8x1xf32>
    %1058 = vector.broadcast %1050 : vector<8x1xf32> to vector<8x32xf32>
    %1059 = arith.subf %1042, %1058 : vector<8x32xf32>
    %cst_340 = arith.constant 9.99999996E-13 : f32
    %1060 = vector.broadcast %cst_340 : f32 to vector<8x1xf32>
    %1061 = arith.addf %1057, %1060 : vector<8x1xf32>
    %1062 = math.rsqrt %1061 : vector<8x1xf32>
    %1063 = vector.broadcast %1062 : vector<8x1xf32> to vector<8x32xf32>
    %1064 = arith.mulf %1059, %1063 : vector<8x32xf32>
    %1065 = vector.shape_cast %1044 : vector<32xf32> to vector<1x32xf32>
    %1066 = vector.broadcast %1065 : vector<1x32xf32> to vector<8x32xf32>
    %1067 = arith.mulf %1064, %1066 : vector<8x32xf32>
    %1068 = vector.shape_cast %1046 : vector<32xf32> to vector<1x32xf32>
    %1069 = vector.broadcast %1068 : vector<1x32xf32> to vector<8x32xf32>
    %1070 = arith.addf %1067, %1069 : vector<8x32xf32>
    %c1_341 = arith.constant 1 : index
    %c0_342 = arith.constant 0 : index
    %c0_343 = arith.constant 0 : index
    %1071 = vector.load %arg20[%c1_341, %c0_342, %c0_343] : memref<2x8x32xf32, #tpu.memory_space<vmem>>, vector<1x8x32xf32>
    %1072 = vector.shape_cast %1071 : vector<1x8x32xf32> to vector<8x32xf32>
    %1073 = vector.shape_cast %1070 : vector<8x32xf32> to vector<1x8x32xf32>
    tpu.vector_store %arg20[%c1_341, %c0_342, %c0_343], %1073 {strides = array<i32>} : memref<2x8x32xf32, #tpu.memory_space<vmem>>, vector<1x8x32xf32>,
    return
  }
  func.func @transform_0(%arg0: i32) -> (i32, i32, i32) {
    %c0_i32 = arith.constant 0 : i32
    %c0_i32_0 = arith.constant 0 : i32
    %c0_i32_1 = arith.constant 0 : i32
    return %arg0, %c0_i32, %c0_i32_0 : i32, i32, i32
  }
  func.func @transform_1(%arg0: i32) -> (i32, i32, i32, i32) {
    %c0_i32 = arith.constant 0 : i32
    %c0_i32_0 = arith.constant 0 : i32
    %c0_i32_1 = arith.constant 0 : i32
    %c0_i32_2 = arith.constant 0 : i32
    return %arg0, %c0_i32, %c0_i32_0, %c0_i32_1 : i32, i32, i32, i32
  }
  func.func @transform_2(%arg0: i32) -> (i32, i32) {
    %c0_i32 = arith.constant 0 : i32
    %c0_i32_0 = arith.constant 0 : i32
    %c0_i32_1 = arith.constant 0 : i32
    return %c0_i32, %c0_i32_0 : i32, i32
  }
  func.func @transform_3(%arg0: i32) -> (i32, i32, i32) {
    %c0_i32 = arith.constant 0 : i32
    %c0_i32_0 = arith.constant 0 : i32
    %c0_i32_1 = arith.constant 0 : i32
    %c0_i32_2 = arith.constant 0 : i32
    return %c0_i32, %c0_i32_0, %c0_i32_1 : i32, i32, i32
  }
  func.func @transform_4(%arg0: i32) -> (i32, i32) {
    %c0_i32 = arith.constant 0 : i32
    %c0_i32_0 = arith.constant 0 : i32
    %c0_i32_1 = arith.constant 0 : i32
    return %c0_i32, %c0_i32_0 : i32, i32
  }
  func.func @transform_5(%arg0: i32) -> (i32, i32, i32) {
    %c0_i32 = arith.constant 0 : i32
    %c0_i32_0 = arith.constant 0 : i32
    %c0_i32_1 = arith.constant 0 : i32
    %c0_i32_2 = arith.constant 0 : i32
    return %c0_i32, %c0_i32_0, %c0_i32_1 : i32, i32, i32
  }
  func.func @transform_6(%arg0: i32) -> (i32, i32) {
    %c0_i32 = arith.constant 0 : i32
    %c0_i32_0 = arith.constant 0 : i32
    %c0_i32_1 = arith.constant 0 : i32
    return %c0_i32, %c0_i32_0 : i32, i32
  }
  func.func @transform_7(%arg0: i32) -> (i32, i32, i32) {
    %c0_i32 = arith.constant 0 : i32
    %c0_i32_0 = arith.constant 0 : i32
    %c0_i32_1 = arith.constant 0 : i32
    %c0_i32_2 = arith.constant 0 : i32
    return %c0_i32, %c0_i32_0, %c0_i32_1 : i32, i32, i32
  }
  func.func @transform_8(%arg0: i32) -> (i32, i32) {
    %c0_i32 = arith.constant 0 : i32
    %c0_i32_0 = arith.constant 0 : i32
    %c0_i32_1 = arith.constant 0 : i32
    return %c0_i32, %c0_i32_0 : i32, i32
  }
  func.func @transform_9(%arg0: i32) -> (i32, i32) {
    %c0_i32 = arith.constant 0 : i32
    %c0_i32_0 = arith.constant 0 : i32
    %c0_i32_1 = arith.constant 0 : i32
    return %c0_i32, %c0_i32_0 : i32, i32
  }
  func.func @transform_10(%arg0: i32) -> (i32, i32) {
    %c0_i32 = arith.constant 0 : i32
    %c0_i32_0 = arith.constant 0 : i32
    %c0_i32_1 = arith.constant 0 : i32
    return %c0_i32, %c0_i32_0 : i32, i32
  }
  func.func @transform_11(%arg0: i32) -> (i32, i32, i32) {
    %c0_i32 = arith.constant 0 : i32
    %c0_i32_0 = arith.constant 0 : i32
    %c0_i32_1 = arith.constant 0 : i32
    %c0_i32_2 = arith.constant 0 : i32
    return %c0_i32, %c0_i32_0, %c0_i32_1 : i32, i32, i32
  }
  func.func @transform_12(%arg0: i32) -> (i32, i32) {
    %c0_i32 = arith.constant 0 : i32
    %c0_i32_0 = arith.constant 0 : i32
    %c0_i32_1 = arith.constant 0 : i32
    return %c0_i32, %c0_i32_0 : i32, i32
  }
  func.func @transform_13(%arg0: i32) -> (i32, i32) {
    %c0_i32 = arith.constant 0 : i32
    %c0_i32_0 = arith.constant 0 : i32
    %c0_i32_1 = arith.constant 0 : i32
    return %c0_i32, %c0_i32_0 : i32, i32
  }
  func.func @transform_14(%arg0: i32) -> (i32, i32) {
    %c0_i32 = arith.constant 0 : i32
    %c0_i32_0 = arith.constant 0 : i32
    %c0_i32_1 = arith.constant 0 : i32
    return %c0_i32, %c0_i32_0 : i32, i32
  }
  func.func @transform_15(%arg0: i32) -> (i32, i32, i32) {
    %c0_i32 = arith.constant 0 : i32
    %c0_i32_0 = arith.constant 0 : i32
    %c0_i32_1 = arith.constant 0 : i32
    %c0_i32_2 = arith.constant 0 : i32
    return %c0_i32, %c0_i32_0, %c0_i32_1 : i32, i32, i32
  }
  func.func @transform_16(%arg0: i32) -> (i32, i32) {
    %c0_i32 = arith.constant 0 : i32
    %c0_i32_0 = arith.constant 0 : i32
    %c0_i32_1 = arith.constant 0 : i32
    return %c0_i32, %c0_i32_0 : i32, i32
  }
  func.func @transform_17(%arg0: i32) -> (i32, i32, i32) {
    %c0_i32 = arith.constant 0 : i32
    %c0_i32_0 = arith.constant 0 : i32
    %c0_i32_1 = arith.constant 0 : i32
    %c0_i32_2 = arith.constant 0 : i32
    return %c0_i32, %c0_i32_0, %c0_i32_1 : i32, i32, i32
  }
  func.func @transform_18(%arg0: i32) -> (i32, i32) {
    %c0_i32 = arith.constant 0 : i32
    %c0_i32_0 = arith.constant 0 : i32
    %c0_i32_1 = arith.constant 0 : i32
    return %c0_i32, %c0_i32_0 : i32, i32
  }
  func.func @transform_19(%arg0: i32) -> (i32, i32, i32) {
    %c0_i32 = arith.constant 0 : i32
    %c0_i32_0 = arith.constant 0 : i32
    %c0_i32_1 = arith.constant 0 : i32
    return %arg0, %c0_i32, %c0_i32_0 : i32, i32, i32
  }
}

</mosaic_0001>

<llo_original>
// kernel: tpu_custom_call.1
$region0: #{tpu_custom_call.1}
  #allocation0 [shape = 'u32[]', space=smem, size = 0x4, offset = 0x4, fixed_abs, tag = 'smem constant byte address 0x4 - core index']
  #allocation1 [shape = 'u32[72,128]{1,0:T(1,128)}', space=vmem, size = 0x9000, scoped, tag = 'internal scratch']
  %s0 = inlined_call_operand.hbm [shape: f32[8,128], index: 0, kind: input, shape index: {}]
  %s1 = inlined_call_operand.hbm [shape: f32[8,128], index: 1, kind: output, shape index: {}]
  %s2 = sld [smem:[#allocation0]]
  $region18: #{tpu_custom_call.1} parent=0
    _
  %s4 = ssub.s32 1, %s2
  %s5 = scalar_select 0, %s4, %s2
  $region1: #{tpu_custom_call.1} parent=0
    #allocation2 [shape = 'u8[4096]{0}', space=vmem, size = 0x1000, scoped, tag = 'input window, operand 0, single buffered']
    #allocation3 [shape = 's32[1]{0}', space=sflag, size = 0x4, scoped, tag = 'scoped memory for tpu_custom_call.1']
    #allocation4 [shape = 's32[1]{0}', space=sflag, size = 0x4, scoped, tag = 'scoped memory for tpu_custom_call.1']
    #allocation5 [shape = 'u8[4096]{0}', space=vmem, size = 0x1000, scoped, tag = 'output window, operand 0, single buffered']
    %6 = vsyncpa [#allocation3], 0
    %7 = vsyncpa [#allocation4], 0
    // Predicated region
    $region2: #{tpu_custom_call.1} parent=1 // pred_check
      _
    $region3: #{tpu_custom_call.1} parent=1 // pred_check_branch
      %9 = sbr.rel (0) target = $region5
    $region4: #{tpu_custom_call.1} parent=1 // pred_region
      %11 = vsyncadd [#allocation3], 0
      %s13 = sshll.u32 %s0, 4
      %s14 = int_to_ptr.hbm [resolvable:$true] %s13
      %s15 = sshll.u32 [#allocation2], 4
      %s16 = int_to_ptr.vmem [resolvable:$true] %s15
      %18 = dma.hbm_to_vmem [thread:$0]  %s14, 128, %s16, [#allocation3]
    $region5: #{tpu_custom_call.1} parent=1 // pred_fallthru
      _
    // Predicated region
    $region6: #{tpu_custom_call.1} parent=1 // pred_check
      _
    $region7: #{tpu_custom_call.1} parent=1 // pred_check_branch
      %20 = sbr.rel (0) target = $region9
    $region8: #{tpu_custom_call.1} parent=1 // pred_region
      %22 = dma.done [#allocation3], 128
    $region9: #{tpu_custom_call.1} parent=1 // pred_fallthru
      _
    %v23 = vld [vmem:[#allocation2] sm:$0xff]
    %v24 = vmul.f32 %v23, %v23
    %v25 = vmin.f32 16.0, %v24
    %v26 = vmul.f32 %v25, 2.1237322e-06
    %v27 = vadd.f32 %v26, 0.00028619796
    %v28 = vmul.f32 %v25, %v27
    %v29 = vadd.f32 %v28, 0.0036580483
    %v30 = vmul.f32 %v25, %v29
    %v31 = vadd.f32 %v30, 0.05243302
    %v32 = vmul.f32 %v25, %v31
    %v33 = vadd.f32 %v32, 0.18741608
    %v34 = vmul.f32 %v25, %v33
    %v35 = vadd.f32 %v34, 1.1283791
    %v36 = vmul.f32 %v23, %v35
    %v37 = vmul.f32 %v25, 3.8918573e-05
    %v38 = vadd.f32 %v37, 0.001143296
    %v39 = vmul.f32 %v25, %v38
    %v40 = vadd.f32 %v39, 0.014752088
    %v41 = vmul.f32 %v25, %v40
    %v42 = vadd.f32 %v41, 0.112945676
    %v43 = vmul.f32 %v25, %v42
    %v44 = vadd.f32 %v43, 0.4994258
    %v45 = vmul.f32 %v25, %v44
    %v46 = vadd.f32 %v45, 1.0
    %v47 = vrcp.pop %v46
    %v48 = vmul.f32 %v46, %v47
    %v49 = vsub.f32 1.0, %v48
    %v50 = vmul.f32 %v47, %v49
    %v51 = vadd.f32 %v47, %v50
    %vm52 = vweird.f32 %v46
    %vm53 = vweird.f32 %v47
    %vm54 = vmor %vm52, %vm53
    %v55 = vsel %vm54, %v47, %v51
    %v56 = vand.u32 2147483647, %v46
    %vm57 = vcmp.eq.f32.partialorder %v56, 8.507059e+37
    %v58 = vand.u32 %v46, 2147483648
    %v59 = vor.u32 1.1754944e-38, %v58
    %v60 = vsel %vm57, %v59, %v55
    %v61 = vmul.f32 %v36, %v60
    %v62 = vmin.f32 %v61, 1.0
    %v63 = vmax.f32 %v62, -1.0
    %64 = vst [vmem:[#allocation5] sm:$0xff] %v63
    // Predicated region
    $region10: #{tpu_custom_call.1} parent=1 // pred_check
      _
    $region11: #{tpu_custom_call.1} parent=1 // pred_check_branch
      %66 = sbr.rel (0) target = $region13
    $region12: #{tpu_custom_call.1} parent=1 // pred_region
      %68 = vsyncadd [#allocation4], 0
      %s70 = sshll.u32 [#allocation5], 4
      %s71 = int_to_ptr.vmem [resolvable:$true] %s70
      %s72 = sshll.u32 %s1, 4
      %s73 = int_to_ptr.hbm [resolvable:$true] %s72
      %75 = dma.vmem_to_hbm [thread:$0]  %s71, 128, %s73, [#allocation4]
    $region13: #{tpu_custom_call.1} parent=1 // pred_fallthru
      _
    // Predicated region
    $region14: #{tpu_custom_call.1} parent=1 // pred_check
      _
    $region15: #{tpu_custom_call.1} parent=1 // pred_check_branch
      %77 = sbr.rel (0) target = $region17
    $region16: #{tpu_custom_call.1} parent=1 // pred_region
      %79 = dma.done [#allocation4], 128
    $region17: #{tpu_custom_call.1} parent=1 // pred_fallthru
      _
    %80 = vsyncpa [#allocation3], 1
    %81 = vsyncpa [#allocation4], 1

// kernel: fwd.1
$region0: #{fwd.1}
  #allocation0 [shape = 'u32[]', space=smem, size = 0x4, offset = 0x4, fixed_abs, tag = 'smem constant byte address 0x4 - core index']
  #allocation1 [shape = 'u32[72,128]{1,0:T(1,128)}', space=vmem, size = 0x9000, scoped, tag = 'internal scratch']
  %s0 = inlined_call_operand.hbm [shape: f32[2,16,32], index: 0, kind: input, shape index: {}]
  %s1 = inlined_call_operand.vmem [shape: f32[2,1,1,16], index: 1, kind: input, shape index: {}]
  %s2 = inlined_call_operand.vmem [shape: f32[8,32], index: 2, kind: input, shape index: {}]
  %s3 = inlined_call_operand.vmem [shape: f32[2,32,96], index: 3, kind: input, shape index: {}]
  %s4 = inlined_call_operand.hbm [shape: f32[2,96], index: 4, kind: input, shape index: {}]
  %s5 = inlined_call_operand.vmem [shape: f32[2,32,32], index: 5, kind: input, shape index: {}]
  %s6 = inlined_call_operand.hbm [shape: f32[2,32], index: 6, kind: input, shape index: {}]
  %s7 = inlined_call_operand.vmem [shape: f32[2,32,32], index: 7, kind: input, shape index: {}]
  %s8 = inlined_call_operand.hbm [shape: f32[2,32], index: 8, kind: input, shape index: {}]
  %s9 = inlined_call_operand.hbm [shape: f32[32,128], index: 9, kind: input, shape index: {}]
  %s10 = inlined_call_operand.hbm [shape: f32[1,128], index: 10, kind: input, shape index: {}]
  %s11 = inlined_call_operand.hbm [shape: f32[2,32,32], index: 11, kind: input, shape index: {}]
  %s12 = inlined_call_operand.hbm [shape: f32[2,32], index: 12, kind: input, shape index: {}]
  %s13 = inlined_call_operand.hbm [shape: f32[7,32], index: 13, kind: input, shape index: {}]
  %s14 = inlined_call_operand.hbm [shape: f32[7,32], index: 14, kind: input, shape index: {}]
  %s15 = inlined_call_operand.hbm [shape: f32[2,32,64], index: 15, kind: input, shape index: {}]
  %s16 = inlined_call_operand.hbm [shape: f32[2,64], index: 16, kind: input, shape index: {}]
  %s17 = inlined_call_operand.vmem [shape: f32[2,64,32], index: 17, kind: input, shape index: {}]
  %s18 = inlined_call_operand.hbm [shape: f32[2,32], index: 18, kind: input, shape index: {}]
  %s19 = inlined_call_operand.hbm [shape: f32[2,8,32], index: 19, kind: output, shape index: {}]
  %s20 = sld [smem:[#allocation0]]
  $region138: #{fwd.1} parent=0
    _
  %s22 = ssub.s32 1, %s20
  %s23 = scalar_select 0, %s22, %s20
  $region1: #{fwd.1} parent=0
    #allocation2 [shape = 'u8[16384]{0}', space=vmem, size = 0x4000, scoped, tag = 'input window, operand 0, single buffered']
    #allocation3 [shape = 's32[1]{0}', space=sflag, size = 0x4, scoped, tag = 'scoped memory for fwd.1']
    #allocation4 [shape = 's32[1]{0}', space=sflag, size = 0x4, scoped, tag = 'scoped memory for fwd.1']
    #allocation5 [shape = 'u8[1024]{0}', space=vmem, size = 0x400, scoped, tag = 'input window, operand 4, single buffered']
    #allocation6 [shape = 's32[1]{0}', space=sflag, size = 0x4, scoped, tag = 'scoped memory for fwd.1']
    #allocation7 [shape = 'u8[1024]{0}', space=vmem, size = 0x400, scoped, tag = 'input window, operand 6, single buffered']
    #allocation8 [shape = 'u8[1024]{0}', space=vmem, size = 0x400, scoped, tag = 'input window, operand 8, single buffered']
    #allocation9 [shape = 's32[1]{0}', space=sflag, size = 0x4, scoped, tag = 'scoped memory for fwd.1']
    #allocation10 [shape = 'u8[16384]{0}', space=vmem, size = 0x4000, scoped, tag = 'input window, operand 9, single buffered']
    #allocation11 [shape = 'u8[512]{0}', space=vmem, size = 0x400, scoped, tag = 'input window, operand 10, single buffered']
    #allocation12 [shape = 's32[1]{0}', space=sflag, size = 0x4, scoped, tag = 'scoped memory for fwd.1']
    #allocation13 [shape = 'u8[32768]{0}', space=vmem, size = 0x8000, scoped, tag = 'input window, operand 11, single buffered']
    #allocation14 [shape = 'u8[1024]{0}', space=vmem, size = 0x400, scoped, tag = 'input window, operand 12, single buffered']
    #allocation15 [shape = 's32[1]{0}', space=sflag, size = 0x4, scoped, tag = 'scoped memory for fwd.1']
    #allocation16 [shape = 'u8[4096]{0}', space=vmem, size = 0x1000, scoped, tag = 'input window, operand 13, single buffered']
    #allocation17 [shape = 'u8[4096]{0}', space=vmem, size = 0x1000, scoped, tag = 'input window, operand 14, single buffered']
    #allocation18 [shape = 's32[1]{0}', space=sflag, size = 0x4, scoped, tag = 'scoped memory for fwd.1']
    #allocation19 [shape = 'u8[32768]{0}', space=vmem, size = 0x8000, scoped, tag = 'input window, operand 15, single buffered']
    #allocation20 [shape = 'u8[1024]{0}', space=vmem, size = 0x400, scoped, tag = 'input window, operand 16, single buffered']
    #allocation21 [shape = 's32[1]{0}', space=sflag, size = 0x4, scoped, tag = 'scoped memory for fwd.1']
    #allocation22 [shape = 'u8[1024]{0}', space=vmem, size = 0x400, scoped, tag = 'input window, operand 18, single buffered']
    #allocation23 [shape = 'u8[8192]{0}', space=vmem, size = 0x2000, scoped, tag = 'output window, operand 0, single buffered']
    %24 = vsyncpa [#allocation3], 0
    %25 = vsyncpa [#allocation6], 0
    %26 = vsyncpa [#allocation9], 0
    %27 = vsyncpa [#allocation12], 0
    %28 = vsyncpa [#allocation15], 0
    %29 = vsyncpa [#allocation18], 0
    %30 = vsyncpa [#allocation21], 0
    %31 = vsyncpa [#allocation4], 0
    // Predicated region
    $region2: #{fwd.1} parent=1 // pred_check
      _
    $region3: #{fwd.1} parent=1 // pred_check_branch
      %33 = sbr.rel (0) target = $region5
    $region4: #{fwd.1} parent=1 // pred_region
      %35 = vsyncadd [#allocation3], 0
      %s36 = sshll.u32 %s0, 4
      %s37 = int_to_ptr.hbm [resolvable:$true] %s36
      %s38 = sshll.u32 [#allocation2], 4
      %s39 = int_to_ptr.vmem [resolvable:$true] %s38
      %44 = dma.hbm_to_vmem [thread:$0]  %s37, 512, %s39, [#allocation3], 128, 128, 8
    $region5: #{fwd.1} parent=1 // pred_fallthru
      _
    // Predicated region
    $region6: #{fwd.1} parent=1 // pred_check
      _
    $region7: #{fwd.1} parent=1 // pred_check_branch
      %46 = sbr.rel (0) target = $region9
    $region8: #{fwd.1} parent=1 // pred_region
      _
    $region9: #{fwd.1} parent=1 // pred_fallthru
      _
    // Predicated region
    $region10: #{fwd.1} parent=1 // pred_check
      _
    $region11: #{fwd.1} parent=1 // pred_check_branch
      %48 = sbr.rel (0) target = $region13
    $region12: #{fwd.1} parent=1 // pred_region
      _
    $region13: #{fwd.1} parent=1 // pred_fallthru
      _
    // Predicated region
    $region14: #{fwd.1} parent=1 // pred_check
      _
    $region15: #{fwd.1} parent=1 // pred_check_branch
      %50 = sbr.rel (0) target = $region17
    $region16: #{fwd.1} parent=1 // pred_region
      _
    $region17: #{fwd.1} parent=1 // pred_fallthru
      _
    // Predicated region
    $region18: #{fwd.1} parent=1 // pred_check
      _
    $region19: #{fwd.1} parent=1 // pred_check_branch
      %52 = sbr.rel (0) target = $region21
    $region20: #{fwd.1} parent=1 // pred_region
      %54 = vsyncadd [#allocation6], 0
      %s56 = sshll.u32 %s4, 4
      %s57 = int_to_ptr.hbm [resolvable:$true] %s56
      %s58 = sshll.u32 [#allocation5], 4
      %s59 = int_to_ptr.vmem [resolvable:$true] %s58
      %61 = dma.hbm_to_vmem [thread:$0]  %s57, 32, %s59, [#allocation6]
    $region21: #{fwd.1} parent=1 // pred_fallthru
      _
    // Predicated region
    $region22: #{fwd.1} parent=1 // pred_check
      _
    $region23: #{fwd.1} parent=1 // pred_check_branch
      %63 = sbr.rel (0) target = $region25
    $region24: #{fwd.1} parent=1 // pred_region
      _
    $region25: #{fwd.1} parent=1 // pred_fallthru
      _
    // Predicated region
    $region26: #{fwd.1} parent=1 // pred_check
      _
    $region27: #{fwd.1} parent=1 // pred_check_branch
      %65 = sbr.rel (0) target = $region29
    $region28: #{fwd.1} parent=1 // pred_region
      %67 = vsyncadd [#allocation6], 0
      %s69 = sshll.u32 %s6, 4
      %s70 = int_to_ptr.hbm [resolvable:$true] %s69
      %s71 = sshll.u32 [#allocation7], 4
      %s72 = int_to_ptr.vmem [resolvable:$true] %s71
      %74 = dma.hbm_to_vmem [thread:$0]  %s70, 32, %s72, [#allocation6]
    $region29: #{fwd.1} parent=1 // pred_fallthru
      _
    // Predicated region
    $region30: #{fwd.1} parent=1 // pred_check
      _
    $region31: #{fwd.1} parent=1 // pred_check_branch
      %76 = sbr.rel (0) target = $region33
    $region32: #{fwd.1} parent=1 // pred_region
      _
    $region33: #{fwd.1} parent=1 // pred_fallthru
      _
    // Predicated region
    $region34: #{fwd.1} parent=1 // pred_check
      _
    $region35: #{fwd.1} parent=1 // pred_check_branch
      %78 = sbr.rel (0) target = $region37
    $region36: #{fwd.1} parent=1 // pred_region
      %80 = vsyncadd [#allocation9], 0
      %s82 = sshll.u32 %s8, 4
      %s83 = int_to_ptr.hbm [resolvable:$true] %s82
      %s84 = sshll.u32 [#allocation8], 4
      %s85 = int_to_ptr.vmem [resolvable:$true] %s84
      %87 = dma.hbm_to_vmem [thread:$0]  %s83, 32, %s85, [#allocation9]
    $region37: #{fwd.1} parent=1 // pred_fallthru
      _
    // Predicated region
    $region38: #{fwd.1} parent=1 // pred_check
      _
    $region39: #{fwd.1} parent=1 // pred_check_branch
      %89 = sbr.rel (0) target = $region41
    $region40: #{fwd.1} parent=1 // pred_region
      %91 = vsyncadd [#allocation9], 0
      %s92 = sshll.u32 %s9, 4
      %s93 = int_to_ptr.hbm [resolvable:$true] %s92
      %s94 = sshll.u32 [#allocation10], 4
      %s95 = int_to_ptr.vmem [resolvable:$true] %s94
      %100 = dma.hbm_to_vmem [thread:$0]  %s93, 512, %s95, [#allocation9], 128, 128, 8
    $region41: #{fwd.1} parent=1 // pred_fallthru
      _
    // Predicated region
    $region42: #{fwd.1} parent=1 // pred_check
      _
    $region43: #{fwd.1} parent=1 // pred_check_branch
      %102 = sbr.rel (0) target = $region45
    $region44: #{fwd.1} parent=1 // pred_region
      %104 = vsyncadd [#allocation12], 0
      %s106 = sshll.u32 %s10, 4
      %s107 = int_to_ptr.hbm [resolvable:$true] %s106
      %s108 = sshll.u32 [#allocation11], 4
      %s109 = int_to_ptr.vmem [resolvable:$true] %s108
      %111 = dma.hbm_to_vmem [thread:$0]  %s107, 16, %s109, [#allocation12]
    $region45: #{fwd.1} parent=1 // pred_fallthru
      _
    // Predicated region
    $region46: #{fwd.1} parent=1 // pred_check
      _
    $region47: #{fwd.1} parent=1 // pred_check_branch
      %113 = sbr.rel (0) target = $region49
    $region48: #{fwd.1} parent=1 // pred_region
      %115 = vsyncadd [#allocation12], 0
      %s116 = sshll.u32 %s11, 4
      %s117 = int_to_ptr.hbm [resolvable:$true] %s116
      %s118 = sshll.u32 [#allocation13], 4
      %s119 = int_to_ptr.vmem [resolvable:$true] %s118
      %124 = dma.hbm_to_vmem [thread:$0]  %s117, 1024, %s119, [#allocation12], 128, 128, 8
    $region49: #{fwd.1} parent=1 // pred_fallthru
      _
    // Predicated region
    $region50: #{fwd.1} parent=1 // pred_check
      _
    $region51: #{fwd.1} parent=1 // pred_check_branch
      %126 = sbr.rel (0) target = $region53
    $region52: #{fwd.1} parent=1 // pred_region
      %128 = vsyncadd [#allocation15], 0
      %s130 = sshll.u32 %s12, 4
      %s131 = int_to_ptr.hbm [resolvable:$true] %s130
      %s132 = sshll.u32 [#allocation14], 4
      %s133 = int_to_ptr.vmem [resolvable:$true] %s132
      %135 = dma.hbm_to_vmem [thread:$0]  %s131, 32, %s133, [#allocation15]
    $region53: #{fwd.1} parent=1 // pred_fallthru
      _
    // Predicated region
    $region54: #{fwd.1} parent=1 // pred_check
      _
    $region55: #{fwd.1} parent=1 // pred_check_branch
      %137 = sbr.rel (0) target = $region57
    $region56: #{fwd.1} parent=1 // pred_region
      %139 = vsyncadd [#allocation15], 0
      %s141 = sshll.u32 %s13, 4
      %s142 = int_to_ptr.hbm [resolvable:$true] %s141
      %s143 = sshll.u32 [#allocation16], 4
      %s144 = int_to_ptr.vmem [resolvable:$true] %s143
      %146 = dma.hbm_to_vmem [thread:$0]  %s142, 128, %s144, [#allocation15]
    $region57: #{fwd.1} parent=1 // pred_fallthru
      _
    // Predicated region
    $region58: #{fwd.1} parent=1 // pred_check
      _
    $region59: #{fwd.1} parent=1 // pred_check_branch
      %148 = sbr.rel (0) target = $region61
    $region60: #{fwd.1} parent=1 // pred_region
      %150 = vsyncadd [#allocation18], 0
      %s152 = sshll.u32 %s14, 4
      %s153 = int_to_ptr.hbm [resolvable:$true] %s152
      %s154 = sshll.u32 [#allocation17], 4
      %s155 = int_to_ptr.vmem [resolvable:$true] %s154
      %157 = dma.hbm_to_vmem [thread:$0]  %s153, 128, %s155, [#allocation18]
    $region61: #{fwd.1} parent=1 // pred_fallthru
      _
    // Predicated region
    $region62: #{fwd.1} parent=1 // pred_check
      _
    $region63: #{fwd.1} parent=1 // pred_check_branch
      %159 = sbr.rel (0) target = $region65
    $region64: #{fwd.1} parent=1 // pred_region
      %161 = vsyncadd [#allocation18], 0
      %s162 = sshll.u32 %s15, 4
      %s163 = int_to_ptr.hbm [resolvable:$true] %s162
      %s164 = sshll.u32 [#allocation19], 4
      %s165 = int_to_ptr.vmem [resolvable:$true] %s164
      %170 = dma.hbm_to_vmem [thread:$0]  %s163, 1024, %s165, [#allocation18], 128, 128, 8
    $region65: #{fwd.1} parent=1 // pred_fallthru
      _
    // Predicated region
    $region66: #{fwd.1} parent=1 // pred_check
      _
    $region67: #{fwd.1} parent=1 // pred_check_branch
      %172 = sbr.rel (0) target = $region69
    $region68: #{fwd.1} parent=1 // pred_region
      %174 = vsyncadd [#allocation21], 0
      %s176 = sshll.u32 %s16, 4
      %s177 = int_to_ptr.hbm [resolvable:$true] %s176
      %s178 = sshll.u32 [#allocation20], 4
      %s179 = int_to_ptr.vmem [resolvable:$true] %s178
      %181 = dma.hbm_to_vmem [thread:$0]  %s177, 32, %s179, [#allocation21]
    $region69: #{fwd.1} parent=1 // pred_fallthru
      _
    // Predicated region
    $region70: #{fwd.1} parent=1 // pred_check
      _
    $region71: #{fwd.1} parent=1 // pred_check_branch
      %183 = sbr.rel (0) target = $region73
    $region72: #{fwd.1} parent=1 // pred_region
      _
    $region73: #{fwd.1} parent=1 // pred_fallthru
      _
    // Predicated region
    $region74: #{fwd.1} parent=1 // pred_check
      _
    $region75: #{fwd.1} parent=1 // pred_check_branch
      %185 = sbr.rel (0) target = $region77
    $region76: #{fwd.1} parent=1 // pred_region
      %187 = vsyncadd [#allocation21], 0
      %s189 = sshll.u32 %s18, 4
      %s190 = int_to_ptr.hbm [resolvable:$true] %s189
      %s191 = sshll.u32 [#allocation22], 4
      %s192 = int_to_ptr.vmem [resolvable:$true] %s191
      %194 = dma.hbm_to_vmem [thread:$0]  %s190, 32, %s192, [#allocation21]
    $region77: #{fwd.1} parent=1 // pred_fallthru
      _
    // Predicated region
    $region78: #{fwd.1} parent=1 // pred_check
      _
    $region79: #{fwd.1} parent=1 // pred_check_branch
      %196 = sbr.rel (0) target = $region81
    $region80: #{fwd.1} parent=1 // pred_region
      %198 = dma.done [#allocation3], 512
    $region81: #{fwd.1} parent=1 // pred_fallthru
      _
    // Predicated region
    $region82: #{fwd.1} parent=1 // pred_check
      _
    $region83: #{fwd.1} parent=1 // pred_check_branch
      %200 = sbr.rel (0) target = $region85
    $region84: #{fwd.1} parent=1 // pred_region
      %202 = dma.done [#allocation6], 32
    $region85: #{fwd.1} parent=1 // pred_fallthru
      _
    // Predicated region
    $region86: #{fwd.1} parent=1 // pred_check
      _
    $region87: #{fwd.1} parent=1 // pred_check_branch
      %204 = sbr.rel (0) target = $region89
    $region88: #{fwd.1} parent=1 // pred_region
      %206 = dma.done [#allocation6], 32
    $region89: #{fwd.1} parent=1 // pred_fallthru
      _
    // Predicated region
    $region90: #{fwd.1} parent=1 // pred_check
      _
    $region91: #{fwd.1} parent=1 // pred_check_branch
      %208 = sbr.rel (0) target = $region93
    $region92: #{fwd.1} parent=1 // pred_region
      %210 = dma.done [#allocation9], 32
    $region93: #{fwd.1} parent=1 // pred_fallthru
      _
    // Predicated region
    $region94: #{fwd.1} parent=1 // pred_check
      _
    $region95: #{fwd.1} parent=1 // pred_check_branch
      %212 = sbr.rel (0) target = $region97
    $region96: #{fwd.1} parent=1 // pred_region
      %214 = dma.done [#allocation9], 512
    $region97: #{fwd.1} parent=1 // pred_fallthru
      _
    // Predicated region
    $region98: #{fwd.1} parent=1 // pred_check
      _
    $region99: #{fwd.1} parent=1 // pred_check_branch
      %216 = sbr.rel (0) target = $region101
    $region100: #{fwd.1} parent=1 // pred_region
      %218 = dma.done [#allocation12], 16
    $region101: #{fwd.1} parent=1 // pred_fallthru
      _
    // Predicated region
    $region102: #{fwd.1} parent=1 // pred_check
      _
    $region103: #{fwd.1} parent=1 // pred_check_branch
      %220 = sbr.rel (0) target = $region105
    $region104: #{fwd.1} parent=1 // pred_region
      %222 = dma.done [#allocation12], 1024
    $region105: #{fwd.1} parent=1 // pred_fallthru
      _
    // Predicated region
    $region106: #{fwd.1} parent=1 // pred_check
      _
    $region107: #{fwd.1} parent=1 // pred_check_branch
      %224 = sbr.rel (0) target = $region109
    $region108: #{fwd.1} parent=1 // pred_region
      %226 = dma.done [#allocation15], 32
    $region109: #{fwd.1} parent=1 // pred_fallthru
      _
    // Predicated region
    $region110: #{fwd.1} parent=1 // pred_check
      _
    $region111: #{fwd.1} parent=1 // pred_check_branch
      %228 = sbr.rel (0) target = $region113
    $region112: #{fwd.1} parent=1 // pred_region
      %230 = dma.done [#allocation15], 128
    $region113: #{fwd.1} parent=1 // pred_fallthru
      _
    // Predicated region
    $region114: #{fwd.1} parent=1 // pred_check
      _
    $region115: #{fwd.1} parent=1 // pred_check_branch
      %232 = sbr.rel (0) target = $region117
    $region116: #{fwd.1} parent=1 // pred_region
      %234 = dma.done [#allocation18], 128
    $region117: #{fwd.1} parent=1 // pred_fallthru
      _
    // Predicated region
    $region118: #{fwd.1} parent=1 // pred_check
      _
    $region119: #{fwd.1} parent=1 // pred_check_branch
      %236 = sbr.rel (0) target = $region121
    $region120: #{fwd.1} parent=1 // pred_region
      %238 = dma.done [#allocation18], 1024
    $region121: #{fwd.1} parent=1 // pred_fallthru
      _
    // Predicated region
    $region122: #{fwd.1} parent=1 // pred_check
      _
    $region123: #{fwd.1} parent=1 // pred_check_branch
      %240 = sbr.rel (0) target = $region125
    $region124: #{fwd.1} parent=1 // pred_region
      %242 = dma.done [#allocation21], 32
    $region125: #{fwd.1} parent=1 // pred_fallthru
      _
    // Predicated region
    $region126: #{fwd.1} parent=1 // pred_check
      _
    $region127: #{fwd.1} parent=1 // pred_check_branch
      %244 = sbr.rel (0) target = $region129
    $region128: #{fwd.1} parent=1 // pred_region
      %246 = dma.done [#allocation21], 32
    $region129: #{fwd.1} parent=1 // pred_fallthru
      _
    %v247 = vld [vmem:[#allocation2] sm:$0xff]
    %v248 = vld [vmem:[#allocation2 + $0x8] sm:$0xff]
    %v249 = vld [vmem:[%s1] sm:$0x1]
    %v250 = vld [vmem:[#allocation10] sm:$0xff]
    %v251 = vld [vmem:[#allocation10 + $0x8] sm:$0xff]
    %v252 = vld [vmem:[#allocation10 + $0x10] sm:$0xff]
    %v253 = vld [vmem:[#allocation10 + $0x18] sm:$0xff]
    %v254 = vld [vmem:[#allocation11] sm:$0x1]
    %v256 = vperm.slane %v254, 0
    %vm258 = vcmask 261120
    %v260 = vsel %vm258, %v247, 0
    %v263 = vsel %vm258, %v248, 0
    %265 = vmatpush.msra.mxu0 0.0
    %266 = vmatpush.msra.mxu0 0.0
    %267 = vmatpush.msra.mxu0 0.0
    %268 = vmatpush.msra.mxu0 0.0
    %269 = vmatpush.msra.mxu0 0.0
    %270 = vmatpush.msra.mxu0 0.0
    %271 = vmatpush.msra.mxu0 0.0
    %272 = vmatpush.msra.mxu0 0.0
    %273 = vmatpush.msra.mxu0 0.0
    %274 = vmatpush.msra.mxu0 0.0
    %275 = vmatpush.msra.mxu0 0.0
    %276 = vmatpush.msra.mxu0 0.0
    %277 = vmatpush.msra.mxu0 %v253
    %278 = vmatpush.msra.mxu0 %v252
    %279 = vmatpush.msra.mxu0 %v251
    %280 = vmatpush.msra.mxu0 %v250
    %281 = vmatmul.f32.gmra.mxu0 %v260
    %v282 = vpop.f32.mrf.mxu0
    %v283 = vadd.f32 %v256, %v282
    %284 = vmatmul.f32.gmra.mxu0 %v263
    %v285 = vpop.f32.mrf.mxu0
    %v286 = vadd.f32 %v256, %v285
    %287 = vdwg.mxu0
    %v288 = vld [vmem:[%s2] sm:$0xff]
    %v289 = vld [vmem:[#allocation16] sm:$0x1]
    %v290 = vld [vmem:[#allocation17] sm:$0x1]
    %v291 = vsel %vm258, %v288, 0.0
    %292 = vadd.xlane.f32.xlu0 %v291
    %v293 = vpop.xlane.xlu0 %292
    %v294 = vrcp.pop 32.0
    %v295 = vmul.f32 32.0, %v294
    %v296 = vsub.f32 1.0, %v295
    %v297 = vmul.f32 %v294, %v296
    %v298 = vadd.f32 %v294, %v297
    %vm299 = vweird.f32 %v294
    %v300 = vsel %vm299, %v294, %v298
    %v301 = vmul.f32 %v293, %v300
    %v302 = vmul.f32 %v288, %v288
    %v303 = vsel %vm258, %v302, 0.0
    %304 = vadd.xlane.f32.xlu0 %v303
    %v305 = vpop.xlane.xlu0 %304
    %v306 = vmul.f32 %v305, %v300
    %v307 = vmul.f32 %v301, %v301
    %v308 = vsub.f32 %v306, %v307
    %v309 = vsub.f32 %v288, %v301
    %v310 = vadd.f32 %v308, 1e-12
    %v311 = vrsqrt.pop %v310
    %v312 = vmul.f32 %v311, %v310
    %v313 = vmul.f32 %v312, %v311
    %v314 = vmul.f32 0.5, %v313
    %v315 = vsub.f32 1.5, %v314
    %v316 = vmul.f32 %v311, %v315
    %vm317 = vweird.f32 %v310
    %vm318 = vweird.f32 %v311
    %vm319 = vmor %vm317, %vm318
    %v320 = vsel %vm319, %v311, %v316
    %v321 = vmul.f32 %v309, %v320
    %v322 = vperm.slane %v289, 0
    %v323 = vmul.f32 %v321, %v322
    %v324 = vperm.slane %v290, 0
    %v325 = vadd.f32 %v323, %v324
    %v326 = vld [vmem:[%s3] sm:$0xff]
    %v327 = vld [vmem:[%s3 + $0x8] sm:$0xff]
    %v328 = vld [vmem:[%s3 + $0x10] sm:$0xff]
    %v329 = vld [vmem:[%s3 + $0x18] sm:$0xff]
    %v330 = vld [vmem:[#allocation5] sm:$0x1]
    %v331 = vperm.slane %v330, 0
    %v333 = vsel %vm258, %v325, 0
    %335 = vmatpush.msra.mxu0 0.0
    %336 = vmatpush.msra.mxu0 0.0
    %337 = vmatpush.msra.mxu0 0.0
    %338 = vmatpush.msra.mxu0 0.0
    %339 = vmatpush.msra.mxu0 0.0
    %340 = vmatpush.msra.mxu0 0.0
    %341 = vmatpush.msra.mxu0 0.0
    %342 = vmatpush.msra.mxu0 0.0
    %343 = vmatpush.msra.mxu0 0.0
    %344 = vmatpush.msra.mxu0 0.0
    %345 = vmatpush.msra.mxu0 0.0
    %346 = vmatpush.msra.mxu0 0.0
    %347 = vmatpush.msra.mxu0 %v329
    %348 = vmatpush.msra.mxu0 %v328
    %349 = vmatpush.msra.mxu0 %v327
    %350 = vmatpush.msra.mxu0 %v326
    %351 = vmatmul.f32.gmra.mxu0 %v333
    %v352 = vpop.f32.mrf.mxu0
    %v353 = vadd.f32 %v331, %v352
    %354 = vdwg.mxu0
    %356 = vrot.lane.b32.xlu0 %v353, 120
    %v357 = vpop.permute.xlu0 %356
    %358 = vrot.lane.b32.xlu0 %v353, 112
    %v359 = vpop.permute.xlu0 %358
    %360 = vrot.lane.b32.xlu0 %v353, 104
    %v361 = vpop.permute.xlu0 %360
    %v362 = vld [vmem:[%s5] sm:$0xff]
    %v363 = vld [vmem:[%s5 + $0x8] sm:$0xff]
    %v364 = vld [vmem:[%s5 + $0x10] sm:$0xff]
    %v365 = vld [vmem:[%s5 + $0x18] sm:$0xff]
    %v366 = vld [vmem:[#allocation7] sm:$0x1]
    %367 = vrot.lane.b32.xlu0 %v353, 96
    %v368 = vpop.permute.xlu0 %367
    %vm369 = vcmask 64512
    %v370 = vsel %vm369, %v353, 0
    %v372 = vsel %vm369, %v368, 0
    %374 = vmatpush.xpose.msra.mxu0 0.0
    %375 = vmatpush.xpose.msra.mxu0 0.0
    %376 = vmatpush.xpose.msra.mxu0 0.0
    %377 = vmatpush.xpose.msra.mxu0 0.0
    %378 = vmatpush.xpose.msra.mxu0 0.0
    %379 = vmatpush.xpose.msra.mxu0 0.0
    %380 = vmatpush.xpose.msra.mxu0 0.0
    %381 = vmatpush.xpose.msra.mxu0 0.0
    %382 = vmatpush.xpose.msra.mxu0 0.0
    %383 = vmatpush.xpose.msra.mxu0 0.0
    %384 = vmatpush.xpose.msra.mxu0 0.0
    %385 = vmatpush.xpose.msra.mxu0 0.0
    %386 = vmatpush.xpose.msra.mxu0 0.0
    %387 = vmatpush.xpose.msra.mxu0 0.0
    %388 = vmatpush.xpose.msra.mxu0 0.0
    %389 = vmatpush.xpose.msra.mxu0 %v372
    %390 = vmatmul.f32.gmra.mxu0 %v370
    %v391 = vpop.f32.mrf.mxu0
    %v392 = vadd.f32 0.0, %v391
    %393 = vdwg.mxu0
    %394 = vrot.lane.b32.xlu0 %v357, 96
    %v395 = vpop.permute.xlu0 %394
    %v396 = vsel %vm369, %v357, 0
    %v398 = vsel %vm369, %v395, 0
    %400 = vmatpush.xpose.msra.mxu0 0.0
    %401 = vmatpush.xpose.msra.mxu0 0.0
    %402 = vmatpush.xpose.msra.mxu0 0.0
    %403 = vmatpush.xpose.msra.mxu0 0.0
    %404 = vmatpush.xpose.msra.mxu0 0.0
    %405 = vmatpush.xpose.msra.mxu0 0.0
    %406 = vmatpush.xpose.msra.mxu0 0.0
    %407 = vmatpush.xpose.msra.mxu0 0.0
    %408 = vmatpush.xpose.msra.mxu0 0.0
    %409 = vmatpush.xpose.msra.mxu0 0.0
    %410 = vmatpush.xpose.msra.mxu0 0.0
    %411 = vmatpush.xpose.msra.mxu0 0.0
    %412 = vmatpush.xpose.msra.mxu0 0.0
    %413 = vmatpush.xpose.msra.mxu0 0.0
    %414 = vmatpush.xpose.msra.mxu0 0.0
    %415 = vmatpush.xpose.msra.mxu0 %v398
    %416 = vmatmul.f32.gmra.mxu0 %v396
    %v417 = vpop.f32.mrf.mxu0
    %v418 = vadd.f32 0.0, %v417
    %419 = vdwg.mxu0
    %420 = vrot.lane.b32.xlu0 %v359, 96
    %v421 = vpop.permute.xlu0 %420
    %v422 = vsel %vm369, %v359, 0
    %v424 = vsel %vm369, %v421, 0
    %426 = vmatpush.xpose.msra.mxu0 0.0
    %427 = vmatpush.xpose.msra.mxu0 0.0
    %428 = vmatpush.xpose.msra.mxu0 0.0
    %429 = vmatpush.xpose.msra.mxu0 0.0
    %430 = vmatpush.xpose.msra.mxu0 0.0
    %431 = vmatpush.xpose.msra.mxu0 0.0
    %432 = vmatpush.xpose.msra.mxu0 0.0
    %433 = vmatpush.xpose.msra.mxu0 0.0
    %434 = vmatpush.xpose.msra.mxu0 0.0
    %435 = vmatpush.xpose.msra.mxu0 0.0
    %436 = vmatpush.xpose.msra.mxu0 0.0
    %437 = vmatpush.xpose.msra.mxu0 0.0
    %438 = vmatpush.xpose.msra.mxu0 0.0
    %439 = vmatpush.xpose.msra.mxu0 0.0
    %440 = vmatpush.xpose.msra.mxu0 0.0
    %441 = vmatpush.xpose.msra.mxu0 %v424
    %442 = vmatmul.f32.gmra.mxu0 %v422
    %v443 = vpop.f32.mrf.mxu0
    %v444 = vadd.f32 0.0, %v443
    %445 = vdwg.mxu0
    %446 = vrot.lane.b32.xlu0 %v361, 96
    %v447 = vpop.permute.xlu0 %446
    %v448 = vsel %vm369, %v361, 0
    %v450 = vsel %vm369, %v447, 0
    %452 = vmatpush.xpose.msra.mxu0 0.0
    %453 = vmatpush.xpose.msra.mxu0 0.0
    %454 = vmatpush.xpose.msra.mxu0 0.0
    %455 = vmatpush.xpose.msra.mxu0 0.0
    %456 = vmatpush.xpose.msra.mxu0 0.0
    %457 = vmatpush.xpose.msra.mxu0 0.0
    %458 = vmatpush.xpose.msra.mxu0 0.0
    %459 = vmatpush.xpose.msra.mxu0 0.0
    %460 = vmatpush.xpose.msra.mxu0 0.0
    %461 = vmatpush.xpose.msra.mxu0 0.0
    %462 = vmatpush.xpose.msra.mxu0 0.0
    %463 = vmatpush.xpose.msra.mxu0 0.0
    %464 = vmatpush.xpose.msra.mxu0 0.0
    %465 = vmatpush.xpose.msra.mxu0 0.0
    %466 = vmatpush.xpose.msra.mxu0 0.0
    %467 = vmatpush.xpose.msra.mxu0 %v450
    %468 = vmatmul.f32.gmra.mxu0 %v448
    %v469 = vpop.f32.mrf.mxu0
    %v470 = vadd.f32 0.0, %v469
    %471 = vdwg.mxu0
    %v472 = vsel %vm369, %v392, -inf
    %473 = vmax.xlane.f32.xlu0 %v472
    %v474 = vpop.xlane.xlu0 %473
    %v475 = vsel %vm369, %v418, -inf
    %476 = vmax.xlane.f32.xlu0 %v475
    %v477 = vpop.xlane.xlu0 %476
    %v478 = vsel %vm369, %v444, -inf
    %479 = vmax.xlane.f32.xlu0 %v478
    %v480 = vpop.xlane.xlu0 %479
    %v481 = vsel %vm369, %v470, -inf
    %482 = vmax.xlane.f32.xlu0 %v481
    %v483 = vpop.xlane.xlu0 %482
    %v484 = vsub.f32 %v392, %v474
    %v485 = vsub.f32 %v418, %v477
    %v486 = vsub.f32 %v444, %v480
    %v487 = vsub.f32 %v470, %v483
    %v488 = vmul.f32 %v484, 1.442695
    %v489 = vpow.pop %v488
    %v490 = vmul.f32 %v485, 1.442695
    %v491 = vpow.pop %v490
    %v492 = vmul.f32 %v486, 1.442695
    %v493 = vpow.pop %v492
    %v494 = vmul.f32 %v487, 1.442695
    %v495 = vpow.pop %v494
    %v496 = vsel %vm369, %v489, 0.0
    %497 = vadd.xlane.f32.xlu0 %v496
    %v498 = vpop.xlane.xlu0 %497
    %v499 = vsel %vm369, %v491, 0.0
    %500 = vadd.xlane.f32.xlu0 %v499
    %v501 = vpop.xlane.xlu0 %500
    %v502 = vsel %vm369, %v493, 0.0
    %503 = vadd.xlane.f32.xlu0 %v502
    %v504 = vpop.xlane.xlu0 %503
    %v505 = vsel %vm369, %v495, 0.0
    %506 = vadd.xlane.f32.xlu0 %v505
    %v507 = vpop.xlane.xlu0 %506
    %v508 = vrcp.pop %v498
    %v509 = vrcp.pop %v501
    %v510 = vrcp.pop %v504
    %v511 = vrcp.pop %v507
    %v512 = vmul.f32 %v489, %v508
    %v513 = vmul.f32 %v491, %v509
    %v514 = vmul.f32 %v493, %v510
    %v515 = vmul.f32 %v495, %v511
    %516 = vrot.lane.b32.xlu0 %v353, 64
    %v517 = vpop.permute.xlu0 %516
    %v520 = vsel %vm369, %v512, 0
    %522 = vmatpush.msra.mxu0 0.0
    %523 = vmatpush.msra.mxu0 0.0
    %524 = vmatpush.msra.mxu0 0.0
    %525 = vmatpush.msra.mxu0 0.0
    %526 = vmatpush.msra.mxu0 0.0
    %527 = vmatpush.msra.mxu0 0.0
    %528 = vmatpush.msra.mxu0 0.0
    %529 = vmatpush.msra.mxu0 0.0
    %530 = vmatpush.msra.mxu0 0.0
    %531 = vmatpush.msra.mxu0 0.0
    %532 = vmatpush.msra.mxu0 0.0
    %533 = vmatpush.msra.mxu0 0.0
    %534 = vmatpush.msra.mxu0 0.0
    %535 = vmatpush.msra.mxu0 0.0
    %536 = vmatpush.msra.mxu0 0.0
    %537 = vmatpush.msra.mxu0 %v517
    %538 = vmatmul.f32.gmra.mxu0 %v520
    %v539 = vpop.f32.mrf.mxu0
    %v540 = vadd.f32 0.0, %v539
    %541 = vdwg.mxu0
    %542 = vrot.lane.b32.xlu0 %v357, 64
    %v543 = vpop.permute.xlu0 %542
    %v546 = vsel %vm369, %v513, 0
    %548 = vmatpush.msra.mxu0 0.0
    %549 = vmatpush.msra.mxu0 0.0
    %550 = vmatpush.msra.mxu0 0.0
    %551 = vmatpush.msra.mxu0 0.0
    %552 = vmatpush.msra.mxu0 0.0
    %553 = vmatpush.msra.mxu0 0.0
    %554 = vmatpush.msra.mxu0 0.0
    %555 = vmatpush.msra.mxu0 0.0
    %556 = vmatpush.msra.mxu0 0.0
    %557 = vmatpush.msra.mxu0 0.0
    %558 = vmatpush.msra.mxu0 0.0
    %559 = vmatpush.msra.mxu0 0.0
    %560 = vmatpush.msra.mxu0 0.0
    %561 = vmatpush.msra.mxu0 0.0
    %562 = vmatpush.msra.mxu0 0.0
    %563 = vmatpush.msra.mxu0 %v543
    %564 = vmatmul.f32.gmra.mxu0 %v546
    %v565 = vpop.f32.mrf.mxu0
    %v566 = vadd.f32 0.0, %v565
    %567 = vdwg.mxu0
    %568 = vrot.lane.b32.xlu0 %v359, 64
    %v569 = vpop.permute.xlu0 %568
    %v572 = vsel %vm369, %v514, 0
    %574 = vmatpush.msra.mxu0 0.0
    %575 = vmatpush.msra.mxu0 0.0
    %576 = vmatpush.msra.mxu0 0.0
    %577 = vmatpush.msra.mxu0 0.0
    %578 = vmatpush.msra.mxu0 0.0
    %579 = vmatpush.msra.mxu0 0.0
    %580 = vmatpush.msra.mxu0 0.0
    %581 = vmatpush.msra.mxu0 0.0
    %582 = vmatpush.msra.mxu0 0.0
    %583 = vmatpush.msra.mxu0 0.0
    %584 = vmatpush.msra.mxu0 0.0
    %585 = vmatpush.msra.mxu0 0.0
    %586 = vmatpush.msra.mxu0 0.0
    %587 = vmatpush.msra.mxu0 0.0
    %588 = vmatpush.msra.mxu0 0.0
    %589 = vmatpush.msra.mxu0 %v569
    %590 = vmatmul.f32.gmra.mxu0 %v572
    %v591 = vpop.f32.mrf.mxu0
    %v592 = vadd.f32 0.0, %v591
    %593 = vdwg.mxu0
    %594 = vrot.lane.b32.xlu0 %v361, 64
    %v595 = vpop.permute.xlu0 %594
    %v598 = vsel %vm369, %v515, 0
    %600 = vmatpush.msra.mxu0 0.0
    %601 = vmatpush.msra.mxu0 0.0
    %602 = vmatpush.msra.mxu0 0.0
    %603 = vmatpush.msra.mxu0 0.0
    %604 = vmatpush.msra.mxu0 0.0
    %605 = vmatpush.msra.mxu0 0.0
    %606 = vmatpush.msra.mxu0 0.0
    %607 = vmatpush.msra.mxu0 0.0
    %608 = vmatpush.msra.mxu0 0.0
    %609 = vmatpush.msra.mxu0 0.0
    %610 = vmatpush.msra.mxu0 0.0
    %611 = vmatpush.msra.mxu0 0.0
    %612 = vmatpush.msra.mxu0 0.0
    %613 = vmatpush.msra.mxu0 0.0
    %614 = vmatpush.msra.mxu0 0.0
    %615 = vmatpush.msra.mxu0 %v595
    %616 = vmatmul.f32.gmra.mxu0 %v598
    %v617 = vpop.f32.mrf.mxu0
    %v618 = vadd.f32 0.0, %v617
    %619 = vdwg.mxu0
    %621 = vrot.lane.b32.xlu0 %v566, 8
    %v622 = vpop.permute.xlu0 %621
    %625 = vrot.lane.b32.xlu0 %v592, 16
    %v626 = vpop.permute.xlu0 %625
    %629 = vrot.lane.b32.xlu0 %v618, 24
    %v630 = vpop.permute.xlu0 %629
    %v632 = vsel %vm369, %v540, %v622
    %vm633 = vcmask 130048
    %v634 = vsel %vm633, %v632, %v626
    %vm635 = vcmask 195584
    %v636 = vsel %vm635, %v634, %v630
    %v637 = vperm.slane %v366, 0
    %v639 = vsel %vm258, %v636, 0
    %641 = vmatpush.msra.mxu0 0.0
    %642 = vmatpush.msra.mxu0 0.0
    %643 = vmatpush.msra.mxu0 0.0
    %644 = vmatpush.msra.mxu0 0.0
    %645 = vmatpush.msra.mxu0 0.0
    %646 = vmatpush.msra.mxu0 0.0
    %647 = vmatpush.msra.mxu0 0.0
    %648 = vmatpush.msra.mxu0 0.0
    %649 = vmatpush.msra.mxu0 0.0
    %650 = vmatpush.msra.mxu0 0.0
    %651 = vmatpush.msra.mxu0 0.0
    %652 = vmatpush.msra.mxu0 0.0
    %653 = vmatpush.msra.mxu0 %v365
    %654 = vmatpush.msra.mxu0 %v364
    %655 = vmatpush.msra.mxu0 %v363
    %656 = vmatpush.msra.mxu0 %v362
    %657 = vmatmul.f32.gmra.mxu0 %v639
    %v658 = vpop.f32.mrf.mxu0
    %v659 = vadd.f32 %v637, %v658
    %660 = vdwg.mxu0
    %v661 = vadd.f32 %v288, %v659
    %v662 = vld [vmem:[#allocation16 + $0x1] sm:$0x1]
    %v663 = vld [vmem:[#allocation17 + $0x1] sm:$0x1]
    %v664 = vsel %vm258, %v661, 0.0
    %665 = vadd.xlane.f32.xlu0 %v664
    %v666 = vpop.xlane.xlu0 %665
    %v667 = vmul.f32 %v666, %v300
    %v668 = vmul.f32 %v661, %v661
    %v669 = vsel %vm258, %v668, 0.0
    %670 = vadd.xlane.f32.xlu0 %v669
    %v671 = vpop.xlane.xlu0 %670
    %v672 = vmul.f32 %v671, %v300
    %v673 = vmul.f32 %v667, %v667
    %v674 = vsub.f32 %v672, %v673
    %v675 = vsub.f32 %v661, %v667
    %v676 = vadd.f32 %v674, 1e-12
    %v677 = vrsqrt.pop %v676
    %v678 = vmul.f32 %v677, %v676
    %v679 = vmul.f32 %v678, %v677
    %v680 = vmul.f32 0.5, %v679
    %v681 = vsub.f32 1.5, %v680
    %v682 = vmul.f32 %v677, %v681
    %vm683 = vweird.f32 %v676
    %vm684 = vweird.f32 %v677
    %vm685 = vmor %vm683, %vm684
    %v686 = vsel %vm685, %v677, %v682
    %v687 = vmul.f32 %v675, %v686
    %v688 = vperm.slane %v662, 0
    %v689 = vmul.f32 %v687, %v688
    %v690 = vperm.slane %v663, 0
    %v691 = vadd.f32 %v689, %v690
    %v692 = vld [vmem:[%s7] sm:$0xff]
    %v693 = vld [vmem:[%s7 + $0x8] sm:$0xff]
    %v694 = vld [vmem:[%s7 + $0x10] sm:$0xff]
    %v695 = vld [vmem:[%s7 + $0x18] sm:$0xff]
    %v696 = vld [vmem:[#allocation8] sm:$0x1]
    %v697 = vperm.slane %v696, 0
    %v699 = vsel %vm258, %v691, 0
    %701 = vmatpush.msra.mxu0 0.0
    %702 = vmatpush.msra.mxu0 0.0
    %703 = vmatpush.msra.mxu0 0.0
    %704 = vmatpush.msra.mxu0 0.0
    %705 = vmatpush.msra.mxu0 0.0
    %706 = vmatpush.msra.mxu0 0.0
    %707 = vmatpush.msra.mxu0 0.0
    %708 = vmatpush.msra.mxu0 0.0
    %709 = vmatpush.msra.mxu0 0.0
    %710 = vmatpush.msra.mxu0 0.0
    %711 = vmatpush.msra.mxu0 0.0
    %712 = vmatpush.msra.mxu0 0.0
    %713 = vmatpush.msra.mxu0 %v695
    %714 = vmatpush.msra.mxu0 %v694
    %715 = vmatpush.msra.mxu0 %v693
    %716 = vmatpush.msra.mxu0 %v692
    %717 = vmatmul.f32.gmra.mxu0 %v699
    %v718 = vpop.f32.mrf.mxu0
    %v719 = vadd.f32 %v697, %v718
    %720 = vdwg.mxu0
    %722 = vrot.lane.b32.xlu0 %v719, 120
    %v723 = vpop.permute.xlu0 %722
    %724 = vrot.lane.b32.xlu0 %v719, 112
    %v725 = vpop.permute.xlu0 %724
    %726 = vrot.lane.b32.xlu0 %v719, 104
    %v727 = vpop.permute.xlu0 %726
    %730 = vrot.lane.b32.xlu0 %v283, 120
    %v731 = vpop.permute.xlu0 %730
    %732 = vrot.lane.b32.xlu0 %v286, 120
    %v733 = vpop.permute.xlu0 %732
    %734 = vrot.lane.b32.xlu0 %v283, 112
    %v735 = vpop.permute.xlu0 %734
    %736 = vrot.lane.b32.xlu0 %v286, 112
    %v737 = vpop.permute.xlu0 %736
    %738 = vrot.lane.b32.xlu0 %v283, 104
    %v739 = vpop.permute.xlu0 %738
    %740 = vrot.lane.b32.xlu0 %v286, 104
    %v741 = vpop.permute.xlu0 %740
    %v742 = vld [vmem:[#allocation13] sm:$0xff]
    %v743 = vld [vmem:[#allocation13 + $0x8] sm:$0xff]
    %v744 = vld [vmem:[#allocation13 + $0x10] sm:$0xff]
    %v745 = vld [vmem:[#allocation13 + $0x18] sm:$0xff]
    %v746 = vld [vmem:[#allocation14] sm:$0x1]
    %v748 = vperm.slane %v249, 0
    %v750 = vsel %vm369, %v719, 0
    %v752 = vsel %vm369, %v283, 0
    %v754 = vsel %vm369, %v286, 0
    %756 = vmatpush.xpose.msra.mxu0 0.0
    %757 = vmatpush.xpose.msra.mxu0 0.0
    %758 = vmatpush.xpose.msra.mxu0 0.0
    %759 = vmatpush.xpose.msra.mxu0 0.0
    %760 = vmatpush.xpose.msra.mxu0 0.0
    %761 = vmatpush.xpose.msra.mxu0 0.0
    %762 = vmatpush.xpose.msra.mxu0 0.0
    %763 = vmatpush.xpose.msra.mxu0 0.0
    %764 = vmatpush.xpose.msra.mxu0 0.0
    %765 = vmatpush.xpose.msra.mxu0 0.0
    %766 = vmatpush.xpose.msra.mxu0 0.0
    %767 = vmatpush.xpose.msra.mxu0 0.0
    %768 = vmatpush.xpose.msra.mxu0 0.0
    %769 = vmatpush.xpose.msra.mxu0 0.0
    %770 = vmatpush.xpose.msra.mxu0 %v754
    %771 = vmatpush.xpose.msra.mxu0 %v752
    %772 = vmatmul.f32.gmra.mxu0 %v750
    %v773 = vpop.f32.mrf.mxu0
    %v774 = vadd.f32 %v748, %v773
    %775 = vdwg.mxu0
    %v776 = vsel %vm369, %v723, 0
    %v778 = vsel %vm369, %v731, 0
    %v780 = vsel %vm369, %v733, 0
    %782 = vmatpush.xpose.msra.mxu0 0.0
    %783 = vmatpush.xpose.msra.mxu0 0.0
    %784 = vmatpush.xpose.msra.mxu0 0.0
    %785 = vmatpush.xpose.msra.mxu0 0.0
    %786 = vmatpush.xpose.msra.mxu0 0.0
    %787 = vmatpush.xpose.msra.mxu0 0.0
    %788 = vmatpush.xpose.msra.mxu0 0.0
    %789 = vmatpush.xpose.msra.mxu0 0.0
    %790 = vmatpush.xpose.msra.mxu0 0.0
    %791 = vmatpush.xpose.msra.mxu0 0.0
    %792 = vmatpush.xpose.msra.mxu0 0.0
    %793 = vmatpush.xpose.msra.mxu0 0.0
    %794 = vmatpush.xpose.msra.mxu0 0.0
    %795 = vmatpush.xpose.msra.mxu0 0.0
    %796 = vmatpush.xpose.msra.mxu0 %v780
    %797 = vmatpush.xpose.msra.mxu0 %v778
    %798 = vmatmul.f32.gmra.mxu0 %v776
    %v799 = vpop.f32.mrf.mxu0
    %v800 = vadd.f32 %v748, %v799
    %801 = vdwg.mxu0
    %v802 = vsel %vm369, %v725, 0
    %v804 = vsel %vm369, %v735, 0
    %v806 = vsel %vm369, %v737, 0
    %808 = vmatpush.xpose.msra.mxu0 0.0
    %809 = vmatpush.xpose.msra.mxu0 0.0
    %810 = vmatpush.xpose.msra.mxu0 0.0
    %811 = vmatpush.xpose.msra.mxu0 0.0
    %812 = vmatpush.xpose.msra.mxu0 0.0
    %813 = vmatpush.xpose.msra.mxu0 0.0
    %814 = vmatpush.xpose.msra.mxu0 0.0
    %815 = vmatpush.xpose.msra.mxu0 0.0
    %816 = vmatpush.xpose.msra.mxu0 0.0
    %817 = vmatpush.xpose.msra.mxu0 0.0
    %818 = vmatpush.xpose.msra.mxu0 0.0
    %819 = vmatpush.xpose.msra.mxu0 0.0
    %820 = vmatpush.xpose.msra.mxu0 0.0
    %821 = vmatpush.xpose.msra.mxu0 0.0
    %822 = vmatpush.xpose.msra.mxu0 %v806
    %823 = vmatpush.xpose.msra.mxu0 %v804
    %824 = vmatmul.f32.gmra.mxu0 %v802
    %v825 = vpop.f32.mrf.mxu0
    %v826 = vadd.f32 %v748, %v825
    %827 = vdwg.mxu0
    %v828 = vsel %vm369, %v727, 0
    %v830 = vsel %vm369, %v739, 0
    %v832 = vsel %vm369, %v741, 0
    %834 = vmatpush.xpose.msra.mxu0 0.0
    %835 = vmatpush.xpose.msra.mxu0 0.0
    %836 = vmatpush.xpose.msra.mxu0 0.0
    %837 = vmatpush.xpose.msra.mxu0 0.0
    %838 = vmatpush.xpose.msra.mxu0 0.0
    %839 = vmatpush.xpose.msra.mxu0 0.0
    %840 = vmatpush.xpose.msra.mxu0 0.0
    %841 = vmatpush.xpose.msra.mxu0 0.0
    %842 = vmatpush.xpose.msra.mxu0 0.0
    %843 = vmatpush.xpose.msra.mxu0 0.0
    %844 = vmatpush.xpose.msra.mxu0 0.0
    %845 = vmatpush.xpose.msra.mxu0 0.0
    %846 = vmatpush.xpose.msra.mxu0 0.0
    %847 = vmatpush.xpose.msra.mxu0 0.0
    %848 = vmatpush.xpose.msra.mxu0 %v832
    %849 = vmatpush.xpose.msra.mxu0 %v830
    %850 = vmatmul.f32.gmra.mxu0 %v828
    %v851 = vpop.f32.mrf.mxu0
    %v852 = vadd.f32 %v748, %v851
    %853 = vdwg.mxu0
    %v854 = vsel %vm633, %v774, -inf
    %855 = vmax.xlane.f32.xlu0 %v854
    %v856 = vpop.xlane.xlu0 %855
    %v857 = vsel %vm633, %v800, -inf
    %858 = vmax.xlane.f32.xlu0 %v857
    %v859 = vpop.xlane.xlu0 %858
    %v860 = vsel %vm633, %v826, -inf
    %861 = vmax.xlane.f32.xlu0 %v860
    %v862 = vpop.xlane.xlu0 %861
    %v863 = vsel %vm633, %v852, -inf
    %864 = vmax.xlane.f32.xlu0 %v863
    %v865 = vpop.xlane.xlu0 %864
    %v866 = vsub.f32 %v774, %v856
    %v867 = vsub.f32 %v800, %v859
    %v868 = vsub.f32 %v826, %v862
    %v869 = vsub.f32 %v852, %v865
    %v870 = vmul.f32 %v866, 1.442695
    %v871 = vpow.pop %v870
    %v872 = vmul.f32 %v867, 1.442695
    %v873 = vpow.pop %v872
    %v874 = vmul.f32 %v868, 1.442695
    %v875 = vpow.pop %v874
    %v876 = vmul.f32 %v869, 1.442695
    %v877 = vpow.pop %v876
    %v878 = vsel %vm633, %v871, 0.0
    %879 = vadd.xlane.f32.xlu0 %v878
    %v880 = vpop.xlane.xlu0 %879
    %v881 = vsel %vm633, %v873, 0.0
    %882 = vadd.xlane.f32.xlu0 %v881
    %v883 = vpop.xlane.xlu0 %882
    %v884 = vsel %vm633, %v875, 0.0
    %885 = vadd.xlane.f32.xlu0 %v884
    %v886 = vpop.xlane.xlu0 %885
    %v887 = vsel %vm633, %v877, 0.0
    %888 = vadd.xlane.f32.xlu0 %v887
    %v889 = vpop.xlane.xlu0 %888
    %v890 = vrcp.pop %v880
    %v891 = vrcp.pop %v883
    %v892 = vrcp.pop %v886
    %v893 = vrcp.pop %v889
    %v894 = vmul.f32 %v871, %v890
    %v895 = vmul.f32 %v873, %v891
    %v896 = vmul.f32 %v875, %v892
    %v897 = vmul.f32 %v877, %v893
    %898 = vrot.lane.b32.xlu0 %v283, 96
    %v899 = vpop.permute.xlu0 %898
    %900 = vrot.lane.b32.xlu0 %v286, 96
    %v901 = vpop.permute.xlu0 %900
    %v905 = vsel %vm633, %v894, 0
    %907 = vmatpush.msra.mxu0 0.0
    %908 = vmatpush.msra.mxu0 0.0
    %909 = vmatpush.msra.mxu0 0.0
    %910 = vmatpush.msra.mxu0 0.0
    %911 = vmatpush.msra.mxu0 0.0
    %912 = vmatpush.msra.mxu0 0.0
    %913 = vmatpush.msra.mxu0 0.0
    %914 = vmatpush.msra.mxu0 0.0
    %915 = vmatpush.msra.mxu0 0.0
    %916 = vmatpush.msra.mxu0 0.0
    %917 = vmatpush.msra.mxu0 0.0
    %918 = vmatpush.msra.mxu0 0.0
    %919 = vmatpush.msra.mxu0 0.0
    %920 = vmatpush.msra.mxu0 0.0
    %921 = vmatpush.msra.mxu0 %v901
    %922 = vmatpush.msra.mxu0 %v899
    %923 = vmatmul.f32.gmra.mxu0 %v905
    %v924 = vpop.f32.mrf.mxu0
    %v925 = vadd.f32 0.0, %v924
    %926 = vdwg.mxu0
    %927 = vrot.lane.b32.xlu0 %v731, 96
    %v928 = vpop.permute.xlu0 %927
    %929 = vrot.lane.b32.xlu0 %v733, 96
    %v930 = vpop.permute.xlu0 %929
    %v934 = vsel %vm633, %v895, 0
    %936 = vmatpush.msra.mxu0 0.0
    %937 = vmatpush.msra.mxu0 0.0
    %938 = vmatpush.msra.mxu0 0.0
    %939 = vmatpush.msra.mxu0 0.0
    %940 = vmatpush.msra.mxu0 0.0
    %941 = vmatpush.msra.mxu0 0.0
    %942 = vmatpush.msra.mxu0 0.0
    %943 = vmatpush.msra.mxu0 0.0
    %944 = vmatpush.msra.mxu0 0.0
    %945 = vmatpush.msra.mxu0 0.0
    %946 = vmatpush.msra.mxu0 0.0
    %947 = vmatpush.msra.mxu0 0.0
    %948 = vmatpush.msra.mxu0 0.0
    %949 = vmatpush.msra.mxu0 0.0
    %950 = vmatpush.msra.mxu0 %v930
    %951 = vmatpush.msra.mxu0 %v928
    %952 = vmatmul.f32.gmra.mxu0 %v934
    %v953 = vpop.f32.mrf.mxu0
    %v954 = vadd.f32 0.0, %v953
    %955 = vdwg.mxu0
    %956 = vrot.lane.b32.xlu0 %v735, 96
    %v957 = vpop.permute.xlu0 %956
    %958 = vrot.lane.b32.xlu0 %v737, 96
    %v959 = vpop.permute.xlu0 %958
    %v963 = vsel %vm633, %v896, 0
    %965 = vmatpush.msra.mxu0 0.0
    %966 = vmatpush.msra.mxu0 0.0
    %967 = vmatpush.msra.mxu0 0.0
    %968 = vmatpush.msra.mxu0 0.0
    %969 = vmatpush.msra.mxu0 0.0
    %970 = vmatpush.msra.mxu0 0.0
    %971 = vmatpush.msra.mxu0 0.0
    %972 = vmatpush.msra.mxu0 0.0
    %973 = vmatpush.msra.mxu0 0.0
    %974 = vmatpush.msra.mxu0 0.0
    %975 = vmatpush.msra.mxu0 0.0
    %976 = vmatpush.msra.mxu0 0.0
    %977 = vmatpush.msra.mxu0 0.0
    %978 = vmatpush.msra.mxu0 0.0
    %979 = vmatpush.msra.mxu0 %v959
    %980 = vmatpush.msra.mxu0 %v957
    %981 = vmatmul.f32.gmra.mxu0 %v963
    %v982 = vpop.f32.mrf.mxu0
    %v983 = vadd.f32 0.0, %v982
    %984 = vdwg.mxu0
    %985 = vrot.lane.b32.xlu0 %v739, 96
    %v986 = vpop.permute.xlu0 %985
    %987 = vrot.lane.b32.xlu0 %v741, 96
    %v988 = vpop.permute.xlu0 %987
    %v992 = vsel %vm633, %v897, 0
    %994 = vmatpush.msra.mxu0 0.0
    %995 = vmatpush.msra.mxu0 0.0
    %996 = vmatpush.msra.mxu0 0.0
    %997 = vmatpush.msra.mxu0 0.0
    %998 = vmatpush.msra.mxu0 0.0
    %999 = vmatpush.msra.mxu0 0.0
    %1000 = vmatpush.msra.mxu0 0.0
    %1001 = vmatpush.msra.mxu0 0.0
    %1002 = vmatpush.msra.mxu0 0.0
    %1003 = vmatpush.msra.mxu0 0.0
    %1004 = vmatpush.msra.mxu0 0.0
    %1005 = vmatpush.msra.mxu0 0.0
    %1006 = vmatpush.msra.mxu0 0.0
    %1007 = vmatpush.msra.mxu0 0.0
    %1008 = vmatpush.msra.mxu0 %v988
    %1009 = vmatpush.msra.mxu0 %v986
    %1010 = vmatmul.f32.gmra.mxu0 %v992
    %v1011 = vpop.f32.mrf.mxu0
    %v1012 = vadd.f32 0.0, %v1011
    %1013 = vdwg.mxu0
    %1015 = vrot.lane.b32.xlu0 %v954, 8
    %v1016 = vpop.permute.xlu0 %1015
    %1019 = vrot.lane.b32.xlu0 %v983, 16
    %v1020 = vpop.permute.xlu0 %1019
    %1023 = vrot.lane.b32.xlu0 %v1012, 24
    %v1024 = vpop.permute.xlu0 %1023
    %v1026 = vsel %vm369, %v925, %v1016
    %v1027 = vsel %vm633, %v1026, %v1020
    %v1028 = vsel %vm635, %v1027, %v1024
    %v1029 = vperm.slane %v746, 0
    %v1031 = vsel %vm258, %v1028, 0
    %1033 = vmatpush.msra.mxu0 0.0
    %1034 = vmatpush.msra.mxu0 0.0
    %1035 = vmatpush.msra.mxu0 0.0
    %1036 = vmatpush.msra.mxu0 0.0
    %1037 = vmatpush.msra.mxu0 0.0
    %1038 = vmatpush.msra.mxu0 0.0
    %1039 = vmatpush.msra.mxu0 0.0
    %1040 = vmatpush.msra.mxu0 0.0
    %1041 = vmatpush.msra.mxu0 0.0
    %1042 = vmatpush.msra.mxu0 0.0
    %1043 = vmatpush.msra.mxu0 0.0
    %1044 = vmatpush.msra.mxu0 0.0
    %1045 = vmatpush.msra.mxu0 %v745
    %1046 = vmatpush.msra.mxu0 %v744
    %1047 = vmatpush.msra.mxu0 %v743
    %1048 = vmatpush.msra.mxu0 %v742
    %1049 = vmatmul.f32.gmra.mxu0 %v1031
    %v1050 = vpop.f32.mrf.mxu0
    %v1051 = vadd.f32 %v1029, %v1050
    %1052 = vdwg.mxu0
    %v1053 = vadd.f32 %v661, %v1051
    %v1054 = vld [vmem:[#allocation16 + $0x2] sm:$0x1]
    %v1055 = vld [vmem:[#allocation17 + $0x2] sm:$0x1]
    %v1056 = vsel %vm258, %v1053, 0.0
    %1057 = vadd.xlane.f32.xlu0 %v1056
    %v1058 = vpop.xlane.xlu0 %1057
    %v1059 = vmul.f32 %v1058, %v300
    %v1060 = vmul.f32 %v1053, %v1053
    %v1061 = vsel %vm258, %v1060, 0.0
    %1062 = vadd.xlane.f32.xlu0 %v1061
    %v1063 = vpop.xlane.xlu0 %1062
    %v1064 = vmul.f32 %v1063, %v300
    %v1065 = vmul.f32 %v1059, %v1059
    %v1066 = vsub.f32 %v1064, %v1065
    %v1067 = vsub.f32 %v1053, %v1059
    %v1068 = vadd.f32 %v1066, 1e-12
    %v1069 = vrsqrt.pop %v1068
    %v1070 = vmul.f32 %v1069, %v1068
    %v1071 = vmul.f32 %v1070, %v1069
    %v1072 = vmul.f32 0.5, %v1071
    %v1073 = vsub.f32 1.5, %v1072
    %v1074 = vmul.f32 %v1069, %v1073
    %vm1075 = vweird.f32 %v1068
    %vm1076 = vweird.f32 %v1069
    %vm1077 = vmor %vm1075, %vm1076
    %v1078 = vsel %vm1077, %v1069, %v1074
    %v1079 = vmul.f32 %v1067, %v1078
    %v1080 = vperm.slane %v1054, 0
    %v1081 = vmul.f32 %v1079, %v1080
    %v1082 = vperm.slane %v1055, 0
    %v1083 = vadd.f32 %v1081, %v1082
    %v1084 = vld [vmem:[#allocation19] sm:$0xff]
    %v1085 = vld [vmem:[#allocation19 + $0x8] sm:$0xff]
    %v1086 = vld [vmem:[#allocation19 + $0x10] sm:$0xff]
    %v1087 = vld [vmem:[#allocation19 + $0x18] sm:$0xff]
    %v1088 = vld [vmem:[#allocation20] sm:$0x1]
    %v1089 = vperm.slane %v1088, 0
    %v1091 = vsel %vm258, %v1083, 0
    %1093 = vmatpush.msra.mxu0 0.0
    %1094 = vmatpush.msra.mxu0 0.0
    %1095 = vmatpush.msra.mxu0 0.0
    %1096 = vmatpush.msra.mxu0 0.0
    %1097 = vmatpush.msra.mxu0 0.0
    %1098 = vmatpush.msra.mxu0 0.0
    %1099 = vmatpush.msra.mxu0 0.0
    %1100 = vmatpush.msra.mxu0 0.0
    %1101 = vmatpush.msra.mxu0 0.0
    %1102 = vmatpush.msra.mxu0 0.0
    %1103 = vmatpush.msra.mxu0 0.0
    %1104 = vmatpush.msra.mxu0 0.0
    %1105 = vmatpush.msra.mxu0 %v1087
    %1106 = vmatpush.msra.mxu0 %v1086
    %1107 = vmatpush.msra.mxu0 %v1085
    %1108 = vmatpush.msra.mxu0 %v1084
    %1109 = vmatmul.f32.gmra.mxu0 %v1091
    %v1110 = vpop.f32.mrf.mxu0
    %v1111 = vadd.f32 %v1089, %v1110
    %1112 = vdwg.mxu0
    %v1113 = vmul.f32 %v1111, %v1111
    %v1114 = vmul.f32 %v1111, %v1113
    %v1115 = vmul.f32 %v1114, 0.044715
    %v1116 = vadd.f32 %v1111, %v1115
    %v1117 = vmul.f32 %v1116, 0.7978846
    %v1118 = vtanh.pop %v1117
    %v1119 = vadd.f32 %v1118, 1.0
    %v1120 = vmul.f32 %v1119, 0.5
    %v1121 = vmul.f32 %v1111, %v1120
    %v1122 = vld [vmem:[%s17] sm:$0xff]
    %v1123 = vld [vmem:[%s17 + $0x8] sm:$0xff]
    %v1124 = vld [vmem:[%s17 + $0x10] sm:$0xff]
    %v1125 = vld [vmem:[%s17 + $0x18] sm:$0xff]
    %v1126 = vld [vmem:[%s17 + $0x20] sm:$0xff]
    %v1127 = vld [vmem:[%s17 + $0x28] sm:$0xff]
    %v1128 = vld [vmem:[%s17 + $0x30] sm:$0xff]
    %v1129 = vld [vmem:[%s17 + $0x38] sm:$0xff]
    %v1130 = vld [vmem:[#allocation22] sm:$0x1]
    %v1131 = vperm.slane %v1130, 0
    %vm1132 = vcmask 523264
    %v1134 = vsel %vm1132, %v1121, 0
    %1136 = vmatpush.msra.mxu0 0.0
    %1137 = vmatpush.msra.mxu0 0.0
    %1138 = vmatpush.msra.mxu0 0.0
    %1139 = vmatpush.msra.mxu0 0.0
    %1140 = vmatpush.msra.mxu0 0.0
    %1141 = vmatpush.msra.mxu0 0.0
    %1142 = vmatpush.msra.mxu0 0.0
    %1143 = vmatpush.msra.mxu0 0.0
    %1144 = vmatpush.msra.mxu0 %v1129
    %1145 = vmatpush.msra.mxu0 %v1128
    %1146 = vmatpush.msra.mxu0 %v1127
    %1147 = vmatpush.msra.mxu0 %v1126
    %1148 = vmatpush.msra.mxu0 %v1125
    %1149 = vmatpush.msra.mxu0 %v1124
    %1150 = vmatpush.msra.mxu0 %v1123
    %1151 = vmatpush.msra.mxu0 %v1122
    %1152 = vmatmul.f32.gmra.mxu0 %v1134
    %v1153 = vpop.f32.mrf.mxu0
    %v1154 = vadd.f32 %v1131, %v1153
    %1155 = vdwg.mxu0
    %v1156 = vadd.f32 %v1053, %v1154
    %v1157 = vld [vmem:[#allocation16 + $0x3] sm:$0x1]
    %v1158 = vld [vmem:[#allocation17 + $0x3] sm:$0x1]
    %v1159 = vsel %vm258, %v1156, 0.0
    %1160 = vadd.xlane.f32.xlu0 %v1159
    %v1161 = vpop.xlane.xlu0 %1160
    %v1162 = vmul.f32 %v1161, %v300
    %v1163 = vmul.f32 %v1156, %v1156
    %v1164 = vsel %vm258, %v1163, 0.0
    %1165 = vadd.xlane.f32.xlu0 %v1164
    %v1166 = vpop.xlane.xlu0 %1165
    %v1167 = vmul.f32 %v1166, %v300
    %v1168 = vmul.f32 %v1162, %v1162
    %v1169 = vsub.f32 %v1167, %v1168
    %v1170 = vsub.f32 %v1156, %v1162
    %v1171 = vadd.f32 %v1169, 1e-12
    %v1172 = vrsqrt.pop %v1171
    %v1173 = vmul.f32 %v1172, %v1171
    %v1174 = vmul.f32 %v1173, %v1172
    %v1175 = vmul.f32 0.5, %v1174
    %v1176 = vsub.f32 1.5, %v1175
    %v1177 = vmul.f32 %v1172, %v1176
    %vm1178 = vweird.f32 %v1171
    %vm1179 = vweird.f32 %v1172
    %vm1180 = vmor %vm1178, %vm1179
    %v1181 = vsel %vm1180, %v1172, %v1177
    %v1182 = vmul.f32 %v1170, %v1181
    %v1183 = vperm.slane %v1157, 0
    %v1184 = vmul.f32 %v1182, %v1183
    %v1185 = vperm.slane %v1158, 0
    %v1186 = vadd.f32 %v1184, %v1185
    %s1187 = scalar_lea.vmem %s3, 32
    %v1188 = vld [vmem:[%s1187] sm:$0xff]
    %v1189 = vld [vmem:[%s1187 + $0x8] sm:$0xff]
    %v1190 = vld [vmem:[%s1187 + $0x10] sm:$0xff]
    %v1191 = vld [vmem:[%s1187 + $0x18] sm:$0xff]
    %v1192 = vld [vmem:[#allocation5 + $0x1] sm:$0x1]
    %v1193 = vperm.slane %v1192, 0
    %v1195 = vsel %vm258, %v1186, 0
    %1197 = vmatpush.msra.mxu0 0.0
    %1198 = vmatpush.msra.mxu0 0.0
    %1199 = vmatpush.msra.mxu0 0.0
    %1200 = vmatpush.msra.mxu0 0.0
    %1201 = vmatpush.msra.mxu0 0.0
    %1202 = vmatpush.msra.mxu0 0.0
    %1203 = vmatpush.msra.mxu0 0.0
    %1204 = vmatpush.msra.mxu0 0.0
    %1205 = vmatpush.msra.mxu0 0.0
    %1206 = vmatpush.msra.mxu0 0.0
    %1207 = vmatpush.msra.mxu0 0.0
    %1208 = vmatpush.msra.mxu0 0.0
    %1209 = vmatpush.msra.mxu0 %v1191
    %1210 = vmatpush.msra.mxu0 %v1190
    %1211 = vmatpush.msra.mxu0 %v1189
    %1212 = vmatpush.msra.mxu0 %v1188
    %1213 = vmatmul.f32.gmra.mxu0 %v1195
    %v1214 = vpop.f32.mrf.mxu0
    %v1215 = vadd.f32 %v1193, %v1214
    %1216 = vdwg.mxu0
    %1218 = vrot.lane.b32.xlu0 %v1215, 120
    %v1219 = vpop.permute.xlu0 %1218
    %1220 = vrot.lane.b32.xlu0 %v1215, 112
    %v1221 = vpop.permute.xlu0 %1220
    %1222 = vrot.lane.b32.xlu0 %v1215, 104
    %v1223 = vpop.permute.xlu0 %1222
    %s1224 = scalar_lea.vmem %s5, 32
    %v1225 = vld [vmem:[%s1224] sm:$0xff]
    %v1226 = vld [vmem:[%s1224 + $0x8] sm:$0xff]
    %v1227 = vld [vmem:[%s1224 + $0x10] sm:$0xff]
    %v1228 = vld [vmem:[%s1224 + $0x18] sm:$0xff]
    %v1229 = vld [vmem:[#allocation7 + $0x1] sm:$0x1]
    %1230 = vrot.lane.b32.xlu0 %v1215, 96
    %v1231 = vpop.permute.xlu0 %1230
    %v1232 = vsel %vm369, %v1215, 0
    %v1234 = vsel %vm369, %v1231, 0
    %1236 = vmatpush.xpose.msra.mxu0 0.0
    %1237 = vmatpush.xpose.msra.mxu0 0.0
    %1238 = vmatpush.xpose.msra.mxu0 0.0
    %1239 = vmatpush.xpose.msra.mxu0 0.0
    %1240 = vmatpush.xpose.msra.mxu0 0.0
    %1241 = vmatpush.xpose.msra.mxu0 0.0
    %1242 = vmatpush.xpose.msra.mxu0 0.0
    %1243 = vmatpush.xpose.msra.mxu0 0.0
    %1244 = vmatpush.xpose.msra.mxu0 0.0
    %1245 = vmatpush.xpose.msra.mxu0 0.0
    %1246 = vmatpush.xpose.msra.mxu0 0.0
    %1247 = vmatpush.xpose.msra.mxu0 0.0
    %1248 = vmatpush.xpose.msra.mxu0 0.0
    %1249 = vmatpush.xpose.msra.mxu0 0.0
    %1250 = vmatpush.xpose.msra.mxu0 0.0
    %1251 = vmatpush.xpose.msra.mxu0 %v1234
    %1252 = vmatmul.f32.gmra.mxu0 %v1232
    %v1253 = vpop.f32.mrf.mxu0
    %v1254 = vadd.f32 0.0, %v1253
    %1255 = vdwg.mxu0
    %1256 = vrot.lane.b32.xlu0 %v1219, 96
    %v1257 = vpop.permute.xlu0 %1256
    %v1258 = vsel %vm369, %v1219, 0
    %v1260 = vsel %vm369, %v1257, 0
    %1262 = vmatpush.xpose.msra.mxu0 0.0
    %1263 = vmatpush.xpose.msra.mxu0 0.0
    %1264 = vmatpush.xpose.msra.mxu0 0.0
    %1265 = vmatpush.xpose.msra.mxu0 0.0
    %1266 = vmatpush.xpose.msra.mxu0 0.0
    %1267 = vmatpush.xpose.msra.mxu0 0.0
    %1268 = vmatpush.xpose.msra.mxu0 0.0
    %1269 = vmatpush.xpose.msra.mxu0 0.0
    %1270 = vmatpush.xpose.msra.mxu0 0.0
    %1271 = vmatpush.xpose.msra.mxu0 0.0
    %1272 = vmatpush.xpose.msra.mxu0 0.0
    %1273 = vmatpush.xpose.msra.mxu0 0.0
    %1274 = vmatpush.xpose.msra.mxu0 0.0
    %1275 = vmatpush.xpose.msra.mxu0 0.0
    %1276 = vmatpush.xpose.msra.mxu0 0.0
    %1277 = vmatpush.xpose.msra.mxu0 %v1260
    %1278 = vmatmul.f32.gmra.mxu0 %v1258
    %v1279 = vpop.f32.mrf.mxu0
    %v1280 = vadd.f32 0.0, %v1279
    %1281 = vdwg.mxu0
    %1282 = vrot.lane.b32.xlu0 %v1221, 96
    %v1283 = vpop.permute.xlu0 %1282
    %v1284 = vsel %vm369, %v1221, 0
    %v1286 = vsel %vm369, %v1283, 0
    %1288 = vmatpush.xpose.msra.mxu0 0.0
    %1289 = vmatpush.xpose.msra.mxu0 0.0
    %1290 = vmatpush.xpose.msra.mxu0 0.0
    %1291 = vmatpush.xpose.msra.mxu0 0.0
    %1292 = vmatpush.xpose.msra.mxu0 0.0
    %1293 = vmatpush.xpose.msra.mxu0 0.0
    %1294 = vmatpush.xpose.msra.mxu0 0.0
    %1295 = vmatpush.xpose.msra.mxu0 0.0
    %1296 = vmatpush.xpose.msra.mxu0 0.0
    %1297 = vmatpush.xpose.msra.mxu0 0.0
    %1298 = vmatpush.xpose.msra.mxu0 0.0
    %1299 = vmatpush.xpose.msra.mxu0 0.0
    %1300 = vmatpush.xpose.msra.mxu0 0.0
    %1301 = vmatpush.xpose.msra.mxu0 0.0
    %1302 = vmatpush.xpose.msra.mxu0 0.0
    %1303 = vmatpush.xpose.msra.mxu0 %v1286
    %1304 = vmatmul.f32.gmra.mxu0 %v1284
    %v1305 = vpop.f32.mrf.mxu0
    %v1306 = vadd.f32 0.0, %v1305
    %1307 = vdwg.mxu0
    %1308 = vrot.lane.b32.xlu0 %v1223, 96
    %v1309 = vpop.permute.xlu0 %1308
    %v1310 = vsel %vm369, %v1223, 0
    %v1312 = vsel %vm369, %v1309, 0
    %1314 = vmatpush.xpose.msra.mxu0 0.0
    %1315 = vmatpush.xpose.msra.mxu0 0.0
    %1316 = vmatpush.xpose.msra.mxu0 0.0
    %1317 = vmatpush.xpose.msra.mxu0 0.0
    %1318 = vmatpush.xpose.msra.mxu0 0.0
    %1319 = vmatpush.xpose.msra.mxu0 0.0
    %1320 = vmatpush.xpose.msra.mxu0 0.0
    %1321 = vmatpush.xpose.msra.mxu0 0.0
    %1322 = vmatpush.xpose.msra.mxu0 0.0
    %1323 = vmatpush.xpose.msra.mxu0 0.0
    %1324 = vmatpush.xpose.msra.mxu0 0.0
    %1325 = vmatpush.xpose.msra.mxu0 0.0
    %1326 = vmatpush.xpose.msra.mxu0 0.0
    %1327 = vmatpush.xpose.msra.mxu0 0.0
    %1328 = vmatpush.xpose.msra.mxu0 0.0
    %1329 = vmatpush.xpose.msra.mxu0 %v1312
    %1330 = vmatmul.f32.gmra.mxu0 %v1310
    %v1331 = vpop.f32.mrf.mxu0
    %v1332 = vadd.f32 0.0, %v1331
    %1333 = vdwg.mxu0
    %v1334 = vsel %vm369, %v1254, -inf
    %1335 = vmax.xlane.f32.xlu0 %v1334
    %v1336 = vpop.xlane.xlu0 %1335
    %v1337 = vsel %vm369, %v1280, -inf
    %1338 = vmax.xlane.f32.xlu0 %v1337
    %v1339 = vpop.xlane.xlu0 %1338
    %v1340 = vsel %vm369, %v1306, -inf
    %1341 = vmax.xlane.f32.xlu0 %v1340
    %v1342 = vpop.xlane.xlu0 %1341
    %v1343 = vsel %vm369, %v1332, -inf
    %1344 = vmax.xlane.f32.xlu0 %v1343
    %v1345 = vpop.xlane.xlu0 %1344
    %v1346 = vsub.f32 %v1254, %v1336
    %v1347 = vsub.f32 %v1280, %v1339
    %v1348 = vsub.f32 %v1306, %v1342
    %v1349 = vsub.f32 %v1332, %v1345
    %v1350 = vmul.f32 %v1346, 1.442695
    %v1351 = vpow.pop %v1350
    %v1352 = vmul.f32 %v1347, 1.442695
    %v1353 = vpow.pop %v1352
    %v1354 = vmul.f32 %v1348, 1.442695
    %v1355 = vpow.pop %v1354
    %v1356 = vmul.f32 %v1349, 1.442695
    %v1357 = vpow.pop %v1356
    %v1358 = vsel %vm369, %v1351, 0.0
    %1359 = vadd.xlane.f32.xlu0 %v1358
    %v1360 = vpop.xlane.xlu0 %1359
    %v1361 = vsel %vm369, %v1353, 0.0
    %1362 = vadd.xlane.f32.xlu0 %v1361
    %v1363 = vpop.xlane.xlu0 %1362
    %v1364 = vsel %vm369, %v1355, 0.0
    %1365 = vadd.xlane.f32.xlu0 %v1364
    %v1366 = vpop.xlane.xlu0 %1365
    %v1367 = vsel %vm369, %v1357, 0.0
    %1368 = vadd.xlane.f32.xlu0 %v1367
    %v1369 = vpop.xlane.xlu0 %1368
    %v1370 = vrcp.pop %v1360
    %v1371 = vrcp.pop %v1363
    %v1372 = vrcp.pop %v1366
    %v1373 = vrcp.pop %v1369
    %v1374 = vmul.f32 %v1351, %v1370
    %v1375 = vmul.f32 %v1353, %v1371
    %v1376 = vmul.f32 %v1355, %v1372
    %v1377 = vmul.f32 %v1357, %v1373
    %1378 = vrot.lane.b32.xlu0 %v1215, 64
    %v1379 = vpop.permute.xlu0 %1378
    %v1382 = vsel %vm369, %v1374, 0
    %1384 = vmatpush.msra.mxu0 0.0
    %1385 = vmatpush.msra.mxu0 0.0
    %1386 = vmatpush.msra.mxu0 0.0
    %1387 = vmatpush.msra.mxu0 0.0
    %1388 = vmatpush.msra.mxu0 0.0
    %1389 = vmatpush.msra.mxu0 0.0
    %1390 = vmatpush.msra.mxu0 0.0
    %1391 = vmatpush.msra.mxu0 0.0
    %1392 = vmatpush.msra.mxu0 0.0
    %1393 = vmatpush.msra.mxu0 0.0
    %1394 = vmatpush.msra.mxu0 0.0
    %1395 = vmatpush.msra.mxu0 0.0
    %1396 = vmatpush.msra.mxu0 0.0
    %1397 = vmatpush.msra.mxu0 0.0
    %1398 = vmatpush.msra.mxu0 0.0
    %1399 = vmatpush.msra.mxu0 %v1379
    %1400 = vmatmul.f32.gmra.mxu0 %v1382
    %v1401 = vpop.f32.mrf.mxu0
    %v1402 = vadd.f32 0.0, %v1401
    %1403 = vdwg.mxu0
    %1404 = vrot.lane.b32.xlu0 %v1219, 64
    %v1405 = vpop.permute.xlu0 %1404
    %v1408 = vsel %vm369, %v1375, 0
    %1410 = vmatpush.msra.mxu0 0.0
    %1411 = vmatpush.msra.mxu0 0.0
    %1412 = vmatpush.msra.mxu0 0.0
    %1413 = vmatpush.msra.mxu0 0.0
    %1414 = vmatpush.msra.mxu0 0.0
    %1415 = vmatpush.msra.mxu0 0.0
    %1416 = vmatpush.msra.mxu0 0.0
    %1417 = vmatpush.msra.mxu0 0.0
    %1418 = vmatpush.msra.mxu0 0.0
    %1419 = vmatpush.msra.mxu0 0.0
    %1420 = vmatpush.msra.mxu0 0.0
    %1421 = vmatpush.msra.mxu0 0.0
    %1422 = vmatpush.msra.mxu0 0.0
    %1423 = vmatpush.msra.mxu0 0.0
    %1424 = vmatpush.msra.mxu0 0.0
    %1425 = vmatpush.msra.mxu0 %v1405
    %1426 = vmatmul.f32.gmra.mxu0 %v1408
    %v1427 = vpop.f32.mrf.mxu0
    %v1428 = vadd.f32 0.0, %v1427
    %1429 = vdwg.mxu0
    %1430 = vrot.lane.b32.xlu0 %v1221, 64
    %v1431 = vpop.permute.xlu0 %1430
    %v1434 = vsel %vm369, %v1376, 0
    %1436 = vmatpush.msra.mxu0 0.0
    %1437 = vmatpush.msra.mxu0 0.0
    %1438 = vmatpush.msra.mxu0 0.0
    %1439 = vmatpush.msra.mxu0 0.0
    %1440 = vmatpush.msra.mxu0 0.0
    %1441 = vmatpush.msra.mxu0 0.0
    %1442 = vmatpush.msra.mxu0 0.0
    %1443 = vmatpush.msra.mxu0 0.0
    %1444 = vmatpush.msra.mxu0 0.0
    %1445 = vmatpush.msra.mxu0 0.0
    %1446 = vmatpush.msra.mxu0 0.0
    %1447 = vmatpush.msra.mxu0 0.0
    %1448 = vmatpush.msra.mxu0 0.0
    %1449 = vmatpush.msra.mxu0 0.0
    %1450 = vmatpush.msra.mxu0 0.0
    %1451 = vmatpush.msra.mxu0 %v1431
    %1452 = vmatmul.f32.gmra.mxu0 %v1434
    %v1453 = vpop.f32.mrf.mxu0
    %v1454 = vadd.f32 0.0, %v1453
    %1455 = vdwg.mxu0
    %1456 = vrot.lane.b32.xlu0 %v1223, 64
    %v1457 = vpop.permute.xlu0 %1456
    %v1460 = vsel %vm369, %v1377, 0
    %1462 = vmatpush.msra.mxu0 0.0
    %1463 = vmatpush.msra.mxu0 0.0
    %1464 = vmatpush.msra.mxu0 0.0
    %1465 = vmatpush.msra.mxu0 0.0
    %1466 = vmatpush.msra.mxu0 0.0
    %1467 = vmatpush.msra.mxu0 0.0
    %1468 = vmatpush.msra.mxu0 0.0
    %1469 = vmatpush.msra.mxu0 0.0
    %1470 = vmatpush.msra.mxu0 0.0
    %1471 = vmatpush.msra.mxu0 0.0
    %1472 = vmatpush.msra.mxu0 0.0
    %1473 = vmatpush.msra.mxu0 0.0
    %1474 = vmatpush.msra.mxu0 0.0
    %1475 = vmatpush.msra.mxu0 0.0
    %1476 = vmatpush.msra.mxu0 0.0
    %1477 = vmatpush.msra.mxu0 %v1457
    %1478 = vmatmul.f32.gmra.mxu0 %v1460
    %v1479 = vpop.f32.mrf.mxu0
    %v1480 = vadd.f32 0.0, %v1479
    %1481 = vdwg.mxu0
    %1483 = vrot.lane.b32.xlu0 %v1428, 8
    %v1484 = vpop.permute.xlu0 %1483
    %1487 = vrot.lane.b32.xlu0 %v1454, 16
    %v1488 = vpop.permute.xlu0 %1487
    %1491 = vrot.lane.b32.xlu0 %v1480, 24
    %v1492 = vpop.permute.xlu0 %1491
    %v1494 = vsel %vm369, %v1402, %v1484
    %v1495 = vsel %vm633, %v1494, %v1488
    %v1496 = vsel %vm635, %v1495, %v1492
    %v1497 = vperm.slane %v1229, 0
    %v1499 = vsel %vm258, %v1496, 0
    %1501 = vmatpush.msra.mxu0 0.0
    %1502 = vmatpush.msra.mxu0 0.0
    %1503 = vmatpush.msra.mxu0 0.0
    %1504 = vmatpush.msra.mxu0 0.0
    %1505 = vmatpush.msra.mxu0 0.0
    %1506 = vmatpush.msra.mxu0 0.0
    %1507 = vmatpush.msra.mxu0 0.0
    %1508 = vmatpush.msra.mxu0 0.0
    %1509 = vmatpush.msra.mxu0 0.0
    %1510 = vmatpush.msra.mxu0 0.0
    %1511 = vmatpush.msra.mxu0 0.0
    %1512 = vmatpush.msra.mxu0 0.0
    %1513 = vmatpush.msra.mxu0 %v1228
    %1514 = vmatpush.msra.mxu0 %v1227
    %1515 = vmatpush.msra.mxu0 %v1226
    %1516 = vmatpush.msra.mxu0 %v1225
    %1517 = vmatmul.f32.gmra.mxu0 %v1499
    %v1518 = vpop.f32.mrf.mxu0
    %v1519 = vadd.f32 %v1497, %v1518
    %1520 = vdwg.mxu0
    %v1521 = vadd.f32 %v1156, %v1519
    %v1522 = vld [vmem:[#allocation16 + $0x4] sm:$0x1]
    %v1523 = vld [vmem:[#allocation17 + $0x4] sm:$0x1]
    %v1524 = vsel %vm258, %v1521, 0.0
    %1525 = vadd.xlane.f32.xlu0 %v1524
    %v1526 = vpop.xlane.xlu0 %1525
    %v1527 = vmul.f32 %v1526, %v300
    %v1528 = vmul.f32 %v1521, %v1521
    %v1529 = vsel %vm258, %v1528, 0.0
    %1530 = vadd.xlane.f32.xlu0 %v1529
    %v1531 = vpop.xlane.xlu0 %1530
    %v1532 = vmul.f32 %v1531, %v300
    %v1533 = vmul.f32 %v1527, %v1527
    %v1534 = vsub.f32 %v1532, %v1533
    %v1535 = vsub.f32 %v1521, %v1527
    %v1536 = vadd.f32 %v1534, 1e-12
    %v1537 = vrsqrt.pop %v1536
    %v1538 = vmul.f32 %v1537, %v1536
    %v1539 = vmul.f32 %v1538, %v1537
    %v1540 = vmul.f32 0.5, %v1539
    %v1541 = vsub.f32 1.5, %v1540
    %v1542 = vmul.f32 %v1537, %v1541
    %vm1543 = vweird.f32 %v1536
    %vm1544 = vweird.f32 %v1537
    %vm1545 = vmor %vm1543, %vm1544
    %v1546 = vsel %vm1545, %v1537, %v1542
    %v1547 = vmul.f32 %v1535, %v1546
    %v1548 = vperm.slane %v1522, 0
    %v1549 = vmul.f32 %v1547, %v1548
    %v1550 = vperm.slane %v1523, 0
    %v1551 = vadd.f32 %v1549, %v1550
    %s1552 = scalar_lea.vmem %s7, 32
    %v1553 = vld [vmem:[%s1552] sm:$0xff]
    %v1554 = vld [vmem:[%s1552 + $0x8] sm:$0xff]
    %v1555 = vld [vmem:[%s1552 + $0x10] sm:$0xff]
    %v1556 = vld [vmem:[%s1552 + $0x18] sm:$0xff]
    %v1557 = vld [vmem:[#allocation8 + $0x1] sm:$0x1]
    %v1558 = vperm.slane %v1557, 0
    %v1560 = vsel %vm258, %v1551, 0
    %1562 = vmatpush.msra.mxu0 0.0
    %1563 = vmatpush.msra.mxu0 0.0
    %1564 = vmatpush.msra.mxu0 0.0
    %1565 = vmatpush.msra.mxu0 0.0
    %1566 = vmatpush.msra.mxu0 0.0
    %1567 = vmatpush.msra.mxu0 0.0
    %1568 = vmatpush.msra.mxu0 0.0
    %1569 = vmatpush.msra.mxu0 0.0
    %1570 = vmatpush.msra.mxu0 0.0
    %1571 = vmatpush.msra.mxu0 0.0
    %1572 = vmatpush.msra.mxu0 0.0
    %1573 = vmatpush.msra.mxu0 0.0
    %1574 = vmatpush.msra.mxu0 %v1556
    %1575 = vmatpush.msra.mxu0 %v1555
    %1576 = vmatpush.msra.mxu0 %v1554
    %1577 = vmatpush.msra.mxu0 %v1553
    %1578 = vmatmul.f32.gmra.mxu0 %v1560
    %v1579 = vpop.f32.mrf.mxu0
    %v1580 = vadd.f32 %v1558, %v1579
    %1581 = vdwg.mxu0
    %1583 = vrot.lane.b32.xlu0 %v1580, 120
    %v1584 = vpop.permute.xlu0 %1583
    %1585 = vrot.lane.b32.xlu0 %v1580, 112
    %v1586 = vpop.permute.xlu0 %1585
    %1587 = vrot.lane.b32.xlu0 %v1580, 104
    %v1588 = vpop.permute.xlu0 %1587
    %s1589 = scalar_lea.vmem [#allocation13], 32
    %v1590 = vld [vmem:[%s1589] sm:$0xff]
    %v1591 = vld [vmem:[%s1589 + $0x8] sm:$0xff]
    %v1592 = vld [vmem:[%s1589 + $0x10] sm:$0xff]
    %v1593 = vld [vmem:[%s1589 + $0x18] sm:$0xff]
    %v1594 = vld [vmem:[#allocation14 + $0x1] sm:$0x1]
    %1595 = vrot.lane.b32.xlu0 %v283, 64
    %v1596 = vpop.permute.xlu0 %1595
    %1597 = vrot.lane.b32.xlu0 %v286, 64
    %v1598 = vpop.permute.xlu0 %1597
    %v1599 = vsel %vm369, %v1580, 0
    %v1601 = vsel %vm369, %v1596, 0
    %v1603 = vsel %vm369, %v1598, 0
    %1605 = vmatpush.xpose.msra.mxu0 0.0
    %1606 = vmatpush.xpose.msra.mxu0 0.0
    %1607 = vmatpush.xpose.msra.mxu0 0.0
    %1608 = vmatpush.xpose.msra.mxu0 0.0
    %1609 = vmatpush.xpose.msra.mxu0 0.0
    %1610 = vmatpush.xpose.msra.mxu0 0.0
    %1611 = vmatpush.xpose.msra.mxu0 0.0
    %1612 = vmatpush.xpose.msra.mxu0 0.0
    %1613 = vmatpush.xpose.msra.mxu0 0.0
    %1614 = vmatpush.xpose.msra.mxu0 0.0
    %1615 = vmatpush.xpose.msra.mxu0 0.0
    %1616 = vmatpush.xpose.msra.mxu0 0.0
    %1617 = vmatpush.xpose.msra.mxu0 0.0
    %1618 = vmatpush.xpose.msra.mxu0 0.0
    %1619 = vmatpush.xpose.msra.mxu0 %v1603
    %1620 = vmatpush.xpose.msra.mxu0 %v1601
    %1621 = vmatmul.f32.gmra.mxu0 %v1599
    %v1622 = vpop.f32.mrf.mxu0
    %v1623 = vadd.f32 %v748, %v1622
    %1624 = vdwg.mxu0
    %1625 = vrot.lane.b32.xlu0 %v731, 64
    %v1626 = vpop.permute.xlu0 %1625
    %1627 = vrot.lane.b32.xlu0 %v733, 64
    %v1628 = vpop.permute.xlu0 %1627
    %v1629 = vsel %vm369, %v1584, 0
    %v1631 = vsel %vm369, %v1626, 0
    %v1633 = vsel %vm369, %v1628, 0
    %1635 = vmatpush.xpose.msra.mxu0 0.0
    %1636 = vmatpush.xpose.msra.mxu0 0.0
    %1637 = vmatpush.xpose.msra.mxu0 0.0
    %1638 = vmatpush.xpose.msra.mxu0 0.0
    %1639 = vmatpush.xpose.msra.mxu0 0.0
    %1640 = vmatpush.xpose.msra.mxu0 0.0
    %1641 = vmatpush.xpose.msra.mxu0 0.0
    %1642 = vmatpush.xpose.msra.mxu0 0.0
    %1643 = vmatpush.xpose.msra.mxu0 0.0
    %1644 = vmatpush.xpose.msra.mxu0 0.0
    %1645 = vmatpush.xpose.msra.mxu0 0.0
    %1646 = vmatpush.xpose.msra.mxu0 0.0
    %1647 = vmatpush.xpose.msra.mxu0 0.0
    %1648 = vmatpush.xpose.msra.mxu0 0.0
    %1649 = vmatpush.xpose.msra.mxu0 %v1633
    %1650 = vmatpush.xpose.msra.mxu0 %v1631
    %1651 = vmatmul.f32.gmra.mxu0 %v1629
    %v1652 = vpop.f32.mrf.mxu0
    %v1653 = vadd.f32 %v748, %v1652
    %1654 = vdwg.mxu0
    %1655 = vrot.lane.b32.xlu0 %v735, 64
    %v1656 = vpop.permute.xlu0 %1655
    %1657 = vrot.lane.b32.xlu0 %v737, 64
    %v1658 = vpop.permute.xlu0 %1657
    %v1659 = vsel %vm369, %v1586, 0
    %v1661 = vsel %vm369, %v1656, 0
    %v1663 = vsel %vm369, %v1658, 0
    %1665 = vmatpush.xpose.msra.mxu0 0.0
    %1666 = vmatpush.xpose.msra.mxu0 0.0
    %1667 = vmatpush.xpose.msra.mxu0 0.0
    %1668 = vmatpush.xpose.msra.mxu0 0.0
    %1669 = vmatpush.xpose.msra.mxu0 0.0
    %1670 = vmatpush.xpose.msra.mxu0 0.0
    %1671 = vmatpush.xpose.msra.mxu0 0.0
    %1672 = vmatpush.xpose.msra.mxu0 0.0
    %1673 = vmatpush.xpose.msra.mxu0 0.0
    %1674 = vmatpush.xpose.msra.mxu0 0.0
    %1675 = vmatpush.xpose.msra.mxu0 0.0
    %1676 = vmatpush.xpose.msra.mxu0 0.0
    %1677 = vmatpush.xpose.msra.mxu0 0.0
    %1678 = vmatpush.xpose.msra.mxu0 0.0
    %1679 = vmatpush.xpose.msra.mxu0 %v1663
    %1680 = vmatpush.xpose.msra.mxu0 %v1661
    %1681 = vmatmul.f32.gmra.mxu0 %v1659
    %v1682 = vpop.f32.mrf.mxu0
    %v1683 = vadd.f32 %v748, %v1682
    %1684 = vdwg.mxu0
    %1685 = vrot.lane.b32.xlu0 %v739, 64
    %v1686 = vpop.permute.xlu0 %1685
    %1687 = vrot.lane.b32.xlu0 %v741, 64
    %v1688 = vpop.permute.xlu0 %1687
    %v1689 = vsel %vm369, %v1588, 0
    %v1691 = vsel %vm369, %v1686, 0
    %v1693 = vsel %vm369, %v1688, 0
    %1695 = vmatpush.xpose.msra.mxu0 0.0
    %1696 = vmatpush.xpose.msra.mxu0 0.0
    %1697 = vmatpush.xpose.msra.mxu0 0.0
    %1698 = vmatpush.xpose.msra.mxu0 0.0
    %1699 = vmatpush.xpose.msra.mxu0 0.0
    %1700 = vmatpush.xpose.msra.mxu0 0.0
    %1701 = vmatpush.xpose.msra.mxu0 0.0
    %1702 = vmatpush.xpose.msra.mxu0 0.0
    %1703 = vmatpush.xpose.msra.mxu0 0.0
    %1704 = vmatpush.xpose.msra.mxu0 0.0
    %1705 = vmatpush.xpose.msra.mxu0 0.0
    %1706 = vmatpush.xpose.msra.mxu0 0.0
    %1707 = vmatpush.xpose.msra.mxu0 0.0
    %1708 = vmatpush.xpose.msra.mxu0 0.0
    %1709 = vmatpush.xpose.msra.mxu0 %v1693
    %1710 = vmatpush.xpose.msra.mxu0 %v1691
    %1711 = vmatmul.f32.gmra.mxu0 %v1689
    %v1712 = vpop.f32.mrf.mxu0
    %v1713 = vadd.f32 %v748, %v1712
    %1714 = vdwg.mxu0
    %v1715 = vsel %vm633, %v1623, -inf
    %1716 = vmax.xlane.f32.xlu0 %v1715
    %v1717 = vpop.xlane.xlu0 %1716
    %v1718 = vsel %vm633, %v1653, -inf
    %1719 = vmax.xlane.f32.xlu0 %v1718
    %v1720 = vpop.xlane.xlu0 %1719
    %v1721 = vsel %vm633, %v1683, -inf
    %1722 = vmax.xlane.f32.xlu0 %v1721
    %v1723 = vpop.xlane.xlu0 %1722
    %v1724 = vsel %vm633, %v1713, -inf
    %1725 = vmax.xlane.f32.xlu0 %v1724
    %v1726 = vpop.xlane.xlu0 %1725
    %v1727 = vsub.f32 %v1623, %v1717
    %v1728 = vsub.f32 %v1653, %v1720
    %v1729 = vsub.f32 %v1683, %v1723
    %v1730 = vsub.f32 %v1713, %v1726
    %v1731 = vmul.f32 %v1727, 1.442695
    %v1732 = vpow.pop %v1731
    %v1733 = vmul.f32 %v1728, 1.442695
    %v1734 = vpow.pop %v1733
    %v1735 = vmul.f32 %v1729, 1.442695
    %v1736 = vpow.pop %v1735
    %v1737 = vmul.f32 %v1730, 1.442695
    %v1738 = vpow.pop %v1737
    %v1739 = vsel %vm633, %v1732, 0.0
    %1740 = vadd.xlane.f32.xlu0 %v1739
    %v1741 = vpop.xlane.xlu0 %1740
    %v1742 = vsel %vm633, %v1734, 0.0
    %1743 = vadd.xlane.f32.xlu0 %v1742
    %v1744 = vpop.xlane.xlu0 %1743
    %v1745 = vsel %vm633, %v1736, 0.0
    %1746 = vadd.xlane.f32.xlu0 %v1745
    %v1747 = vpop.xlane.xlu0 %1746
    %v1748 = vsel %vm633, %v1738, 0.0
    %1749 = vadd.xlane.f32.xlu0 %v1748
    %v1750 = vpop.xlane.xlu0 %1749
    %v1751 = vrcp.pop %v1741
    %v1752 = vrcp.pop %v1744
    %v1753 = vrcp.pop %v1747
    %v1754 = vrcp.pop %v1750
    %v1755 = vmul.f32 %v1732, %v1751
    %v1756 = vmul.f32 %v1734, %v1752
    %v1757 = vmul.f32 %v1736, %v1753
    %v1758 = vmul.f32 %v1738, %v1754
    %1759 = vrot.lane.b32.xlu0 %v283, 32
    %v1760 = vpop.permute.xlu0 %1759
    %1761 = vrot.lane.b32.xlu0 %v286, 32
    %v1762 = vpop.permute.xlu0 %1761
    %v1766 = vsel %vm633, %v1755, 0
    %1768 = vmatpush.msra.mxu0 0.0
    %1769 = vmatpush.msra.mxu0 0.0
    %1770 = vmatpush.msra.mxu0 0.0
    %1771 = vmatpush.msra.mxu0 0.0
    %1772 = vmatpush.msra.mxu0 0.0
    %1773 = vmatpush.msra.mxu0 0.0
    %1774 = vmatpush.msra.mxu0 0.0
    %1775 = vmatpush.msra.mxu0 0.0
    %1776 = vmatpush.msra.mxu0 0.0
    %1777 = vmatpush.msra.mxu0 0.0
    %1778 = vmatpush.msra.mxu0 0.0
    %1779 = vmatpush.msra.mxu0 0.0
    %1780 = vmatpush.msra.mxu0 0.0
    %1781 = vmatpush.msra.mxu0 0.0
    %1782 = vmatpush.msra.mxu0 %v1762
    %1783 = vmatpush.msra.mxu0 %v1760
    %1784 = vmatmul.f32.gmra.mxu0 %v1766
    %v1785 = vpop.f32.mrf.mxu0
    %v1786 = vadd.f32 0.0, %v1785
    %1787 = vdwg.mxu0
    %1788 = vrot.lane.b32.xlu0 %v731, 32
    %v1789 = vpop.permute.xlu0 %1788
    %1790 = vrot.lane.b32.xlu0 %v733, 32
    %v1791 = vpop.permute.xlu0 %1790
    %v1795 = vsel %vm633, %v1756, 0
    %1797 = vmatpush.msra.mxu0 0.0
    %1798 = vmatpush.msra.mxu0 0.0
    %1799 = vmatpush.msra.mxu0 0.0
    %1800 = vmatpush.msra.mxu0 0.0
    %1801 = vmatpush.msra.mxu0 0.0
    %1802 = vmatpush.msra.mxu0 0.0
    %1803 = vmatpush.msra.mxu0 0.0
    %1804 = vmatpush.msra.mxu0 0.0
    %1805 = vmatpush.msra.mxu0 0.0
    %1806 = vmatpush.msra.mxu0 0.0
    %1807 = vmatpush.msra.mxu0 0.0
    %1808 = vmatpush.msra.mxu0 0.0
    %1809 = vmatpush.msra.mxu0 0.0
    %1810 = vmatpush.msra.mxu0 0.0
    %1811 = vmatpush.msra.mxu0 %v1791
    %1812 = vmatpush.msra.mxu0 %v1789
    %1813 = vmatmul.f32.gmra.mxu0 %v1795
    %v1814 = vpop.f32.mrf.mxu0
    %v1815 = vadd.f32 0.0, %v1814
    %1816 = vdwg.mxu0
    %1817 = vrot.lane.b32.xlu0 %v735, 32
    %v1818 = vpop.permute.xlu0 %1817
    %1819 = vrot.lane.b32.xlu0 %v737, 32
    %v1820 = vpop.permute.xlu0 %1819
    %v1824 = vsel %vm633, %v1757, 0
    %1826 = vmatpush.msra.mxu0 0.0
    %1827 = vmatpush.msra.mxu0 0.0
    %1828 = vmatpush.msra.mxu0 0.0
    %1829 = vmatpush.msra.mxu0 0.0
    %1830 = vmatpush.msra.mxu0 0.0
    %1831 = vmatpush.msra.mxu0 0.0
    %1832 = vmatpush.msra.mxu0 0.0
    %1833 = vmatpush.msra.mxu0 0.0
    %1834 = vmatpush.msra.mxu0 0.0
    %1835 = vmatpush.msra.mxu0 0.0
    %1836 = vmatpush.msra.mxu0 0.0
    %1837 = vmatpush.msra.mxu0 0.0
    %1838 = vmatpush.msra.mxu0 0.0
    %1839 = vmatpush.msra.mxu0 0.0
    %1840 = vmatpush.msra.mxu0 %v1820
    %1841 = vmatpush.msra.mxu0 %v1818
    %1842 = vmatmul.f32.gmra.mxu0 %v1824
    %v1843 = vpop.f32.mrf.mxu0
    %v1844 = vadd.f32 0.0, %v1843
    %1845 = vdwg.mxu0
    %1846 = vrot.lane.b32.xlu0 %v739, 32
    %v1847 = vpop.permute.xlu0 %1846
    %1848 = vrot.lane.b32.xlu0 %v741, 32
    %v1849 = vpop.permute.xlu0 %1848
    %v1853 = vsel %vm633, %v1758, 0
    %1855 = vmatpush.msra.mxu0 0.0
    %1856 = vmatpush.msra.mxu0 0.0
    %1857 = vmatpush.msra.mxu0 0.0
    %1858 = vmatpush.msra.mxu0 0.0
    %1859 = vmatpush.msra.mxu0 0.0
    %1860 = vmatpush.msra.mxu0 0.0
    %1861 = vmatpush.msra.mxu0 0.0
    %1862 = vmatpush.msra.mxu0 0.0
    %1863 = vmatpush.msra.mxu0 0.0
    %1864 = vmatpush.msra.mxu0 0.0
    %1865 = vmatpush.msra.mxu0 0.0
    %1866 = vmatpush.msra.mxu0 0.0
    %1867 = vmatpush.msra.mxu0 0.0
    %1868 = vmatpush.msra.mxu0 0.0
    %1869 = vmatpush.msra.mxu0 %v1849
    %1870 = vmatpush.msra.mxu0 %v1847
    %1871 = vmatmul.f32.gmra.mxu0 %v1853
    %v1872 = vpop.f32.mrf.mxu0
    %v1873 = vadd.f32 0.0, %v1872
    %1874 = vdwg.mxu0
    %1876 = vrot.lane.b32.xlu0 %v1815, 8
    %v1877 = vpop.permute.xlu0 %1876
    %1880 = vrot.lane.b32.xlu0 %v1844, 16
    %v1881 = vpop.permute.xlu0 %1880
    %1884 = vrot.lane.b32.xlu0 %v1873, 24
    %v1885 = vpop.permute.xlu0 %1884
    %v1887 = vsel %vm369, %v1786, %v1877
    %v1888 = vsel %vm633, %v1887, %v1881
    %v1889 = vsel %vm635, %v1888, %v1885
    %v1890 = vperm.slane %v1594, 0
    %v1892 = vsel %vm258, %v1889, 0
    %1894 = vmatpush.msra.mxu0 0.0
    %1895 = vmatpush.msra.mxu0 0.0
    %1896 = vmatpush.msra.mxu0 0.0
    %1897 = vmatpush.msra.mxu0 0.0
    %1898 = vmatpush.msra.mxu0 0.0
    %1899 = vmatpush.msra.mxu0 0.0
    %1900 = vmatpush.msra.mxu0 0.0
    %1901 = vmatpush.msra.mxu0 0.0
    %1902 = vmatpush.msra.mxu0 0.0
    %1903 = vmatpush.msra.mxu0 0.0
    %1904 = vmatpush.msra.mxu0 0.0
    %1905 = vmatpush.msra.mxu0 0.0
    %1906 = vmatpush.msra.mxu0 %v1593
    %1907 = vmatpush.msra.mxu0 %v1592
    %1908 = vmatpush.msra.mxu0 %v1591
    %1909 = vmatpush.msra.mxu0 %v1590
    %1910 = vmatmul.f32.gmra.mxu0 %v1892
    %v1911 = vpop.f32.mrf.mxu0
    %v1912 = vadd.f32 %v1890, %v1911
    %1913 = vdwg.mxu0
    %v1914 = vadd.f32 %v1521, %v1912
    %v1915 = vld [vmem:[#allocation16 + $0x5] sm:$0x1]
    %v1916 = vld [vmem:[#allocation17 + $0x5] sm:$0x1]
    %v1917 = vsel %vm258, %v1914, 0.0
    %1918 = vadd.xlane.f32.xlu0 %v1917
    %v1919 = vpop.xlane.xlu0 %1918
    %v1920 = vmul.f32 %v1919, %v300
    %v1921 = vmul.f32 %v1914, %v1914
    %v1922 = vsel %vm258, %v1921, 0.0
    %1923 = vadd.xlane.f32.xlu0 %v1922
    %v1924 = vpop.xlane.xlu0 %1923
    %v1925 = vmul.f32 %v1924, %v300
    %v1926 = vmul.f32 %v1920, %v1920
    %v1927 = vsub.f32 %v1925, %v1926
    %v1928 = vsub.f32 %v1914, %v1920
    %v1929 = vadd.f32 %v1927, 1e-12
    %v1930 = vrsqrt.pop %v1929
    %v1931 = vmul.f32 %v1930, %v1929
    %v1932 = vmul.f32 %v1931, %v1930
    %v1933 = vmul.f32 0.5, %v1932
    %v1934 = vsub.f32 1.5, %v1933
    %v1935 = vmul.f32 %v1930, %v1934
    %vm1936 = vweird.f32 %v1929
    %vm1937 = vweird.f32 %v1930
    %vm1938 = vmor %vm1936, %vm1937
    %v1939 = vsel %vm1938, %v1930, %v1935
    %v1940 = vmul.f32 %v1928, %v1939
    %v1941 = vperm.slane %v1915, 0
    %v1942 = vmul.f32 %v1940, %v1941
    %v1943 = vperm.slane %v1916, 0
    %v1944 = vadd.f32 %v1942, %v1943
    %s1945 = scalar_lea.vmem [#allocation19], 32
    %v1946 = vld [vmem:[%s1945] sm:$0xff]
    %v1947 = vld [vmem:[%s1945 + $0x8] sm:$0xff]
    %v1948 = vld [vmem:[%s1945 + $0x10] sm:$0xff]
    %v1949 = vld [vmem:[%s1945 + $0x18] sm:$0xff]
    %v1950 = vld [vmem:[#allocation20 + $0x1] sm:$0x1]
    %v1951 = vperm.slane %v1950, 0
    %v1953 = vsel %vm258, %v1944, 0
    %1955 = vmatpush.msra.mxu0 0.0
    %1956 = vmatpush.msra.mxu0 0.0
    %1957 = vmatpush.msra.mxu0 0.0
    %1958 = vmatpush.msra.mxu0 0.0
    %1959 = vmatpush.msra.mxu0 0.0
    %1960 = vmatpush.msra.mxu0 0.0
    %1961 = vmatpush.msra.mxu0 0.0
    %1962 = vmatpush.msra.mxu0 0.0
    %1963 = vmatpush.msra.mxu0 0.0
    %1964 = vmatpush.msra.mxu0 0.0
    %1965 = vmatpush.msra.mxu0 0.0
    %1966 = vmatpush.msra.mxu0 0.0
    %1967 = vmatpush.msra.mxu0 %v1949
    %1968 = vmatpush.msra.mxu0 %v1948
    %1969 = vmatpush.msra.mxu0 %v1947
    %1970 = vmatpush.msra.mxu0 %v1946
    %1971 = vmatmul.f32.gmra.mxu0 %v1953
    %v1972 = vpop.f32.mrf.mxu0
    %v1973 = vadd.f32 %v1951, %v1972
    %1974 = vdwg.mxu0
    %v1975 = vmul.f32 %v1973, %v1973
    %v1976 = vmul.f32 %v1973, %v1975
    %v1977 = vmul.f32 %v1976, 0.044715
    %v1978 = vadd.f32 %v1973, %v1977
    %v1979 = vmul.f32 %v1978, 0.7978846
    %v1980 = vtanh.pop %v1979
    %v1981 = vadd.f32 %v1980, 1.0
    %v1982 = vmul.f32 %v1981, 0.5
    %v1983 = vmul.f32 %v1973, %v1982
    %s1984 = scalar_lea.vmem %s17, 64
    %v1985 = vld [vmem:[%s1984] sm:$0xff]
    %v1986 = vld [vmem:[%s1984 + $0x8] sm:$0xff]
    %v1987 = vld [vmem:[%s1984 + $0x10] sm:$0xff]
    %v1988 = vld [vmem:[%s1984 + $0x18] sm:$0xff]
    %v1989 = vld [vmem:[%s1984 + $0x20] sm:$0xff]
    %v1990 = vld [vmem:[%s1984 + $0x28] sm:$0xff]
    %v1991 = vld [vmem:[%s1984 + $0x30] sm:$0xff]
    %v1992 = vld [vmem:[%s1984 + $0x38] sm:$0xff]
    %v1993 = vld [vmem:[#allocation22 + $0x1] sm:$0x1]
    %v1994 = vperm.slane %v1993, 0
    %v1996 = vsel %vm1132, %v1983, 0
    %1998 = vmatpush.msra.mxu0 0.0
    %1999 = vmatpush.msra.mxu0 0.0
    %2000 = vmatpush.msra.mxu0 0.0
    %2001 = vmatpush.msra.mxu0 0.0
    %2002 = vmatpush.msra.mxu0 0.0
    %2003 = vmatpush.msra.mxu0 0.0
    %2004 = vmatpush.msra.mxu0 0.0
    %2005 = vmatpush.msra.mxu0 0.0
    %2006 = vmatpush.msra.mxu0 %v1992
    %2007 = vmatpush.msra.mxu0 %v1991
    %2008 = vmatpush.msra.mxu0 %v1990
    %2009 = vmatpush.msra.mxu0 %v1989
    %2010 = vmatpush.msra.mxu0 %v1988
    %2011 = vmatpush.msra.mxu0 %v1987
    %2012 = vmatpush.msra.mxu0 %v1986
    %2013 = vmatpush.msra.mxu0 %v1985
    %2014 = vmatmul.f32.gmra.mxu0 %v1996
    %v2015 = vpop.f32.mrf.mxu0
    %v2016 = vadd.f32 %v1994, %v2015
    %2017 = vdwg.mxu0
    %v2018 = vadd.f32 %v1914, %v2016
    %v2019 = vld [vmem:[#allocation16 + $0x6] sm:$0x1]
    %v2020 = vld [vmem:[#allocation17 + $0x6] sm:$0x1]
    %v2021 = vsel %vm258, %v2018, 0.0
    %2022 = vadd.xlane.f32.xlu0 %v2021
    %v2023 = vpop.xlane.xlu0 %2022
    %v2024 = vmul.f32 %v2023, %v300
    %v2025 = vmul.f32 %v2018, %v2018
    %v2026 = vsel %vm258, %v2025, 0.0
    %2027 = vadd.xlane.f32.xlu0 %v2026
    %v2028 = vpop.xlane.xlu0 %2027
    %v2029 = vmul.f32 %v2028, %v300
    %v2030 = vmul.f32 %v2024, %v2024
    %v2031 = vsub.f32 %v2029, %v2030
    %v2032 = vsub.f32 %v2018, %v2024
    %v2033 = vadd.f32 %v2031, 1e-12
    %v2034 = vrsqrt.pop %v2033
    %v2035 = vmul.f32 %v2034, %v2033
    %v2036 = vmul.f32 %v2035, %v2034
    %v2037 = vmul.f32 0.5, %v2036
    %v2038 = vsub.f32 1.5, %v2037
    %v2039 = vmul.f32 %v2034, %v2038
    %vm2040 = vweird.f32 %v2033
    %vm2041 = vweird.f32 %v2034
    %vm2042 = vmor %vm2040, %vm2041
    %v2043 = vsel %vm2042, %v2034, %v2039
    %v2044 = vmul.f32 %v2032, %v2043
    %v2045 = vperm.slane %v2019, 0
    %v2046 = vmul.f32 %v2044, %v2045
    %v2047 = vperm.slane %v2020, 0
    %v2048 = vadd.f32 %v2046, %v2047
    %2049 = vst.msk [vmem:[#allocation23] sm:$0xff] %vm258, %v2048
    %s2050 = scalar_lea.vmem [#allocation2], 16
    %v2051 = vld [vmem:[%s2050] sm:$0xff]
    %v2052 = vld [vmem:[%s2050 + $0x8] sm:$0xff]
    %s2053 = scalar_lea.vmem %s1, 1
    %v2054 = vld [vmem:[%s2053] sm:$0x1]
    %v2055 = vld [vmem:[#allocation10] sm:$0xff]
    %v2056 = vld [vmem:[#allocation10 + $0x8] sm:$0xff]
    %v2057 = vld [vmem:[#allocation10 + $0x10] sm:$0xff]
    %v2058 = vld [vmem:[#allocation10 + $0x18] sm:$0xff]
    %v2059 = vld [vmem:[#allocation11] sm:$0x1]
    %v2061 = vperm.slane %v2059, 0
    %v2064 = vsel %vm258, %v2051, 0
    %v2067 = vsel %vm258, %v2052, 0
    %2069 = vmatpush.msra.mxu0 0.0
    %2070 = vmatpush.msra.mxu0 0.0
    %2071 = vmatpush.msra.mxu0 0.0
    %2072 = vmatpush.msra.mxu0 0.0
    %2073 = vmatpush.msra.mxu0 0.0
    %2074 = vmatpush.msra.mxu0 0.0
    %2075 = vmatpush.msra.mxu0 0.0
    %2076 = vmatpush.msra.mxu0 0.0
    %2077 = vmatpush.msra.mxu0 0.0
    %2078 = vmatpush.msra.mxu0 0.0
    %2079 = vmatpush.msra.mxu0 0.0
    %2080 = vmatpush.msra.mxu0 0.0
    %2081 = vmatpush.msra.mxu0 %v2058
    %2082 = vmatpush.msra.mxu0 %v2057
    %2083 = vmatpush.msra.mxu0 %v2056
    %2084 = vmatpush.msra.mxu0 %v2055
    %2085 = vmatmul.f32.gmra.mxu0 %v2064
    %v2086 = vpop.f32.mrf.mxu0
    %v2087 = vadd.f32 %v2061, %v2086
    %2088 = vmatmul.f32.gmra.mxu0 %v2067
    %v2089 = vpop.f32.mrf.mxu0
    %v2090 = vadd.f32 %v2061, %v2089
    %2091 = vdwg.mxu0
    %v2092 = vld [vmem:[%s2] sm:$0xff]
    %v2093 = vld [vmem:[#allocation16] sm:$0x1]
    %v2094 = vld [vmem:[#allocation17] sm:$0x1]
    %v2095 = vsel %vm258, %v2092, 0.0
    %2096 = vadd.xlane.f32.xlu0 %v2095
    %v2097 = vpop.xlane.xlu0 %2096
    %v2098 = vmul.f32 %v2097, %v300
    %v2099 = vmul.f32 %v2092, %v2092
    %v2100 = vsel %vm258, %v2099, 0.0
    %2101 = vadd.xlane.f32.xlu0 %v2100
    %v2102 = vpop.xlane.xlu0 %2101
    %v2103 = vmul.f32 %v2102, %v300
    %v2104 = vmul.f32 %v2098, %v2098
    %v2105 = vsub.f32 %v2103, %v2104
    %v2106 = vsub.f32 %v2092, %v2098
    %v2107 = vadd.f32 %v2105, 1e-12
    %v2108 = vrsqrt.pop %v2107
    %v2109 = vmul.f32 %v2108, %v2107
    %v2110 = vmul.f32 %v2109, %v2108
    %v2111 = vmul.f32 0.5, %v2110
    %v2112 = vsub.f32 1.5, %v2111
    %v2113 = vmul.f32 %v2108, %v2112
    %vm2114 = vweird.f32 %v2107
    %vm2115 = vweird.f32 %v2108
    %vm2116 = vmor %vm2114, %vm2115
    %v2117 = vsel %vm2116, %v2108, %v2113
    %v2118 = vmul.f32 %v2106, %v2117
    %v2119 = vperm.slane %v2093, 0
    %v2120 = vmul.f32 %v2118, %v2119
    %v2121 = vperm.slane %v2094, 0
    %v2122 = vadd.f32 %v2120, %v2121
    %v2123 = vld [vmem:[%s3] sm:$0xff]
    %v2124 = vld [vmem:[%s3 + $0x8] sm:$0xff]
    %v2125 = vld [vmem:[%s3 + $0x10] sm:$0xff]
    %v2126 = vld [vmem:[%s3 + $0x18] sm:$0xff]
    %v2127 = vld [vmem:[#allocation5] sm:$0x1]
    %v2128 = vperm.slane %v2127, 0
    %v2130 = vsel %vm258, %v2122, 0
    %2132 = vmatpush.msra.mxu0 0.0
    %2133 = vmatpush.msra.mxu0 0.0
    %2134 = vmatpush.msra.mxu0 0.0
    %2135 = vmatpush.msra.mxu0 0.0
    %2136 = vmatpush.msra.mxu0 0.0
    %2137 = vmatpush.msra.mxu0 0.0
    %2138 = vmatpush.msra.mxu0 0.0
    %2139 = vmatpush.msra.mxu0 0.0
    %2140 = vmatpush.msra.mxu0 0.0
    %2141 = vmatpush.msra.mxu0 0.0
    %2142 = vmatpush.msra.mxu0 0.0
    %2143 = vmatpush.msra.mxu0 0.0
    %2144 = vmatpush.msra.mxu0 %v2126
    %2145 = vmatpush.msra.mxu0 %v2125
    %2146 = vmatpush.msra.mxu0 %v2124
    %2147 = vmatpush.msra.mxu0 %v2123
    %2148 = vmatmul.f32.gmra.mxu0 %v2130
    %v2149 = vpop.f32.mrf.mxu0
    %v2150 = vadd.f32 %v2128, %v2149
    %2151 = vdwg.mxu0
    %2153 = vrot.lane.b32.xlu0 %v2150, 120
    %v2154 = vpop.permute.xlu0 %2153
    %2155 = vrot.lane.b32.xlu0 %v2150, 112
    %v2156 = vpop.permute.xlu0 %2155
    %2157 = vrot.lane.b32.xlu0 %v2150, 104
    %v2158 = vpop.permute.xlu0 %2157
    %v2159 = vld [vmem:[%s5] sm:$0xff]
    %v2160 = vld [vmem:[%s5 + $0x8] sm:$0xff]
    %v2161 = vld [vmem:[%s5 + $0x10] sm:$0xff]
    %v2162 = vld [vmem:[%s5 + $0x18] sm:$0xff]
    %v2163 = vld [vmem:[#allocation7] sm:$0x1]
    %2164 = vrot.lane.b32.xlu0 %v2150, 96
    %v2165 = vpop.permute.xlu0 %2164
    %v2166 = vsel %vm369, %v2150, 0
    %v2168 = vsel %vm369, %v2165, 0
    %2170 = vmatpush.xpose.msra.mxu0 0.0
    %2171 = vmatpush.xpose.msra.mxu0 0.0
    %2172 = vmatpush.xpose.msra.mxu0 0.0
    %2173 = vmatpush.xpose.msra.mxu0 0.0
    %2174 = vmatpush.xpose.msra.mxu0 0.0
    %2175 = vmatpush.xpose.msra.mxu0 0.0
    %2176 = vmatpush.xpose.msra.mxu0 0.0
    %2177 = vmatpush.xpose.msra.mxu0 0.0
    %2178 = vmatpush.xpose.msra.mxu0 0.0
    %2179 = vmatpush.xpose.msra.mxu0 0.0
    %2180 = vmatpush.xpose.msra.mxu0 0.0
    %2181 = vmatpush.xpose.msra.mxu0 0.0
    %2182 = vmatpush.xpose.msra.mxu0 0.0
    %2183 = vmatpush.xpose.msra.mxu0 0.0
    %2184 = vmatpush.xpose.msra.mxu0 0.0
    %2185 = vmatpush.xpose.msra.mxu0 %v2168
    %2186 = vmatmul.f32.gmra.mxu0 %v2166
    %v2187 = vpop.f32.mrf.mxu0
    %v2188 = vadd.f32 0.0, %v2187
    %2189 = vdwg.mxu0
    %2190 = vrot.lane.b32.xlu0 %v2154, 96
    %v2191 = vpop.permute.xlu0 %2190
    %v2192 = vsel %vm369, %v2154, 0
    %v2194 = vsel %vm369, %v2191, 0
    %2196 = vmatpush.xpose.msra.mxu0 0.0
    %2197 = vmatpush.xpose.msra.mxu0 0.0
    %2198 = vmatpush.xpose.msra.mxu0 0.0
    %2199 = vmatpush.xpose.msra.mxu0 0.0
    %2200 = vmatpush.xpose.msra.mxu0 0.0
    %2201 = vmatpush.xpose.msra.mxu0 0.0
    %2202 = vmatpush.xpose.msra.mxu0 0.0
    %2203 = vmatpush.xpose.msra.mxu0 0.0
    %2204 = vmatpush.xpose.msra.mxu0 0.0
    %2205 = vmatpush.xpose.msra.mxu0 0.0
    %2206 = vmatpush.xpose.msra.mxu0 0.0
    %2207 = vmatpush.xpose.msra.mxu0 0.0
    %2208 = vmatpush.xpose.msra.mxu0 0.0
    %2209 = vmatpush.xpose.msra.mxu0 0.0
    %2210 = vmatpush.xpose.msra.mxu0 0.0
    %2211 = vmatpush.xpose.msra.mxu0 %v2194
    %2212 = vmatmul.f32.gmra.mxu0 %v2192
    %v2213 = vpop.f32.mrf.mxu0
    %v2214 = vadd.f32 0.0, %v2213
    %2215 = vdwg.mxu0
    %2216 = vrot.lane.b32.xlu0 %v2156, 96
    %v2217 = vpop.permute.xlu0 %2216
    %v2218 = vsel %vm369, %v2156, 0
    %v2220 = vsel %vm369, %v2217, 0
    %2222 = vmatpush.xpose.msra.mxu0 0.0
    %2223 = vmatpush.xpose.msra.mxu0 0.0
    %2224 = vmatpush.xpose.msra.mxu0 0.0
    %2225 = vmatpush.xpose.msra.mxu0 0.0
    %2226 = vmatpush.xpose.msra.mxu0 0.0
    %2227 = vmatpush.xpose.msra.mxu0 0.0
    %2228 = vmatpush.xpose.msra.mxu0 0.0
    %2229 = vmatpush.xpose.msra.mxu0 0.0
    %2230 = vmatpush.xpose.msra.mxu0 0.0
    %2231 = vmatpush.xpose.msra.mxu0 0.0
    %2232 = vmatpush.xpose.msra.mxu0 0.0
    %2233 = vmatpush.xpose.msra.mxu0 0.0
    %2234 = vmatpush.xpose.msra.mxu0 0.0
    %2235 = vmatpush.xpose.msra.mxu0 0.0
    %2236 = vmatpush.xpose.msra.mxu0 0.0
    %2237 = vmatpush.xpose.msra.mxu0 %v2220
    %2238 = vmatmul.f32.gmra.mxu0 %v2218
    %v2239 = vpop.f32.mrf.mxu0
    %v2240 = vadd.f32 0.0, %v2239
    %2241 = vdwg.mxu0
    %2242 = vrot.lane.b32.xlu0 %v2158, 96
    %v2243 = vpop.permute.xlu0 %2242
    %v2244 = vsel %vm369, %v2158, 0
    %v2246 = vsel %vm369, %v2243, 0
    %2248 = vmatpush.xpose.msra.mxu0 0.0
    %2249 = vmatpush.xpose.msra.mxu0 0.0
    %2250 = vmatpush.xpose.msra.mxu0 0.0
    %2251 = vmatpush.xpose.msra.mxu0 0.0
    %2252 = vmatpush.xpose.msra.mxu0 0.0
    %2253 = vmatpush.xpose.msra.mxu0 0.0
    %2254 = vmatpush.xpose.msra.mxu0 0.0
    %2255 = vmatpush.xpose.msra.mxu0 0.0
    %2256 = vmatpush.xpose.msra.mxu0 0.0
    %2257 = vmatpush.xpose.msra.mxu0 0.0
    %2258 = vmatpush.xpose.msra.mxu0 0.0
    %2259 = vmatpush.xpose.msra.mxu0 0.0
    %2260 = vmatpush.xpose.msra.mxu0 0.0
    %2261 = vmatpush.xpose.msra.mxu0 0.0
    %2262 = vmatpush.xpose.msra.mxu0 0.0
    %2263 = vmatpush.xpose.msra.mxu0 %v2246
    %2264 = vmatmul.f32.gmra.mxu0 %v2244
    %v2265 = vpop.f32.mrf.mxu0
    %v2266 = vadd.f32 0.0, %v2265
    %2267 = vdwg.mxu0
    %v2268 = vsel %vm369, %v2188, -inf
    %2269 = vmax.xlane.f32.xlu0 %v2268
    %v2270 = vpop.xlane.xlu0 %2269
    %v2271 = vsel %vm369, %v2214, -inf
    %2272 = vmax.xlane.f32.xlu0 %v2271
    %v2273 = vpop.xlane.xlu0 %2272
    %v2274 = vsel %vm369, %v2240, -inf
    %2275 = vmax.xlane.f32.xlu0 %v2274
    %v2276 = vpop.xlane.xlu0 %2275
    %v2277 = vsel %vm369, %v2266, -inf
    %2278 = vmax.xlane.f32.xlu0 %v2277
    %v2279 = vpop.xlane.xlu0 %2278
    %v2280 = vsub.f32 %v2188, %v2270
    %v2281 = vsub.f32 %v2214, %v2273
    %v2282 = vsub.f32 %v2240, %v2276
    %v2283 = vsub.f32 %v2266, %v2279
    %v2284 = vmul.f32 %v2280, 1.442695
    %v2285 = vpow.pop %v2284
    %v2286 = vmul.f32 %v2281, 1.442695
    %v2287 = vpow.pop %v2286
    %v2288 = vmul.f32 %v2282, 1.442695
    %v2289 = vpow.pop %v2288
    %v2290 = vmul.f32 %v2283, 1.442695
    %v2291 = vpow.pop %v2290
    %v2292 = vsel %vm369, %v2285, 0.0
    %2293 = vadd.xlane.f32.xlu0 %v2292
    %v2294 = vpop.xlane.xlu0 %2293
    %v2295 = vsel %vm369, %v2287, 0.0
    %2296 = vadd.xlane.f32.xlu0 %v2295
    %v2297 = vpop.xlane.xlu0 %2296
    %v2298 = vsel %vm369, %v2289, 0.0
    %2299 = vadd.xlane.f32.xlu0 %v2298
    %v2300 = vpop.xlane.xlu0 %2299
    %v2301 = vsel %vm369, %v2291, 0.0
    %2302 = vadd.xlane.f32.xlu0 %v2301
    %v2303 = vpop.xlane.xlu0 %2302
    %v2304 = vrcp.pop %v2294
    %v2305 = vrcp.pop %v2297
    %v2306 = vrcp.pop %v2300
    %v2307 = vrcp.pop %v2303
    %v2308 = vmul.f32 %v2285, %v2304
    %v2309 = vmul.f32 %v2287, %v2305
    %v2310 = vmul.f32 %v2289, %v2306
    %v2311 = vmul.f32 %v2291, %v2307
    %2312 = vrot.lane.b32.xlu0 %v2150, 64
    %v2313 = vpop.permute.xlu0 %2312
    %v2316 = vsel %vm369, %v2308, 0
    %2318 = vmatpush.msra.mxu0 0.0
    %2319 = vmatpush.msra.mxu0 0.0
    %2320 = vmatpush.msra.mxu0 0.0
    %2321 = vmatpush.msra.mxu0 0.0
    %2322 = vmatpush.msra.mxu0 0.0
    %2323 = vmatpush.msra.mxu0 0.0
    %2324 = vmatpush.msra.mxu0 0.0
    %2325 = vmatpush.msra.mxu0 0.0
    %2326 = vmatpush.msra.mxu0 0.0
    %2327 = vmatpush.msra.mxu0 0.0
    %2328 = vmatpush.msra.mxu0 0.0
    %2329 = vmatpush.msra.mxu0 0.0
    %2330 = vmatpush.msra.mxu0 0.0
    %2331 = vmatpush.msra.mxu0 0.0
    %2332 = vmatpush.msra.mxu0 0.0
    %2333 = vmatpush.msra.mxu0 %v2313
    %2334 = vmatmul.f32.gmra.mxu0 %v2316
    %v2335 = vpop.f32.mrf.mxu0
    %v2336 = vadd.f32 0.0, %v2335
    %2337 = vdwg.mxu0
    %2338 = vrot.lane.b32.xlu0 %v2154, 64
    %v2339 = vpop.permute.xlu0 %2338
    %v2342 = vsel %vm369, %v2309, 0
    %2344 = vmatpush.msra.mxu0 0.0
    %2345 = vmatpush.msra.mxu0 0.0
    %2346 = vmatpush.msra.mxu0 0.0
    %2347 = vmatpush.msra.mxu0 0.0
    %2348 = vmatpush.msra.mxu0 0.0
    %2349 = vmatpush.msra.mxu0 0.0
    %2350 = vmatpush.msra.mxu0 0.0
    %2351 = vmatpush.msra.mxu0 0.0
    %2352 = vmatpush.msra.mxu0 0.0
    %2353 = vmatpush.msra.mxu0 0.0
    %2354 = vmatpush.msra.mxu0 0.0
    %2355 = vmatpush.msra.mxu0 0.0
    %2356 = vmatpush.msra.mxu0 0.0
    %2357 = vmatpush.msra.mxu0 0.0
    %2358 = vmatpush.msra.mxu0 0.0
    %2359 = vmatpush.msra.mxu0 %v2339
    %2360 = vmatmul.f32.gmra.mxu0 %v2342
    %v2361 = vpop.f32.mrf.mxu0
    %v2362 = vadd.f32 0.0, %v2361
    %2363 = vdwg.mxu0
    %2364 = vrot.lane.b32.xlu0 %v2156, 64
    %v2365 = vpop.permute.xlu0 %2364
    %v2368 = vsel %vm369, %v2310, 0
    %2370 = vmatpush.msra.mxu0 0.0
    %2371 = vmatpush.msra.mxu0 0.0
    %2372 = vmatpush.msra.mxu0 0.0
    %2373 = vmatpush.msra.mxu0 0.0
    %2374 = vmatpush.msra.mxu0 0.0
    %2375 = vmatpush.msra.mxu0 0.0
    %2376 = vmatpush.msra.mxu0 0.0
    %2377 = vmatpush.msra.mxu0 0.0
    %2378 = vmatpush.msra.mxu0 0.0
    %2379 = vmatpush.msra.mxu0 0.0
    %2380 = vmatpush.msra.mxu0 0.0
    %2381 = vmatpush.msra.mxu0 0.0
    %2382 = vmatpush.msra.mxu0 0.0
    %2383 = vmatpush.msra.mxu0 0.0
    %2384 = vmatpush.msra.mxu0 0.0
    %2385 = vmatpush.msra.mxu0 %v2365
    %2386 = vmatmul.f32.gmra.mxu0 %v2368
    %v2387 = vpop.f32.mrf.mxu0
    %v2388 = vadd.f32 0.0, %v2387
    %2389 = vdwg.mxu0
    %2390 = vrot.lane.b32.xlu0 %v2158, 64
    %v2391 = vpop.permute.xlu0 %2390
    %v2394 = vsel %vm369, %v2311, 0
    %2396 = vmatpush.msra.mxu0 0.0
    %2397 = vmatpush.msra.mxu0 0.0
    %2398 = vmatpush.msra.mxu0 0.0
    %2399 = vmatpush.msra.mxu0 0.0
    %2400 = vmatpush.msra.mxu0 0.0
    %2401 = vmatpush.msra.mxu0 0.0
    %2402 = vmatpush.msra.mxu0 0.0
    %2403 = vmatpush.msra.mxu0 0.0
    %2404 = vmatpush.msra.mxu0 0.0
    %2405 = vmatpush.msra.mxu0 0.0
    %2406 = vmatpush.msra.mxu0 0.0
    %2407 = vmatpush.msra.mxu0 0.0
    %2408 = vmatpush.msra.mxu0 0.0
    %2409 = vmatpush.msra.mxu0 0.0
    %2410 = vmatpush.msra.mxu0 0.0
    %2411 = vmatpush.msra.mxu0 %v2391
    %2412 = vmatmul.f32.gmra.mxu0 %v2394
    %v2413 = vpop.f32.mrf.mxu0
    %v2414 = vadd.f32 0.0, %v2413
    %2415 = vdwg.mxu0
    %2417 = vrot.lane.b32.xlu0 %v2362, 8
    %v2418 = vpop.permute.xlu0 %2417
    %2421 = vrot.lane.b32.xlu0 %v2388, 16
    %v2422 = vpop.permute.xlu0 %2421
    %2425 = vrot.lane.b32.xlu0 %v2414, 24
    %v2426 = vpop.permute.xlu0 %2425
    %v2428 = vsel %vm369, %v2336, %v2418
    %v2429 = vsel %vm633, %v2428, %v2422
    %v2430 = vsel %vm635, %v2429, %v2426
    %v2431 = vperm.slane %v2163, 0
    %v2433 = vsel %vm258, %v2430, 0
    %2435 = vmatpush.msra.mxu0 0.0
    %2436 = vmatpush.msra.mxu0 0.0
    %2437 = vmatpush.msra.mxu0 0.0
    %2438 = vmatpush.msra.mxu0 0.0
    %2439 = vmatpush.msra.mxu0 0.0
    %2440 = vmatpush.msra.mxu0 0.0
    %2441 = vmatpush.msra.mxu0 0.0
    %2442 = vmatpush.msra.mxu0 0.0
    %2443 = vmatpush.msra.mxu0 0.0
    %2444 = vmatpush.msra.mxu0 0.0
    %2445 = vmatpush.msra.mxu0 0.0
    %2446 = vmatpush.msra.mxu0 0.0
    %2447 = vmatpush.msra.mxu0 %v2162
    %2448 = vmatpush.msra.mxu0 %v2161
    %2449 = vmatpush.msra.mxu0 %v2160
    %2450 = vmatpush.msra.mxu0 %v2159
    %2451 = vmatmul.f32.gmra.mxu0 %v2433
    %v2452 = vpop.f32.mrf.mxu0
    %v2453 = vadd.f32 %v2431, %v2452
    %2454 = vdwg.mxu0
    %v2455 = vadd.f32 %v2092, %v2453
    %v2456 = vld [vmem:[#allocation16 + $0x1] sm:$0x1]
    %v2457 = vld [vmem:[#allocation17 + $0x1] sm:$0x1]
    %v2458 = vsel %vm258, %v2455, 0.0
    %2459 = vadd.xlane.f32.xlu0 %v2458
    %v2460 = vpop.xlane.xlu0 %2459
    %v2461 = vmul.f32 %v2460, %v300
    %v2462 = vmul.f32 %v2455, %v2455
    %v2463 = vsel %vm258, %v2462, 0.0
    %2464 = vadd.xlane.f32.xlu0 %v2463
    %v2465 = vpop.xlane.xlu0 %2464
    %v2466 = vmul.f32 %v2465, %v300
    %v2467 = vmul.f32 %v2461, %v2461
    %v2468 = vsub.f32 %v2466, %v2467
    %v2469 = vsub.f32 %v2455, %v2461
    %v2470 = vadd.f32 %v2468, 1e-12
    %v2471 = vrsqrt.pop %v2470
    %v2472 = vmul.f32 %v2471, %v2470
    %v2473 = vmul.f32 %v2472, %v2471
    %v2474 = vmul.f32 0.5, %v2473
    %v2475 = vsub.f32 1.5, %v2474
    %v2476 = vmul.f32 %v2471, %v2475
    %vm2477 = vweird.f32 %v2470
    %vm2478 = vweird.f32 %v2471
    %vm2479 = vmor %vm2477, %vm2478
    %v2480 = vsel %vm2479, %v2471, %v2476
    %v2481 = vmul.f32 %v2469, %v2480
    %v2482 = vperm.slane %v2456, 0
    %v2483 = vmul.f32 %v2481, %v2482
    %v2484 = vperm.slane %v2457, 0
    %v2485 = vadd.f32 %v2483, %v2484
    %v2486 = vld [vmem:[%s7] sm:$0xff]
    %v2487 = vld [vmem:[%s7 + $0x8] sm:$0xff]
    %v2488 = vld [vmem:[%s7 + $0x10] sm:$0xff]
    %v2489 = vld [vmem:[%s7 + $0x18] sm:$0xff]
    %v2490 = vld [vmem:[#allocation8] sm:$0x1]
    %v2491 = vperm.slane %v2490, 0
    %v2493 = vsel %vm258, %v2485, 0
    %2495 = vmatpush.msra.mxu0 0.0
    %2496 = vmatpush.msra.mxu0 0.0
    %2497 = vmatpush.msra.mxu0 0.0
    %2498 = vmatpush.msra.mxu0 0.0
    %2499 = vmatpush.msra.mxu0 0.0
    %2500 = vmatpush.msra.mxu0 0.0
    %2501 = vmatpush.msra.mxu0 0.0
    %2502 = vmatpush.msra.mxu0 0.0
    %2503 = vmatpush.msra.mxu0 0.0
    %2504 = vmatpush.msra.mxu0 0.0
    %2505 = vmatpush.msra.mxu0 0.0
    %2506 = vmatpush.msra.mxu0 0.0
    %2507 = vmatpush.msra.mxu0 %v2489
    %2508 = vmatpush.msra.mxu0 %v2488
    %2509 = vmatpush.msra.mxu0 %v2487
    %2510 = vmatpush.msra.mxu0 %v2486
    %2511 = vmatmul.f32.gmra.mxu0 %v2493
    %v2512 = vpop.f32.mrf.mxu0
    %v2513 = vadd.f32 %v2491, %v2512
    %2514 = vdwg.mxu0
    %2516 = vrot.lane.b32.xlu0 %v2513, 120
    %v2517 = vpop.permute.xlu0 %2516
    %2518 = vrot.lane.b32.xlu0 %v2513, 112
    %v2519 = vpop.permute.xlu0 %2518
    %2520 = vrot.lane.b32.xlu0 %v2513, 104
    %v2521 = vpop.permute.xlu0 %2520
    %2524 = vrot.lane.b32.xlu0 %v2087, 120
    %v2525 = vpop.permute.xlu0 %2524
    %2526 = vrot.lane.b32.xlu0 %v2090, 120
    %v2527 = vpop.permute.xlu0 %2526
    %2528 = vrot.lane.b32.xlu0 %v2087, 112
    %v2529 = vpop.permute.xlu0 %2528
    %2530 = vrot.lane.b32.xlu0 %v2090, 112
    %v2531 = vpop.permute.xlu0 %2530
    %2532 = vrot.lane.b32.xlu0 %v2087, 104
    %v2533 = vpop.permute.xlu0 %2532
    %2534 = vrot.lane.b32.xlu0 %v2090, 104
    %v2535 = vpop.permute.xlu0 %2534
    %v2536 = vld [vmem:[#allocation13] sm:$0xff]
    %v2537 = vld [vmem:[#allocation13 + $0x8] sm:$0xff]
    %v2538 = vld [vmem:[#allocation13 + $0x10] sm:$0xff]
    %v2539 = vld [vmem:[#allocation13 + $0x18] sm:$0xff]
    %v2540 = vld [vmem:[#allocation14] sm:$0x1]
    %v2542 = vperm.slane %v2054, 0
    %v2544 = vsel %vm369, %v2513, 0
    %v2546 = vsel %vm369, %v2087, 0
    %v2548 = vsel %vm369, %v2090, 0
    %2550 = vmatpush.xpose.msra.mxu0 0.0
    %2551 = vmatpush.xpose.msra.mxu0 0.0
    %2552 = vmatpush.xpose.msra.mxu0 0.0
    %2553 = vmatpush.xpose.msra.mxu0 0.0
    %2554 = vmatpush.xpose.msra.mxu0 0.0
    %2555 = vmatpush.xpose.msra.mxu0 0.0
    %2556 = vmatpush.xpose.msra.mxu0 0.0
    %2557 = vmatpush.xpose.msra.mxu0 0.0
    %2558 = vmatpush.xpose.msra.mxu0 0.0
    %2559 = vmatpush.xpose.msra.mxu0 0.0
    %2560 = vmatpush.xpose.msra.mxu0 0.0
    %2561 = vmatpush.xpose.msra.mxu0 0.0
    %2562 = vmatpush.xpose.msra.mxu0 0.0
    %2563 = vmatpush.xpose.msra.mxu0 0.0
    %2564 = vmatpush.xpose.msra.mxu0 %v2548
    %2565 = vmatpush.xpose.msra.mxu0 %v2546
    %2566 = vmatmul.f32.gmra.mxu0 %v2544
    %v2567 = vpop.f32.mrf.mxu0
    %v2568 = vadd.f32 %v2542, %v2567
    %2569 = vdwg.mxu0
    %v2570 = vsel %vm369, %v2517, 0
    %v2572 = vsel %vm369, %v2525, 0
    %v2574 = vsel %vm369, %v2527, 0
    %2576 = vmatpush.xpose.msra.mxu0 0.0
    %2577 = vmatpush.xpose.msra.mxu0 0.0
    %2578 = vmatpush.xpose.msra.mxu0 0.0
    %2579 = vmatpush.xpose.msra.mxu0 0.0
    %2580 = vmatpush.xpose.msra.mxu0 0.0
    %2581 = vmatpush.xpose.msra.mxu0 0.0
    %2582 = vmatpush.xpose.msra.mxu0 0.0
    %2583 = vmatpush.xpose.msra.mxu0 0.0
    %2584 = vmatpush.xpose.msra.mxu0 0.0
    %2585 = vmatpush.xpose.msra.mxu0 0.0
    %2586 = vmatpush.xpose.msra.mxu0 0.0
    %2587 = vmatpush.xpose.msra.mxu0 0.0
    %2588 = vmatpush.xpose.msra.mxu0 0.0
    %2589 = vmatpush.xpose.msra.mxu0 0.0
    %2590 = vmatpush.xpose.msra.mxu0 %v2574
    %2591 = vmatpush.xpose.msra.mxu0 %v2572
    %2592 = vmatmul.f32.gmra.mxu0 %v2570
    %v2593 = vpop.f32.mrf.mxu0
    %v2594 = vadd.f32 %v2542, %v2593
    %2595 = vdwg.mxu0
    %v2596 = vsel %vm369, %v2519, 0
    %v2598 = vsel %vm369, %v2529, 0
    %v2600 = vsel %vm369, %v2531, 0
    %2602 = vmatpush.xpose.msra.mxu0 0.0
    %2603 = vmatpush.xpose.msra.mxu0 0.0
    %2604 = vmatpush.xpose.msra.mxu0 0.0
    %2605 = vmatpush.xpose.msra.mxu0 0.0
    %2606 = vmatpush.xpose.msra.mxu0 0.0
    %2607 = vmatpush.xpose.msra.mxu0 0.0
    %2608 = vmatpush.xpose.msra.mxu0 0.0
    %2609 = vmatpush.xpose.msra.mxu0 0.0
    %2610 = vmatpush.xpose.msra.mxu0 0.0
    %2611 = vmatpush.xpose.msra.mxu0 0.0
    %2612 = vmatpush.xpose.msra.mxu0 0.0
    %2613 = vmatpush.xpose.msra.mxu0 0.0
    %2614 = vmatpush.xpose.msra.mxu0 0.0
    %2615 = vmatpush.xpose.msra.mxu0 0.0
    %2616 = vmatpush.xpose.msra.mxu0 %v2600
    %2617 = vmatpush.xpose.msra.mxu0 %v2598
    %2618 = vmatmul.f32.gmra.mxu0 %v2596
    %v2619 = vpop.f32.mrf.mxu0
    %v2620 = vadd.f32 %v2542, %v2619
    %2621 = vdwg.mxu0
    %v2622 = vsel %vm369, %v2521, 0
    %v2624 = vsel %vm369, %v2533, 0
    %v2626 = vsel %vm369, %v2535, 0
    %2628 = vmatpush.xpose.msra.mxu0 0.0
    %2629 = vmatpush.xpose.msra.mxu0 0.0
    %2630 = vmatpush.xpose.msra.mxu0 0.0
    %2631 = vmatpush.xpose.msra.mxu0 0.0
    %2632 = vmatpush.xpose.msra.mxu0 0.0
    %2633 = vmatpush.xpose.msra.mxu0 0.0
    %2634 = vmatpush.xpose.msra.mxu0 0.0
    %2635 = vmatpush.xpose.msra.mxu0 0.0
    %2636 = vmatpush.xpose.msra.mxu0 0.0
    %2637 = vmatpush.xpose.msra.mxu0 0.0
    %2638 = vmatpush.xpose.msra.mxu0 0.0
    %2639 = vmatpush.xpose.msra.mxu0 0.0
    %2640 = vmatpush.xpose.msra.mxu0 0.0
    %2641 = vmatpush.xpose.msra.mxu0 0.0
    %2642 = vmatpush.xpose.msra.mxu0 %v2626
    %2643 = vmatpush.xpose.msra.mxu0 %v2624
    %2644 = vmatmul.f32.gmra.mxu0 %v2622
    %v2645 = vpop.f32.mrf.mxu0
    %v2646 = vadd.f32 %v2542, %v2645
    %2647 = vdwg.mxu0
    %v2648 = vsel %vm633, %v2568, -inf
    %2649 = vmax.xlane.f32.xlu0 %v2648
    %v2650 = vpop.xlane.xlu0 %2649
    %v2651 = vsel %vm633, %v2594, -inf
    %2652 = vmax.xlane.f32.xlu0 %v2651
    %v2653 = vpop.xlane.xlu0 %2652
    %v2654 = vsel %vm633, %v2620, -inf
    %2655 = vmax.xlane.f32.xlu0 %v2654
    %v2656 = vpop.xlane.xlu0 %2655
    %v2657 = vsel %vm633, %v2646, -inf
    %2658 = vmax.xlane.f32.xlu0 %v2657
    %v2659 = vpop.xlane.xlu0 %2658
    %v2660 = vsub.f32 %v2568, %v2650
    %v2661 = vsub.f32 %v2594, %v2653
    %v2662 = vsub.f32 %v2620, %v2656
    %v2663 = vsub.f32 %v2646, %v2659
    %v2664 = vmul.f32 %v2660, 1.442695
    %v2665 = vpow.pop %v2664
    %v2666 = vmul.f32 %v2661, 1.442695
    %v2667 = vpow.pop %v2666
    %v2668 = vmul.f32 %v2662, 1.442695
    %v2669 = vpow.pop %v2668
    %v2670 = vmul.f32 %v2663, 1.442695
    %v2671 = vpow.pop %v2670
    %v2672 = vsel %vm633, %v2665, 0.0
    %2673 = vadd.xlane.f32.xlu0 %v2672
    %v2674 = vpop.xlane.xlu0 %2673
    %v2675 = vsel %vm633, %v2667, 0.0
    %2676 = vadd.xlane.f32.xlu0 %v2675
    %v2677 = vpop.xlane.xlu0 %2676
    %v2678 = vsel %vm633, %v2669, 0.0
    %2679 = vadd.xlane.f32.xlu0 %v2678
    %v2680 = vpop.xlane.xlu0 %2679
    %v2681 = vsel %vm633, %v2671, 0.0
    %2682 = vadd.xlane.f32.xlu0 %v2681
    %v2683 = vpop.xlane.xlu0 %2682
    %v2684 = vrcp.pop %v2674
    %v2685 = vrcp.pop %v2677
    %v2686 = vrcp.pop %v2680
    %v2687 = vrcp.pop %v2683
    %v2688 = vmul.f32 %v2665, %v2684
    %v2689 = vmul.f32 %v2667, %v2685
    %v2690 = vmul.f32 %v2669, %v2686
    %v2691 = vmul.f32 %v2671, %v2687
    %2692 = vrot.lane.b32.xlu0 %v2087, 96
    %v2693 = vpop.permute.xlu0 %2692
    %2694 = vrot.lane.b32.xlu0 %v2090, 96
    %v2695 = vpop.permute.xlu0 %2694
    %v2699 = vsel %vm633, %v2688, 0
    %2701 = vmatpush.msra.mxu0 0.0
    %2702 = vmatpush.msra.mxu0 0.0
    %2703 = vmatpush.msra.mxu0 0.0
    %2704 = vmatpush.msra.mxu0 0.0
    %2705 = vmatpush.msra.mxu0 0.0
    %2706 = vmatpush.msra.mxu0 0.0
    %2707 = vmatpush.msra.mxu0 0.0
    %2708 = vmatpush.msra.mxu0 0.0
    %2709 = vmatpush.msra.mxu0 0.0
    %2710 = vmatpush.msra.mxu0 0.0
    %2711 = vmatpush.msra.mxu0 0.0
    %2712 = vmatpush.msra.mxu0 0.0
    %2713 = vmatpush.msra.mxu0 0.0
    %2714 = vmatpush.msra.mxu0 0.0
    %2715 = vmatpush.msra.mxu0 %v2695
    %2716 = vmatpush.msra.mxu0 %v2693
    %2717 = vmatmul.f32.gmra.mxu0 %v2699
    %v2718 = vpop.f32.mrf.mxu0
    %v2719 = vadd.f32 0.0, %v2718
    %2720 = vdwg.mxu0
    %2721 = vrot.lane.b32.xlu0 %v2525, 96
    %v2722 = vpop.permute.xlu0 %2721
    %2723 = vrot.lane.b32.xlu0 %v2527, 96
    %v2724 = vpop.permute.xlu0 %2723
    %v2728 = vsel %vm633, %v2689, 0
    %2730 = vmatpush.msra.mxu0 0.0
    %2731 = vmatpush.msra.mxu0 0.0
    %2732 = vmatpush.msra.mxu0 0.0
    %2733 = vmatpush.msra.mxu0 0.0
    %2734 = vmatpush.msra.mxu0 0.0
    %2735 = vmatpush.msra.mxu0 0.0
    %2736 = vmatpush.msra.mxu0 0.0
    %2737 = vmatpush.msra.mxu0 0.0
    %2738 = vmatpush.msra.mxu0 0.0
    %2739 = vmatpush.msra.mxu0 0.0
    %2740 = vmatpush.msra.mxu0 0.0
    %2741 = vmatpush.msra.mxu0 0.0
    %2742 = vmatpush.msra.mxu0 0.0
    %2743 = vmatpush.msra.mxu0 0.0
    %2744 = vmatpush.msra.mxu0 %v2724
    %2745 = vmatpush.msra.mxu0 %v2722
    %2746 = vmatmul.f32.gmra.mxu0 %v2728
    %v2747 = vpop.f32.mrf.mxu0
    %v2748 = vadd.f32 0.0, %v2747
    %2749 = vdwg.mxu0
    %2750 = vrot.lane.b32.xlu0 %v2529, 96
    %v2751 = vpop.permute.xlu0 %2750
    %2752 = vrot.lane.b32.xlu0 %v2531, 96
    %v2753 = vpop.permute.xlu0 %2752
    %v2757 = vsel %vm633, %v2690, 0
    %2759 = vmatpush.msra.mxu0 0.0
    %2760 = vmatpush.msra.mxu0 0.0
    %2761 = vmatpush.msra.mxu0 0.0
    %2762 = vmatpush.msra.mxu0 0.0
    %2763 = vmatpush.msra.mxu0 0.0
    %2764 = vmatpush.msra.mxu0 0.0
    %2765 = vmatpush.msra.mxu0 0.0
    %2766 = vmatpush.msra.mxu0 0.0
    %2767 = vmatpush.msra.mxu0 0.0
    %2768 = vmatpush.msra.mxu0 0.0
    %2769 = vmatpush.msra.mxu0 0.0
    %2770 = vmatpush.msra.mxu0 0.0
    %2771 = vmatpush.msra.mxu0 0.0
    %2772 = vmatpush.msra.mxu0 0.0
    %2773 = vmatpush.msra.mxu0 %v2753
    %2774 = vmatpush.msra.mxu0 %v2751
    %2775 = vmatmul.f32.gmra.mxu0 %v2757
    %v2776 = vpop.f32.mrf.mxu0
    %v2777 = vadd.f32 0.0, %v2776
    %2778 = vdwg.mxu0
    %2779 = vrot.lane.b32.xlu0 %v2533, 96
    %v2780 = vpop.permute.xlu0 %2779
    %2781 = vrot.lane.b32.xlu0 %v2535, 96
    %v2782 = vpop.permute.xlu0 %2781
    %v2786 = vsel %vm633, %v2691, 0
    %2788 = vmatpush.msra.mxu0 0.0
    %2789 = vmatpush.msra.mxu0 0.0
    %2790 = vmatpush.msra.mxu0 0.0
    %2791 = vmatpush.msra.mxu0 0.0
    %2792 = vmatpush.msra.mxu0 0.0
    %2793 = vmatpush.msra.mxu0 0.0
    %2794 = vmatpush.msra.mxu0 0.0
    %2795 = vmatpush.msra.mxu0 0.0
    %2796 = vmatpush.msra.mxu0 0.0
    %2797 = vmatpush.msra.mxu0 0.0
    %2798 = vmatpush.msra.mxu0 0.0
    %2799 = vmatpush.msra.mxu0 0.0
    %2800 = vmatpush.msra.mxu0 0.0
    %2801 = vmatpush.msra.mxu0 0.0
    %2802 = vmatpush.msra.mxu0 %v2782
    %2803 = vmatpush.msra.mxu0 %v2780
    %2804 = vmatmul.f32.gmra.mxu0 %v2786
    %v2805 = vpop.f32.mrf.mxu0
    %v2806 = vadd.f32 0.0, %v2805
    %2807 = vdwg.mxu0
    %2809 = vrot.lane.b32.xlu0 %v2748, 8
    %v2810 = vpop.permute.xlu0 %2809
    %2813 = vrot.lane.b32.xlu0 %v2777, 16
    %v2814 = vpop.permute.xlu0 %2813
    %2817 = vrot.lane.b32.xlu0 %v2806, 24
    %v2818 = vpop.permute.xlu0 %2817
    %v2820 = vsel %vm369, %v2719, %v2810
    %v2821 = vsel %vm633, %v2820, %v2814
    %v2822 = vsel %vm635, %v2821, %v2818
    %v2823 = vperm.slane %v2540, 0
    %v2825 = vsel %vm258, %v2822, 0
    %2827 = vmatpush.msra.mxu0 0.0
    %2828 = vmatpush.msra.mxu0 0.0
    %2829 = vmatpush.msra.mxu0 0.0
    %2830 = vmatpush.msra.mxu0 0.0
    %2831 = vmatpush.msra.mxu0 0.0
    %2832 = vmatpush.msra.mxu0 0.0
    %2833 = vmatpush.msra.mxu0 0.0
    %2834 = vmatpush.msra.mxu0 0.0
    %2835 = vmatpush.msra.mxu0 0.0
    %2836 = vmatpush.msra.mxu0 0.0
    %2837 = vmatpush.msra.mxu0 0.0
    %2838 = vmatpush.msra.mxu0 0.0
    %2839 = vmatpush.msra.mxu0 %v2539
    %2840 = vmatpush.msra.mxu0 %v2538
    %2841 = vmatpush.msra.mxu0 %v2537
    %2842 = vmatpush.msra.mxu0 %v2536
    %2843 = vmatmul.f32.gmra.mxu0 %v2825
    %v2844 = vpop.f32.mrf.mxu0
    %v2845 = vadd.f32 %v2823, %v2844
    %2846 = vdwg.mxu0
    %v2847 = vadd.f32 %v2455, %v2845
    %v2848 = vld [vmem:[#allocation16 + $0x2] sm:$0x1]
    %v2849 = vld [vmem:[#allocation17 + $0x2] sm:$0x1]
    %v2850 = vsel %vm258, %v2847, 0.0
    %2851 = vadd.xlane.f32.xlu0 %v2850
    %v2852 = vpop.xlane.xlu0 %2851
    %v2853 = vmul.f32 %v2852, %v300
    %v2854 = vmul.f32 %v2847, %v2847
    %v2855 = vsel %vm258, %v2854, 0.0
    %2856 = vadd.xlane.f32.xlu0 %v2855
    %v2857 = vpop.xlane.xlu0 %2856
    %v2858 = vmul.f32 %v2857, %v300
    %v2859 = vmul.f32 %v2853, %v2853
    %v2860 = vsub.f32 %v2858, %v2859
    %v2861 = vsub.f32 %v2847, %v2853
    %v2862 = vadd.f32 %v2860, 1e-12
    %v2863 = vrsqrt.pop %v2862
    %v2864 = vmul.f32 %v2863, %v2862
    %v2865 = vmul.f32 %v2864, %v2863
    %v2866 = vmul.f32 0.5, %v2865
    %v2867 = vsub.f32 1.5, %v2866
    %v2868 = vmul.f32 %v2863, %v2867
    %vm2869 = vweird.f32 %v2862
    %vm2870 = vweird.f32 %v2863
    %vm2871 = vmor %vm2869, %vm2870
    %v2872 = vsel %vm2871, %v2863, %v2868
    %v2873 = vmul.f32 %v2861, %v2872
    %v2874 = vperm.slane %v2848, 0
    %v2875 = vmul.f32 %v2873, %v2874
    %v2876 = vperm.slane %v2849, 0
    %v2877 = vadd.f32 %v2875, %v2876
    %v2878 = vld [vmem:[#allocation19] sm:$0xff]
    %v2879 = vld [vmem:[#allocation19 + $0x8] sm:$0xff]
    %v2880 = vld [vmem:[#allocation19 + $0x10] sm:$0xff]
    %v2881 = vld [vmem:[#allocation19 + $0x18] sm:$0xff]
    %v2882 = vld [vmem:[#allocation20] sm:$0x1]
    %v2883 = vperm.slane %v2882, 0
    %v2885 = vsel %vm258, %v2877, 0
    %2887 = vmatpush.msra.mxu0 0.0
    %2888 = vmatpush.msra.mxu0 0.0
    %2889 = vmatpush.msra.mxu0 0.0
    %2890 = vmatpush.msra.mxu0 0.0
    %2891 = vmatpush.msra.mxu0 0.0
    %2892 = vmatpush.msra.mxu0 0.0
    %2893 = vmatpush.msra.mxu0 0.0
    %2894 = vmatpush.msra.mxu0 0.0
    %2895 = vmatpush.msra.mxu0 0.0
    %2896 = vmatpush.msra.mxu0 0.0
    %2897 = vmatpush.msra.mxu0 0.0
    %2898 = vmatpush.msra.mxu0 0.0
    %2899 = vmatpush.msra.mxu0 %v2881
    %2900 = vmatpush.msra.mxu0 %v2880
    %2901 = vmatpush.msra.mxu0 %v2879
    %2902 = vmatpush.msra.mxu0 %v2878
    %2903 = vmatmul.f32.gmra.mxu0 %v2885
    %v2904 = vpop.f32.mrf.mxu0
    %v2905 = vadd.f32 %v2883, %v2904
    %2906 = vdwg.mxu0
    %v2907 = vmul.f32 %v2905, %v2905
    %v2908 = vmul.f32 %v2905, %v2907
    %v2909 = vmul.f32 %v2908, 0.044715
    %v2910 = vadd.f32 %v2905, %v2909
    %v2911 = vmul.f32 %v2910, 0.7978846
    %v2912 = vtanh.pop %v2911
    %v2913 = vadd.f32 %v2912, 1.0
    %v2914 = vmul.f32 %v2913, 0.5
    %v2915 = vmul.f32 %v2905, %v2914
    %v2916 = vld [vmem:[%s17] sm:$0xff]
    %v2917 = vld [vmem:[%s17 + $0x8] sm:$0xff]
    %v2918 = vld [vmem:[%s17 + $0x10] sm:$0xff]
    %v2919 = vld [vmem:[%s17 + $0x18] sm:$0xff]
    %v2920 = vld [vmem:[%s17 + $0x20] sm:$0xff]
    %v2921 = vld [vmem:[%s17 + $0x28] sm:$0xff]
    %v2922 = vld [vmem:[%s17 + $0x30] sm:$0xff]
    %v2923 = vld [vmem:[%s17 + $0x38] sm:$0xff]
    %v2924 = vld [vmem:[#allocation22] sm:$0x1]
    %v2925 = vperm.slane %v2924, 0
    %v2927 = vsel %vm1132, %v2915, 0
    %2929 = vmatpush.msra.mxu0 0.0
    %2930 = vmatpush.msra.mxu0 0.0
    %2931 = vmatpush.msra.mxu0 0.0
    %2932 = vmatpush.msra.mxu0 0.0
    %2933 = vmatpush.msra.mxu0 0.0
    %2934 = vmatpush.msra.mxu0 0.0
    %2935 = vmatpush.msra.mxu0 0.0
    %2936 = vmatpush.msra.mxu0 0.0
    %2937 = vmatpush.msra.mxu0 %v2923
    %2938 = vmatpush.msra.mxu0 %v2922
    %2939 = vmatpush.msra.mxu0 %v2921
    %2940 = vmatpush.msra.mxu0 %v2920
    %2941 = vmatpush.msra.mxu0 %v2919
    %2942 = vmatpush.msra.mxu0 %v2918
    %2943 = vmatpush.msra.mxu0 %v2917
    %2944 = vmatpush.msra.mxu0 %v2916
    %2945 = vmatmul.f32.gmra.mxu0 %v2927
    %v2946 = vpop.f32.mrf.mxu0
    %v2947 = vadd.f32 %v2925, %v2946
    %2948 = vdwg.mxu0
    %v2949 = vadd.f32 %v2847, %v2947
    %v2950 = vld [vmem:[#allocation16 + $0x3] sm:$0x1]
    %v2951 = vld [vmem:[#allocation17 + $0x3] sm:$0x1]
    %v2952 = vsel %vm258, %v2949, 0.0
    %2953 = vadd.xlane.f32.xlu0 %v2952
    %v2954 = vpop.xlane.xlu0 %2953
    %v2955 = vmul.f32 %v2954, %v300
    %v2956 = vmul.f32 %v2949, %v2949
    %v2957 = vsel %vm258, %v2956, 0.0
    %2958 = vadd.xlane.f32.xlu0 %v2957
    %v2959 = vpop.xlane.xlu0 %2958
    %v2960 = vmul.f32 %v2959, %v300
    %v2961 = vmul.f32 %v2955, %v2955
    %v2962 = vsub.f32 %v2960, %v2961
    %v2963 = vsub.f32 %v2949, %v2955
    %v2964 = vadd.f32 %v2962, 1e-12
    %v2965 = vrsqrt.pop %v2964
    %v2966 = vmul.f32 %v2965, %v2964
    %v2967 = vmul.f32 %v2966, %v2965
    %v2968 = vmul.f32 0.5, %v2967
    %v2969 = vsub.f32 1.5, %v2968
    %v2970 = vmul.f32 %v2965, %v2969
    %vm2971 = vweird.f32 %v2964
    %vm2972 = vweird.f32 %v2965
    %vm2973 = vmor %vm2971, %vm2972
    %v2974 = vsel %vm2973, %v2965, %v2970
    %v2975 = vmul.f32 %v2963, %v2974
    %v2976 = vperm.slane %v2950, 0
    %v2977 = vmul.f32 %v2975, %v2976
    %v2978 = vperm.slane %v2951, 0
    %v2979 = vadd.f32 %v2977, %v2978
    %v2980 = vld [vmem:[%s1187] sm:$0xff]
    %v2981 = vld [vmem:[%s1187 + $0x8] sm:$0xff]
    %v2982 = vld [vmem:[%s1187 + $0x10] sm:$0xff]
    %v2983 = vld [vmem:[%s1187 + $0x18] sm:$0xff]
    %v2984 = vld [vmem:[#allocation5 + $0x1] sm:$0x1]
    %v2985 = vperm.slane %v2984, 0
    %v2987 = vsel %vm258, %v2979, 0
    %2989 = vmatpush.msra.mxu0 0.0
    %2990 = vmatpush.msra.mxu0 0.0
    %2991 = vmatpush.msra.mxu0 0.0
    %2992 = vmatpush.msra.mxu0 0.0
    %2993 = vmatpush.msra.mxu0 0.0
    %2994 = vmatpush.msra.mxu0 0.0
    %2995 = vmatpush.msra.mxu0 0.0
    %2996 = vmatpush.msra.mxu0 0.0
    %2997 = vmatpush.msra.mxu0 0.0
    %2998 = vmatpush.msra.mxu0 0.0
    %2999 = vmatpush.msra.mxu0 0.0
    %3000 = vmatpush.msra.mxu0 0.0
    %3001 = vmatpush.msra.mxu0 %v2983
    %3002 = vmatpush.msra.mxu0 %v2982
    %3003 = vmatpush.msra.mxu0 %v2981
    %3004 = vmatpush.msra.mxu0 %v2980
    %3005 = vmatmul.f32.gmra.mxu0 %v2987
    %v3006 = vpop.f32.mrf.mxu0
    %v3007 = vadd.f32 %v2985, %v3006
    %3008 = vdwg.mxu0
    %3010 = vrot.lane.b32.xlu0 %v3007, 120
    %v3011 = vpop.permute.xlu0 %3010
    %3012 = vrot.lane.b32.xlu0 %v3007, 112
    %v3013 = vpop.permute.xlu0 %3012
    %3014 = vrot.lane.b32.xlu0 %v3007, 104
    %v3015 = vpop.permute.xlu0 %3014
    %v3016 = vld [vmem:[%s1224] sm:$0xff]
    %v3017 = vld [vmem:[%s1224 + $0x8] sm:$0xff]
    %v3018 = vld [vmem:[%s1224 + $0x10] sm:$0xff]
    %v3019 = vld [vmem:[%s1224 + $0x18] sm:$0xff]
    %v3020 = vld [vmem:[#allocation7 + $0x1] sm:$0x1]
    %3021 = vrot.lane.b32.xlu0 %v3007, 96
    %v3022 = vpop.permute.xlu0 %3021
    %v3023 = vsel %vm369, %v3007, 0
    %v3025 = vsel %vm369, %v3022, 0
    %3027 = vmatpush.xpose.msra.mxu0 0.0
    %3028 = vmatpush.xpose.msra.mxu0 0.0
    %3029 = vmatpush.xpose.msra.mxu0 0.0
    %3030 = vmatpush.xpose.msra.mxu0 0.0
    %3031 = vmatpush.xpose.msra.mxu0 0.0
    %3032 = vmatpush.xpose.msra.mxu0 0.0
    %3033 = vmatpush.xpose.msra.mxu0 0.0
    %3034 = vmatpush.xpose.msra.mxu0 0.0
    %3035 = vmatpush.xpose.msra.mxu0 0.0
    %3036 = vmatpush.xpose.msra.mxu0 0.0
    %3037 = vmatpush.xpose.msra.mxu0 0.0
    %3038 = vmatpush.xpose.msra.mxu0 0.0
    %3039 = vmatpush.xpose.msra.mxu0 0.0
    %3040 = vmatpush.xpose.msra.mxu0 0.0
    %3041 = vmatpush.xpose.msra.mxu0 0.0
    %3042 = vmatpush.xpose.msra.mxu0 %v3025
    %3043 = vmatmul.f32.gmra.mxu0 %v3023
    %v3044 = vpop.f32.mrf.mxu0
    %v3045 = vadd.f32 0.0, %v3044
    %3046 = vdwg.mxu0
    %3047 = vrot.lane.b32.xlu0 %v3011, 96
    %v3048 = vpop.permute.xlu0 %3047
    %v3049 = vsel %vm369, %v3011, 0
    %v3051 = vsel %vm369, %v3048, 0
    %3053 = vmatpush.xpose.msra.mxu0 0.0
    %3054 = vmatpush.xpose.msra.mxu0 0.0
    %3055 = vmatpush.xpose.msra.mxu0 0.0
    %3056 = vmatpush.xpose.msra.mxu0 0.0
    %3057 = vmatpush.xpose.msra.mxu0 0.0
    %3058 = vmatpush.xpose.msra.mxu0 0.0
    %3059 = vmatpush.xpose.msra.mxu0 0.0
    %3060 = vmatpush.xpose.msra.mxu0 0.0
    %3061 = vmatpush.xpose.msra.mxu0 0.0
    %3062 = vmatpush.xpose.msra.mxu0 0.0
    %3063 = vmatpush.xpose.msra.mxu0 0.0
    %3064 = vmatpush.xpose.msra.mxu0 0.0
    %3065 = vmatpush.xpose.msra.mxu0 0.0
    %3066 = vmatpush.xpose.msra.mxu0 0.0
    %3067 = vmatpush.xpose.msra.mxu0 0.0
    %3068 = vmatpush.xpose.msra.mxu0 %v3051
    %3069 = vmatmul.f32.gmra.mxu0 %v3049
    %v3070 = vpop.f32.mrf.mxu0
    %v3071 = vadd.f32 0.0, %v3070
    %3072 = vdwg.mxu0
    %3073 = vrot.lane.b32.xlu0 %v3013, 96
    %v3074 = vpop.permute.xlu0 %3073
    %v3075 = vsel %vm369, %v3013, 0
    %v3077 = vsel %vm369, %v3074, 0
    %3079 = vmatpush.xpose.msra.mxu0 0.0
    %3080 = vmatpush.xpose.msra.mxu0 0.0
    %3081 = vmatpush.xpose.msra.mxu0 0.0
    %3082 = vmatpush.xpose.msra.mxu0 0.0
    %3083 = vmatpush.xpose.msra.mxu0 0.0
    %3084 = vmatpush.xpose.msra.mxu0 0.0
    %3085 = vmatpush.xpose.msra.mxu0 0.0
    %3086 = vmatpush.xpose.msra.mxu0 0.0
    %3087 = vmatpush.xpose.msra.mxu0 0.0
    %3088 = vmatpush.xpose.msra.mxu0 0.0
    %3089 = vmatpush.xpose.msra.mxu0 0.0
    %3090 = vmatpush.xpose.msra.mxu0 0.0
    %3091 = vmatpush.xpose.msra.mxu0 0.0
    %3092 = vmatpush.xpose.msra.mxu0 0.0
    %3093 = vmatpush.xpose.msra.mxu0 0.0
    %3094 = vmatpush.xpose.msra.mxu0 %v3077
    %3095 = vmatmul.f32.gmra.mxu0 %v3075
    %v3096 = vpop.f32.mrf.mxu0
    %v3097 = vadd.f32 0.0, %v3096
    %3098 = vdwg.mxu0
    %3099 = vrot.lane.b32.xlu0 %v3015, 96
    %v3100 = vpop.permute.xlu0 %3099
    %v3101 = vsel %vm369, %v3015, 0
    %v3103 = vsel %vm369, %v3100, 0
    %3105 = vmatpush.xpose.msra.mxu0 0.0
    %3106 = vmatpush.xpose.msra.mxu0 0.0
    %3107 = vmatpush.xpose.msra.mxu0 0.0
    %3108 = vmatpush.xpose.msra.mxu0 0.0
    %3109 = vmatpush.xpose.msra.mxu0 0.0
    %3110 = vmatpush.xpose.msra.mxu0 0.0
    %3111 = vmatpush.xpose.msra.mxu0 0.0
    %3112 = vmatpush.xpose.msra.mxu0 0.0
    %3113 = vmatpush.xpose.msra.mxu0 0.0
    %3114 = vmatpush.xpose.msra.mxu0 0.0
    %3115 = vmatpush.xpose.msra.mxu0 0.0
    %3116 = vmatpush.xpose.msra.mxu0 0.0
    %3117 = vmatpush.xpose.msra.mxu0 0.0
    %3118 = vmatpush.xpose.msra.mxu0 0.0
    %3119 = vmatpush.xpose.msra.mxu0 0.0
    %3120 = vmatpush.xpose.msra.mxu0 %v3103
    %3121 = vmatmul.f32.gmra.mxu0 %v3101
    %v3122 = vpop.f32.mrf.mxu0
    %v3123 = vadd.f32 0.0, %v3122
    %3124 = vdwg.mxu0
    %v3125 = vsel %vm369, %v3045, -inf
    %3126 = vmax.xlane.f32.xlu0 %v3125
    %v3127 = vpop.xlane.xlu0 %3126
    %v3128 = vsel %vm369, %v3071, -inf
    %3129 = vmax.xlane.f32.xlu0 %v3128
    %v3130 = vpop.xlane.xlu0 %3129
    %v3131 = vsel %vm369, %v3097, -inf
    %3132 = vmax.xlane.f32.xlu0 %v3131
    %v3133 = vpop.xlane.xlu0 %3132
    %v3134 = vsel %vm369, %v3123, -inf
    %3135 = vmax.xlane.f32.xlu0 %v3134
    %v3136 = vpop.xlane.xlu0 %3135
    %v3137 = vsub.f32 %v3045, %v3127
    %v3138 = vsub.f32 %v3071, %v3130
    %v3139 = vsub.f32 %v3097, %v3133
    %v3140 = vsub.f32 %v3123, %v3136
    %v3141 = vmul.f32 %v3137, 1.442695
    %v3142 = vpow.pop %v3141
    %v3143 = vmul.f32 %v3138, 1.442695
    %v3144 = vpow.pop %v3143
    %v3145 = vmul.f32 %v3139, 1.442695
    %v3146 = vpow.pop %v3145
    %v3147 = vmul.f32 %v3140, 1.442695
    %v3148 = vpow.pop %v3147
    %v3149 = vsel %vm369, %v3142, 0.0
    %3150 = vadd.xlane.f32.xlu0 %v3149
    %v3151 = vpop.xlane.xlu0 %3150
    %v3152 = vsel %vm369, %v3144, 0.0
    %3153 = vadd.xlane.f32.xlu0 %v3152
    %v3154 = vpop.xlane.xlu0 %3153
    %v3155 = vsel %vm369, %v3146, 0.0
    %3156 = vadd.xlane.f32.xlu0 %v3155
    %v3157 = vpop.xlane.xlu0 %3156
    %v3158 = vsel %vm369, %v3148, 0.0
    %3159 = vadd.xlane.f32.xlu0 %v3158
    %v3160 = vpop.xlane.xlu0 %3159
    %v3161 = vrcp.pop %v3151
    %v3162 = vrcp.pop %v3154
    %v3163 = vrcp.pop %v3157
    %v3164 = vrcp.pop %v3160
    %v3165 = vmul.f32 %v3142, %v3161
    %v3166 = vmul.f32 %v3144, %v3162
    %v3167 = vmul.f32 %v3146, %v3163
    %v3168 = vmul.f32 %v3148, %v3164
    %3169 = vrot.lane.b32.xlu0 %v3007, 64
    %v3170 = vpop.permute.xlu0 %3169
    %v3173 = vsel %vm369, %v3165, 0
    %3175 = vmatpush.msra.mxu0 0.0
    %3176 = vmatpush.msra.mxu0 0.0
    %3177 = vmatpush.msra.mxu0 0.0
    %3178 = vmatpush.msra.mxu0 0.0
    %3179 = vmatpush.msra.mxu0 0.0
    %3180 = vmatpush.msra.mxu0 0.0
    %3181 = vmatpush.msra.mxu0 0.0
    %3182 = vmatpush.msra.mxu0 0.0
    %3183 = vmatpush.msra.mxu0 0.0
    %3184 = vmatpush.msra.mxu0 0.0
    %3185 = vmatpush.msra.mxu0 0.0
    %3186 = vmatpush.msra.mxu0 0.0
    %3187 = vmatpush.msra.mxu0 0.0
    %3188 = vmatpush.msra.mxu0 0.0
    %3189 = vmatpush.msra.mxu0 0.0
    %3190 = vmatpush.msra.mxu0 %v3170
    %3191 = vmatmul.f32.gmra.mxu0 %v3173
    %v3192 = vpop.f32.mrf.mxu0
    %v3193 = vadd.f32 0.0, %v3192
    %3194 = vdwg.mxu0
    %3195 = vrot.lane.b32.xlu0 %v3011, 64
    %v3196 = vpop.permute.xlu0 %3195
    %v3199 = vsel %vm369, %v3166, 0
    %3201 = vmatpush.msra.mxu0 0.0
    %3202 = vmatpush.msra.mxu0 0.0
    %3203 = vmatpush.msra.mxu0 0.0
    %3204 = vmatpush.msra.mxu0 0.0
    %3205 = vmatpush.msra.mxu0 0.0
    %3206 = vmatpush.msra.mxu0 0.0
    %3207 = vmatpush.msra.mxu0 0.0
    %3208 = vmatpush.msra.mxu0 0.0
    %3209 = vmatpush.msra.mxu0 0.0
    %3210 = vmatpush.msra.mxu0 0.0
    %3211 = vmatpush.msra.mxu0 0.0
    %3212 = vmatpush.msra.mxu0 0.0
    %3213 = vmatpush.msra.mxu0 0.0
    %3214 = vmatpush.msra.mxu0 0.0
    %3215 = vmatpush.msra.mxu0 0.0
    %3216 = vmatpush.msra.mxu0 %v3196
    %3217 = vmatmul.f32.gmra.mxu0 %v3199
    %v3218 = vpop.f32.mrf.mxu0
    %v3219 = vadd.f32 0.0, %v3218
    %3220 = vdwg.mxu0
    %3221 = vrot.lane.b32.xlu0 %v3013, 64
    %v3222 = vpop.permute.xlu0 %3221
    %v3225 = vsel %vm369, %v3167, 0
    %3227 = vmatpush.msra.mxu0 0.0
    %3228 = vmatpush.msra.mxu0 0.0
    %3229 = vmatpush.msra.mxu0 0.0
    %3230 = vmatpush.msra.mxu0 0.0
    %3231 = vmatpush.msra.mxu0 0.0
    %3232 = vmatpush.msra.mxu0 0.0
    %3233 = vmatpush.msra.mxu0 0.0
    %3234 = vmatpush.msra.mxu0 0.0
    %3235 = vmatpush.msra.mxu0 0.0
    %3236 = vmatpush.msra.mxu0 0.0
    %3237 = vmatpush.msra.mxu0 0.0
    %3238 = vmatpush.msra.mxu0 0.0
    %3239 = vmatpush.msra.mxu0 0.0
    %3240 = vmatpush.msra.mxu0 0.0
    %3241 = vmatpush.msra.mxu0 0.0
    %3242 = vmatpush.msra.mxu0 %v3222
    %3243 = vmatmul.f32.gmra.mxu0 %v3225
    %v3244 = vpop.f32.mrf.mxu0
    %v3245 = vadd.f32 0.0, %v3244
    %3246 = vdwg.mxu0
    %3247 = vrot.lane.b32.xlu0 %v3015, 64
    %v3248 = vpop.permute.xlu0 %3247
    %v3251 = vsel %vm369, %v3168, 0
    %3253 = vmatpush.msra.mxu0 0.0
    %3254 = vmatpush.msra.mxu0 0.0
    %3255 = vmatpush.msra.mxu0 0.0
    %3256 = vmatpush.msra.mxu0 0.0
    %3257 = vmatpush.msra.mxu0 0.0
    %3258 = vmatpush.msra.mxu0 0.0
    %3259 = vmatpush.msra.mxu0 0.0
    %3260 = vmatpush.msra.mxu0 0.0
    %3261 = vmatpush.msra.mxu0 0.0
    %3262 = vmatpush.msra.mxu0 0.0
    %3263 = vmatpush.msra.mxu0 0.0
    %3264 = vmatpush.msra.mxu0 0.0
    %3265 = vmatpush.msra.mxu0 0.0
    %3266 = vmatpush.msra.mxu0 0.0
    %3267 = vmatpush.msra.mxu0 0.0
    %3268 = vmatpush.msra.mxu0 %v3248
    %3269 = vmatmul.f32.gmra.mxu0 %v3251
    %v3270 = vpop.f32.mrf.mxu0
    %v3271 = vadd.f32 0.0, %v3270
    %3272 = vdwg.mxu0
    %3274 = vrot.lane.b32.xlu0 %v3219, 8
    %v3275 = vpop.permute.xlu0 %3274
    %3278 = vrot.lane.b32.xlu0 %v3245, 16
    %v3279 = vpop.permute.xlu0 %3278
    %3282 = vrot.lane.b32.xlu0 %v3271, 24
    %v3283 = vpop.permute.xlu0 %3282
    %v3285 = vsel %vm369, %v3193, %v3275
    %v3286 = vsel %vm633, %v3285, %v3279
    %v3287 = vsel %vm635, %v3286, %v3283
    %v3288 = vperm.slane %v3020, 0
    %v3290 = vsel %vm258, %v3287, 0
    %3292 = vmatpush.msra.mxu0 0.0
    %3293 = vmatpush.msra.mxu0 0.0
    %3294 = vmatpush.msra.mxu0 0.0
    %3295 = vmatpush.msra.mxu0 0.0
    %3296 = vmatpush.msra.mxu0 0.0
    %3297 = vmatpush.msra.mxu0 0.0
    %3298 = vmatpush.msra.mxu0 0.0
    %3299 = vmatpush.msra.mxu0 0.0
    %3300 = vmatpush.msra.mxu0 0.0
    %3301 = vmatpush.msra.mxu0 0.0
    %3302 = vmatpush.msra.mxu0 0.0
    %3303 = vmatpush.msra.mxu0 0.0
    %3304 = vmatpush.msra.mxu0 %v3019
    %3305 = vmatpush.msra.mxu0 %v3018
    %3306 = vmatpush.msra.mxu0 %v3017
    %3307 = vmatpush.msra.mxu0 %v3016
    %3308 = vmatmul.f32.gmra.mxu0 %v3290
    %v3309 = vpop.f32.mrf.mxu0
    %v3310 = vadd.f32 %v3288, %v3309
    %3311 = vdwg.mxu0
    %v3312 = vadd.f32 %v2949, %v3310
    %v3313 = vld [vmem:[#allocation16 + $0x4] sm:$0x1]
    %v3314 = vld [vmem:[#allocation17 + $0x4] sm:$0x1]
    %v3315 = vsel %vm258, %v3312, 0.0
    %3316 = vadd.xlane.f32.xlu0 %v3315
    %v3317 = vpop.xlane.xlu0 %3316
    %v3318 = vmul.f32 %v3317, %v300
    %v3319 = vmul.f32 %v3312, %v3312
    %v3320 = vsel %vm258, %v3319, 0.0
    %3321 = vadd.xlane.f32.xlu0 %v3320
    %v3322 = vpop.xlane.xlu0 %3321
    %v3323 = vmul.f32 %v3322, %v300
    %v3324 = vmul.f32 %v3318, %v3318
    %v3325 = vsub.f32 %v3323, %v3324
    %v3326 = vsub.f32 %v3312, %v3318
    %v3327 = vadd.f32 %v3325, 1e-12
    %v3328 = vrsqrt.pop %v3327
    %v3329 = vmul.f32 %v3328, %v3327
    %v3330 = vmul.f32 %v3329, %v3328
    %v3331 = vmul.f32 0.5, %v3330
    %v3332 = vsub.f32 1.5, %v3331
    %v3333 = vmul.f32 %v3328, %v3332
    %vm3334 = vweird.f32 %v3327
    %vm3335 = vweird.f32 %v3328
    %vm3336 = vmor %vm3334, %vm3335
    %v3337 = vsel %vm3336, %v3328, %v3333
    %v3338 = vmul.f32 %v3326, %v3337
    %v3339 = vperm.slane %v3313, 0
    %v3340 = vmul.f32 %v3338, %v3339
    %v3341 = vperm.slane %v3314, 0
    %v3342 = vadd.f32 %v3340, %v3341
    %v3343 = vld [vmem:[%s1552] sm:$0xff]
    %v3344 = vld [vmem:[%s1552 + $0x8] sm:$0xff]
    %v3345 = vld [vmem:[%s1552 + $0x10] sm:$0xff]
    %v3346 = vld [vmem:[%s1552 + $0x18] sm:$0xff]
    %v3347 = vld [vmem:[#allocation8 + $0x1] sm:$0x1]
    %v3348 = vperm.slane %v3347, 0
    %v3350 = vsel %vm258, %v3342, 0
    %3352 = vmatpush.msra.mxu0 0.0
    %3353 = vmatpush.msra.mxu0 0.0
    %3354 = vmatpush.msra.mxu0 0.0
    %3355 = vmatpush.msra.mxu0 0.0
    %3356 = vmatpush.msra.mxu0 0.0
    %3357 = vmatpush.msra.mxu0 0.0
    %3358 = vmatpush.msra.mxu0 0.0
    %3359 = vmatpush.msra.mxu0 0.0
    %3360 = vmatpush.msra.mxu0 0.0
    %3361 = vmatpush.msra.mxu0 0.0
    %3362 = vmatpush.msra.mxu0 0.0
    %3363 = vmatpush.msra.mxu0 0.0
    %3364 = vmatpush.msra.mxu0 %v3346
    %3365 = vmatpush.msra.mxu0 %v3345
    %3366 = vmatpush.msra.mxu0 %v3344
    %3367 = vmatpush.msra.mxu0 %v3343
    %3368 = vmatmul.f32.gmra.mxu0 %v3350
    %v3369 = vpop.f32.mrf.mxu0
    %v3370 = vadd.f32 %v3348, %v3369
    %3371 = vdwg.mxu0
    %3373 = vrot.lane.b32.xlu0 %v3370, 120
    %v3374 = vpop.permute.xlu0 %3373
    %3375 = vrot.lane.b32.xlu0 %v3370, 112
    %v3376 = vpop.permute.xlu0 %3375
    %3377 = vrot.lane.b32.xlu0 %v3370, 104
    %v3378 = vpop.permute.xlu0 %3377
    %v3379 = vld [vmem:[%s1589] sm:$0xff]
    %v3380 = vld [vmem:[%s1589 + $0x8] sm:$0xff]
    %v3381 = vld [vmem:[%s1589 + $0x10] sm:$0xff]
    %v3382 = vld [vmem:[%s1589 + $0x18] sm:$0xff]
    %v3383 = vld [vmem:[#allocation14 + $0x1] sm:$0x1]
    %3384 = vrot.lane.b32.xlu0 %v2087, 64
    %v3385 = vpop.permute.xlu0 %3384
    %3386 = vrot.lane.b32.xlu0 %v2090, 64
    %v3387 = vpop.permute.xlu0 %3386
    %v3388 = vsel %vm369, %v3370, 0
    %v3390 = vsel %vm369, %v3385, 0
    %v3392 = vsel %vm369, %v3387, 0
    %3394 = vmatpush.xpose.msra.mxu0 0.0
    %3395 = vmatpush.xpose.msra.mxu0 0.0
    %3396 = vmatpush.xpose.msra.mxu0 0.0
    %3397 = vmatpush.xpose.msra.mxu0 0.0
    %3398 = vmatpush.xpose.msra.mxu0 0.0
    %3399 = vmatpush.xpose.msra.mxu0 0.0
    %3400 = vmatpush.xpose.msra.mxu0 0.0
    %3401 = vmatpush.xpose.msra.mxu0 0.0
    %3402 = vmatpush.xpose.msra.mxu0 0.0
    %3403 = vmatpush.xpose.msra.mxu0 0.0
    %3404 = vmatpush.xpose.msra.mxu0 0.0
    %3405 = vmatpush.xpose.msra.mxu0 0.0
    %3406 = vmatpush.xpose.msra.mxu0 0.0
    %3407 = vmatpush.xpose.msra.mxu0 0.0
    %3408 = vmatpush.xpose.msra.mxu0 %v3392
    %3409 = vmatpush.xpose.msra.mxu0 %v3390
    %3410 = vmatmul.f32.gmra.mxu0 %v3388
    %v3411 = vpop.f32.mrf.mxu0
    %v3412 = vadd.f32 %v2542, %v3411
    %3413 = vdwg.mxu0
    %3414 = vrot.lane.b32.xlu0 %v2525, 64
    %v3415 = vpop.permute.xlu0 %3414
    %3416 = vrot.lane.b32.xlu0 %v2527, 64
    %v3417 = vpop.permute.xlu0 %3416
    %v3418 = vsel %vm369, %v3374, 0
    %v3420 = vsel %vm369, %v3415, 0
    %v3422 = vsel %vm369, %v3417, 0
    %3424 = vmatpush.xpose.msra.mxu0 0.0
    %3425 = vmatpush.xpose.msra.mxu0 0.0
    %3426 = vmatpush.xpose.msra.mxu0 0.0
    %3427 = vmatpush.xpose.msra.mxu0 0.0
    %3428 = vmatpush.xpose.msra.mxu0 0.0
    %3429 = vmatpush.xpose.msra.mxu0 0.0
    %3430 = vmatpush.xpose.msra.mxu0 0.0
    %3431 = vmatpush.xpose.msra.mxu0 0.0
    %3432 = vmatpush.xpose.msra.mxu0 0.0
    %3433 = vmatpush.xpose.msra.mxu0 0.0
    %3434 = vmatpush.xpose.msra.mxu0 0.0
    %3435 = vmatpush.xpose.msra.mxu0 0.0
    %3436 = vmatpush.xpose.msra.mxu0 0.0
    %3437 = vmatpush.xpose.msra.mxu0 0.0
    %3438 = vmatpush.xpose.msra.mxu0 %v3422
    %3439 = vmatpush.xpose.msra.mxu0 %v3420
    %3440 = vmatmul.f32.gmra.mxu0 %v3418
    %v3441 = vpop.f32.mrf.mxu0
    %v3442 = vadd.f32 %v2542, %v3441
    %3443 = vdwg.mxu0
    %3444 = vrot.lane.b32.xlu0 %v2529, 64
    %v3445 = vpop.permute.xlu0 %3444
    %3446 = vrot.lane.b32.xlu0 %v2531, 64
    %v3447 = vpop.permute.xlu0 %3446
    %v3448 = vsel %vm369, %v3376, 0
    %v3450 = vsel %vm369, %v3445, 0
    %v3452 = vsel %vm369, %v3447, 0
    %3454 = vmatpush.xpose.msra.mxu0 0.0
    %3455 = vmatpush.xpose.msra.mxu0 0.0
    %3456 = vmatpush.xpose.msra.mxu0 0.0
    %3457 = vmatpush.xpose.msra.mxu0 0.0
    %3458 = vmatpush.xpose.msra.mxu0 0.0
    %3459 = vmatpush.xpose.msra.mxu0 0.0
    %3460 = vmatpush.xpose.msra.mxu0 0.0
    %3461 = vmatpush.xpose.msra.mxu0 0.0
    %3462 = vmatpush.xpose.msra.mxu0 0.0
    %3463 = vmatpush.xpose.msra.mxu0 0.0
    %3464 = vmatpush.xpose.msra.mxu0 0.0
    %3465 = vmatpush.xpose.msra.mxu0 0.0
    %3466 = vmatpush.xpose.msra.mxu0 0.0
    %3467 = vmatpush.xpose.msra.mxu0 0.0
    %3468 = vmatpush.xpose.msra.mxu0 %v3452
    %3469 = vmatpush.xpose.msra.mxu0 %v3450
    %3470 = vmatmul.f32.gmra.mxu0 %v3448
    %v3471 = vpop.f32.mrf.mxu0
    %v3472 = vadd.f32 %v2542, %v3471
    %3473 = vdwg.mxu0
    %3474 = vrot.lane.b32.xlu0 %v2533, 64
    %v3475 = vpop.permute.xlu0 %3474
    %3476 = vrot.lane.b32.xlu0 %v2535, 64
    %v3477 = vpop.permute.xlu0 %3476
    %v3478 = vsel %vm369, %v3378, 0
    %v3480 = vsel %vm369, %v3475, 0
    %v3482 = vsel %vm369, %v3477, 0
    %3484 = vmatpush.xpose.msra.mxu0 0.0
    %3485 = vmatpush.xpose.msra.mxu0 0.0
    %3486 = vmatpush.xpose.msra.mxu0 0.0
    %3487 = vmatpush.xpose.msra.mxu0 0.0
    %3488 = vmatpush.xpose.msra.mxu0 0.0
    %3489 = vmatpush.xpose.msra.mxu0 0.0
    %3490 = vmatpush.xpose.msra.mxu0 0.0
    %3491 = vmatpush.xpose.msra.mxu0 0.0
    %3492 = vmatpush.xpose.msra.mxu0 0.0
    %3493 = vmatpush.xpose.msra.mxu0 0.0
    %3494 = vmatpush.xpose.msra.mxu0 0.0
    %3495 = vmatpush.xpose.msra.mxu0 0.0
    %3496 = vmatpush.xpose.msra.mxu0 0.0
    %3497 = vmatpush.xpose.msra.mxu0 0.0
    %3498 = vmatpush.xpose.msra.mxu0 %v3482
    %3499 = vmatpush.xpose.msra.mxu0 %v3480
    %3500 = vmatmul.f32.gmra.mxu0 %v3478
    %v3501 = vpop.f32.mrf.mxu0
    %v3502 = vadd.f32 %v2542, %v3501
    %3503 = vdwg.mxu0
    %v3504 = vsel %vm633, %v3412, -inf
    %3505 = vmax.xlane.f32.xlu0 %v3504
    %v3506 = vpop.xlane.xlu0 %3505
    %v3507 = vsel %vm633, %v3442, -inf
    %3508 = vmax.xlane.f32.xlu0 %v3507
    %v3509 = vpop.xlane.xlu0 %3508
    %v3510 = vsel %vm633, %v3472, -inf
    %3511 = vmax.xlane.f32.xlu0 %v3510
    %v3512 = vpop.xlane.xlu0 %3511
    %v3513 = vsel %vm633, %v3502, -inf
    %3514 = vmax.xlane.f32.xlu0 %v3513
    %v3515 = vpop.xlane.xlu0 %3514
    %v3516 = vsub.f32 %v3412, %v3506
    %v3517 = vsub.f32 %v3442, %v3509
    %v3518 = vsub.f32 %v3472, %v3512
    %v3519 = vsub.f32 %v3502, %v3515
    %v3520 = vmul.f32 %v3516, 1.442695
    %v3521 = vpow.pop %v3520
    %v3522 = vmul.f32 %v3517, 1.442695
    %v3523 = vpow.pop %v3522
    %v3524 = vmul.f32 %v3518, 1.442695
    %v3525 = vpow.pop %v3524
    %v3526 = vmul.f32 %v3519, 1.442695
    %v3527 = vpow.pop %v3526
    %v3528 = vsel %vm633, %v3521, 0.0
    %3529 = vadd.xlane.f32.xlu0 %v3528
    %v3530 = vpop.xlane.xlu0 %3529
    %v3531 = vsel %vm633, %v3523, 0.0
    %3532 = vadd.xlane.f32.xlu0 %v3531
    %v3533 = vpop.xlane.xlu0 %3532
    %v3534 = vsel %vm633, %v3525, 0.0
    %3535 = vadd.xlane.f32.xlu0 %v3534
    %v3536 = vpop.xlane.xlu0 %3535
    %v3537 = vsel %vm633, %v3527, 0.0
    %3538 = vadd.xlane.f32.xlu0 %v3537
    %v3539 = vpop.xlane.xlu0 %3538
    %v3540 = vrcp.pop %v3530
    %v3541 = vrcp.pop %v3533
    %v3542 = vrcp.pop %v3536
    %v3543 = vrcp.pop %v3539
    %v3544 = vmul.f32 %v3521, %v3540
    %v3545 = vmul.f32 %v3523, %v3541
    %v3546 = vmul.f32 %v3525, %v3542
    %v3547 = vmul.f32 %v3527, %v3543
    %3548 = vrot.lane.b32.xlu0 %v2087, 32
    %v3549 = vpop.permute.xlu0 %3548
    %3550 = vrot.lane.b32.xlu0 %v2090, 32
    %v3551 = vpop.permute.xlu0 %3550
    %v3555 = vsel %vm633, %v3544, 0
    %3557 = vmatpush.msra.mxu0 0.0
    %3558 = vmatpush.msra.mxu0 0.0
    %3559 = vmatpush.msra.mxu0 0.0
    %3560 = vmatpush.msra.mxu0 0.0
    %3561 = vmatpush.msra.mxu0 0.0
    %3562 = vmatpush.msra.mxu0 0.0
    %3563 = vmatpush.msra.mxu0 0.0
    %3564 = vmatpush.msra.mxu0 0.0
    %3565 = vmatpush.msra.mxu0 0.0
    %3566 = vmatpush.msra.mxu0 0.0
    %3567 = vmatpush.msra.mxu0 0.0
    %3568 = vmatpush.msra.mxu0 0.0
    %3569 = vmatpush.msra.mxu0 0.0
    %3570 = vmatpush.msra.mxu0 0.0
    %3571 = vmatpush.msra.mxu0 %v3551
    %3572 = vmatpush.msra.mxu0 %v3549
    %3573 = vmatmul.f32.gmra.mxu0 %v3555
    %v3574 = vpop.f32.mrf.mxu0
    %v3575 = vadd.f32 0.0, %v3574
    %3576 = vdwg.mxu0
    %3577 = vrot.lane.b32.xlu0 %v2525, 32
    %v3578 = vpop.permute.xlu0 %3577
    %3579 = vrot.lane.b32.xlu0 %v2527, 32
    %v3580 = vpop.permute.xlu0 %3579
    %v3584 = vsel %vm633, %v3545, 0
    %3586 = vmatpush.msra.mxu0 0.0
    %3587 = vmatpush.msra.mxu0 0.0
    %3588 = vmatpush.msra.mxu0 0.0
    %3589 = vmatpush.msra.mxu0 0.0
    %3590 = vmatpush.msra.mxu0 0.0
    %3591 = vmatpush.msra.mxu0 0.0
    %3592 = vmatpush.msra.mxu0 0.0
    %3593 = vmatpush.msra.mxu0 0.0
    %3594 = vmatpush.msra.mxu0 0.0
    %3595 = vmatpush.msra.mxu0 0.0
    %3596 = vmatpush.msra.mxu0 0.0
    %3597 = vmatpush.msra.mxu0 0.0
    %3598 = vmatpush.msra.mxu0 0.0
    %3599 = vmatpush.msra.mxu0 0.0
    %3600 = vmatpush.msra.mxu0 %v3580
    %3601 = vmatpush.msra.mxu0 %v3578
    %3602 = vmatmul.f32.gmra.mxu0 %v3584
    %v3603 = vpop.f32.mrf.mxu0
    %v3604 = vadd.f32 0.0, %v3603
    %3605 = vdwg.mxu0
    %3606 = vrot.lane.b32.xlu0 %v2529, 32
    %v3607 = vpop.permute.xlu0 %3606
    %3608 = vrot.lane.b32.xlu0 %v2531, 32
    %v3609 = vpop.permute.xlu0 %3608
    %v3613 = vsel %vm633, %v3546, 0
    %3615 = vmatpush.msra.mxu0 0.0
    %3616 = vmatpush.msra.mxu0 0.0
    %3617 = vmatpush.msra.mxu0 0.0
    %3618 = vmatpush.msra.mxu0 0.0
    %3619 = vmatpush.msra.mxu0 0.0
    %3620 = vmatpush.msra.mxu0 0.0
    %3621 = vmatpush.msra.mxu0 0.0
    %3622 = vmatpush.msra.mxu0 0.0
    %3623 = vmatpush.msra.mxu0 0.0
    %3624 = vmatpush.msra.mxu0 0.0
    %3625 = vmatpush.msra.mxu0 0.0
    %3626 = vmatpush.msra.mxu0 0.0
    %3627 = vmatpush.msra.mxu0 0.0
    %3628 = vmatpush.msra.mxu0 0.0
    %3629 = vmatpush.msra.mxu0 %v3609
    %3630 = vmatpush.msra.mxu0 %v3607
    %3631 = vmatmul.f32.gmra.mxu0 %v3613
    %v3632 = vpop.f32.mrf.mxu0
    %v3633 = vadd.f32 0.0, %v3632
    %3634 = vdwg.mxu0
    %3635 = vrot.lane.b32.xlu0 %v2533, 32
    %v3636 = vpop.permute.xlu0 %3635
    %3637 = vrot.lane.b32.xlu0 %v2535, 32
    %v3638 = vpop.permute.xlu0 %3637
    %v3642 = vsel %vm633, %v3547, 0
    %3644 = vmatpush.msra.mxu0 0.0
    %3645 = vmatpush.msra.mxu0 0.0
    %3646 = vmatpush.msra.mxu0 0.0
    %3647 = vmatpush.msra.mxu0 0.0
    %3648 = vmatpush.msra.mxu0 0.0
    %3649 = vmatpush.msra.mxu0 0.0
    %3650 = vmatpush.msra.mxu0 0.0
    %3651 = vmatpush.msra.mxu0 0.0
    %3652 = vmatpush.msra.mxu0 0.0
    %3653 = vmatpush.msra.mxu0 0.0
    %3654 = vmatpush.msra.mxu0 0.0
    %3655 = vmatpush.msra.mxu0 0.0
    %3656 = vmatpush.msra.mxu0 0.0
    %3657 = vmatpush.msra.mxu0 0.0
    %3658 = vmatpush.msra.mxu0 %v3638
    %3659 = vmatpush.msra.mxu0 %v3636
    %3660 = vmatmul.f32.gmra.mxu0 %v3642
    %v3661 = vpop.f32.mrf.mxu0
    %v3662 = vadd.f32 0.0, %v3661
    %3663 = vdwg.mxu0
    %3665 = vrot.lane.b32.xlu0 %v3604, 8
    %v3666 = vpop.permute.xlu0 %3665
    %3669 = vrot.lane.b32.xlu0 %v3633, 16
    %v3670 = vpop.permute.xlu0 %3669
    %3673 = vrot.lane.b32.xlu0 %v3662, 24
    %v3674 = vpop.permute.xlu0 %3673
    %v3676 = vsel %vm369, %v3575, %v3666
    %v3677 = vsel %vm633, %v3676, %v3670
    %v3678 = vsel %vm635, %v3677, %v3674
    %v3679 = vperm.slane %v3383, 0
    %v3681 = vsel %vm258, %v3678, 0
    %3683 = vmatpush.msra.mxu0 0.0
    %3684 = vmatpush.msra.mxu0 0.0
    %3685 = vmatpush.msra.mxu0 0.0
    %3686 = vmatpush.msra.mxu0 0.0
    %3687 = vmatpush.msra.mxu0 0.0
    %3688 = vmatpush.msra.mxu0 0.0
    %3689 = vmatpush.msra.mxu0 0.0
    %3690 = vmatpush.msra.mxu0 0.0
    %3691 = vmatpush.msra.mxu0 0.0
    %3692 = vmatpush.msra.mxu0 0.0
    %3693 = vmatpush.msra.mxu0 0.0
    %3694 = vmatpush.msra.mxu0 0.0
    %3695 = vmatpush.msra.mxu0 %v3382
    %3696 = vmatpush.msra.mxu0 %v3381
    %3697 = vmatpush.msra.mxu0 %v3380
    %3698 = vmatpush.msra.mxu0 %v3379
    %3699 = vmatmul.f32.gmra.mxu0 %v3681
    %v3700 = vpop.f32.mrf.mxu0
    %v3701 = vadd.f32 %v3679, %v3700
    %3702 = vdwg.mxu0
    %v3703 = vadd.f32 %v3312, %v3701
    %v3704 = vld [vmem:[#allocation16 + $0x5] sm:$0x1]
    %v3705 = vld [vmem:[#allocation17 + $0x5] sm:$0x1]
    %v3706 = vsel %vm258, %v3703, 0.0
    %3707 = vadd.xlane.f32.xlu0 %v3706
    %v3708 = vpop.xlane.xlu0 %3707
    %v3709 = vmul.f32 %v3708, %v300
    %v3710 = vmul.f32 %v3703, %v3703
    %v3711 = vsel %vm258, %v3710, 0.0
    %3712 = vadd.xlane.f32.xlu0 %v3711
    %v3713 = vpop.xlane.xlu0 %3712
    %v3714 = vmul.f32 %v3713, %v300
    %v3715 = vmul.f32 %v3709, %v3709
    %v3716 = vsub.f32 %v3714, %v3715
    %v3717 = vsub.f32 %v3703, %v3709
    %v3718 = vadd.f32 %v3716, 1e-12
    %v3719 = vrsqrt.pop %v3718
    %v3720 = vmul.f32 %v3719, %v3718
    %v3721 = vmul.f32 %v3720, %v3719
    %v3722 = vmul.f32 0.5, %v3721
    %v3723 = vsub.f32 1.5, %v3722
    %v3724 = vmul.f32 %v3719, %v3723
    %vm3725 = vweird.f32 %v3718
    %vm3726 = vweird.f32 %v3719
    %vm3727 = vmor %vm3725, %vm3726
    %v3728 = vsel %vm3727, %v3719, %v3724
    %v3729 = vmul.f32 %v3717, %v3728
    %v3730 = vperm.slane %v3704, 0
    %v3731 = vmul.f32 %v3729, %v3730
    %v3732 = vperm.slane %v3705, 0
    %v3733 = vadd.f32 %v3731, %v3732
    %v3734 = vld [vmem:[%s1945] sm:$0xff]
    %v3735 = vld [vmem:[%s1945 + $0x8] sm:$0xff]
    %v3736 = vld [vmem:[%s1945 + $0x10] sm:$0xff]
    %v3737 = vld [vmem:[%s1945 + $0x18] sm:$0xff]
    %v3738 = vld [vmem:[#allocation20 + $0x1] sm:$0x1]
    %v3739 = vperm.slane %v3738, 0
    %v3741 = vsel %vm258, %v3733, 0
    %3743 = vmatpush.msra.mxu0 0.0
    %3744 = vmatpush.msra.mxu0 0.0
    %3745 = vmatpush.msra.mxu0 0.0
    %3746 = vmatpush.msra.mxu0 0.0
    %3747 = vmatpush.msra.mxu0 0.0
    %3748 = vmatpush.msra.mxu0 0.0
    %3749 = vmatpush.msra.mxu0 0.0
    %3750 = vmatpush.msra.mxu0 0.0
    %3751 = vmatpush.msra.mxu0 0.0
    %3752 = vmatpush.msra.mxu0 0.0
    %3753 = vmatpush.msra.mxu0 0.0
    %3754 = vmatpush.msra.mxu0 0.0
    %3755 = vmatpush.msra.mxu0 %v3737
    %3756 = vmatpush.msra.mxu0 %v3736
    %3757 = vmatpush.msra.mxu0 %v3735
    %3758 = vmatpush.msra.mxu0 %v3734
    %3759 = vmatmul.f32.gmra.mxu0 %v3741
    %v3760 = vpop.f32.mrf.mxu0
    %v3761 = vadd.f32 %v3739, %v3760
    %3762 = vdwg.mxu0
    %v3763 = vmul.f32 %v3761, %v3761
    %v3764 = vmul.f32 %v3761, %v3763
    %v3765 = vmul.f32 %v3764, 0.044715
    %v3766 = vadd.f32 %v3761, %v3765
    %v3767 = vmul.f32 %v3766, 0.7978846
    %v3768 = vtanh.pop %v3767
    %v3769 = vadd.f32 %v3768, 1.0
    %v3770 = vmul.f32 %v3769, 0.5
    %v3771 = vmul.f32 %v3761, %v3770
    %v3772 = vld [vmem:[%s1984] sm:$0xff]
    %v3773 = vld [vmem:[%s1984 + $0x8] sm:$0xff]
    %v3774 = vld [vmem:[%s1984 + $0x10] sm:$0xff]
    %v3775 = vld [vmem:[%s1984 + $0x18] sm:$0xff]
    %v3776 = vld [vmem:[%s1984 + $0x20] sm:$0xff]
    %v3777 = vld [vmem:[%s1984 + $0x28] sm:$0xff]
    %v3778 = vld [vmem:[%s1984 + $0x30] sm:$0xff]
    %v3779 = vld [vmem:[%s1984 + $0x38] sm:$0xff]
    %v3780 = vld [vmem:[#allocation22 + $0x1] sm:$0x1]
    %v3781 = vperm.slane %v3780, 0
    %v3783 = vsel %vm1132, %v3771, 0
    %3785 = vmatpush.msra.mxu0 0.0
    %3786 = vmatpush.msra.mxu0 0.0
    %3787 = vmatpush.msra.mxu0 0.0
    %3788 = vmatpush.msra.mxu0 0.0
    %3789 = vmatpush.msra.mxu0 0.0
    %3790 = vmatpush.msra.mxu0 0.0
    %3791 = vmatpush.msra.mxu0 0.0
    %3792 = vmatpush.msra.mxu0 0.0
    %3793 = vmatpush.msra.mxu0 %v3779
    %3794 = vmatpush.msra.mxu0 %v3778
    %3795 = vmatpush.msra.mxu0 %v3777
    %3796 = vmatpush.msra.mxu0 %v3776
    %3797 = vmatpush.msra.mxu0 %v3775
    %3798 = vmatpush.msra.mxu0 %v3774
    %3799 = vmatpush.msra.mxu0 %v3773
    %3800 = vmatpush.msra.mxu0 %v3772
    %3801 = vmatmul.f32.gmra.mxu0 %v3783
    %v3802 = vpop.f32.mrf.mxu0
    %v3803 = vadd.f32 %v3781, %v3802
    %3804 = vdwg.mxu0
    %v3805 = vadd.f32 %v3703, %v3803
    %v3806 = vld [vmem:[#allocation16 + $0x6] sm:$0x1]
    %v3807 = vld [vmem:[#allocation17 + $0x6] sm:$0x1]
    %v3808 = vsel %vm258, %v3805, 0.0
    %3809 = vadd.xlane.f32.xlu0 %v3808
    %v3810 = vpop.xlane.xlu0 %3809
    %v3811 = vmul.f32 %v3810, %v300
    %v3812 = vmul.f32 %v3805, %v3805
    %v3813 = vsel %vm258, %v3812, 0.0
    %3814 = vadd.xlane.f32.xlu0 %v3813
    %v3815 = vpop.xlane.xlu0 %3814
    %v3816 = vmul.f32 %v3815, %v300
    %v3817 = vmul.f32 %v3811, %v3811
    %v3818 = vsub.f32 %v3816, %v3817
    %v3819 = vsub.f32 %v3805, %v3811
    %v3820 = vadd.f32 %v3818, 1e-12
    %v3821 = vrsqrt.pop %v3820
    %v3822 = vmul.f32 %v3821, %v3820
    %v3823 = vmul.f32 %v3822, %v3821
    %v3824 = vmul.f32 0.5, %v3823
    %v3825 = vsub.f32 1.5, %v3824
    %v3826 = vmul.f32 %v3821, %v3825
    %vm3827 = vweird.f32 %v3820
    %vm3828 = vweird.f32 %v3821
    %vm3829 = vmor %vm3827, %vm3828
    %v3830 = vsel %vm3829, %v3821, %v3826
    %v3831 = vmul.f32 %v3819, %v3830
    %v3832 = vperm.slane %v3806, 0
    %v3833 = vmul.f32 %v3831, %v3832
    %v3834 = vperm.slane %v3807, 0
    %v3835 = vadd.f32 %v3833, %v3834
    %s3836 = scalar_lea.vmem [#allocation23], 8
    %3837 = vst.msk [vmem:[%s3836] sm:$0xff] %vm258, %v3835
    // Predicated region
    $region130: #{fwd.1} parent=1 // pred_check
      _
    $region131: #{fwd.1} parent=1 // pred_check_branch
      %3839 = sbr.rel (0) target = $region133
    $region132: #{fwd.1} parent=1 // pred_region
      %3841 = vsyncadd [#allocation4], 0
      %s3842 = sshll.u32 [#allocation23], 4
      %s3843 = int_to_ptr.vmem [resolvable:$true] %s3842
      %s3844 = sshll.u32 %s19, 4
      %s3845 = int_to_ptr.hbm [resolvable:$true] %s3844
      %3850 = dma.vmem_to_hbm [thread:$0]  %s3843, 256, %s3845, [#allocation4], 128, 128, 8
    $region133: #{fwd.1} parent=1 // pred_fallthru
      _
    // Predicated region
    $region134: #{fwd.1} parent=1 // pred_check
      _
    $region135: #{fwd.1} parent=1 // pred_check_branch
      %3852 = sbr.rel (0) target = $region137
    $region136: #{fwd.1} parent=1 // pred_region
      %3854 = dma.done [#allocation4], 256
    $region137: #{fwd.1} parent=1 // pred_fallthru
      _
    %3855 = vsyncpa [#allocation3], 1
    %3856 = vsyncpa [#allocation6], 1
    %3857 = vsyncpa [#allocation9], 1
    %3858 = vsyncpa [#allocation12], 1
    %3859 = vsyncpa [#allocation15], 1
    %3860 = vsyncpa [#allocation18], 1
    %3861 = vsyncpa [#allocation21], 1
    %3862 = vsyncpa [#allocation4], 1

</llo_original>
